<compile_context>
chip_gen: v6e
topology: v6e:2x2x1
jax: 0.10.0
libtpu: 0.0.40
codegen_flags: <defaults>
</compile_context>

<pallas_src>
import jax
import jax.numpy as jnp
from jax.experimental import pallas as pl
from jax.experimental.pallas import tpu as pltpu

NUM_CLASSES = 8
FEAT_DIM = 1024          # 4 * 16 * 16  (flatten of NCHW [B, 4, 16, 16])
FUSED_N = 128 + 512      # wr1 (1024->128) ++ wc1 (1024->512); 640 = 5 * 128, lane aligned
PAD = 128                # lane-padded width for all small layers
B_TILE = 8               # batch rows per grid block (sublane aligned)


def _detector_kernel(
    x_ref,        # [B_TILE, 1024] bf16   flattened image block
    wb_ref,       # [1024, 1024]   bf16   baseModel fc
    wf_ref,       # [1024, 640]    bf16   fused wr1 ++ wc1
    wc2_ref,      # [512, 512]     bf16   classifier layer 2
    wsmall_ref,   # [896, 128]     f32    wr2_p | wr3_p | wr4_p | wc3_p stacked on rows
    bias_ref,     # [8, 1024]      f32    one (lane-padded) bias per row
    out_ref,      # [2, B_TILE, 128] f32  out[0]=sigmoid bbox (lanes 0:4), out[1]=probs (lanes 0:8)
):
    x = x_ref[...]                         # bf16
    b = bias_ref[...]                      # f32, 8 vregs, loaded once

    # --- baseModel: Flatten -> Linear(1024, 1024) -> ReLU  (fc_model[-1] = Identity) ---
    f = jnp.dot(x, wb_ref[...], preferred_element_type=jnp.float32) + b[0:1, :]
    f = jnp.maximum(f, 0.0).astype(jnp.bfloat16)

    # --- fused first layers of regressor (1024->128) and classifier (1024->512) ---
    hf = jnp.dot(f, wf_ref[...], preferred_element_type=jnp.float32) + b[1:2, :FUSED_N]
    hf = jnp.maximum(hf, 0.0)
    h = hf[:, :128]                        # regressor branch, already 128 lanes
    c = hf[:, 128:FUSED_N].astype(jnp.bfloat16)   # classifier branch, 512 lanes

    # --- regressor tail: 128 -> 64 -> 32 -> 4 (all lane-padded to 128, zeros elsewhere) ---
    h = jnp.maximum(
        jnp.dot(h, wsmall_ref[0:128, :], preferred_element_type=jnp.float32) + b[3:4, :PAD], 0.0)
    h = jnp.maximum(
        jnp.dot(h, wsmall_ref[128:256, :], preferred_element_type=jnp.float32) + b[4:5, :PAD], 0.0)
    bb = jnp.dot(h, wsmall_ref[256:384, :], preferred_element_type=jnp.float32) + b[5:6, :PAD]
    # Sigmoid = 1 / (1 + exp(-x)); divide routed to the EUP.
    out_ref[0] = pl.reciprocal(1.0 + jnp.exp(-bb), approx=True)

    # --- classifier tail: 512 -> 512 -> numClasses (Dropout is identity in eval) ---
    c = jnp.dot(c, wc2_ref[...], preferred_element_type=jnp.float32) + b[2:3, :512]
    c = jnp.maximum(c, 0.0)
    logits = jnp.dot(c, wsmall_ref[384:896, :], preferred_element_type=jnp.float32) + b[6:7, :PAD]
    # mask padded lanes so they contribute 0 to the softmax
    lane = jax.lax.broadcasted_iota(jnp.int32, logits.shape, 1)
    logits = jnp.where(lane < NUM_CLASSES, logits, -jnp.inf)
    logits = logits - jnp.max(logits, axis=1, keepdims=True)
    e = jnp.exp(logits)
    out_ref[1] = e * pl.reciprocal(jnp.sum(e, axis=1, keepdims=True), approx=True)


# ----------------------------------------------------------------------------- params

def _linear(key, fan_in, fan_out, scale=0.02):
    kw, kb = jax.random.split(key)
    w = scale * jax.random.normal(kw, (fan_in, fan_out), dtype=jnp.float32)
    b = scale * jax.random.normal(kb, (fan_out,), dtype=jnp.float32)
    return w, b


def init_params(key, num_classes=NUM_CLASSES):
    """Build the packed / bf16-quantized parameter slabs consumed by the kernel."""
    ks = jax.random.split(key, 8)
    wb,  bb  = _linear(ks[0], FEAT_DIM, FEAT_DIM)    # baseModel fc (final fc -> Identity)
    wr1, br1 = _linear(ks[1], FEAT_DIM, 128)
    wr2, br2 = _linear(ks[2], 128, 64)
    wr3, br3 = _linear(ks[3], 64, 32)
    wr4, br4 = _linear(ks[4], 32, 4)
    wc1, bc1 = _linear(ks[5], FEAT_DIM, 512)
    wc2, bc2 = _linear(ks[6], 512, 512)
    wc3, bc3 = _linear(ks[7], 512, num_classes)

    # big weights: bf16 storage (halves the dominant HBM->VMEM traffic), wr1++wc1 fused
    wb_b  = wb.astype(jnp.bfloat16)                                  # [1024, 1024]
    wf_b  = jnp.concatenate([wr1, wc1], axis=1).astype(jnp.bfloat16)  # [1024, 640]
    wc2_b = wc2.astype(jnp.bfloat16)                                  # [512, 512]

    # small weights: zero-pad to 128 output lanes, stack rows into one f32 slab [896, 128]
    def pad2(w, rows, cols=PAD):
        return jnp.zeros((rows, cols), jnp.float32).at[:w.shape[0], :w.shape[1]].set(w)

    wsmall = jnp.concatenate([
        pad2(wr2, 128),    # rows   0:128   (128 -> 64)
        pad2(wr3, 128),    # rows 128:256   ( 64 -> 32, padded inputs are zero rows)
        pad2(wr4, 128),    # rows 256:384   ( 32 ->  4)
        pad2(wc3, 512),    # rows 384:896   (512 ->  C)
    ], axis=0)

    # all biases in one lane-padded f32 slab [8, 1024]
    def pad1(v):
        return jnp.zeros((FEAT_DIM,), jnp.float32).at[:v.shape[0]].set(v)

    bias = jnp.stack([
        pad1(bb),                                    # row 0: baseModel fc
        pad1(jnp.concatenate([br1, bc1])),           # row 1: fused wr1/wc1 bias (640 real)
        pad1(bc2),                                   # row 2
        pad1(br2), pad1(br3), pad1(br4), pad1(bc3),  # rows 3..6
        jnp.zeros((FEAT_DIM,), jnp.float32),         # row 7: sublane padding
    ], axis=0)

    return wb_b, wf_b, wc2_b, wsmall, bias


# ----------------------------------------------------------------------------- wrapper

@jax.jit
def object_detector_forward(x, params):
    wb, wf, wc2, wsmall, bias = params
    B = x.shape[0]
    x_flat = x.reshape(B, -1).astype(jnp.bfloat16)   # NCHW flatten, same order as torch
    assert x_flat.shape[1] == FEAT_DIM

    b_pad = pl.cdiv(B, B_TILE) * B_TILE
    if b_pad != B:
        x_flat = jnp.pad(x_flat, ((0, b_pad - B), (0, 0)))
    n_blocks = b_pad // B_TILE

    def resident(shape):                  # weights: same block for every batch block
        return pl.BlockSpec(shape, lambda i: (0,) * len(shape))

    out = pl.pallas_call(
        _detector_kernel,
        out_shape=jax.ShapeDtypeStruct((2, b_pad, 128), jnp.float32),
        grid=(n_blocks,),
        in_specs=[
            pl.BlockSpec((B_TILE, FEAT_DIM), lambda i: (i, 0)),   # x: per batch block
            resident(wb.shape),
            resident(wf.shape),
            resident(wc2.shape),
            resident(wsmall.shape),
            resident(bias.shape),
        ],
        out_specs=pl.BlockSpec((2, B_TILE, 128), lambda i: (0, i, 0)),
        compiler_params=pltpu.CompilerParams(
            dimension_semantics=("parallel",),   # v7x: shard batch blocks across both TCs
        ),
    )(x_flat, wb, wf, wc2, wsmall, bias)

    bboxes = out[0, :B, :4]
    class_probs = out[1, :B, :NUM_CLASSES]
    return bboxes, class_probs


# ----------------------------------------------------------------------------- reference

def _reference_forward(x, params):
    """Pure-JAX reference with the same bf16 weight storage / cast points as the kernel."""
    wb, wf, wc2, wsmall, bias = params
    B = x.shape[0]
    xf = x.reshape(B, -1).astype(jnp.bfloat16)
    f = jax.nn.relu(jnp.dot(xf, wb, preferred_element_type=jnp.float32) + bias[0:1, :])
    hf = jax.nn.relu(jnp.dot(f.astype(jnp.bfloat16), wf,
                             preferred_element_type=jnp.float32) + bias[1:2, :FUSED_N])
    h = hf[:, :128]
    c = hf[:, 128:FUSED_N].astype(jnp.bfloat16)
    h = jax.nn.relu(h @ wsmall[0:128, :] + bias[3:4, :PAD])
    h = jax.nn.relu(h @ wsmall[128:256, :] + bias[4:5, :PAD])
    bb = h @ wsmall[256:384, :] + bias[5:6, :PAD]
    bboxes = jax.nn.sigmoid(bb[:, :4])
    c = jax.nn.relu(jnp.dot(c, wc2, preferred_element_type=jnp.float32) + bias[2:3, :512])
    logits = c @ wsmall[384:896, :] + bias[6:7, :PAD]
    probs = jax.nn.softmax(logits[:, :NUM_CLASSES], axis=1)
    return bboxes, probs


if __name__ == "__main__":
    key = jax.random.PRNGKey(0)
    k_x, k_p = jax.random.split(key)
    # shapes consistent with the forward: B=2, C=4, H=W=16 -> 1024 features
    x = jax.random.normal(k_x, (2, 4, 16, 16), dtype=jnp.float32)
    params = init_params(k_p)

    bboxes, class_probs = object_detector_forward(x, params)
    jax.block_until_ready((bboxes, class_probs))

    assert bboxes.shape == (2, 4)
    assert class_probs.shape == (2, NUM_CLASSES)
    # sanity: sigmoid range, softmax rows sum to ~1 (approx EUP reciprocal -> loose tol)
    assert bool(jnp.all((bboxes >= 0.0) & (bboxes <= 1.0)))
    assert bool(jnp.allclose(jnp.sum(class_probs, axis=1), 1.0, atol=1e-2))

    # numerical check against a pure-JAX reference using the same packed parameters
    ref_bb, ref_cp = _reference_forward(x, params)
    assert bool(jnp.allclose(bboxes, ref_bb, atol=2e-2))
    assert bool(jnp.allclose(class_probs, ref_cp, atol=2e-2))

    print("KERNEL_OK")
</pallas_src>

<mosaic_0001>
module attributes {stable_mosaic.version = 11 : i64} {
  func.func @_detector_kernel(%arg0: i32, %arg1: memref<8x1024xbf16, #tpu.memory_space<vmem>>, %arg2: memref<1024x1024xbf16, #tpu.memory_space<vmem>>, %arg3: memref<1024x640xbf16, #tpu.memory_space<vmem>>, %arg4: memref<512x512xbf16, #tpu.memory_space<vmem>>, %arg5: memref<896x128xf32, #tpu.memory_space<vmem>>, %arg6: memref<8x1024xf32, #tpu.memory_space<vmem>>, %arg7: memref<2x8x128xf32, #tpu.memory_space<vmem>>) attributes {dimension_semantics = [#tpu.dimension_semantics<parallel>], iteration_bounds = array<i64: 1>, scalar_prefetch = 0 : i64, scratch_operands = 0 : i64, tpu.core_type = #tpu.core_type<tc>, window_params = [{transform_indices = @transform_0, window_bounds = array<i64: 8, 1024>}, {pipeline_mode = #tpu.pipeline_mode<synchronous>, transform_indices = @transform_1, window_bounds = array<i64: 1024, 1024>}, {pipeline_mode = #tpu.pipeline_mode<synchronous>, transform_indices = @transform_2, window_bounds = array<i64: 1024, 640>}, {pipeline_mode = #tpu.pipeline_mode<synchronous>, transform_indices = @transform_3, window_bounds = array<i64: 512, 512>}, {pipeline_mode = #tpu.pipeline_mode<synchronous>, transform_indices = @transform_4, window_bounds = array<i64: 896, 128>}, {pipeline_mode = #tpu.pipeline_mode<synchronous>, transform_indices = @transform_5, window_bounds = array<i64: 8, 1024>}, {transform_indices = @transform_6, window_bounds = array<i64: 2, 8, 128>}]} {
    %c0 = arith.constant 0 : index
    %c0_0 = arith.constant 0 : index
    %0 = vector.load %arg1[%c0, %c0_0] : memref<8x1024xbf16, #tpu.memory_space<vmem>>, vector<8x1024xbf16>
    %c0_1 = arith.constant 0 : index
    %c0_2 = arith.constant 0 : index
    %1 = vector.load %arg6[%c0_1, %c0_2] : memref<8x1024xf32, #tpu.memory_space<vmem>>, vector<8x1024xf32>
    %c0_3 = arith.constant 0 : index
    %c0_4 = arith.constant 0 : index
    %2 = vector.load %arg2[%c0_3, %c0_4] : memref<1024x1024xbf16, #tpu.memory_space<vmem>>, vector<1024x1024xbf16>
    %cst = arith.constant dense<0.000000e+00> : vector<8x1024xf32>
    %3 = tpu.matmul %0, %2, %cst {dimension_numbers = #tpu.dot_dimension_numbers<[1], [0], [0], [1], [0, 0, 1, 1], [], []>} : vector<8x1024xbf16>, vector<1024x1024xbf16>, vector<8x1024xf32> -> vector<8x1024xf32>
    %4 = vector.extract_strided_slice %1 {offsets = [0, 0], sizes = [1, 1024], strides = [1, 1]} : vector<8x1024xf32> to vector<1x1024xf32>
    %5 = vector.broadcast %4 : vector<1x1024xf32> to vector<8x1024xf32>
    %6 = arith.addf %3, %5 : vector<8x1024xf32>
    %cst_5 = arith.constant 0.000000e+00 : f32
    %7 = vector.broadcast %cst_5 : f32 to vector<8x1024xf32>
    %8 = arith.maximumf %6, %7 : vector<8x1024xf32>
    %9 = arith.truncf %8 : vector<8x1024xf32> to vector<8x1024xbf16>
    %c0_6 = arith.constant 0 : index
    %c0_7 = arith.constant 0 : index
    %10 = vector.load %arg3[%c0_6, %c0_7] : memref<1024x640xbf16, #tpu.memory_space<vmem>>, vector<1024x640xbf16>
    %cst_8 = arith.constant dense<0.000000e+00> : vector<8x640xf32>
    %11 = tpu.matmul %9, %10, %cst_8 {dimension_numbers = #tpu.dot_dimension_numbers<[1], [0], [0], [1], [0, 0, 1, 1], [], []>} : vector<8x1024xbf16>, vector<1024x640xbf16>, vector<8x640xf32> -> vector<8x640xf32>
    %12 = vector.extract_strided_slice %1 {offsets = [1, 0], sizes = [1, 640], strides = [1, 1]} : vector<8x1024xf32> to vector<1x640xf32>
    %13 = vector.broadcast %12 : vector<1x640xf32> to vector<8x640xf32>
    %14 = arith.addf %11, %13 : vector<8x640xf32>
    %cst_9 = arith.constant 0.000000e+00 : f32
    %15 = vector.broadcast %cst_9 : f32 to vector<8x640xf32>
    %16 = arith.maximumf %14, %15 : vector<8x640xf32>
    %17 = vector.extract_strided_slice %16 {offsets = [0, 0], sizes = [8, 128], strides = [1, 1]} : vector<8x640xf32> to vector<8x128xf32>
    %18 = vector.extract_strided_slice %16 {offsets = [0, 128], sizes = [8, 512], strides = [1, 1]} : vector<8x640xf32> to vector<8x512xf32>
    %19 = arith.truncf %18 : vector<8x512xf32> to vector<8x512xbf16>
    %c0_10 = arith.constant 0 : index
    %c0_11 = arith.constant 0 : index
    %20 = vector.load %arg5[%c0_10, %c0_11] : memref<896x128xf32, #tpu.memory_space<vmem>>, vector<128x128xf32>
    %cst_12 = arith.constant dense<0.000000e+00> : vector<8x128xf32>
    %21 = tpu.matmul %17, %20, %cst_12 {dimension_numbers = #tpu.dot_dimension_numbers<[1], [0], [0], [1], [0, 0, 1, 1], [], []>} : vector<8x128xf32>, vector<128x128xf32>, vector<8x128xf32> -> vector<8x128xf32>
    %22 = vector.extract_strided_slice %1 {offsets = [3, 0], sizes = [1, 128], strides = [1, 1]} : vector<8x1024xf32> to vector<1x128xf32>
    %23 = vector.broadcast %22 : vector<1x128xf32> to vector<8x128xf32>
    %24 = arith.addf %21, %23 : vector<8x128xf32>
    %cst_13 = arith.constant 0.000000e+00 : f32
    %25 = vector.broadcast %cst_13 : f32 to vector<8x128xf32>
    %26 = arith.maximumf %24, %25 : vector<8x128xf32>
    %c128 = arith.constant 128 : index
    %c0_14 = arith.constant 0 : index
    %27 = vector.load %arg5[%c128, %c0_14] : memref<896x128xf32, #tpu.memory_space<vmem>>, vector<128x128xf32>
    %cst_15 = arith.constant dense<0.000000e+00> : vector<8x128xf32>
    %28 = tpu.matmul %26, %27, %cst_15 {dimension_numbers = #tpu.dot_dimension_numbers<[1], [0], [0], [1], [0, 0, 1, 1], [], []>} : vector<8x128xf32>, vector<128x128xf32>, vector<8x128xf32> -> vector<8x128xf32>
    %29 = vector.extract_strided_slice %1 {offsets = [4, 0], sizes = [1, 128], strides = [1, 1]} : vector<8x1024xf32> to vector<1x128xf32>
    %30 = vector.broadcast %29 : vector<1x128xf32> to vector<8x128xf32>
    %31 = arith.addf %28, %30 : vector<8x128xf32>
    %cst_16 = arith.constant 0.000000e+00 : f32
    %32 = vector.broadcast %cst_16 : f32 to vector<8x128xf32>
    %33 = arith.maximumf %31, %32 : vector<8x128xf32>
    %c256 = arith.constant 256 : index
    %c0_17 = arith.constant 0 : index
    %34 = vector.load %arg5[%c256, %c0_17] : memref<896x128xf32, #tpu.memory_space<vmem>>, vector<128x128xf32>
    %cst_18 = arith.constant dense<0.000000e+00> : vector<8x128xf32>
    %35 = tpu.matmul %33, %34, %cst_18 {dimension_numbers = #tpu.dot_dimension_numbers<[1], [0], [0], [1], [0, 0, 1, 1], [], []>} : vector<8x128xf32>, vector<128x128xf32>, vector<8x128xf32> -> vector<8x128xf32>
    %36 = vector.extract_strided_slice %1 {offsets = [5, 0], sizes = [1, 128], strides = [1, 1]} : vector<8x1024xf32> to vector<1x128xf32>
    %37 = vector.broadcast %36 : vector<1x128xf32> to vector<8x128xf32>
    %38 = arith.addf %35, %37 : vector<8x128xf32>
    %cst_19 = arith.constant 0.000000e+00 : f32
    %39 = vector.broadcast %cst_19 : f32 to vector<8x128xf32>
    %40 = arith.subf %39, %38 : vector<8x128xf32>
    %41 = math.exp %40 : vector<8x128xf32>
    %cst_20 = arith.constant 1.000000e+00 : f32
    %42 = vector.broadcast %cst_20 : f32 to vector<8x128xf32>
    %43 = arith.addf %42, %41 : vector<8x128xf32>
    %44 = tpu.reciprocal %43 {approx = true} : vector<8x128xf32> -> vector<8x128xf32>
    %c0_21 = arith.constant 0 : index
    %c0_22 = arith.constant 0 : index
    %c0_23 = arith.constant 0 : index
    %45 = vector.load %arg7[%c0_21, %c0_22, %c0_23] : memref<2x8x128xf32, #tpu.memory_space<vmem>>, vector<1x8x128xf32>
    %46 = vector.shape_cast %45 : vector<1x8x128xf32> to vector<8x128xf32>
    %47 = vector.shape_cast %44 : vector<8x128xf32> to vector<1x8x128xf32>
    tpu.vector_store %arg7[%c0_21, %c0_22, %c0_23], %47 {strides = array<i32>} : memref<2x8x128xf32, #tpu.memory_space<vmem>>, vector<1x8x128xf32>,
    %c0_24 = arith.constant 0 : index
    %c0_25 = arith.constant 0 : index
    %48 = vector.load %arg4[%c0_24, %c0_25] : memref<512x512xbf16, #tpu.memory_space<vmem>>, vector<512x512xbf16>
    %cst_26 = arith.constant dense<0.000000e+00> : vector<8x512xf32>
    %49 = tpu.matmul %19, %48, %cst_26 {dimension_numbers = #tpu.dot_dimension_numbers<[1], [0], [0], [1], [0, 0, 1, 1], [], []>} : vector<8x512xbf16>, vector<512x512xbf16>, vector<8x512xf32> -> vector<8x512xf32>
    %50 = vector.extract_strided_slice %1 {offsets = [2, 0], sizes = [1, 512], strides = [1, 1]} : vector<8x1024xf32> to vector<1x512xf32>
    %51 = vector.broadcast %50 : vector<1x512xf32> to vector<8x512xf32>
    %52 = arith.addf %49, %51 : vector<8x512xf32>
    %cst_27 = arith.constant 0.000000e+00 : f32
    %53 = vector.broadcast %cst_27 : f32 to vector<8x512xf32>
    %54 = arith.maximumf %52, %53 : vector<8x512xf32>
    %c384 = arith.constant 384 : index
    %c0_28 = arith.constant 0 : index
    %55 = vector.load %arg5[%c384, %c0_28] : memref<896x128xf32, #tpu.memory_space<vmem>>, vector<512x128xf32>
    %cst_29 = arith.constant dense<0.000000e+00> : vector<8x128xf32>
    %56 = tpu.matmul %54, %55, %cst_29 {dimension_numbers = #tpu.dot_dimension_numbers<[1], [0], [0], [1], [0, 0, 1, 1], [], []>} : vector<8x512xf32>, vector<512x128xf32>, vector<8x128xf32> -> vector<8x128xf32>
    %57 = vector.extract_strided_slice %1 {offsets = [6, 0], sizes = [1, 128], strides = [1, 1]} : vector<8x1024xf32> to vector<1x128xf32>
    %58 = vector.broadcast %57 : vector<1x128xf32> to vector<8x128xf32>
    %59 = arith.addf %56, %58 : vector<8x128xf32>
    %60 = tpu.iota {dimensions = array<i32: 1>} : vector<8x128xi32>
    %c8_i32 = arith.constant 8 : i32
    %61 = vector.broadcast %c8_i32 : i32 to vector<8x128xi32>
    %62 = arith.cmpi slt, %60, %61 : vector<8x128xi32>
    %cst_30 = arith.constant 0xFF800000 : f32
    %63 = vector.broadcast %cst_30 : f32 to vector<8x128xf32>
    %64 = arith.select %62, %59, %63 : vector<8x128xi1>, vector<8x128xf32>
    %cst_31 = arith.constant dense<0xFF800000> : vector<8xf32>
    %65 = vector.multi_reduction <maximumf>, %64, %cst_31 [1] : vector<8x128xf32> to vector<8xf32>
    %66 = vector.shape_cast %65 : vector<8xf32> to vector<8x1xf32>
    %67 = vector.broadcast %66 : vector<8x1xf32> to vector<8x128xf32>
    %68 = arith.subf %64, %67 : vector<8x128xf32>
    %69 = math.exp %68 : vector<8x128xf32>
    %cst_32 = arith.constant dense<0.000000e+00> : vector<8xf32>
    %70 = vector.multi_reduction <add>, %69, %cst_32 [1] : vector<8x128xf32> to vector<8xf32>
    %71 = vector.shape_cast %70 : vector<8xf32> to vector<8x1xf32>
    %72 = tpu.reciprocal %71 {approx = true} : vector<8x1xf32> -> vector<8x1xf32>
    %73 = vector.broadcast %72 : vector<8x1xf32> to vector<8x128xf32>
    %74 = arith.mulf %69, %73 : vector<8x128xf32>
    %c1 = arith.constant 1 : index
    %c0_33 = arith.constant 0 : index
    %c0_34 = arith.constant 0 : index
    %75 = vector.load %arg7[%c1, %c0_33, %c0_34] : memref<2x8x128xf32, #tpu.memory_space<vmem>>, vector<1x8x128xf32>
    %76 = vector.shape_cast %75 : vector<1x8x128xf32> to vector<8x128xf32>
    %77 = vector.shape_cast %74 : vector<8x128xf32> to vector<1x8x128xf32>
    tpu.vector_store %arg7[%c1, %c0_33, %c0_34], %77 {strides = array<i32>} : memref<2x8x128xf32, #tpu.memory_space<vmem>>, vector<1x8x128xf32>,
    return
  }
  func.func @transform_0(%arg0: i32) -> (i32, i32) {
    %c0_i32 = arith.constant 0 : i32
    %c0_i32_0 = arith.constant 0 : i32
    return %arg0, %c0_i32 : i32, i32
  }
  func.func @transform_1(%arg0: i32) -> (i32, i32) {
    %c0_i32 = arith.constant 0 : i32
    %c0_i32_0 = arith.constant 0 : i32
    %c0_i32_1 = arith.constant 0 : i32
    return %c0_i32, %c0_i32_0 : i32, i32
  }
  func.func @transform_2(%arg0: i32) -> (i32, i32) {
    %c0_i32 = arith.constant 0 : i32
    %c0_i32_0 = arith.constant 0 : i32
    %c0_i32_1 = arith.constant 0 : i32
    return %c0_i32, %c0_i32_0 : i32, i32
  }
  func.func @transform_3(%arg0: i32) -> (i32, i32) {
    %c0_i32 = arith.constant 0 : i32
    %c0_i32_0 = arith.constant 0 : i32
    %c0_i32_1 = arith.constant 0 : i32
    return %c0_i32, %c0_i32_0 : i32, i32
  }
  func.func @transform_4(%arg0: i32) -> (i32, i32) {
    %c0_i32 = arith.constant 0 : i32
    %c0_i32_0 = arith.constant 0 : i32
    %c0_i32_1 = arith.constant 0 : i32
    return %c0_i32, %c0_i32_0 : i32, i32
  }
  func.func @transform_5(%arg0: i32) -> (i32, i32) {
    %c0_i32 = arith.constant 0 : i32
    %c0_i32_0 = arith.constant 0 : i32
    %c0_i32_1 = arith.constant 0 : i32
    return %c0_i32, %c0_i32_0 : i32, i32
  }
  func.func @transform_6(%arg0: i32) -> (i32, i32, i32) {
    %c0_i32 = arith.constant 0 : i32
    %c0_i32_0 = arith.constant 0 : i32
    %c0_i32_1 = arith.constant 0 : i32
    return %c0_i32, %arg0, %c0_i32_0 : i32, i32, i32
  }
}

</mosaic_0001>

<llo_original>
// kernel: object_detector_forward.1
$region0: #{object_detector_forward.1}
  #allocation0 [shape = 'u32[]', space=smem, size = 0x4, offset = 0x4, fixed_abs, tag = 'smem constant byte address 0x4 - core index']
  #allocation1 [shape = 'u32[144,128]{1,0:T(1,128)}', space=vmem, size = 0x12000, scoped, tag = 'internal scratch']
  %s0 = inlined_call_operand.vmem [shape: bf16[8,1024], index: 0, kind: input, shape index: {}]
  %s1 = inlined_call_operand.hbm [shape: bf16[1024,1024], index: 1, kind: input, shape index: {}]
  %s2 = inlined_call_operand.hbm [shape: bf16[1024,640], index: 2, kind: input, shape index: {}]
  %s3 = inlined_call_operand.hbm [shape: bf16[512,512], index: 3, kind: input, shape index: {}]
  %s4 = inlined_call_operand.hbm [shape: f32[896,128], index: 4, kind: input, shape index: {}]
  %s5 = inlined_call_operand.hbm [shape: f32[8,1024], index: 5, kind: input, shape index: {}]
  %s6 = inlined_call_operand.vmem [shape: f32[2,8,128], index: 6, kind: output, shape index: {}]
  %s7 = sld [smem:[#allocation0]]
  $region54: #{object_detector_forward.1} parent=0
    _
  %s9 = ssub.s32 1, %s7
  %s10 = scalar_select 0, %s9, %s7
  $region1: #{object_detector_forward.1} parent=0
    #allocation2 [shape = 'u8[2097152]{0}', space=vmem, size = 0x200000, scoped, tag = 'input window, operand 1, single buffered']
    #allocation3 [shape = 's32[1]{0}', space=sflag, size = 0x4, scoped, tag = 'scoped memory for object_detector_forward.1']
    #allocation4 [shape = 'u8[1310720]{0}', space=vmem, size = 0x140000, scoped, tag = 'input window, operand 2, single buffered']
    #allocation5 [shape = 's32[1]{0}', space=sflag, size = 0x4, scoped, tag = 'scoped memory for object_detector_forward.1']
    #allocation6 [shape = 'u8[524288]{0}', space=vmem, size = 0x80000, scoped, tag = 'input window, operand 3, single buffered']
    #allocation7 [shape = 'u8[458752]{0}', space=vmem, size = 0x70000, scoped, tag = 'input window, operand 4, single buffered']
    #allocation8 [shape = 's32[1]{0}', space=sflag, size = 0x4, scoped, tag = 'scoped memory for object_detector_forward.1']
    #allocation9 [shape = 'u8[32768]{0}', space=vmem, size = 0x8000, scoped, tag = 'input window, operand 5, single buffered']
    %11 = vsyncpa [#allocation3], 0
    %12 = vsyncpa [#allocation5], 0
    %13 = vsyncpa [#allocation8], 0
    // Predicated region
    $region2: #{object_detector_forward.1} parent=1 // pred_check
      _
    $region3: #{object_detector_forward.1} parent=1 // pred_check_branch
      %15 = sbr.rel (0) target = $region5
    $region4: #{object_detector_forward.1} parent=1 // pred_region
      _
    $region5: #{object_detector_forward.1} parent=1 // pred_fallthru
      _
    // Predicated region
    $region6: #{object_detector_forward.1} parent=1 // pred_check
      _
    $region7: #{object_detector_forward.1} parent=1 // pred_check_branch
      %17 = sbr.rel (0) target = $region9
    $region8: #{object_detector_forward.1} parent=1 // pred_region
      %s19 = ssub.s32 65536, 65536
      %20 = vsyncadd [#allocation3], %s19
      %s21 = sshll.u32 [#allocation2], 4
      %s22 = int_to_ptr.vmem [resolvable:$true] %s21
      %27 = dma.hbm_to_vmem [thread:$0]  %s1, 65536, %s22, [#allocation3], 512, 512, 32
    $region9: #{object_detector_forward.1} parent=1 // pred_fallthru
      _
    // Predicated region
    $region10: #{object_detector_forward.1} parent=1 // pred_check
      _
    $region11: #{object_detector_forward.1} parent=1 // pred_check_branch
      %29 = sbr.rel (0) target = $region13
    $region12: #{object_detector_forward.1} parent=1 // pred_region
      %s31 = ssub.s32 40960, 40960
      %32 = vsyncadd [#allocation5], %s31
      %s33 = sshll.u32 [#allocation4], 4
      %s34 = int_to_ptr.vmem [resolvable:$true] %s33
      %39 = dma.hbm_to_vmem [thread:$0]  %s2, 40960, %s34, [#allocation5], 320, 320, 20
    $region13: #{object_detector_forward.1} parent=1 // pred_fallthru
      _
    // Predicated region
    $region14: #{object_detector_forward.1} parent=1 // pred_check
      _
    $region15: #{object_detector_forward.1} parent=1 // pred_check_branch
      %41 = sbr.rel (0) target = $region17
    $region16: #{object_detector_forward.1} parent=1 // pred_region
      %s43 = ssub.s32 16384, 16384
      %44 = vsyncadd [#allocation5], %s43
      %s45 = sshll.u32 [#allocation6], 4
      %s46 = int_to_ptr.vmem [resolvable:$true] %s45
      %51 = dma.hbm_to_vmem [thread:$0]  %s3, 16384, %s46, [#allocation5], 256, 256, 16
    $region17: #{object_detector_forward.1} parent=1 // pred_fallthru
      _
    // Predicated region
    $region18: #{object_detector_forward.1} parent=1 // pred_check
      _
    $region19: #{object_detector_forward.1} parent=1 // pred_check_branch
      %53 = sbr.rel (0) target = $region21
    $region20: #{object_detector_forward.1} parent=1 // pred_region
      %s55 = ssub.s32 14336, 14336
      %56 = vsyncadd [#allocation8], %s55
      %s57 = sshll.u32 [#allocation7], 4
      %s58 = int_to_ptr.vmem [resolvable:$true] %s57
      %63 = dma.hbm_to_vmem [thread:$0]  %s4, 14336, %s58, [#allocation8], 128, 128, 8
    $region21: #{object_detector_forward.1} parent=1 // pred_fallthru
      _
    // Predicated region
    $region22: #{object_detector_forward.1} parent=1 // pred_check
      _
    $region23: #{object_detector_forward.1} parent=1 // pred_check_branch
      %65 = sbr.rel (0) target = $region25
    $region24: #{object_detector_forward.1} parent=1 // pred_region
      %s67 = ssub.s32 1024, 1024
      %68 = vsyncadd [#allocation8], %s67
      %s70 = sshll.u32 [#allocation9], 4
      %s71 = int_to_ptr.vmem [resolvable:$true] %s70
      %73 = dma.hbm_to_vmem [thread:$0]  %s5, 1024, %s71, [#allocation8]
    $region25: #{object_detector_forward.1} parent=1 // pred_fallthru
      _
    // Predicated region
    $region26: #{object_detector_forward.1} parent=1 // pred_check
      _
    $region27: #{object_detector_forward.1} parent=1 // pred_check_branch
      %75 = sbr.rel (0) target = $region29
    $region28: #{object_detector_forward.1} parent=1 // pred_region
      %76 = dma.done [#allocation3], 65536
    $region29: #{object_detector_forward.1} parent=1 // pred_fallthru
      _
    // Predicated region
    $region30: #{object_detector_forward.1} parent=1 // pred_check
      _
    $region31: #{object_detector_forward.1} parent=1 // pred_check_branch
      %78 = sbr.rel (0) target = $region33
    $region32: #{object_detector_forward.1} parent=1 // pred_region
      %79 = dma.done [#allocation5], 40960
    $region33: #{object_detector_forward.1} parent=1 // pred_fallthru
      _
    // Predicated region
    $region34: #{object_detector_forward.1} parent=1 // pred_check
      _
    $region35: #{object_detector_forward.1} parent=1 // pred_check_branch
      %81 = sbr.rel (0) target = $region37
    $region36: #{object_detector_forward.1} parent=1 // pred_region
      %82 = dma.done [#allocation5], 16384
    $region37: #{object_detector_forward.1} parent=1 // pred_fallthru
      _
    // Predicated region
    $region38: #{object_detector_forward.1} parent=1 // pred_check
      _
    $region39: #{object_detector_forward.1} parent=1 // pred_check_branch
      %84 = sbr.rel (0) target = $region41
    $region40: #{object_detector_forward.1} parent=1 // pred_region
      %85 = dma.done [#allocation8], 14336
    $region41: #{object_detector_forward.1} parent=1 // pred_fallthru
      _
    // Predicated region
    $region42: #{object_detector_forward.1} parent=1 // pred_check
      _
    $region43: #{object_detector_forward.1} parent=1 // pred_check_branch
      %87 = sbr.rel (0) target = $region45
    $region44: #{object_detector_forward.1} parent=1 // pred_region
      %88 = dma.done [#allocation8], 1024
    $region45: #{object_detector_forward.1} parent=1 // pred_fallthru
      _
    %v90 = vld [vmem:[%s0] sm:$0xff]
    %v91 = vld [vmem:[%s0 + $0x8] sm:$0xff]
    %v92 = vld [vmem:[%s0 + $0x10] sm:$0xff]
    %v93 = vld [vmem:[%s0 + $0x18] sm:$0xff]
    %v94 = vld [vmem:[#allocation9] sm:$0xff]
    %v95 = vld [vmem:[#allocation9 + $0x8] sm:$0xff]
    %v96 = vld [vmem:[#allocation9 + $0x10] sm:$0xff]
    %v97 = vld [vmem:[#allocation9 + $0x18] sm:$0xff]
    %v98 = vld [vmem:[#allocation9 + $0x20] sm:$0xff]
    %v99 = vld [vmem:[#allocation9 + $0x28] sm:$0xff]
    %v100 = vld [vmem:[#allocation9 + $0x30] sm:$0xff]
    %v101 = vld [vmem:[#allocation9 + $0x38] sm:$0xff]
    %v102 = vld [vmem:[#allocation2] sm:$0xff]
    %v103 = vld [vmem:[#allocation2 + $0x8] sm:$0xff]
    %v104 = vld [vmem:[#allocation2 + $0x10] sm:$0xff]
    %v105 = vld [vmem:[#allocation2 + $0x18] sm:$0xff]
    %v106 = vld [vmem:[#allocation2 + $0x20] sm:$0xff]
    %v107 = vld [vmem:[#allocation2 + $0x28] sm:$0xff]
    %v108 = vld [vmem:[#allocation2 + $0x30] sm:$0xff]
    %v109 = vld [vmem:[#allocation2 + $0x38] sm:$0xff]
    %v110 = vld [vmem:[#allocation2 + $0x40] sm:$0xff]
    %v111 = vld [vmem:[#allocation2 + $0x48] sm:$0xff]
    %v112 = vld [vmem:[#allocation2 + $0x50] sm:$0xff]
    %v113 = vld [vmem:[#allocation2 + $0x58] sm:$0xff]
    %v114 = vld [vmem:[#allocation2 + $0x60] sm:$0xff]
    %v115 = vld [vmem:[#allocation2 + $0x68] sm:$0xff]
    %v116 = vld [vmem:[#allocation2 + $0x70] sm:$0xff]
    %v117 = vld [vmem:[#allocation2 + $0x78] sm:$0xff]
    %v118 = vld [vmem:[#allocation2 + $0x80] sm:$0xff]
    %v119 = vld [vmem:[#allocation2 + $0x88] sm:$0xff]
    %v120 = vld [vmem:[#allocation2 + $0x90] sm:$0xff]
    %v121 = vld [vmem:[#allocation2 + $0x98] sm:$0xff]
    %v122 = vld [vmem:[#allocation2 + $0xa0] sm:$0xff]
    %v123 = vld [vmem:[#allocation2 + $0xa8] sm:$0xff]
    %v124 = vld [vmem:[#allocation2 + $0xb0] sm:$0xff]
    %v125 = vld [vmem:[#allocation2 + $0xb8] sm:$0xff]
    %v126 = vld [vmem:[#allocation2 + $0xc0] sm:$0xff]
    %v127 = vld [vmem:[#allocation2 + $0xc8] sm:$0xff]
    %v128 = vld [vmem:[#allocation2 + $0xd0] sm:$0xff]
    %v129 = vld [vmem:[#allocation2 + $0xd8] sm:$0xff]
    %v130 = vld [vmem:[#allocation2 + $0xe0] sm:$0xff]
    %v131 = vld [vmem:[#allocation2 + $0xe8] sm:$0xff]
    %v132 = vld [vmem:[#allocation2 + $0xf0] sm:$0xff]
    %v133 = vld [vmem:[#allocation2 + $0xf8] sm:$0xff]
    %v134 = vld [vmem:[#allocation2 + $0x100] sm:$0xff]
    %v135 = vld [vmem:[#allocation2 + $0x108] sm:$0xff]
    %v136 = vld [vmem:[#allocation2 + $0x110] sm:$0xff]
    %v137 = vld [vmem:[#allocation2 + $0x118] sm:$0xff]
    %v138 = vld [vmem:[#allocation2 + $0x120] sm:$0xff]
    %v139 = vld [vmem:[#allocation2 + $0x128] sm:$0xff]
    %v140 = vld [vmem:[#allocation2 + $0x130] sm:$0xff]
    %v141 = vld [vmem:[#allocation2 + $0x138] sm:$0xff]
    %v142 = vld [vmem:[#allocation2 + $0x140] sm:$0xff]
    %v143 = vld [vmem:[#allocation2 + $0x148] sm:$0xff]
    %v144 = vld [vmem:[#allocation2 + $0x150] sm:$0xff]
    %v145 = vld [vmem:[#allocation2 + $0x158] sm:$0xff]
    %v146 = vld [vmem:[#allocation2 + $0x160] sm:$0xff]
    %v147 = vld [vmem:[#allocation2 + $0x168] sm:$0xff]
    %v148 = vld [vmem:[#allocation2 + $0x170] sm:$0xff]
    %v149 = vld [vmem:[#allocation2 + $0x178] sm:$0xff]
    %v150 = vld [vmem:[#allocation2 + $0x180] sm:$0xff]
    %v151 = vld [vmem:[#allocation2 + $0x188] sm:$0xff]
    %v152 = vld [vmem:[#allocation2 + $0x190] sm:$0xff]
    %v153 = vld [vmem:[#allocation2 + $0x198] sm:$0xff]
    %v154 = vld [vmem:[#allocation2 + $0x1a0] sm:$0xff]
    %v155 = vld [vmem:[#allocation2 + $0x1a8] sm:$0xff]
    %v156 = vld [vmem:[#allocation2 + $0x1b0] sm:$0xff]
    %v157 = vld [vmem:[#allocation2 + $0x1b8] sm:$0xff]
    %v158 = vld [vmem:[#allocation2 + $0x1c0] sm:$0xff]
    %v159 = vld [vmem:[#allocation2 + $0x1c8] sm:$0xff]
    %v160 = vld [vmem:[#allocation2 + $0x1d0] sm:$0xff]
    %v161 = vld [vmem:[#allocation2 + $0x1d8] sm:$0xff]
    %v162 = vld [vmem:[#allocation2 + $0x1e0] sm:$0xff]
    %v163 = vld [vmem:[#allocation2 + $0x1e8] sm:$0xff]
    %v164 = vld [vmem:[#allocation2 + $0x1f0] sm:$0xff]
    %v165 = vld [vmem:[#allocation2 + $0x1f8] sm:$0xff]
    %v166 = vld [vmem:[#allocation2 + $0x200] sm:$0xff]
    %v167 = vld [vmem:[#allocation2 + $0x208] sm:$0xff]
    %v168 = vld [vmem:[#allocation2 + $0x210] sm:$0xff]
    %v169 = vld [vmem:[#allocation2 + $0x218] sm:$0xff]
    %v170 = vld [vmem:[#allocation2 + $0x220] sm:$0xff]
    %v171 = vld [vmem:[#allocation2 + $0x228] sm:$0xff]
    %v172 = vld [vmem:[#allocation2 + $0x230] sm:$0xff]
    %v173 = vld [vmem:[#allocation2 + $0x238] sm:$0xff]
    %v174 = vld [vmem:[#allocation2 + $0x240] sm:$0xff]
    %v175 = vld [vmem:[#allocation2 + $0x248] sm:$0xff]
    %v176 = vld [vmem:[#allocation2 + $0x250] sm:$0xff]
    %v177 = vld [vmem:[#allocation2 + $0x258] sm:$0xff]
    %v178 = vld [vmem:[#allocation2 + $0x260] sm:$0xff]
    %v179 = vld [vmem:[#allocation2 + $0x268] sm:$0xff]
    %v180 = vld [vmem:[#allocation2 + $0x270] sm:$0xff]
    %v181 = vld [vmem:[#allocation2 + $0x278] sm:$0xff]
    %v182 = vld [vmem:[#allocation2 + $0x280] sm:$0xff]
    %v183 = vld [vmem:[#allocation2 + $0x288] sm:$0xff]
    %v184 = vld [vmem:[#allocation2 + $0x290] sm:$0xff]
    %v185 = vld [vmem:[#allocation2 + $0x298] sm:$0xff]
    %v186 = vld [vmem:[#allocation2 + $0x2a0] sm:$0xff]
    %v187 = vld [vmem:[#allocation2 + $0x2a8] sm:$0xff]
    %v188 = vld [vmem:[#allocation2 + $0x2b0] sm:$0xff]
    %v189 = vld [vmem:[#allocation2 + $0x2b8] sm:$0xff]
    %v190 = vld [vmem:[#allocation2 + $0x2c0] sm:$0xff]
    %v191 = vld [vmem:[#allocation2 + $0x2c8] sm:$0xff]
    %v192 = vld [vmem:[#allocation2 + $0x2d0] sm:$0xff]
    %v193 = vld [vmem:[#allocation2 + $0x2d8] sm:$0xff]
    %v194 = vld [vmem:[#allocation2 + $0x2e0] sm:$0xff]
    %v195 = vld [vmem:[#allocation2 + $0x2e8] sm:$0xff]
    %v196 = vld [vmem:[#allocation2 + $0x2f0] sm:$0xff]
    %v197 = vld [vmem:[#allocation2 + $0x2f8] sm:$0xff]
    %v198 = vld [vmem:[#allocation2 + $0x300] sm:$0xff]
    %v199 = vld [vmem:[#allocation2 + $0x308] sm:$0xff]
    %v200 = vld [vmem:[#allocation2 + $0x310] sm:$0xff]
    %v201 = vld [vmem:[#allocation2 + $0x318] sm:$0xff]
    %v202 = vld [vmem:[#allocation2 + $0x320] sm:$0xff]
    %v203 = vld [vmem:[#allocation2 + $0x328] sm:$0xff]
    %v204 = vld [vmem:[#allocation2 + $0x330] sm:$0xff]
    %v205 = vld [vmem:[#allocation2 + $0x338] sm:$0xff]
    %v206 = vld [vmem:[#allocation2 + $0x340] sm:$0xff]
    %v207 = vld [vmem:[#allocation2 + $0x348] sm:$0xff]
    %v208 = vld [vmem:[#allocation2 + $0x350] sm:$0xff]
    %v209 = vld [vmem:[#allocation2 + $0x358] sm:$0xff]
    %v210 = vld [vmem:[#allocation2 + $0x360] sm:$0xff]
    %v211 = vld [vmem:[#allocation2 + $0x368] sm:$0xff]
    %v212 = vld [vmem:[#allocation2 + $0x370] sm:$0xff]
    %v213 = vld [vmem:[#allocation2 + $0x378] sm:$0xff]
    %v214 = vld [vmem:[#allocation2 + $0x380] sm:$0xff]
    %v215 = vld [vmem:[#allocation2 + $0x388] sm:$0xff]
    %v216 = vld [vmem:[#allocation2 + $0x390] sm:$0xff]
    %v217 = vld [vmem:[#allocation2 + $0x398] sm:$0xff]
    %v218 = vld [vmem:[#allocation2 + $0x3a0] sm:$0xff]
    %v219 = vld [vmem:[#allocation2 + $0x3a8] sm:$0xff]
    %v220 = vld [vmem:[#allocation2 + $0x3b0] sm:$0xff]
    %v221 = vld [vmem:[#allocation2 + $0x3b8] sm:$0xff]
    %v222 = vld [vmem:[#allocation2 + $0x3c0] sm:$0xff]
    %v223 = vld [vmem:[#allocation2 + $0x3c8] sm:$0xff]
    %v224 = vld [vmem:[#allocation2 + $0x3d0] sm:$0xff]
    %v225 = vld [vmem:[#allocation2 + $0x3d8] sm:$0xff]
    %v226 = vld [vmem:[#allocation2 + $0x3e0] sm:$0xff]
    %v227 = vld [vmem:[#allocation2 + $0x3e8] sm:$0xff]
    %v228 = vld [vmem:[#allocation2 + $0x3f0] sm:$0xff]
    %v229 = vld [vmem:[#allocation2 + $0x3f8] sm:$0xff]
    %v230 = vld [vmem:[#allocation2 + $0x400] sm:$0xff]
    %v231 = vld [vmem:[#allocation2 + $0x408] sm:$0xff]
    %v232 = vld [vmem:[#allocation2 + $0x410] sm:$0xff]
    %v233 = vld [vmem:[#allocation2 + $0x418] sm:$0xff]
    %v234 = vld [vmem:[#allocation2 + $0x420] sm:$0xff]
    %v235 = vld [vmem:[#allocation2 + $0x428] sm:$0xff]
    %v236 = vld [vmem:[#allocation2 + $0x430] sm:$0xff]
    %v237 = vld [vmem:[#allocation2 + $0x438] sm:$0xff]
    %v238 = vld [vmem:[#allocation2 + $0x440] sm:$0xff]
    %v239 = vld [vmem:[#allocation2 + $0x448] sm:$0xff]
    %v240 = vld [vmem:[#allocation2 + $0x450] sm:$0xff]
    %v241 = vld [vmem:[#allocation2 + $0x458] sm:$0xff]
    %v242 = vld [vmem:[#allocation2 + $0x460] sm:$0xff]
    %v243 = vld [vmem:[#allocation2 + $0x468] sm:$0xff]
    %v244 = vld [vmem:[#allocation2 + $0x470] sm:$0xff]
    %v245 = vld [vmem:[#allocation2 + $0x478] sm:$0xff]
    %v246 = vld [vmem:[#allocation2 + $0x480] sm:$0xff]
    %v247 = vld [vmem:[#allocation2 + $0x488] sm:$0xff]
    %v248 = vld [vmem:[#allocation2 + $0x490] sm:$0xff]
    %v249 = vld [vmem:[#allocation2 + $0x498] sm:$0xff]
    %v250 = vld [vmem:[#allocation2 + $0x4a0] sm:$0xff]
    %v251 = vld [vmem:[#allocation2 + $0x4a8] sm:$0xff]
    %v252 = vld [vmem:[#allocation2 + $0x4b0] sm:$0xff]
    %v253 = vld [vmem:[#allocation2 + $0x4b8] sm:$0xff]
    %v254 = vld [vmem:[#allocation2 + $0x4c0] sm:$0xff]
    %v255 = vld [vmem:[#allocation2 + $0x4c8] sm:$0xff]
    %v256 = vld [vmem:[#allocation2 + $0x4d0] sm:$0xff]
    %v257 = vld [vmem:[#allocation2 + $0x4d8] sm:$0xff]
    %v258 = vld [vmem:[#allocation2 + $0x4e0] sm:$0xff]
    %v259 = vld [vmem:[#allocation2 + $0x4e8] sm:$0xff]
    %v260 = vld [vmem:[#allocation2 + $0x4f0] sm:$0xff]
    %v261 = vld [vmem:[#allocation2 + $0x4f8] sm:$0xff]
    %v262 = vld [vmem:[#allocation2 + $0x500] sm:$0xff]
    %v263 = vld [vmem:[#allocation2 + $0x508] sm:$0xff]
    %v264 = vld [vmem:[#allocation2 + $0x510] sm:$0xff]
    %v265 = vld [vmem:[#allocation2 + $0x518] sm:$0xff]
    %v266 = vld [vmem:[#allocation2 + $0x520] sm:$0xff]
    %v267 = vld [vmem:[#allocation2 + $0x528] sm:$0xff]
    %v268 = vld [vmem:[#allocation2 + $0x530] sm:$0xff]
    %v269 = vld [vmem:[#allocation2 + $0x538] sm:$0xff]
    %v270 = vld [vmem:[#allocation2 + $0x540] sm:$0xff]
    %v271 = vld [vmem:[#allocation2 + $0x548] sm:$0xff]
    %v272 = vld [vmem:[#allocation2 + $0x550] sm:$0xff]
    %v273 = vld [vmem:[#allocation2 + $0x558] sm:$0xff]
    %v274 = vld [vmem:[#allocation2 + $0x560] sm:$0xff]
    %v275 = vld [vmem:[#allocation2 + $0x568] sm:$0xff]
    %v276 = vld [vmem:[#allocation2 + $0x570] sm:$0xff]
    %v277 = vld [vmem:[#allocation2 + $0x578] sm:$0xff]
    %v278 = vld [vmem:[#allocation2 + $0x580] sm:$0xff]
    %v279 = vld [vmem:[#allocation2 + $0x588] sm:$0xff]
    %v280 = vld [vmem:[#allocation2 + $0x590] sm:$0xff]
    %v281 = vld [vmem:[#allocation2 + $0x598] sm:$0xff]
    %v282 = vld [vmem:[#allocation2 + $0x5a0] sm:$0xff]
    %v283 = vld [vmem:[#allocation2 + $0x5a8] sm:$0xff]
    %v284 = vld [vmem:[#allocation2 + $0x5b0] sm:$0xff]
    %v285 = vld [vmem:[#allocation2 + $0x5b8] sm:$0xff]
    %v286 = vld [vmem:[#allocation2 + $0x5c0] sm:$0xff]
    %v287 = vld [vmem:[#allocation2 + $0x5c8] sm:$0xff]
    %v288 = vld [vmem:[#allocation2 + $0x5d0] sm:$0xff]
    %v289 = vld [vmem:[#allocation2 + $0x5d8] sm:$0xff]
    %v290 = vld [vmem:[#allocation2 + $0x5e0] sm:$0xff]
    %v291 = vld [vmem:[#allocation2 + $0x5e8] sm:$0xff]
    %v292 = vld [vmem:[#allocation2 + $0x5f0] sm:$0xff]
    %v293 = vld [vmem:[#allocation2 + $0x5f8] sm:$0xff]
    %v294 = vld [vmem:[#allocation2 + $0x600] sm:$0xff]
    %v295 = vld [vmem:[#allocation2 + $0x608] sm:$0xff]
    %v296 = vld [vmem:[#allocation2 + $0x610] sm:$0xff]
    %v297 = vld [vmem:[#allocation2 + $0x618] sm:$0xff]
    %v298 = vld [vmem:[#allocation2 + $0x620] sm:$0xff]
    %v299 = vld [vmem:[#allocation2 + $0x628] sm:$0xff]
    %v300 = vld [vmem:[#allocation2 + $0x630] sm:$0xff]
    %v301 = vld [vmem:[#allocation2 + $0x638] sm:$0xff]
    %v302 = vld [vmem:[#allocation2 + $0x640] sm:$0xff]
    %v303 = vld [vmem:[#allocation2 + $0x648] sm:$0xff]
    %v304 = vld [vmem:[#allocation2 + $0x650] sm:$0xff]
    %v305 = vld [vmem:[#allocation2 + $0x658] sm:$0xff]
    %v306 = vld [vmem:[#allocation2 + $0x660] sm:$0xff]
    %v307 = vld [vmem:[#allocation2 + $0x668] sm:$0xff]
    %v308 = vld [vmem:[#allocation2 + $0x670] sm:$0xff]
    %v309 = vld [vmem:[#allocation2 + $0x678] sm:$0xff]
    %v310 = vld [vmem:[#allocation2 + $0x680] sm:$0xff]
    %v311 = vld [vmem:[#allocation2 + $0x688] sm:$0xff]
    %v312 = vld [vmem:[#allocation2 + $0x690] sm:$0xff]
    %v313 = vld [vmem:[#allocation2 + $0x698] sm:$0xff]
    %v314 = vld [vmem:[#allocation2 + $0x6a0] sm:$0xff]
    %v315 = vld [vmem:[#allocation2 + $0x6a8] sm:$0xff]
    %v316 = vld [vmem:[#allocation2 + $0x6b0] sm:$0xff]
    %v317 = vld [vmem:[#allocation2 + $0x6b8] sm:$0xff]
    %v318 = vld [vmem:[#allocation2 + $0x6c0] sm:$0xff]
    %v319 = vld [vmem:[#allocation2 + $0x6c8] sm:$0xff]
    %v320 = vld [vmem:[#allocation2 + $0x6d0] sm:$0xff]
    %v321 = vld [vmem:[#allocation2 + $0x6d8] sm:$0xff]
    %v322 = vld [vmem:[#allocation2 + $0x6e0] sm:$0xff]
    %v323 = vld [vmem:[#allocation2 + $0x6e8] sm:$0xff]
    %v324 = vld [vmem:[#allocation2 + $0x6f0] sm:$0xff]
    %v325 = vld [vmem:[#allocation2 + $0x6f8] sm:$0xff]
    %v326 = vld [vmem:[#allocation2 + $0x700] sm:$0xff]
    %v327 = vld [vmem:[#allocation2 + $0x708] sm:$0xff]
    %v328 = vld [vmem:[#allocation2 + $0x710] sm:$0xff]
    %v329 = vld [vmem:[#allocation2 + $0x718] sm:$0xff]
    %v330 = vld [vmem:[#allocation2 + $0x720] sm:$0xff]
    %v331 = vld [vmem:[#allocation2 + $0x728] sm:$0xff]
    %v332 = vld [vmem:[#allocation2 + $0x730] sm:$0xff]
    %v333 = vld [vmem:[#allocation2 + $0x738] sm:$0xff]
    %v334 = vld [vmem:[#allocation2 + $0x740] sm:$0xff]
    %v335 = vld [vmem:[#allocation2 + $0x748] sm:$0xff]
    %v336 = vld [vmem:[#allocation2 + $0x750] sm:$0xff]
    %v337 = vld [vmem:[#allocation2 + $0x758] sm:$0xff]
    %v338 = vld [vmem:[#allocation2 + $0x760] sm:$0xff]
    %v339 = vld [vmem:[#allocation2 + $0x768] sm:$0xff]
    %v340 = vld [vmem:[#allocation2 + $0x770] sm:$0xff]
    %v341 = vld [vmem:[#allocation2 + $0x778] sm:$0xff]
    %v342 = vld [vmem:[#allocation2 + $0x780] sm:$0xff]
    %v343 = vld [vmem:[#allocation2 + $0x788] sm:$0xff]
    %v344 = vld [vmem:[#allocation2 + $0x790] sm:$0xff]
    %v345 = vld [vmem:[#allocation2 + $0x798] sm:$0xff]
    %v346 = vld [vmem:[#allocation2 + $0x7a0] sm:$0xff]
    %v347 = vld [vmem:[#allocation2 + $0x7a8] sm:$0xff]
    %v348 = vld [vmem:[#allocation2 + $0x7b0] sm:$0xff]
    %v349 = vld [vmem:[#allocation2 + $0x7b8] sm:$0xff]
    %v350 = vld [vmem:[#allocation2 + $0x7c0] sm:$0xff]
    %v351 = vld [vmem:[#allocation2 + $0x7c8] sm:$0xff]
    %v352 = vld [vmem:[#allocation2 + $0x7d0] sm:$0xff]
    %v353 = vld [vmem:[#allocation2 + $0x7d8] sm:$0xff]
    %v354 = vld [vmem:[#allocation2 + $0x7e0] sm:$0xff]
    %v355 = vld [vmem:[#allocation2 + $0x7e8] sm:$0xff]
    %v356 = vld [vmem:[#allocation2 + $0x7f0] sm:$0xff]
    %v357 = vld [vmem:[#allocation2 + $0x7f8] sm:$0xff]
    %v358 = vld [vmem:[#allocation2 + $0x800] sm:$0xff]
    %v359 = vld [vmem:[#allocation2 + $0x808] sm:$0xff]
    %v360 = vld [vmem:[#allocation2 + $0x810] sm:$0xff]
    %v361 = vld [vmem:[#allocation2 + $0x818] sm:$0xff]
    %v362 = vld [vmem:[#allocation2 + $0x820] sm:$0xff]
    %v363 = vld [vmem:[#allocation2 + $0x828] sm:$0xff]
    %v364 = vld [vmem:[#allocation2 + $0x830] sm:$0xff]
    %v365 = vld [vmem:[#allocation2 + $0x838] sm:$0xff]
    %v366 = vld [vmem:[#allocation2 + $0x840] sm:$0xff]
    %v367 = vld [vmem:[#allocation2 + $0x848] sm:$0xff]
    %v368 = vld [vmem:[#allocation2 + $0x850] sm:$0xff]
    %v369 = vld [vmem:[#allocation2 + $0x858] sm:$0xff]
    %v370 = vld [vmem:[#allocation2 + $0x860] sm:$0xff]
    %v371 = vld [vmem:[#allocation2 + $0x868] sm:$0xff]
    %v372 = vld [vmem:[#allocation2 + $0x870] sm:$0xff]
    %v373 = vld [vmem:[#allocation2 + $0x878] sm:$0xff]
    %v374 = vld [vmem:[#allocation2 + $0x880] sm:$0xff]
    %v375 = vld [vmem:[#allocation2 + $0x888] sm:$0xff]
    %v376 = vld [vmem:[#allocation2 + $0x890] sm:$0xff]
    %v377 = vld [vmem:[#allocation2 + $0x898] sm:$0xff]
    %v378 = vld [vmem:[#allocation2 + $0x8a0] sm:$0xff]
    %v379 = vld [vmem:[#allocation2 + $0x8a8] sm:$0xff]
    %v380 = vld [vmem:[#allocation2 + $0x8b0] sm:$0xff]
    %v381 = vld [vmem:[#allocation2 + $0x8b8] sm:$0xff]
    %v382 = vld [vmem:[#allocation2 + $0x8c0] sm:$0xff]
    %v383 = vld [vmem:[#allocation2 + $0x8c8] sm:$0xff]
    %v384 = vld [vmem:[#allocation2 + $0x8d0] sm:$0xff]
    %v385 = vld [vmem:[#allocation2 + $0x8d8] sm:$0xff]
    %v386 = vld [vmem:[#allocation2 + $0x8e0] sm:$0xff]
    %v387 = vld [vmem:[#allocation2 + $0x8e8] sm:$0xff]
    %v388 = vld [vmem:[#allocation2 + $0x8f0] sm:$0xff]
    %v389 = vld [vmem:[#allocation2 + $0x8f8] sm:$0xff]
    %v390 = vld [vmem:[#allocation2 + $0x900] sm:$0xff]
    %v391 = vld [vmem:[#allocation2 + $0x908] sm:$0xff]
    %v392 = vld [vmem:[#allocation2 + $0x910] sm:$0xff]
    %v393 = vld [vmem:[#allocation2 + $0x918] sm:$0xff]
    %v394 = vld [vmem:[#allocation2 + $0x920] sm:$0xff]
    %v395 = vld [vmem:[#allocation2 + $0x928] sm:$0xff]
    %v396 = vld [vmem:[#allocation2 + $0x930] sm:$0xff]
    %v397 = vld [vmem:[#allocation2 + $0x938] sm:$0xff]
    %v398 = vld [vmem:[#allocation2 + $0x940] sm:$0xff]
    %v399 = vld [vmem:[#allocation2 + $0x948] sm:$0xff]
    %v400 = vld [vmem:[#allocation2 + $0x950] sm:$0xff]
    %v401 = vld [vmem:[#allocation2 + $0x958] sm:$0xff]
    %v402 = vld [vmem:[#allocation2 + $0x960] sm:$0xff]
    %v403 = vld [vmem:[#allocation2 + $0x968] sm:$0xff]
    %v404 = vld [vmem:[#allocation2 + $0x970] sm:$0xff]
    %v405 = vld [vmem:[#allocation2 + $0x978] sm:$0xff]
    %v406 = vld [vmem:[#allocation2 + $0x980] sm:$0xff]
    %v407 = vld [vmem:[#allocation2 + $0x988] sm:$0xff]
    %v408 = vld [vmem:[#allocation2 + $0x990] sm:$0xff]
    %v409 = vld [vmem:[#allocation2 + $0x998] sm:$0xff]
    %v410 = vld [vmem:[#allocation2 + $0x9a0] sm:$0xff]
    %v411 = vld [vmem:[#allocation2 + $0x9a8] sm:$0xff]
    %v412 = vld [vmem:[#allocation2 + $0x9b0] sm:$0xff]
    %v413 = vld [vmem:[#allocation2 + $0x9b8] sm:$0xff]
    %v414 = vld [vmem:[#allocation2 + $0x9c0] sm:$0xff]
    %v415 = vld [vmem:[#allocation2 + $0x9c8] sm:$0xff]
    %v416 = vld [vmem:[#allocation2 + $0x9d0] sm:$0xff]
    %v417 = vld [vmem:[#allocation2 + $0x9d8] sm:$0xff]
    %v418 = vld [vmem:[#allocation2 + $0x9e0] sm:$0xff]
    %v419 = vld [vmem:[#allocation2 + $0x9e8] sm:$0xff]
    %v420 = vld [vmem:[#allocation2 + $0x9f0] sm:$0xff]
    %v421 = vld [vmem:[#allocation2 + $0x9f8] sm:$0xff]
    %v422 = vld [vmem:[#allocation2 + $0xa00] sm:$0xff]
    %v423 = vld [vmem:[#allocation2 + $0xa08] sm:$0xff]
    %v424 = vld [vmem:[#allocation2 + $0xa10] sm:$0xff]
    %v425 = vld [vmem:[#allocation2 + $0xa18] sm:$0xff]
    %v426 = vld [vmem:[#allocation2 + $0xa20] sm:$0xff]
    %v427 = vld [vmem:[#allocation2 + $0xa28] sm:$0xff]
    %v428 = vld [vmem:[#allocation2 + $0xa30] sm:$0xff]
    %v429 = vld [vmem:[#allocation2 + $0xa38] sm:$0xff]
    %v430 = vld [vmem:[#allocation2 + $0xa40] sm:$0xff]
    %v431 = vld [vmem:[#allocation2 + $0xa48] sm:$0xff]
    %v432 = vld [vmem:[#allocation2 + $0xa50] sm:$0xff]
    %v433 = vld [vmem:[#allocation2 + $0xa58] sm:$0xff]
    %v434 = vld [vmem:[#allocation2 + $0xa60] sm:$0xff]
    %v435 = vld [vmem:[#allocation2 + $0xa68] sm:$0xff]
    %v436 = vld [vmem:[#allocation2 + $0xa70] sm:$0xff]
    %v437 = vld [vmem:[#allocation2 + $0xa78] sm:$0xff]
    %v438 = vld [vmem:[#allocation2 + $0xa80] sm:$0xff]
    %v439 = vld [vmem:[#allocation2 + $0xa88] sm:$0xff]
    %v440 = vld [vmem:[#allocation2 + $0xa90] sm:$0xff]
    %v441 = vld [vmem:[#allocation2 + $0xa98] sm:$0xff]
    %v442 = vld [vmem:[#allocation2 + $0xaa0] sm:$0xff]
    %v443 = vld [vmem:[#allocation2 + $0xaa8] sm:$0xff]
    %v444 = vld [vmem:[#allocation2 + $0xab0] sm:$0xff]
    %v445 = vld [vmem:[#allocation2 + $0xab8] sm:$0xff]
    %v446 = vld [vmem:[#allocation2 + $0xac0] sm:$0xff]
    %v447 = vld [vmem:[#allocation2 + $0xac8] sm:$0xff]
    %v448 = vld [vmem:[#allocation2 + $0xad0] sm:$0xff]
    %v449 = vld [vmem:[#allocation2 + $0xad8] sm:$0xff]
    %v450 = vld [vmem:[#allocation2 + $0xae0] sm:$0xff]
    %v451 = vld [vmem:[#allocation2 + $0xae8] sm:$0xff]
    %v452 = vld [vmem:[#allocation2 + $0xaf0] sm:$0xff]
    %v453 = vld [vmem:[#allocation2 + $0xaf8] sm:$0xff]
    %v454 = vld [vmem:[#allocation2 + $0xb00] sm:$0xff]
    %v455 = vld [vmem:[#allocation2 + $0xb08] sm:$0xff]
    %v456 = vld [vmem:[#allocation2 + $0xb10] sm:$0xff]
    %v457 = vld [vmem:[#allocation2 + $0xb18] sm:$0xff]
    %v458 = vld [vmem:[#allocation2 + $0xb20] sm:$0xff]
    %v459 = vld [vmem:[#allocation2 + $0xb28] sm:$0xff]
    %v460 = vld [vmem:[#allocation2 + $0xb30] sm:$0xff]
    %v461 = vld [vmem:[#allocation2 + $0xb38] sm:$0xff]
    %v462 = vld [vmem:[#allocation2 + $0xb40] sm:$0xff]
    %v463 = vld [vmem:[#allocation2 + $0xb48] sm:$0xff]
    %v464 = vld [vmem:[#allocation2 + $0xb50] sm:$0xff]
    %v465 = vld [vmem:[#allocation2 + $0xb58] sm:$0xff]
    %v466 = vld [vmem:[#allocation2 + $0xb60] sm:$0xff]
    %v467 = vld [vmem:[#allocation2 + $0xb68] sm:$0xff]
    %v468 = vld [vmem:[#allocation2 + $0xb70] sm:$0xff]
    %v469 = vld [vmem:[#allocation2 + $0xb78] sm:$0xff]
    %v470 = vld [vmem:[#allocation2 + $0xb80] sm:$0xff]
    %v471 = vld [vmem:[#allocation2 + $0xb88] sm:$0xff]
    %v472 = vld [vmem:[#allocation2 + $0xb90] sm:$0xff]
    %v473 = vld [vmem:[#allocation2 + $0xb98] sm:$0xff]
    %v474 = vld [vmem:[#allocation2 + $0xba0] sm:$0xff]
    %v475 = vld [vmem:[#allocation2 + $0xba8] sm:$0xff]
    %v476 = vld [vmem:[#allocation2 + $0xbb0] sm:$0xff]
    %v477 = vld [vmem:[#allocation2 + $0xbb8] sm:$0xff]
    %v478 = vld [vmem:[#allocation2 + $0xbc0] sm:$0xff]
    %v479 = vld [vmem:[#allocation2 + $0xbc8] sm:$0xff]
    %v480 = vld [vmem:[#allocation2 + $0xbd0] sm:$0xff]
    %v481 = vld [vmem:[#allocation2 + $0xbd8] sm:$0xff]
    %v482 = vld [vmem:[#allocation2 + $0xbe0] sm:$0xff]
    %v483 = vld [vmem:[#allocation2 + $0xbe8] sm:$0xff]
    %v484 = vld [vmem:[#allocation2 + $0xbf0] sm:$0xff]
    %v485 = vld [vmem:[#allocation2 + $0xbf8] sm:$0xff]
    %v486 = vld [vmem:[#allocation2 + $0xc00] sm:$0xff]
    %v487 = vld [vmem:[#allocation2 + $0xc08] sm:$0xff]
    %v488 = vld [vmem:[#allocation2 + $0xc10] sm:$0xff]
    %v489 = vld [vmem:[#allocation2 + $0xc18] sm:$0xff]
    %v490 = vld [vmem:[#allocation2 + $0xc20] sm:$0xff]
    %v491 = vld [vmem:[#allocation2 + $0xc28] sm:$0xff]
    %v492 = vld [vmem:[#allocation2 + $0xc30] sm:$0xff]
    %v493 = vld [vmem:[#allocation2 + $0xc38] sm:$0xff]
    %v494 = vld [vmem:[#allocation2 + $0xc40] sm:$0xff]
    %v495 = vld [vmem:[#allocation2 + $0xc48] sm:$0xff]
    %v496 = vld [vmem:[#allocation2 + $0xc50] sm:$0xff]
    %v497 = vld [vmem:[#allocation2 + $0xc58] sm:$0xff]
    %v498 = vld [vmem:[#allocation2 + $0xc60] sm:$0xff]
    %v499 = vld [vmem:[#allocation2 + $0xc68] sm:$0xff]
    %v500 = vld [vmem:[#allocation2 + $0xc70] sm:$0xff]
    %v501 = vld [vmem:[#allocation2 + $0xc78] sm:$0xff]
    %v502 = vld [vmem:[#allocation2 + $0xc80] sm:$0xff]
    %v503 = vld [vmem:[#allocation2 + $0xc88] sm:$0xff]
    %v504 = vld [vmem:[#allocation2 + $0xc90] sm:$0xff]
    %v505 = vld [vmem:[#allocation2 + $0xc98] sm:$0xff]
    %v506 = vld [vmem:[#allocation2 + $0xca0] sm:$0xff]
    %v507 = vld [vmem:[#allocation2 + $0xca8] sm:$0xff]
    %v508 = vld [vmem:[#allocation2 + $0xcb0] sm:$0xff]
    %v509 = vld [vmem:[#allocation2 + $0xcb8] sm:$0xff]
    %v510 = vld [vmem:[#allocation2 + $0xcc0] sm:$0xff]
    %v511 = vld [vmem:[#allocation2 + $0xcc8] sm:$0xff]
    %v512 = vld [vmem:[#allocation2 + $0xcd0] sm:$0xff]
    %v513 = vld [vmem:[#allocation2 + $0xcd8] sm:$0xff]
    %v514 = vld [vmem:[#allocation2 + $0xce0] sm:$0xff]
    %v515 = vld [vmem:[#allocation2 + $0xce8] sm:$0xff]
    %v516 = vld [vmem:[#allocation2 + $0xcf0] sm:$0xff]
    %v517 = vld [vmem:[#allocation2 + $0xcf8] sm:$0xff]
    %v518 = vld [vmem:[#allocation2 + $0xd00] sm:$0xff]
    %v519 = vld [vmem:[#allocation2 + $0xd08] sm:$0xff]
    %v520 = vld [vmem:[#allocation2 + $0xd10] sm:$0xff]
    %v521 = vld [vmem:[#allocation2 + $0xd18] sm:$0xff]
    %v522 = vld [vmem:[#allocation2 + $0xd20] sm:$0xff]
    %v523 = vld [vmem:[#allocation2 + $0xd28] sm:$0xff]
    %v524 = vld [vmem:[#allocation2 + $0xd30] sm:$0xff]
    %v525 = vld [vmem:[#allocation2 + $0xd38] sm:$0xff]
    %v526 = vld [vmem:[#allocation2 + $0xd40] sm:$0xff]
    %v527 = vld [vmem:[#allocation2 + $0xd48] sm:$0xff]
    %v528 = vld [vmem:[#allocation2 + $0xd50] sm:$0xff]
    %v529 = vld [vmem:[#allocation2 + $0xd58] sm:$0xff]
    %v530 = vld [vmem:[#allocation2 + $0xd60] sm:$0xff]
    %v531 = vld [vmem:[#allocation2 + $0xd68] sm:$0xff]
    %v532 = vld [vmem:[#allocation2 + $0xd70] sm:$0xff]
    %v533 = vld [vmem:[#allocation2 + $0xd78] sm:$0xff]
    %v534 = vld [vmem:[#allocation2 + $0xd80] sm:$0xff]
    %v535 = vld [vmem:[#allocation2 + $0xd88] sm:$0xff]
    %v536 = vld [vmem:[#allocation2 + $0xd90] sm:$0xff]
    %v537 = vld [vmem:[#allocation2 + $0xd98] sm:$0xff]
    %v538 = vld [vmem:[#allocation2 + $0xda0] sm:$0xff]
    %v539 = vld [vmem:[#allocation2 + $0xda8] sm:$0xff]
    %v540 = vld [vmem:[#allocation2 + $0xdb0] sm:$0xff]
    %v541 = vld [vmem:[#allocation2 + $0xdb8] sm:$0xff]
    %v542 = vld [vmem:[#allocation2 + $0xdc0] sm:$0xff]
    %v543 = vld [vmem:[#allocation2 + $0xdc8] sm:$0xff]
    %v544 = vld [vmem:[#allocation2 + $0xdd0] sm:$0xff]
    %v545 = vld [vmem:[#allocation2 + $0xdd8] sm:$0xff]
    %v546 = vld [vmem:[#allocation2 + $0xde0] sm:$0xff]
    %v547 = vld [vmem:[#allocation2 + $0xde8] sm:$0xff]
    %v548 = vld [vmem:[#allocation2 + $0xdf0] sm:$0xff]
    %v549 = vld [vmem:[#allocation2 + $0xdf8] sm:$0xff]
    %v550 = vld [vmem:[#allocation2 + $0xe00] sm:$0xff]
    %v551 = vld [vmem:[#allocation2 + $0xe08] sm:$0xff]
    %v552 = vld [vmem:[#allocation2 + $0xe10] sm:$0xff]
    %v553 = vld [vmem:[#allocation2 + $0xe18] sm:$0xff]
    %v554 = vld [vmem:[#allocation2 + $0xe20] sm:$0xff]
    %v555 = vld [vmem:[#allocation2 + $0xe28] sm:$0xff]
    %v556 = vld [vmem:[#allocation2 + $0xe30] sm:$0xff]
    %v557 = vld [vmem:[#allocation2 + $0xe38] sm:$0xff]
    %v558 = vld [vmem:[#allocation2 + $0xe40] sm:$0xff]
    %v559 = vld [vmem:[#allocation2 + $0xe48] sm:$0xff]
    %v560 = vld [vmem:[#allocation2 + $0xe50] sm:$0xff]
    %v561 = vld [vmem:[#allocation2 + $0xe58] sm:$0xff]
    %v562 = vld [vmem:[#allocation2 + $0xe60] sm:$0xff]
    %v563 = vld [vmem:[#allocation2 + $0xe68] sm:$0xff]
    %v564 = vld [vmem:[#allocation2 + $0xe70] sm:$0xff]
    %v565 = vld [vmem:[#allocation2 + $0xe78] sm:$0xff]
    %v566 = vld [vmem:[#allocation2 + $0xe80] sm:$0xff]
    %v567 = vld [vmem:[#allocation2 + $0xe88] sm:$0xff]
    %v568 = vld [vmem:[#allocation2 + $0xe90] sm:$0xff]
    %v569 = vld [vmem:[#allocation2 + $0xe98] sm:$0xff]
    %v570 = vld [vmem:[#allocation2 + $0xea0] sm:$0xff]
    %v571 = vld [vmem:[#allocation2 + $0xea8] sm:$0xff]
    %v572 = vld [vmem:[#allocation2 + $0xeb0] sm:$0xff]
    %v573 = vld [vmem:[#allocation2 + $0xeb8] sm:$0xff]
    %v574 = vld [vmem:[#allocation2 + $0xec0] sm:$0xff]
    %v575 = vld [vmem:[#allocation2 + $0xec8] sm:$0xff]
    %v576 = vld [vmem:[#allocation2 + $0xed0] sm:$0xff]
    %v577 = vld [vmem:[#allocation2 + $0xed8] sm:$0xff]
    %v578 = vld [vmem:[#allocation2 + $0xee0] sm:$0xff]
    %v579 = vld [vmem:[#allocation2 + $0xee8] sm:$0xff]
    %v580 = vld [vmem:[#allocation2 + $0xef0] sm:$0xff]
    %v581 = vld [vmem:[#allocation2 + $0xef8] sm:$0xff]
    %v582 = vld [vmem:[#allocation2 + $0xf00] sm:$0xff]
    %v583 = vld [vmem:[#allocation2 + $0xf08] sm:$0xff]
    %v584 = vld [vmem:[#allocation2 + $0xf10] sm:$0xff]
    %v585 = vld [vmem:[#allocation2 + $0xf18] sm:$0xff]
    %v586 = vld [vmem:[#allocation2 + $0xf20] sm:$0xff]
    %v587 = vld [vmem:[#allocation2 + $0xf28] sm:$0xff]
    %v588 = vld [vmem:[#allocation2 + $0xf30] sm:$0xff]
    %v589 = vld [vmem:[#allocation2 + $0xf38] sm:$0xff]
    %v590 = vld [vmem:[#allocation2 + $0xf40] sm:$0xff]
    %v591 = vld [vmem:[#allocation2 + $0xf48] sm:$0xff]
    %v592 = vld [vmem:[#allocation2 + $0xf50] sm:$0xff]
    %v593 = vld [vmem:[#allocation2 + $0xf58] sm:$0xff]
    %v594 = vld [vmem:[#allocation2 + $0xf60] sm:$0xff]
    %v595 = vld [vmem:[#allocation2 + $0xf68] sm:$0xff]
    %v596 = vld [vmem:[#allocation2 + $0xf70] sm:$0xff]
    %v597 = vld [vmem:[#allocation2 + $0xf78] sm:$0xff]
    %v598 = vld [vmem:[#allocation2 + $0xf80] sm:$0xff]
    %v599 = vld [vmem:[#allocation2 + $0xf88] sm:$0xff]
    %v600 = vld [vmem:[#allocation2 + $0xf90] sm:$0xff]
    %v601 = vld [vmem:[#allocation2 + $0xf98] sm:$0xff]
    %v602 = vld [vmem:[#allocation2 + $0xfa0] sm:$0xff]
    %v603 = vld [vmem:[#allocation2 + $0xfa8] sm:$0xff]
    %v604 = vld [vmem:[#allocation2 + $0xfb0] sm:$0xff]
    %v605 = vld [vmem:[#allocation2 + $0xfb8] sm:$0xff]
    %v606 = vld [vmem:[#allocation2 + $0xfc0] sm:$0xff]
    %v607 = vld [vmem:[#allocation2 + $0xfc8] sm:$0xff]
    %v608 = vld [vmem:[#allocation2 + $0xfd0] sm:$0xff]
    %v609 = vld [vmem:[#allocation2 + $0xfd8] sm:$0xff]
    %v610 = vld [vmem:[#allocation2 + $0xfe0] sm:$0xff]
    %v611 = vld [vmem:[#allocation2 + $0xfe8] sm:$0xff]
    %v612 = vld [vmem:[#allocation2 + $0xff0] sm:$0xff]
    %v613 = vld [vmem:[#allocation2 + $0xff8] sm:$0xff]
    %v614 = vlaneseq
    %v615 = vshrl.u32 %v614, 7
    %v616 = vsub.s32 0, %v615
    %v617 = vrot.slane %v94, %v616
    %v618 = vlaneseq
    %v619 = vshrl.u32 %v618, 7
    %v620 = vsub.s32 0, %v619
    %v621 = vrot.slane %v95, %v620
    %v622 = vlaneseq
    %v623 = vshrl.u32 %v622, 7
    %v624 = vsub.s32 0, %v623
    %v625 = vrot.slane %v96, %v624
    %v626 = vlaneseq
    %v627 = vshrl.u32 %v626, 7
    %v628 = vsub.s32 0, %v627
    %v629 = vrot.slane %v97, %v628
    %v630 = vlaneseq
    %v631 = vshrl.u32 %v630, 7
    %v632 = vsub.s32 0, %v631
    %v633 = vrot.slane %v98, %v632
    %v634 = vlaneseq
    %v635 = vshrl.u32 %v634, 7
    %v636 = vsub.s32 0, %v635
    %v637 = vrot.slane %v99, %v636
    %v638 = vlaneseq
    %v639 = vshrl.u32 %v638, 7
    %v640 = vsub.s32 0, %v639
    %v641 = vrot.slane %v100, %v640
    %v642 = vlaneseq
    %v643 = vshrl.u32 %v642, 7
    %v644 = vsub.s32 0, %v643
    %v645 = vrot.slane %v101, %v644
    %v650 = vunpack.c.l.b16 %v90
    %v651 = vunpack.c.h.b16 %v90
    %v652 = vunpack.c.l.b16 %v91
    %v653 = vunpack.c.h.b16 %v91
    %v654 = vunpack.c.l.b16 %v92
    %v655 = vunpack.c.h.b16 %v92
    %v656 = vunpack.c.l.b16 %v93
    %v657 = vunpack.c.h.b16 %v93
    %v658 = vpack.c.b16 %v650, %v650
    %v659 = vpack.c.b16 %v651, %v651
    %v660 = vpack.c.b16 %v652, %v652
    %v661 = vpack.c.b16 %v653, %v653
    %v662 = vpack.c.b16 %v654, %v654
    %v663 = vpack.c.b16 %v655, %v655
    %v664 = vpack.c.b16 %v656, %v656
    %v665 = vpack.c.b16 %v657, %v657
    %v1186 = vunpack.c.l.b16 %v102
    %v1187 = vunpack.c.h.b16 %v102
    %v1188 = vunpack.c.l.b16 %v103
    %v1189 = vunpack.c.h.b16 %v103
    %v1190 = vunpack.c.l.b16 %v104
    %v1191 = vunpack.c.h.b16 %v104
    %v1192 = vunpack.c.l.b16 %v105
    %v1193 = vunpack.c.h.b16 %v105
    %v1194 = vunpack.c.l.b16 %v106
    %v1195 = vunpack.c.h.b16 %v106
    %v1196 = vunpack.c.l.b16 %v107
    %v1197 = vunpack.c.h.b16 %v107
    %v1198 = vunpack.c.l.b16 %v108
    %v1199 = vunpack.c.h.b16 %v108
    %v1200 = vunpack.c.l.b16 %v109
    %v1201 = vunpack.c.h.b16 %v109
    %v1202 = vunpack.c.l.b16 %v110
    %v1203 = vunpack.c.h.b16 %v110
    %v1204 = vunpack.c.l.b16 %v111
    %v1205 = vunpack.c.h.b16 %v111
    %v1206 = vunpack.c.l.b16 %v112
    %v1207 = vunpack.c.h.b16 %v112
    %v1208 = vunpack.c.l.b16 %v113
    %v1209 = vunpack.c.h.b16 %v113
    %v1210 = vunpack.c.l.b16 %v114
    %v1211 = vunpack.c.h.b16 %v114
    %v1212 = vunpack.c.l.b16 %v115
    %v1213 = vunpack.c.h.b16 %v115
    %v1214 = vunpack.c.l.b16 %v116
    %v1215 = vunpack.c.h.b16 %v116
    %v1216 = vunpack.c.l.b16 %v117
    %v1217 = vunpack.c.h.b16 %v117
    %v1218 = vunpack.c.l.b16 %v118
    %v1219 = vunpack.c.h.b16 %v118
    %v1220 = vunpack.c.l.b16 %v119
    %v1221 = vunpack.c.h.b16 %v119
    %v1222 = vunpack.c.l.b16 %v120
    %v1223 = vunpack.c.h.b16 %v120
    %v1224 = vunpack.c.l.b16 %v121
    %v1225 = vunpack.c.h.b16 %v121
    %v1226 = vunpack.c.l.b16 %v122
    %v1227 = vunpack.c.h.b16 %v122
    %v1228 = vunpack.c.l.b16 %v123
    %v1229 = vunpack.c.h.b16 %v123
    %v1230 = vunpack.c.l.b16 %v124
    %v1231 = vunpack.c.h.b16 %v124
    %v1232 = vunpack.c.l.b16 %v125
    %v1233 = vunpack.c.h.b16 %v125
    %v1234 = vunpack.c.l.b16 %v126
    %v1235 = vunpack.c.h.b16 %v126
    %v1236 = vunpack.c.l.b16 %v127
    %v1237 = vunpack.c.h.b16 %v127
    %v1238 = vunpack.c.l.b16 %v128
    %v1239 = vunpack.c.h.b16 %v128
    %v1240 = vunpack.c.l.b16 %v129
    %v1241 = vunpack.c.h.b16 %v129
    %v1242 = vunpack.c.l.b16 %v130
    %v1243 = vunpack.c.h.b16 %v130
    %v1244 = vunpack.c.l.b16 %v131
    %v1245 = vunpack.c.h.b16 %v131
    %v1246 = vunpack.c.l.b16 %v132
    %v1247 = vunpack.c.h.b16 %v132
    %v1248 = vunpack.c.l.b16 %v133
    %v1249 = vunpack.c.h.b16 %v133
    %v1250 = vunpack.c.l.b16 %v134
    %v1251 = vunpack.c.h.b16 %v134
    %v1252 = vunpack.c.l.b16 %v135
    %v1253 = vunpack.c.h.b16 %v135
    %v1254 = vunpack.c.l.b16 %v136
    %v1255 = vunpack.c.h.b16 %v136
    %v1256 = vunpack.c.l.b16 %v137
    %v1257 = vunpack.c.h.b16 %v137
    %v1258 = vunpack.c.l.b16 %v138
    %v1259 = vunpack.c.h.b16 %v138
    %v1260 = vunpack.c.l.b16 %v139
    %v1261 = vunpack.c.h.b16 %v139
    %v1262 = vunpack.c.l.b16 %v140
    %v1263 = vunpack.c.h.b16 %v140
    %v1264 = vunpack.c.l.b16 %v141
    %v1265 = vunpack.c.h.b16 %v141
    %v1266 = vunpack.c.l.b16 %v142
    %v1267 = vunpack.c.h.b16 %v142
    %v1268 = vunpack.c.l.b16 %v143
    %v1269 = vunpack.c.h.b16 %v143
    %v1270 = vunpack.c.l.b16 %v144
    %v1271 = vunpack.c.h.b16 %v144
    %v1272 = vunpack.c.l.b16 %v145
    %v1273 = vunpack.c.h.b16 %v145
    %v1274 = vunpack.c.l.b16 %v146
    %v1275 = vunpack.c.h.b16 %v146
    %v1276 = vunpack.c.l.b16 %v147
    %v1277 = vunpack.c.h.b16 %v147
    %v1278 = vunpack.c.l.b16 %v148
    %v1279 = vunpack.c.h.b16 %v148
    %v1280 = vunpack.c.l.b16 %v149
    %v1281 = vunpack.c.h.b16 %v149
    %v1282 = vunpack.c.l.b16 %v150
    %v1283 = vunpack.c.h.b16 %v150
    %v1284 = vunpack.c.l.b16 %v151
    %v1285 = vunpack.c.h.b16 %v151
    %v1286 = vunpack.c.l.b16 %v152
    %v1287 = vunpack.c.h.b16 %v152
    %v1288 = vunpack.c.l.b16 %v153
    %v1289 = vunpack.c.h.b16 %v153
    %v1290 = vunpack.c.l.b16 %v154
    %v1291 = vunpack.c.h.b16 %v154
    %v1292 = vunpack.c.l.b16 %v155
    %v1293 = vunpack.c.h.b16 %v155
    %v1294 = vunpack.c.l.b16 %v156
    %v1295 = vunpack.c.h.b16 %v156
    %v1296 = vunpack.c.l.b16 %v157
    %v1297 = vunpack.c.h.b16 %v157
    %v1298 = vunpack.c.l.b16 %v158
    %v1299 = vunpack.c.h.b16 %v158
    %v1300 = vunpack.c.l.b16 %v159
    %v1301 = vunpack.c.h.b16 %v159
    %v1302 = vunpack.c.l.b16 %v160
    %v1303 = vunpack.c.h.b16 %v160
    %v1304 = vunpack.c.l.b16 %v161
    %v1305 = vunpack.c.h.b16 %v161
    %v1306 = vunpack.c.l.b16 %v162
    %v1307 = vunpack.c.h.b16 %v162
    %v1308 = vunpack.c.l.b16 %v163
    %v1309 = vunpack.c.h.b16 %v163
    %v1310 = vunpack.c.l.b16 %v164
    %v1311 = vunpack.c.h.b16 %v164
    %v1312 = vunpack.c.l.b16 %v165
    %v1313 = vunpack.c.h.b16 %v165
    %v1314 = vunpack.c.l.b16 %v166
    %v1315 = vunpack.c.h.b16 %v166
    %v1316 = vunpack.c.l.b16 %v167
    %v1317 = vunpack.c.h.b16 %v167
    %v1318 = vunpack.c.l.b16 %v168
    %v1319 = vunpack.c.h.b16 %v168
    %v1320 = vunpack.c.l.b16 %v169
    %v1321 = vunpack.c.h.b16 %v169
    %v1322 = vunpack.c.l.b16 %v170
    %v1323 = vunpack.c.h.b16 %v170
    %v1324 = vunpack.c.l.b16 %v171
    %v1325 = vunpack.c.h.b16 %v171
    %v1326 = vunpack.c.l.b16 %v172
    %v1327 = vunpack.c.h.b16 %v172
    %v1328 = vunpack.c.l.b16 %v173
    %v1329 = vunpack.c.h.b16 %v173
    %v1330 = vunpack.c.l.b16 %v174
    %v1331 = vunpack.c.h.b16 %v174
    %v1332 = vunpack.c.l.b16 %v175
    %v1333 = vunpack.c.h.b16 %v175
    %v1334 = vunpack.c.l.b16 %v176
    %v1335 = vunpack.c.h.b16 %v176
    %v1336 = vunpack.c.l.b16 %v177
    %v1337 = vunpack.c.h.b16 %v177
    %v1338 = vunpack.c.l.b16 %v178
    %v1339 = vunpack.c.h.b16 %v178
    %v1340 = vunpack.c.l.b16 %v179
    %v1341 = vunpack.c.h.b16 %v179
    %v1342 = vunpack.c.l.b16 %v180
    %v1343 = vunpack.c.h.b16 %v180
    %v1344 = vunpack.c.l.b16 %v181
    %v1345 = vunpack.c.h.b16 %v181
    %v1346 = vunpack.c.l.b16 %v182
    %v1347 = vunpack.c.h.b16 %v182
    %v1348 = vunpack.c.l.b16 %v183
    %v1349 = vunpack.c.h.b16 %v183
    %v1350 = vunpack.c.l.b16 %v184
    %v1351 = vunpack.c.h.b16 %v184
    %v1352 = vunpack.c.l.b16 %v185
    %v1353 = vunpack.c.h.b16 %v185
    %v1354 = vunpack.c.l.b16 %v186
    %v1355 = vunpack.c.h.b16 %v186
    %v1356 = vunpack.c.l.b16 %v187
    %v1357 = vunpack.c.h.b16 %v187
    %v1358 = vunpack.c.l.b16 %v188
    %v1359 = vunpack.c.h.b16 %v188
    %v1360 = vunpack.c.l.b16 %v189
    %v1361 = vunpack.c.h.b16 %v189
    %v1362 = vunpack.c.l.b16 %v190
    %v1363 = vunpack.c.h.b16 %v190
    %v1364 = vunpack.c.l.b16 %v191
    %v1365 = vunpack.c.h.b16 %v191
    %v1366 = vunpack.c.l.b16 %v192
    %v1367 = vunpack.c.h.b16 %v192
    %v1368 = vunpack.c.l.b16 %v193
    %v1369 = vunpack.c.h.b16 %v193
    %v1370 = vunpack.c.l.b16 %v194
    %v1371 = vunpack.c.h.b16 %v194
    %v1372 = vunpack.c.l.b16 %v195
    %v1373 = vunpack.c.h.b16 %v195
    %v1374 = vunpack.c.l.b16 %v196
    %v1375 = vunpack.c.h.b16 %v196
    %v1376 = vunpack.c.l.b16 %v197
    %v1377 = vunpack.c.h.b16 %v197
    %v1378 = vunpack.c.l.b16 %v198
    %v1379 = vunpack.c.h.b16 %v198
    %v1380 = vunpack.c.l.b16 %v199
    %v1381 = vunpack.c.h.b16 %v199
    %v1382 = vunpack.c.l.b16 %v200
    %v1383 = vunpack.c.h.b16 %v200
    %v1384 = vunpack.c.l.b16 %v201
    %v1385 = vunpack.c.h.b16 %v201
    %v1386 = vunpack.c.l.b16 %v202
    %v1387 = vunpack.c.h.b16 %v202
    %v1388 = vunpack.c.l.b16 %v203
    %v1389 = vunpack.c.h.b16 %v203
    %v1390 = vunpack.c.l.b16 %v204
    %v1391 = vunpack.c.h.b16 %v204
    %v1392 = vunpack.c.l.b16 %v205
    %v1393 = vunpack.c.h.b16 %v205
    %v1394 = vunpack.c.l.b16 %v206
    %v1395 = vunpack.c.h.b16 %v206
    %v1396 = vunpack.c.l.b16 %v207
    %v1397 = vunpack.c.h.b16 %v207
    %v1398 = vunpack.c.l.b16 %v208
    %v1399 = vunpack.c.h.b16 %v208
    %v1400 = vunpack.c.l.b16 %v209
    %v1401 = vunpack.c.h.b16 %v209
    %v1402 = vunpack.c.l.b16 %v210
    %v1403 = vunpack.c.h.b16 %v210
    %v1404 = vunpack.c.l.b16 %v211
    %v1405 = vunpack.c.h.b16 %v211
    %v1406 = vunpack.c.l.b16 %v212
    %v1407 = vunpack.c.h.b16 %v212
    %v1408 = vunpack.c.l.b16 %v213
    %v1409 = vunpack.c.h.b16 %v213
    %v1410 = vunpack.c.l.b16 %v214
    %v1411 = vunpack.c.h.b16 %v214
    %v1412 = vunpack.c.l.b16 %v215
    %v1413 = vunpack.c.h.b16 %v215
    %v1414 = vunpack.c.l.b16 %v216
    %v1415 = vunpack.c.h.b16 %v216
    %v1416 = vunpack.c.l.b16 %v217
    %v1417 = vunpack.c.h.b16 %v217
    %v1418 = vunpack.c.l.b16 %v218
    %v1419 = vunpack.c.h.b16 %v218
    %v1420 = vunpack.c.l.b16 %v219
    %v1421 = vunpack.c.h.b16 %v219
    %v1422 = vunpack.c.l.b16 %v220
    %v1423 = vunpack.c.h.b16 %v220
    %v1424 = vunpack.c.l.b16 %v221
    %v1425 = vunpack.c.h.b16 %v221
    %v1426 = vunpack.c.l.b16 %v222
    %v1427 = vunpack.c.h.b16 %v222
    %v1428 = vunpack.c.l.b16 %v223
    %v1429 = vunpack.c.h.b16 %v223
    %v1430 = vunpack.c.l.b16 %v224
    %v1431 = vunpack.c.h.b16 %v224
    %v1432 = vunpack.c.l.b16 %v225
    %v1433 = vunpack.c.h.b16 %v225
    %v1434 = vunpack.c.l.b16 %v226
    %v1435 = vunpack.c.h.b16 %v226
    %v1436 = vunpack.c.l.b16 %v227
    %v1437 = vunpack.c.h.b16 %v227
    %v1438 = vunpack.c.l.b16 %v228
    %v1439 = vunpack.c.h.b16 %v228
    %v1440 = vunpack.c.l.b16 %v229
    %v1441 = vunpack.c.h.b16 %v229
    %v1442 = vunpack.c.l.b16 %v230
    %v1443 = vunpack.c.h.b16 %v230
    %v1444 = vunpack.c.l.b16 %v231
    %v1445 = vunpack.c.h.b16 %v231
    %v1446 = vunpack.c.l.b16 %v232
    %v1447 = vunpack.c.h.b16 %v232
    %v1448 = vunpack.c.l.b16 %v233
    %v1449 = vunpack.c.h.b16 %v233
    %v1450 = vunpack.c.l.b16 %v234
    %v1451 = vunpack.c.h.b16 %v234
    %v1452 = vunpack.c.l.b16 %v235
    %v1453 = vunpack.c.h.b16 %v235
    %v1454 = vunpack.c.l.b16 %v236
    %v1455 = vunpack.c.h.b16 %v236
    %v1456 = vunpack.c.l.b16 %v237
    %v1457 = vunpack.c.h.b16 %v237
    %v1458 = vunpack.c.l.b16 %v238
    %v1459 = vunpack.c.h.b16 %v238
    %v1460 = vunpack.c.l.b16 %v239
    %v1461 = vunpack.c.h.b16 %v239
    %v1462 = vunpack.c.l.b16 %v240
    %v1463 = vunpack.c.h.b16 %v240
    %v1464 = vunpack.c.l.b16 %v241
    %v1465 = vunpack.c.h.b16 %v241
    %v1466 = vunpack.c.l.b16 %v242
    %v1467 = vunpack.c.h.b16 %v242
    %v1468 = vunpack.c.l.b16 %v243
    %v1469 = vunpack.c.h.b16 %v243
    %v1470 = vunpack.c.l.b16 %v244
    %v1471 = vunpack.c.h.b16 %v244
    %v1472 = vunpack.c.l.b16 %v245
    %v1473 = vunpack.c.h.b16 %v245
    %v1474 = vunpack.c.l.b16 %v246
    %v1475 = vunpack.c.h.b16 %v246
    %v1476 = vunpack.c.l.b16 %v247
    %v1477 = vunpack.c.h.b16 %v247
    %v1478 = vunpack.c.l.b16 %v248
    %v1479 = vunpack.c.h.b16 %v248
    %v1480 = vunpack.c.l.b16 %v249
    %v1481 = vunpack.c.h.b16 %v249
    %v1482 = vunpack.c.l.b16 %v250
    %v1483 = vunpack.c.h.b16 %v250
    %v1484 = vunpack.c.l.b16 %v251
    %v1485 = vunpack.c.h.b16 %v251
    %v1486 = vunpack.c.l.b16 %v252
    %v1487 = vunpack.c.h.b16 %v252
    %v1488 = vunpack.c.l.b16 %v253
    %v1489 = vunpack.c.h.b16 %v253
    %v1490 = vunpack.c.l.b16 %v254
    %v1491 = vunpack.c.h.b16 %v254
    %v1492 = vunpack.c.l.b16 %v255
    %v1493 = vunpack.c.h.b16 %v255
    %v1494 = vunpack.c.l.b16 %v256
    %v1495 = vunpack.c.h.b16 %v256
    %v1496 = vunpack.c.l.b16 %v257
    %v1497 = vunpack.c.h.b16 %v257
    %v1498 = vunpack.c.l.b16 %v258
    %v1499 = vunpack.c.h.b16 %v258
    %v1500 = vunpack.c.l.b16 %v259
    %v1501 = vunpack.c.h.b16 %v259
    %v1502 = vunpack.c.l.b16 %v260
    %v1503 = vunpack.c.h.b16 %v260
    %v1504 = vunpack.c.l.b16 %v261
    %v1505 = vunpack.c.h.b16 %v261
    %v1506 = vunpack.c.l.b16 %v262
    %v1507 = vunpack.c.h.b16 %v262
    %v1508 = vunpack.c.l.b16 %v263
    %v1509 = vunpack.c.h.b16 %v263
    %v1510 = vunpack.c.l.b16 %v264
    %v1511 = vunpack.c.h.b16 %v264
    %v1512 = vunpack.c.l.b16 %v265
    %v1513 = vunpack.c.h.b16 %v265
    %v1514 = vunpack.c.l.b16 %v266
    %v1515 = vunpack.c.h.b16 %v266
    %v1516 = vunpack.c.l.b16 %v267
    %v1517 = vunpack.c.h.b16 %v267
    %v1518 = vunpack.c.l.b16 %v268
    %v1519 = vunpack.c.h.b16 %v268
    %v1520 = vunpack.c.l.b16 %v269
    %v1521 = vunpack.c.h.b16 %v269
    %v1522 = vunpack.c.l.b16 %v270
    %v1523 = vunpack.c.h.b16 %v270
    %v1524 = vunpack.c.l.b16 %v271
    %v1525 = vunpack.c.h.b16 %v271
    %v1526 = vunpack.c.l.b16 %v272
    %v1527 = vunpack.c.h.b16 %v272
    %v1528 = vunpack.c.l.b16 %v273
    %v1529 = vunpack.c.h.b16 %v273
    %v1530 = vunpack.c.l.b16 %v274
    %v1531 = vunpack.c.h.b16 %v274
    %v1532 = vunpack.c.l.b16 %v275
    %v1533 = vunpack.c.h.b16 %v275
    %v1534 = vunpack.c.l.b16 %v276
    %v1535 = vunpack.c.h.b16 %v276
    %v1536 = vunpack.c.l.b16 %v277
    %v1537 = vunpack.c.h.b16 %v277
    %v1538 = vunpack.c.l.b16 %v278
    %v1539 = vunpack.c.h.b16 %v278
    %v1540 = vunpack.c.l.b16 %v279
    %v1541 = vunpack.c.h.b16 %v279
    %v1542 = vunpack.c.l.b16 %v280
    %v1543 = vunpack.c.h.b16 %v280
    %v1544 = vunpack.c.l.b16 %v281
    %v1545 = vunpack.c.h.b16 %v281
    %v1546 = vunpack.c.l.b16 %v282
    %v1547 = vunpack.c.h.b16 %v282
    %v1548 = vunpack.c.l.b16 %v283
    %v1549 = vunpack.c.h.b16 %v283
    %v1550 = vunpack.c.l.b16 %v284
    %v1551 = vunpack.c.h.b16 %v284
    %v1552 = vunpack.c.l.b16 %v285
    %v1553 = vunpack.c.h.b16 %v285
    %v1554 = vunpack.c.l.b16 %v286
    %v1555 = vunpack.c.h.b16 %v286
    %v1556 = vunpack.c.l.b16 %v287
    %v1557 = vunpack.c.h.b16 %v287
    %v1558 = vunpack.c.l.b16 %v288
    %v1559 = vunpack.c.h.b16 %v288
    %v1560 = vunpack.c.l.b16 %v289
    %v1561 = vunpack.c.h.b16 %v289
    %v1562 = vunpack.c.l.b16 %v290
    %v1563 = vunpack.c.h.b16 %v290
    %v1564 = vunpack.c.l.b16 %v291
    %v1565 = vunpack.c.h.b16 %v291
    %v1566 = vunpack.c.l.b16 %v292
    %v1567 = vunpack.c.h.b16 %v292
    %v1568 = vunpack.c.l.b16 %v293
    %v1569 = vunpack.c.h.b16 %v293
    %v1570 = vunpack.c.l.b16 %v294
    %v1571 = vunpack.c.h.b16 %v294
    %v1572 = vunpack.c.l.b16 %v295
    %v1573 = vunpack.c.h.b16 %v295
    %v1574 = vunpack.c.l.b16 %v296
    %v1575 = vunpack.c.h.b16 %v296
    %v1576 = vunpack.c.l.b16 %v297
    %v1577 = vunpack.c.h.b16 %v297
    %v1578 = vunpack.c.l.b16 %v298
    %v1579 = vunpack.c.h.b16 %v298
    %v1580 = vunpack.c.l.b16 %v299
    %v1581 = vunpack.c.h.b16 %v299
    %v1582 = vunpack.c.l.b16 %v300
    %v1583 = vunpack.c.h.b16 %v300
    %v1584 = vunpack.c.l.b16 %v301
    %v1585 = vunpack.c.h.b16 %v301
    %v1586 = vunpack.c.l.b16 %v302
    %v1587 = vunpack.c.h.b16 %v302
    %v1588 = vunpack.c.l.b16 %v303
    %v1589 = vunpack.c.h.b16 %v303
    %v1590 = vunpack.c.l.b16 %v304
    %v1591 = vunpack.c.h.b16 %v304
    %v1592 = vunpack.c.l.b16 %v305
    %v1593 = vunpack.c.h.b16 %v305
    %v1594 = vunpack.c.l.b16 %v306
    %v1595 = vunpack.c.h.b16 %v306
    %v1596 = vunpack.c.l.b16 %v307
    %v1597 = vunpack.c.h.b16 %v307
    %v1598 = vunpack.c.l.b16 %v308
    %v1599 = vunpack.c.h.b16 %v308
    %v1600 = vunpack.c.l.b16 %v309
    %v1601 = vunpack.c.h.b16 %v309
    %v1602 = vunpack.c.l.b16 %v310
    %v1603 = vunpack.c.h.b16 %v310
    %v1604 = vunpack.c.l.b16 %v311
    %v1605 = vunpack.c.h.b16 %v311
    %v1606 = vunpack.c.l.b16 %v312
    %v1607 = vunpack.c.h.b16 %v312
    %v1608 = vunpack.c.l.b16 %v313
    %v1609 = vunpack.c.h.b16 %v313
    %v1610 = vunpack.c.l.b16 %v314
    %v1611 = vunpack.c.h.b16 %v314
    %v1612 = vunpack.c.l.b16 %v315
    %v1613 = vunpack.c.h.b16 %v315
    %v1614 = vunpack.c.l.b16 %v316
    %v1615 = vunpack.c.h.b16 %v316
    %v1616 = vunpack.c.l.b16 %v317
    %v1617 = vunpack.c.h.b16 %v317
    %v1618 = vunpack.c.l.b16 %v318
    %v1619 = vunpack.c.h.b16 %v318
    %v1620 = vunpack.c.l.b16 %v319
    %v1621 = vunpack.c.h.b16 %v319
    %v1622 = vunpack.c.l.b16 %v320
    %v1623 = vunpack.c.h.b16 %v320
    %v1624 = vunpack.c.l.b16 %v321
    %v1625 = vunpack.c.h.b16 %v321
    %v1626 = vunpack.c.l.b16 %v322
    %v1627 = vunpack.c.h.b16 %v322
    %v1628 = vunpack.c.l.b16 %v323
    %v1629 = vunpack.c.h.b16 %v323
    %v1630 = vunpack.c.l.b16 %v324
    %v1631 = vunpack.c.h.b16 %v324
    %v1632 = vunpack.c.l.b16 %v325
    %v1633 = vunpack.c.h.b16 %v325
    %v1634 = vunpack.c.l.b16 %v326
    %v1635 = vunpack.c.h.b16 %v326
    %v1636 = vunpack.c.l.b16 %v327
    %v1637 = vunpack.c.h.b16 %v327
    %v1638 = vunpack.c.l.b16 %v328
    %v1639 = vunpack.c.h.b16 %v328
    %v1640 = vunpack.c.l.b16 %v329
    %v1641 = vunpack.c.h.b16 %v329
    %v1642 = vunpack.c.l.b16 %v330
    %v1643 = vunpack.c.h.b16 %v330
    %v1644 = vunpack.c.l.b16 %v331
    %v1645 = vunpack.c.h.b16 %v331
    %v1646 = vunpack.c.l.b16 %v332
    %v1647 = vunpack.c.h.b16 %v332
    %v1648 = vunpack.c.l.b16 %v333
    %v1649 = vunpack.c.h.b16 %v333
    %v1650 = vunpack.c.l.b16 %v334
    %v1651 = vunpack.c.h.b16 %v334
    %v1652 = vunpack.c.l.b16 %v335
    %v1653 = vunpack.c.h.b16 %v335
    %v1654 = vunpack.c.l.b16 %v336
    %v1655 = vunpack.c.h.b16 %v336
    %v1656 = vunpack.c.l.b16 %v337
    %v1657 = vunpack.c.h.b16 %v337
    %v1658 = vunpack.c.l.b16 %v338
    %v1659 = vunpack.c.h.b16 %v338
    %v1660 = vunpack.c.l.b16 %v339
    %v1661 = vunpack.c.h.b16 %v339
    %v1662 = vunpack.c.l.b16 %v340
    %v1663 = vunpack.c.h.b16 %v340
    %v1664 = vunpack.c.l.b16 %v341
    %v1665 = vunpack.c.h.b16 %v341
    %v1666 = vunpack.c.l.b16 %v342
    %v1667 = vunpack.c.h.b16 %v342
    %v1668 = vunpack.c.l.b16 %v343
    %v1669 = vunpack.c.h.b16 %v343
    %v1670 = vunpack.c.l.b16 %v344
    %v1671 = vunpack.c.h.b16 %v344
    %v1672 = vunpack.c.l.b16 %v345
    %v1673 = vunpack.c.h.b16 %v345
    %v1674 = vunpack.c.l.b16 %v346
    %v1675 = vunpack.c.h.b16 %v346
    %v1676 = vunpack.c.l.b16 %v347
    %v1677 = vunpack.c.h.b16 %v347
    %v1678 = vunpack.c.l.b16 %v348
    %v1679 = vunpack.c.h.b16 %v348
    %v1680 = vunpack.c.l.b16 %v349
    %v1681 = vunpack.c.h.b16 %v349
    %v1682 = vunpack.c.l.b16 %v350
    %v1683 = vunpack.c.h.b16 %v350
    %v1684 = vunpack.c.l.b16 %v351
    %v1685 = vunpack.c.h.b16 %v351
    %v1686 = vunpack.c.l.b16 %v352
    %v1687 = vunpack.c.h.b16 %v352
    %v1688 = vunpack.c.l.b16 %v353
    %v1689 = vunpack.c.h.b16 %v353
    %v1690 = vunpack.c.l.b16 %v354
    %v1691 = vunpack.c.h.b16 %v354
    %v1692 = vunpack.c.l.b16 %v355
    %v1693 = vunpack.c.h.b16 %v355
    %v1694 = vunpack.c.l.b16 %v356
    %v1695 = vunpack.c.h.b16 %v356
    %v1696 = vunpack.c.l.b16 %v357
    %v1697 = vunpack.c.h.b16 %v357
    %v1698 = vunpack.c.l.b16 %v358
    %v1699 = vunpack.c.h.b16 %v358
    %v1700 = vunpack.c.l.b16 %v359
    %v1701 = vunpack.c.h.b16 %v359
    %v1702 = vunpack.c.l.b16 %v360
    %v1703 = vunpack.c.h.b16 %v360
    %v1704 = vunpack.c.l.b16 %v361
    %v1705 = vunpack.c.h.b16 %v361
    %v1706 = vunpack.c.l.b16 %v362
    %v1707 = vunpack.c.h.b16 %v362
    %v1708 = vunpack.c.l.b16 %v363
    %v1709 = vunpack.c.h.b16 %v363
    %v1710 = vunpack.c.l.b16 %v364
    %v1711 = vunpack.c.h.b16 %v364
    %v1712 = vunpack.c.l.b16 %v365
    %v1713 = vunpack.c.h.b16 %v365
    %v1714 = vunpack.c.l.b16 %v366
    %v1715 = vunpack.c.h.b16 %v366
    %v1716 = vunpack.c.l.b16 %v367
    %v1717 = vunpack.c.h.b16 %v367
    %v1718 = vunpack.c.l.b16 %v368
    %v1719 = vunpack.c.h.b16 %v368
    %v1720 = vunpack.c.l.b16 %v369
    %v1721 = vunpack.c.h.b16 %v369
    %v1722 = vunpack.c.l.b16 %v370
    %v1723 = vunpack.c.h.b16 %v370
    %v1724 = vunpack.c.l.b16 %v371
    %v1725 = vunpack.c.h.b16 %v371
    %v1726 = vunpack.c.l.b16 %v372
    %v1727 = vunpack.c.h.b16 %v372
    %v1728 = vunpack.c.l.b16 %v373
    %v1729 = vunpack.c.h.b16 %v373
    %v1730 = vunpack.c.l.b16 %v374
    %v1731 = vunpack.c.h.b16 %v374
    %v1732 = vunpack.c.l.b16 %v375
    %v1733 = vunpack.c.h.b16 %v375
    %v1734 = vunpack.c.l.b16 %v376
    %v1735 = vunpack.c.h.b16 %v376
    %v1736 = vunpack.c.l.b16 %v377
    %v1737 = vunpack.c.h.b16 %v377
    %v1738 = vunpack.c.l.b16 %v378
    %v1739 = vunpack.c.h.b16 %v378
    %v1740 = vunpack.c.l.b16 %v379
    %v1741 = vunpack.c.h.b16 %v379
    %v1742 = vunpack.c.l.b16 %v380
    %v1743 = vunpack.c.h.b16 %v380
    %v1744 = vunpack.c.l.b16 %v381
    %v1745 = vunpack.c.h.b16 %v381
    %v1746 = vunpack.c.l.b16 %v382
    %v1747 = vunpack.c.h.b16 %v382
    %v1748 = vunpack.c.l.b16 %v383
    %v1749 = vunpack.c.h.b16 %v383
    %v1750 = vunpack.c.l.b16 %v384
    %v1751 = vunpack.c.h.b16 %v384
    %v1752 = vunpack.c.l.b16 %v385
    %v1753 = vunpack.c.h.b16 %v385
    %v1754 = vunpack.c.l.b16 %v386
    %v1755 = vunpack.c.h.b16 %v386
    %v1756 = vunpack.c.l.b16 %v387
    %v1757 = vunpack.c.h.b16 %v387
    %v1758 = vunpack.c.l.b16 %v388
    %v1759 = vunpack.c.h.b16 %v388
    %v1760 = vunpack.c.l.b16 %v389
    %v1761 = vunpack.c.h.b16 %v389
    %v1762 = vunpack.c.l.b16 %v390
    %v1763 = vunpack.c.h.b16 %v390
    %v1764 = vunpack.c.l.b16 %v391
    %v1765 = vunpack.c.h.b16 %v391
    %v1766 = vunpack.c.l.b16 %v392
    %v1767 = vunpack.c.h.b16 %v392
    %v1768 = vunpack.c.l.b16 %v393
    %v1769 = vunpack.c.h.b16 %v393
    %v1770 = vunpack.c.l.b16 %v394
    %v1771 = vunpack.c.h.b16 %v394
    %v1772 = vunpack.c.l.b16 %v395
    %v1773 = vunpack.c.h.b16 %v395
    %v1774 = vunpack.c.l.b16 %v396
    %v1775 = vunpack.c.h.b16 %v396
    %v1776 = vunpack.c.l.b16 %v397
    %v1777 = vunpack.c.h.b16 %v397
    %v1778 = vunpack.c.l.b16 %v398
    %v1779 = vunpack.c.h.b16 %v398
    %v1780 = vunpack.c.l.b16 %v399
    %v1781 = vunpack.c.h.b16 %v399
    %v1782 = vunpack.c.l.b16 %v400
    %v1783 = vunpack.c.h.b16 %v400
    %v1784 = vunpack.c.l.b16 %v401
    %v1785 = vunpack.c.h.b16 %v401
    %v1786 = vunpack.c.l.b16 %v402
    %v1787 = vunpack.c.h.b16 %v402
    %v1788 = vunpack.c.l.b16 %v403
    %v1789 = vunpack.c.h.b16 %v403
    %v1790 = vunpack.c.l.b16 %v404
    %v1791 = vunpack.c.h.b16 %v404
    %v1792 = vunpack.c.l.b16 %v405
    %v1793 = vunpack.c.h.b16 %v405
    %v1794 = vunpack.c.l.b16 %v406
    %v1795 = vunpack.c.h.b16 %v406
    %v1796 = vunpack.c.l.b16 %v407
    %v1797 = vunpack.c.h.b16 %v407
    %v1798 = vunpack.c.l.b16 %v408
    %v1799 = vunpack.c.h.b16 %v408
    %v1800 = vunpack.c.l.b16 %v409
    %v1801 = vunpack.c.h.b16 %v409
    %v1802 = vunpack.c.l.b16 %v410
    %v1803 = vunpack.c.h.b16 %v410
    %v1804 = vunpack.c.l.b16 %v411
    %v1805 = vunpack.c.h.b16 %v411
    %v1806 = vunpack.c.l.b16 %v412
    %v1807 = vunpack.c.h.b16 %v412
    %v1808 = vunpack.c.l.b16 %v413
    %v1809 = vunpack.c.h.b16 %v413
    %v1810 = vunpack.c.l.b16 %v414
    %v1811 = vunpack.c.h.b16 %v414
    %v1812 = vunpack.c.l.b16 %v415
    %v1813 = vunpack.c.h.b16 %v415
    %v1814 = vunpack.c.l.b16 %v416
    %v1815 = vunpack.c.h.b16 %v416
    %v1816 = vunpack.c.l.b16 %v417
    %v1817 = vunpack.c.h.b16 %v417
    %v1818 = vunpack.c.l.b16 %v418
    %v1819 = vunpack.c.h.b16 %v418
    %v1820 = vunpack.c.l.b16 %v419
    %v1821 = vunpack.c.h.b16 %v419
    %v1822 = vunpack.c.l.b16 %v420
    %v1823 = vunpack.c.h.b16 %v420
    %v1824 = vunpack.c.l.b16 %v421
    %v1825 = vunpack.c.h.b16 %v421
    %v1826 = vunpack.c.l.b16 %v422
    %v1827 = vunpack.c.h.b16 %v422
    %v1828 = vunpack.c.l.b16 %v423
    %v1829 = vunpack.c.h.b16 %v423
    %v1830 = vunpack.c.l.b16 %v424
    %v1831 = vunpack.c.h.b16 %v424
    %v1832 = vunpack.c.l.b16 %v425
    %v1833 = vunpack.c.h.b16 %v425
    %v1834 = vunpack.c.l.b16 %v426
    %v1835 = vunpack.c.h.b16 %v426
    %v1836 = vunpack.c.l.b16 %v427
    %v1837 = vunpack.c.h.b16 %v427
    %v1838 = vunpack.c.l.b16 %v428
    %v1839 = vunpack.c.h.b16 %v428
    %v1840 = vunpack.c.l.b16 %v429
    %v1841 = vunpack.c.h.b16 %v429
    %v1842 = vunpack.c.l.b16 %v430
    %v1843 = vunpack.c.h.b16 %v430
    %v1844 = vunpack.c.l.b16 %v431
    %v1845 = vunpack.c.h.b16 %v431
    %v1846 = vunpack.c.l.b16 %v432
    %v1847 = vunpack.c.h.b16 %v432
    %v1848 = vunpack.c.l.b16 %v433
    %v1849 = vunpack.c.h.b16 %v433
    %v1850 = vunpack.c.l.b16 %v434
    %v1851 = vunpack.c.h.b16 %v434
    %v1852 = vunpack.c.l.b16 %v435
    %v1853 = vunpack.c.h.b16 %v435
    %v1854 = vunpack.c.l.b16 %v436
    %v1855 = vunpack.c.h.b16 %v436
    %v1856 = vunpack.c.l.b16 %v437
    %v1857 = vunpack.c.h.b16 %v437
    %v1858 = vunpack.c.l.b16 %v438
    %v1859 = vunpack.c.h.b16 %v438
    %v1860 = vunpack.c.l.b16 %v439
    %v1861 = vunpack.c.h.b16 %v439
    %v1862 = vunpack.c.l.b16 %v440
    %v1863 = vunpack.c.h.b16 %v440
    %v1864 = vunpack.c.l.b16 %v441
    %v1865 = vunpack.c.h.b16 %v441
    %v1866 = vunpack.c.l.b16 %v442
    %v1867 = vunpack.c.h.b16 %v442
    %v1868 = vunpack.c.l.b16 %v443
    %v1869 = vunpack.c.h.b16 %v443
    %v1870 = vunpack.c.l.b16 %v444
    %v1871 = vunpack.c.h.b16 %v444
    %v1872 = vunpack.c.l.b16 %v445
    %v1873 = vunpack.c.h.b16 %v445
    %v1874 = vunpack.c.l.b16 %v446
    %v1875 = vunpack.c.h.b16 %v446
    %v1876 = vunpack.c.l.b16 %v447
    %v1877 = vunpack.c.h.b16 %v447
    %v1878 = vunpack.c.l.b16 %v448
    %v1879 = vunpack.c.h.b16 %v448
    %v1880 = vunpack.c.l.b16 %v449
    %v1881 = vunpack.c.h.b16 %v449
    %v1882 = vunpack.c.l.b16 %v450
    %v1883 = vunpack.c.h.b16 %v450
    %v1884 = vunpack.c.l.b16 %v451
    %v1885 = vunpack.c.h.b16 %v451
    %v1886 = vunpack.c.l.b16 %v452
    %v1887 = vunpack.c.h.b16 %v452
    %v1888 = vunpack.c.l.b16 %v453
    %v1889 = vunpack.c.h.b16 %v453
    %v1890 = vunpack.c.l.b16 %v454
    %v1891 = vunpack.c.h.b16 %v454
    %v1892 = vunpack.c.l.b16 %v455
    %v1893 = vunpack.c.h.b16 %v455
    %v1894 = vunpack.c.l.b16 %v456
    %v1895 = vunpack.c.h.b16 %v456
    %v1896 = vunpack.c.l.b16 %v457
    %v1897 = vunpack.c.h.b16 %v457
    %v1898 = vunpack.c.l.b16 %v458
    %v1899 = vunpack.c.h.b16 %v458
    %v1900 = vunpack.c.l.b16 %v459
    %v1901 = vunpack.c.h.b16 %v459
    %v1902 = vunpack.c.l.b16 %v460
    %v1903 = vunpack.c.h.b16 %v460
    %v1904 = vunpack.c.l.b16 %v461
    %v1905 = vunpack.c.h.b16 %v461
    %v1906 = vunpack.c.l.b16 %v462
    %v1907 = vunpack.c.h.b16 %v462
    %v1908 = vunpack.c.l.b16 %v463
    %v1909 = vunpack.c.h.b16 %v463
    %v1910 = vunpack.c.l.b16 %v464
    %v1911 = vunpack.c.h.b16 %v464
    %v1912 = vunpack.c.l.b16 %v465
    %v1913 = vunpack.c.h.b16 %v465
    %v1914 = vunpack.c.l.b16 %v466
    %v1915 = vunpack.c.h.b16 %v466
    %v1916 = vunpack.c.l.b16 %v467
    %v1917 = vunpack.c.h.b16 %v467
    %v1918 = vunpack.c.l.b16 %v468
    %v1919 = vunpack.c.h.b16 %v468
    %v1920 = vunpack.c.l.b16 %v469
    %v1921 = vunpack.c.h.b16 %v469
    %v1922 = vunpack.c.l.b16 %v470
    %v1923 = vunpack.c.h.b16 %v470
    %v1924 = vunpack.c.l.b16 %v471
    %v1925 = vunpack.c.h.b16 %v471
    %v1926 = vunpack.c.l.b16 %v472
    %v1927 = vunpack.c.h.b16 %v472
    %v1928 = vunpack.c.l.b16 %v473
    %v1929 = vunpack.c.h.b16 %v473
    %v1930 = vunpack.c.l.b16 %v474
    %v1931 = vunpack.c.h.b16 %v474
    %v1932 = vunpack.c.l.b16 %v475
    %v1933 = vunpack.c.h.b16 %v475
    %v1934 = vunpack.c.l.b16 %v476
    %v1935 = vunpack.c.h.b16 %v476
    %v1936 = vunpack.c.l.b16 %v477
    %v1937 = vunpack.c.h.b16 %v477
    %v1938 = vunpack.c.l.b16 %v478
    %v1939 = vunpack.c.h.b16 %v478
    %v1940 = vunpack.c.l.b16 %v479
    %v1941 = vunpack.c.h.b16 %v479
    %v1942 = vunpack.c.l.b16 %v480
    %v1943 = vunpack.c.h.b16 %v480
    %v1944 = vunpack.c.l.b16 %v481
    %v1945 = vunpack.c.h.b16 %v481
    %v1946 = vunpack.c.l.b16 %v482
    %v1947 = vunpack.c.h.b16 %v482
    %v1948 = vunpack.c.l.b16 %v483
    %v1949 = vunpack.c.h.b16 %v483
    %v1950 = vunpack.c.l.b16 %v484
    %v1951 = vunpack.c.h.b16 %v484
    %v1952 = vunpack.c.l.b16 %v485
    %v1953 = vunpack.c.h.b16 %v485
    %v1954 = vunpack.c.l.b16 %v486
    %v1955 = vunpack.c.h.b16 %v486
    %v1956 = vunpack.c.l.b16 %v487
    %v1957 = vunpack.c.h.b16 %v487
    %v1958 = vunpack.c.l.b16 %v488
    %v1959 = vunpack.c.h.b16 %v488
    %v1960 = vunpack.c.l.b16 %v489
    %v1961 = vunpack.c.h.b16 %v489
    %v1962 = vunpack.c.l.b16 %v490
    %v1963 = vunpack.c.h.b16 %v490
    %v1964 = vunpack.c.l.b16 %v491
    %v1965 = vunpack.c.h.b16 %v491
    %v1966 = vunpack.c.l.b16 %v492
    %v1967 = vunpack.c.h.b16 %v492
    %v1968 = vunpack.c.l.b16 %v493
    %v1969 = vunpack.c.h.b16 %v493
    %v1970 = vunpack.c.l.b16 %v494
    %v1971 = vunpack.c.h.b16 %v494
    %v1972 = vunpack.c.l.b16 %v495
    %v1973 = vunpack.c.h.b16 %v495
    %v1974 = vunpack.c.l.b16 %v496
    %v1975 = vunpack.c.h.b16 %v496
    %v1976 = vunpack.c.l.b16 %v497
    %v1977 = vunpack.c.h.b16 %v497
    %v1978 = vunpack.c.l.b16 %v498
    %v1979 = vunpack.c.h.b16 %v498
    %v1980 = vunpack.c.l.b16 %v499
    %v1981 = vunpack.c.h.b16 %v499
    %v1982 = vunpack.c.l.b16 %v500
    %v1983 = vunpack.c.h.b16 %v500
    %v1984 = vunpack.c.l.b16 %v501
    %v1985 = vunpack.c.h.b16 %v501
    %v1986 = vunpack.c.l.b16 %v502
    %v1987 = vunpack.c.h.b16 %v502
    %v1988 = vunpack.c.l.b16 %v503
    %v1989 = vunpack.c.h.b16 %v503
    %v1990 = vunpack.c.l.b16 %v504
    %v1991 = vunpack.c.h.b16 %v504
    %v1992 = vunpack.c.l.b16 %v505
    %v1993 = vunpack.c.h.b16 %v505
    %v1994 = vunpack.c.l.b16 %v506
    %v1995 = vunpack.c.h.b16 %v506
    %v1996 = vunpack.c.l.b16 %v507
    %v1997 = vunpack.c.h.b16 %v507
    %v1998 = vunpack.c.l.b16 %v508
    %v1999 = vunpack.c.h.b16 %v508
    %v2000 = vunpack.c.l.b16 %v509
    %v2001 = vunpack.c.h.b16 %v509
    %v2002 = vunpack.c.l.b16 %v510
    %v2003 = vunpack.c.h.b16 %v510
    %v2004 = vunpack.c.l.b16 %v511
    %v2005 = vunpack.c.h.b16 %v511
    %v2006 = vunpack.c.l.b16 %v512
    %v2007 = vunpack.c.h.b16 %v512
    %v2008 = vunpack.c.l.b16 %v513
    %v2009 = vunpack.c.h.b16 %v513
    %v2010 = vunpack.c.l.b16 %v514
    %v2011 = vunpack.c.h.b16 %v514
    %v2012 = vunpack.c.l.b16 %v515
    %v2013 = vunpack.c.h.b16 %v515
    %v2014 = vunpack.c.l.b16 %v516
    %v2015 = vunpack.c.h.b16 %v516
    %v2016 = vunpack.c.l.b16 %v517
    %v2017 = vunpack.c.h.b16 %v517
    %v2018 = vunpack.c.l.b16 %v518
    %v2019 = vunpack.c.h.b16 %v518
    %v2020 = vunpack.c.l.b16 %v519
    %v2021 = vunpack.c.h.b16 %v519
    %v2022 = vunpack.c.l.b16 %v520
    %v2023 = vunpack.c.h.b16 %v520
    %v2024 = vunpack.c.l.b16 %v521
    %v2025 = vunpack.c.h.b16 %v521
    %v2026 = vunpack.c.l.b16 %v522
    %v2027 = vunpack.c.h.b16 %v522
    %v2028 = vunpack.c.l.b16 %v523
    %v2029 = vunpack.c.h.b16 %v523
    %v2030 = vunpack.c.l.b16 %v524
    %v2031 = vunpack.c.h.b16 %v524
    %v2032 = vunpack.c.l.b16 %v525
    %v2033 = vunpack.c.h.b16 %v525
    %v2034 = vunpack.c.l.b16 %v526
    %v2035 = vunpack.c.h.b16 %v526
    %v2036 = vunpack.c.l.b16 %v527
    %v2037 = vunpack.c.h.b16 %v527
    %v2038 = vunpack.c.l.b16 %v528
    %v2039 = vunpack.c.h.b16 %v528
    %v2040 = vunpack.c.l.b16 %v529
    %v2041 = vunpack.c.h.b16 %v529
    %v2042 = vunpack.c.l.b16 %v530
    %v2043 = vunpack.c.h.b16 %v530
    %v2044 = vunpack.c.l.b16 %v531
    %v2045 = vunpack.c.h.b16 %v531
    %v2046 = vunpack.c.l.b16 %v532
    %v2047 = vunpack.c.h.b16 %v532
    %v2048 = vunpack.c.l.b16 %v533
    %v2049 = vunpack.c.h.b16 %v533
    %v2050 = vunpack.c.l.b16 %v534
    %v2051 = vunpack.c.h.b16 %v534
    %v2052 = vunpack.c.l.b16 %v535
    %v2053 = vunpack.c.h.b16 %v535
    %v2054 = vunpack.c.l.b16 %v536
    %v2055 = vunpack.c.h.b16 %v536
    %v2056 = vunpack.c.l.b16 %v537
    %v2057 = vunpack.c.h.b16 %v537
    %v2058 = vunpack.c.l.b16 %v538
    %v2059 = vunpack.c.h.b16 %v538
    %v2060 = vunpack.c.l.b16 %v539
    %v2061 = vunpack.c.h.b16 %v539
    %v2062 = vunpack.c.l.b16 %v540
    %v2063 = vunpack.c.h.b16 %v540
    %v2064 = vunpack.c.l.b16 %v541
    %v2065 = vunpack.c.h.b16 %v541
    %v2066 = vunpack.c.l.b16 %v542
    %v2067 = vunpack.c.h.b16 %v542
    %v2068 = vunpack.c.l.b16 %v543
    %v2069 = vunpack.c.h.b16 %v543
    %v2070 = vunpack.c.l.b16 %v544
    %v2071 = vunpack.c.h.b16 %v544
    %v2072 = vunpack.c.l.b16 %v545
    %v2073 = vunpack.c.h.b16 %v545
    %v2074 = vunpack.c.l.b16 %v546
    %v2075 = vunpack.c.h.b16 %v546
    %v2076 = vunpack.c.l.b16 %v547
    %v2077 = vunpack.c.h.b16 %v547
    %v2078 = vunpack.c.l.b16 %v548
    %v2079 = vunpack.c.h.b16 %v548
    %v2080 = vunpack.c.l.b16 %v549
    %v2081 = vunpack.c.h.b16 %v549
    %v2082 = vunpack.c.l.b16 %v550
    %v2083 = vunpack.c.h.b16 %v550
    %v2084 = vunpack.c.l.b16 %v551
    %v2085 = vunpack.c.h.b16 %v551
    %v2086 = vunpack.c.l.b16 %v552
    %v2087 = vunpack.c.h.b16 %v552
    %v2088 = vunpack.c.l.b16 %v553
    %v2089 = vunpack.c.h.b16 %v553
    %v2090 = vunpack.c.l.b16 %v554
    %v2091 = vunpack.c.h.b16 %v554
    %v2092 = vunpack.c.l.b16 %v555
    %v2093 = vunpack.c.h.b16 %v555
    %v2094 = vunpack.c.l.b16 %v556
    %v2095 = vunpack.c.h.b16 %v556
    %v2096 = vunpack.c.l.b16 %v557
    %v2097 = vunpack.c.h.b16 %v557
    %v2098 = vunpack.c.l.b16 %v558
    %v2099 = vunpack.c.h.b16 %v558
    %v2100 = vunpack.c.l.b16 %v559
    %v2101 = vunpack.c.h.b16 %v559
    %v2102 = vunpack.c.l.b16 %v560
    %v2103 = vunpack.c.h.b16 %v560
    %v2104 = vunpack.c.l.b16 %v561
    %v2105 = vunpack.c.h.b16 %v561
    %v2106 = vunpack.c.l.b16 %v562
    %v2107 = vunpack.c.h.b16 %v562
    %v2108 = vunpack.c.l.b16 %v563
    %v2109 = vunpack.c.h.b16 %v563
    %v2110 = vunpack.c.l.b16 %v564
    %v2111 = vunpack.c.h.b16 %v564
    %v2112 = vunpack.c.l.b16 %v565
    %v2113 = vunpack.c.h.b16 %v565
    %v2114 = vunpack.c.l.b16 %v566
    %v2115 = vunpack.c.h.b16 %v566
    %v2116 = vunpack.c.l.b16 %v567
    %v2117 = vunpack.c.h.b16 %v567
    %v2118 = vunpack.c.l.b16 %v568
    %v2119 = vunpack.c.h.b16 %v568
    %v2120 = vunpack.c.l.b16 %v569
    %v2121 = vunpack.c.h.b16 %v569
    %v2122 = vunpack.c.l.b16 %v570
    %v2123 = vunpack.c.h.b16 %v570
    %v2124 = vunpack.c.l.b16 %v571
    %v2125 = vunpack.c.h.b16 %v571
    %v2126 = vunpack.c.l.b16 %v572
    %v2127 = vunpack.c.h.b16 %v572
    %v2128 = vunpack.c.l.b16 %v573
    %v2129 = vunpack.c.h.b16 %v573
    %v2130 = vunpack.c.l.b16 %v574
    %v2131 = vunpack.c.h.b16 %v574
    %v2132 = vunpack.c.l.b16 %v575
    %v2133 = vunpack.c.h.b16 %v575
    %v2134 = vunpack.c.l.b16 %v576
    %v2135 = vunpack.c.h.b16 %v576
    %v2136 = vunpack.c.l.b16 %v577
    %v2137 = vunpack.c.h.b16 %v577
    %v2138 = vunpack.c.l.b16 %v578
    %v2139 = vunpack.c.h.b16 %v578
    %v2140 = vunpack.c.l.b16 %v579
    %v2141 = vunpack.c.h.b16 %v579
    %v2142 = vunpack.c.l.b16 %v580
    %v2143 = vunpack.c.h.b16 %v580
    %v2144 = vunpack.c.l.b16 %v581
    %v2145 = vunpack.c.h.b16 %v581
    %v2146 = vunpack.c.l.b16 %v582
    %v2147 = vunpack.c.h.b16 %v582
    %v2148 = vunpack.c.l.b16 %v583
    %v2149 = vunpack.c.h.b16 %v583
    %v2150 = vunpack.c.l.b16 %v584
    %v2151 = vunpack.c.h.b16 %v584
    %v2152 = vunpack.c.l.b16 %v585
    %v2153 = vunpack.c.h.b16 %v585
    %v2154 = vunpack.c.l.b16 %v586
    %v2155 = vunpack.c.h.b16 %v586
    %v2156 = vunpack.c.l.b16 %v587
    %v2157 = vunpack.c.h.b16 %v587
    %v2158 = vunpack.c.l.b16 %v588
    %v2159 = vunpack.c.h.b16 %v588
    %v2160 = vunpack.c.l.b16 %v589
    %v2161 = vunpack.c.h.b16 %v589
    %v2162 = vunpack.c.l.b16 %v590
    %v2163 = vunpack.c.h.b16 %v590
    %v2164 = vunpack.c.l.b16 %v591
    %v2165 = vunpack.c.h.b16 %v591
    %v2166 = vunpack.c.l.b16 %v592
    %v2167 = vunpack.c.h.b16 %v592
    %v2168 = vunpack.c.l.b16 %v593
    %v2169 = vunpack.c.h.b16 %v593
    %v2170 = vunpack.c.l.b16 %v594
    %v2171 = vunpack.c.h.b16 %v594
    %v2172 = vunpack.c.l.b16 %v595
    %v2173 = vunpack.c.h.b16 %v595
    %v2174 = vunpack.c.l.b16 %v596
    %v2175 = vunpack.c.h.b16 %v596
    %v2176 = vunpack.c.l.b16 %v597
    %v2177 = vunpack.c.h.b16 %v597
    %v2178 = vunpack.c.l.b16 %v598
    %v2179 = vunpack.c.h.b16 %v598
    %v2180 = vunpack.c.l.b16 %v599
    %v2181 = vunpack.c.h.b16 %v599
    %v2182 = vunpack.c.l.b16 %v600
    %v2183 = vunpack.c.h.b16 %v600
    %v2184 = vunpack.c.l.b16 %v601
    %v2185 = vunpack.c.h.b16 %v601
    %v2186 = vunpack.c.l.b16 %v602
    %v2187 = vunpack.c.h.b16 %v602
    %v2188 = vunpack.c.l.b16 %v603
    %v2189 = vunpack.c.h.b16 %v603
    %v2190 = vunpack.c.l.b16 %v604
    %v2191 = vunpack.c.h.b16 %v604
    %v2192 = vunpack.c.l.b16 %v605
    %v2193 = vunpack.c.h.b16 %v605
    %v2194 = vunpack.c.l.b16 %v606
    %v2195 = vunpack.c.h.b16 %v606
    %v2196 = vunpack.c.l.b16 %v607
    %v2197 = vunpack.c.h.b16 %v607
    %v2198 = vunpack.c.l.b16 %v608
    %v2199 = vunpack.c.h.b16 %v608
    %v2200 = vunpack.c.l.b16 %v609
    %v2201 = vunpack.c.h.b16 %v609
    %v2202 = vunpack.c.l.b16 %v610
    %v2203 = vunpack.c.h.b16 %v610
    %v2204 = vunpack.c.l.b16 %v611
    %v2205 = vunpack.c.h.b16 %v611
    %v2206 = vunpack.c.l.b16 %v612
    %v2207 = vunpack.c.h.b16 %v612
    %v2208 = vunpack.c.l.b16 %v613
    %v2209 = vunpack.c.h.b16 %v613
    %v2210 = vpack.c.b16 %v1194, %v1186
    %v2211 = vpack.c.b16 %v1195, %v1187
    %v2212 = vpack.c.b16 %v1196, %v1188
    %v2213 = vpack.c.b16 %v1197, %v1189
    %v2214 = vpack.c.b16 %v1198, %v1190
    %v2215 = vpack.c.b16 %v1199, %v1191
    %v2216 = vpack.c.b16 %v1200, %v1192
    %v2217 = vpack.c.b16 %v1201, %v1193
    %v2218 = vpack.c.b16 %v1210, %v1202
    %v2219 = vpack.c.b16 %v1211, %v1203
    %v2220 = vpack.c.b16 %v1212, %v1204
    %v2221 = vpack.c.b16 %v1213, %v1205
    %v2222 = vpack.c.b16 %v1214, %v1206
    %v2223 = vpack.c.b16 %v1215, %v1207
    %v2224 = vpack.c.b16 %v1216, %v1208
    %v2225 = vpack.c.b16 %v1217, %v1209
    %v2226 = vpack.c.b16 %v1226, %v1218
    %v2227 = vpack.c.b16 %v1227, %v1219
    %v2228 = vpack.c.b16 %v1228, %v1220
    %v2229 = vpack.c.b16 %v1229, %v1221
    %v2230 = vpack.c.b16 %v1230, %v1222
    %v2231 = vpack.c.b16 %v1231, %v1223
    %v2232 = vpack.c.b16 %v1232, %v1224
    %v2233 = vpack.c.b16 %v1233, %v1225
    %v2234 = vpack.c.b16 %v1242, %v1234
    %v2235 = vpack.c.b16 %v1243, %v1235
    %v2236 = vpack.c.b16 %v1244, %v1236
    %v2237 = vpack.c.b16 %v1245, %v1237
    %v2238 = vpack.c.b16 %v1246, %v1238
    %v2239 = vpack.c.b16 %v1247, %v1239
    %v2240 = vpack.c.b16 %v1248, %v1240
    %v2241 = vpack.c.b16 %v1249, %v1241
    %v2242 = vpack.c.b16 %v1258, %v1250
    %v2243 = vpack.c.b16 %v1259, %v1251
    %v2244 = vpack.c.b16 %v1260, %v1252
    %v2245 = vpack.c.b16 %v1261, %v1253
    %v2246 = vpack.c.b16 %v1262, %v1254
    %v2247 = vpack.c.b16 %v1263, %v1255
    %v2248 = vpack.c.b16 %v1264, %v1256
    %v2249 = vpack.c.b16 %v1265, %v1257
    %v2250 = vpack.c.b16 %v1274, %v1266
    %v2251 = vpack.c.b16 %v1275, %v1267
    %v2252 = vpack.c.b16 %v1276, %v1268
    %v2253 = vpack.c.b16 %v1277, %v1269
    %v2254 = vpack.c.b16 %v1278, %v1270
    %v2255 = vpack.c.b16 %v1279, %v1271
    %v2256 = vpack.c.b16 %v1280, %v1272
    %v2257 = vpack.c.b16 %v1281, %v1273
    %v2258 = vpack.c.b16 %v1290, %v1282
    %v2259 = vpack.c.b16 %v1291, %v1283
    %v2260 = vpack.c.b16 %v1292, %v1284
    %v2261 = vpack.c.b16 %v1293, %v1285
    %v2262 = vpack.c.b16 %v1294, %v1286
    %v2263 = vpack.c.b16 %v1295, %v1287
    %v2264 = vpack.c.b16 %v1296, %v1288
    %v2265 = vpack.c.b16 %v1297, %v1289
    %v2266 = vpack.c.b16 %v1306, %v1298
    %v2267 = vpack.c.b16 %v1307, %v1299
    %v2268 = vpack.c.b16 %v1308, %v1300
    %v2269 = vpack.c.b16 %v1309, %v1301
    %v2270 = vpack.c.b16 %v1310, %v1302
    %v2271 = vpack.c.b16 %v1311, %v1303
    %v2272 = vpack.c.b16 %v1312, %v1304
    %v2273 = vpack.c.b16 %v1313, %v1305
    %v2274 = vpack.c.b16 %v1322, %v1314
    %v2275 = vpack.c.b16 %v1323, %v1315
    %v2276 = vpack.c.b16 %v1324, %v1316
    %v2277 = vpack.c.b16 %v1325, %v1317
    %v2278 = vpack.c.b16 %v1326, %v1318
    %v2279 = vpack.c.b16 %v1327, %v1319
    %v2280 = vpack.c.b16 %v1328, %v1320
    %v2281 = vpack.c.b16 %v1329, %v1321
    %v2282 = vpack.c.b16 %v1338, %v1330
    %v2283 = vpack.c.b16 %v1339, %v1331
    %v2284 = vpack.c.b16 %v1340, %v1332
    %v2285 = vpack.c.b16 %v1341, %v1333
    %v2286 = vpack.c.b16 %v1342, %v1334
    %v2287 = vpack.c.b16 %v1343, %v1335
    %v2288 = vpack.c.b16 %v1344, %v1336
    %v2289 = vpack.c.b16 %v1345, %v1337
    %v2290 = vpack.c.b16 %v1354, %v1346
    %v2291 = vpack.c.b16 %v1355, %v1347
    %v2292 = vpack.c.b16 %v1356, %v1348
    %v2293 = vpack.c.b16 %v1357, %v1349
    %v2294 = vpack.c.b16 %v1358, %v1350
    %v2295 = vpack.c.b16 %v1359, %v1351
    %v2296 = vpack.c.b16 %v1360, %v1352
    %v2297 = vpack.c.b16 %v1361, %v1353
    %v2298 = vpack.c.b16 %v1370, %v1362
    %v2299 = vpack.c.b16 %v1371, %v1363
    %v2300 = vpack.c.b16 %v1372, %v1364
    %v2301 = vpack.c.b16 %v1373, %v1365
    %v2302 = vpack.c.b16 %v1374, %v1366
    %v2303 = vpack.c.b16 %v1375, %v1367
    %v2304 = vpack.c.b16 %v1376, %v1368
    %v2305 = vpack.c.b16 %v1377, %v1369
    %v2306 = vpack.c.b16 %v1386, %v1378
    %v2307 = vpack.c.b16 %v1387, %v1379
    %v2308 = vpack.c.b16 %v1388, %v1380
    %v2309 = vpack.c.b16 %v1389, %v1381
    %v2310 = vpack.c.b16 %v1390, %v1382
    %v2311 = vpack.c.b16 %v1391, %v1383
    %v2312 = vpack.c.b16 %v1392, %v1384
    %v2313 = vpack.c.b16 %v1393, %v1385
    %v2314 = vpack.c.b16 %v1402, %v1394
    %v2315 = vpack.c.b16 %v1403, %v1395
    %v2316 = vpack.c.b16 %v1404, %v1396
    %v2317 = vpack.c.b16 %v1405, %v1397
    %v2318 = vpack.c.b16 %v1406, %v1398
    %v2319 = vpack.c.b16 %v1407, %v1399
    %v2320 = vpack.c.b16 %v1408, %v1400
    %v2321 = vpack.c.b16 %v1409, %v1401
    %v2322 = vpack.c.b16 %v1418, %v1410
    %v2323 = vpack.c.b16 %v1419, %v1411
    %v2324 = vpack.c.b16 %v1420, %v1412
    %v2325 = vpack.c.b16 %v1421, %v1413
    %v2326 = vpack.c.b16 %v1422, %v1414
    %v2327 = vpack.c.b16 %v1423, %v1415
    %v2328 = vpack.c.b16 %v1424, %v1416
    %v2329 = vpack.c.b16 %v1425, %v1417
    %v2330 = vpack.c.b16 %v1434, %v1426
    %v2331 = vpack.c.b16 %v1435, %v1427
    %v2332 = vpack.c.b16 %v1436, %v1428
    %v2333 = vpack.c.b16 %v1437, %v1429
    %v2334 = vpack.c.b16 %v1438, %v1430
    %v2335 = vpack.c.b16 %v1439, %v1431
    %v2336 = vpack.c.b16 %v1440, %v1432
    %v2337 = vpack.c.b16 %v1441, %v1433
    %v2338 = vpack.c.b16 %v1450, %v1442
    %v2339 = vpack.c.b16 %v1451, %v1443
    %v2340 = vpack.c.b16 %v1452, %v1444
    %v2341 = vpack.c.b16 %v1453, %v1445
    %v2342 = vpack.c.b16 %v1454, %v1446
    %v2343 = vpack.c.b16 %v1455, %v1447
    %v2344 = vpack.c.b16 %v1456, %v1448
    %v2345 = vpack.c.b16 %v1457, %v1449
    %v2346 = vpack.c.b16 %v1466, %v1458
    %v2347 = vpack.c.b16 %v1467, %v1459
    %v2348 = vpack.c.b16 %v1468, %v1460
    %v2349 = vpack.c.b16 %v1469, %v1461
    %v2350 = vpack.c.b16 %v1470, %v1462
    %v2351 = vpack.c.b16 %v1471, %v1463
    %v2352 = vpack.c.b16 %v1472, %v1464
    %v2353 = vpack.c.b16 %v1473, %v1465
    %v2354 = vpack.c.b16 %v1482, %v1474
    %v2355 = vpack.c.b16 %v1483, %v1475
    %v2356 = vpack.c.b16 %v1484, %v1476
    %v2357 = vpack.c.b16 %v1485, %v1477
    %v2358 = vpack.c.b16 %v1486, %v1478
    %v2359 = vpack.c.b16 %v1487, %v1479
    %v2360 = vpack.c.b16 %v1488, %v1480
    %v2361 = vpack.c.b16 %v1489, %v1481
    %v2362 = vpack.c.b16 %v1498, %v1490
    %v2363 = vpack.c.b16 %v1499, %v1491
    %v2364 = vpack.c.b16 %v1500, %v1492
    %v2365 = vpack.c.b16 %v1501, %v1493
    %v2366 = vpack.c.b16 %v1502, %v1494
    %v2367 = vpack.c.b16 %v1503, %v1495
    %v2368 = vpack.c.b16 %v1504, %v1496
    %v2369 = vpack.c.b16 %v1505, %v1497
    %v2370 = vpack.c.b16 %v1514, %v1506
    %v2371 = vpack.c.b16 %v1515, %v1507
    %v2372 = vpack.c.b16 %v1516, %v1508
    %v2373 = vpack.c.b16 %v1517, %v1509
    %v2374 = vpack.c.b16 %v1518, %v1510
    %v2375 = vpack.c.b16 %v1519, %v1511
    %v2376 = vpack.c.b16 %v1520, %v1512
    %v2377 = vpack.c.b16 %v1521, %v1513
    %v2378 = vpack.c.b16 %v1530, %v1522
    %v2379 = vpack.c.b16 %v1531, %v1523
    %v2380 = vpack.c.b16 %v1532, %v1524
    %v2381 = vpack.c.b16 %v1533, %v1525
    %v2382 = vpack.c.b16 %v1534, %v1526
    %v2383 = vpack.c.b16 %v1535, %v1527
    %v2384 = vpack.c.b16 %v1536, %v1528
    %v2385 = vpack.c.b16 %v1537, %v1529
    %v2386 = vpack.c.b16 %v1546, %v1538
    %v2387 = vpack.c.b16 %v1547, %v1539
    %v2388 = vpack.c.b16 %v1548, %v1540
    %v2389 = vpack.c.b16 %v1549, %v1541
    %v2390 = vpack.c.b16 %v1550, %v1542
    %v2391 = vpack.c.b16 %v1551, %v1543
    %v2392 = vpack.c.b16 %v1552, %v1544
    %v2393 = vpack.c.b16 %v1553, %v1545
    %v2394 = vpack.c.b16 %v1562, %v1554
    %v2395 = vpack.c.b16 %v1563, %v1555
    %v2396 = vpack.c.b16 %v1564, %v1556
    %v2397 = vpack.c.b16 %v1565, %v1557
    %v2398 = vpack.c.b16 %v1566, %v1558
    %v2399 = vpack.c.b16 %v1567, %v1559
    %v2400 = vpack.c.b16 %v1568, %v1560
    %v2401 = vpack.c.b16 %v1569, %v1561
    %v2402 = vpack.c.b16 %v1578, %v1570
    %v2403 = vpack.c.b16 %v1579, %v1571
    %v2404 = vpack.c.b16 %v1580, %v1572
    %v2405 = vpack.c.b16 %v1581, %v1573
    %v2406 = vpack.c.b16 %v1582, %v1574
    %v2407 = vpack.c.b16 %v1583, %v1575
    %v2408 = vpack.c.b16 %v1584, %v1576
    %v2409 = vpack.c.b16 %v1585, %v1577
    %v2410 = vpack.c.b16 %v1594, %v1586
    %v2411 = vpack.c.b16 %v1595, %v1587
    %v2412 = vpack.c.b16 %v1596, %v1588
    %v2413 = vpack.c.b16 %v1597, %v1589
    %v2414 = vpack.c.b16 %v1598, %v1590
    %v2415 = vpack.c.b16 %v1599, %v1591
    %v2416 = vpack.c.b16 %v1600, %v1592
    %v2417 = vpack.c.b16 %v1601, %v1593
    %v2418 = vpack.c.b16 %v1610, %v1602
    %v2419 = vpack.c.b16 %v1611, %v1603
    %v2420 = vpack.c.b16 %v1612, %v1604
    %v2421 = vpack.c.b16 %v1613, %v1605
    %v2422 = vpack.c.b16 %v1614, %v1606
    %v2423 = vpack.c.b16 %v1615, %v1607
    %v2424 = vpack.c.b16 %v1616, %v1608
    %v2425 = vpack.c.b16 %v1617, %v1609
    %v2426 = vpack.c.b16 %v1626, %v1618
    %v2427 = vpack.c.b16 %v1627, %v1619
    %v2428 = vpack.c.b16 %v1628, %v1620
    %v2429 = vpack.c.b16 %v1629, %v1621
    %v2430 = vpack.c.b16 %v1630, %v1622
    %v2431 = vpack.c.b16 %v1631, %v1623
    %v2432 = vpack.c.b16 %v1632, %v1624
    %v2433 = vpack.c.b16 %v1633, %v1625
    %v2434 = vpack.c.b16 %v1642, %v1634
    %v2435 = vpack.c.b16 %v1643, %v1635
    %v2436 = vpack.c.b16 %v1644, %v1636
    %v2437 = vpack.c.b16 %v1645, %v1637
    %v2438 = vpack.c.b16 %v1646, %v1638
    %v2439 = vpack.c.b16 %v1647, %v1639
    %v2440 = vpack.c.b16 %v1648, %v1640
    %v2441 = vpack.c.b16 %v1649, %v1641
    %v2442 = vpack.c.b16 %v1658, %v1650
    %v2443 = vpack.c.b16 %v1659, %v1651
    %v2444 = vpack.c.b16 %v1660, %v1652
    %v2445 = vpack.c.b16 %v1661, %v1653
    %v2446 = vpack.c.b16 %v1662, %v1654
    %v2447 = vpack.c.b16 %v1663, %v1655
    %v2448 = vpack.c.b16 %v1664, %v1656
    %v2449 = vpack.c.b16 %v1665, %v1657
    %v2450 = vpack.c.b16 %v1674, %v1666
    %v2451 = vpack.c.b16 %v1675, %v1667
    %v2452 = vpack.c.b16 %v1676, %v1668
    %v2453 = vpack.c.b16 %v1677, %v1669
    %v2454 = vpack.c.b16 %v1678, %v1670
    %v2455 = vpack.c.b16 %v1679, %v1671
    %v2456 = vpack.c.b16 %v1680, %v1672
    %v2457 = vpack.c.b16 %v1681, %v1673
    %v2458 = vpack.c.b16 %v1690, %v1682
    %v2459 = vpack.c.b16 %v1691, %v1683
    %v2460 = vpack.c.b16 %v1692, %v1684
    %v2461 = vpack.c.b16 %v1693, %v1685
    %v2462 = vpack.c.b16 %v1694, %v1686
    %v2463 = vpack.c.b16 %v1695, %v1687
    %v2464 = vpack.c.b16 %v1696, %v1688
    %v2465 = vpack.c.b16 %v1697, %v1689
    %v2466 = vpack.c.b16 %v1706, %v1698
    %v2467 = vpack.c.b16 %v1707, %v1699
    %v2468 = vpack.c.b16 %v1708, %v1700
    %v2469 = vpack.c.b16 %v1709, %v1701
    %v2470 = vpack.c.b16 %v1710, %v1702
    %v2471 = vpack.c.b16 %v1711, %v1703
    %v2472 = vpack.c.b16 %v1712, %v1704
    %v2473 = vpack.c.b16 %v1713, %v1705
    %v2474 = vpack.c.b16 %v1722, %v1714
    %v2475 = vpack.c.b16 %v1723, %v1715
    %v2476 = vpack.c.b16 %v1724, %v1716
    %v2477 = vpack.c.b16 %v1725, %v1717
    %v2478 = vpack.c.b16 %v1726, %v1718
    %v2479 = vpack.c.b16 %v1727, %v1719
    %v2480 = vpack.c.b16 %v1728, %v1720
    %v2481 = vpack.c.b16 %v1729, %v1721
    %v2482 = vpack.c.b16 %v1738, %v1730
    %v2483 = vpack.c.b16 %v1739, %v1731
    %v2484 = vpack.c.b16 %v1740, %v1732
    %v2485 = vpack.c.b16 %v1741, %v1733
    %v2486 = vpack.c.b16 %v1742, %v1734
    %v2487 = vpack.c.b16 %v1743, %v1735
    %v2488 = vpack.c.b16 %v1744, %v1736
    %v2489 = vpack.c.b16 %v1745, %v1737
    %v2490 = vpack.c.b16 %v1754, %v1746
    %v2491 = vpack.c.b16 %v1755, %v1747
    %v2492 = vpack.c.b16 %v1756, %v1748
    %v2493 = vpack.c.b16 %v1757, %v1749
    %v2494 = vpack.c.b16 %v1758, %v1750
    %v2495 = vpack.c.b16 %v1759, %v1751
    %v2496 = vpack.c.b16 %v1760, %v1752
    %v2497 = vpack.c.b16 %v1761, %v1753
    %v2498 = vpack.c.b16 %v1770, %v1762
    %v2499 = vpack.c.b16 %v1771, %v1763
    %v2500 = vpack.c.b16 %v1772, %v1764
    %v2501 = vpack.c.b16 %v1773, %v1765
    %v2502 = vpack.c.b16 %v1774, %v1766
    %v2503 = vpack.c.b16 %v1775, %v1767
    %v2504 = vpack.c.b16 %v1776, %v1768
    %v2505 = vpack.c.b16 %v1777, %v1769
    %v2506 = vpack.c.b16 %v1786, %v1778
    %v2507 = vpack.c.b16 %v1787, %v1779
    %v2508 = vpack.c.b16 %v1788, %v1780
    %v2509 = vpack.c.b16 %v1789, %v1781
    %v2510 = vpack.c.b16 %v1790, %v1782
    %v2511 = vpack.c.b16 %v1791, %v1783
    %v2512 = vpack.c.b16 %v1792, %v1784
    %v2513 = vpack.c.b16 %v1793, %v1785
    %v2514 = vpack.c.b16 %v1802, %v1794
    %v2515 = vpack.c.b16 %v1803, %v1795
    %v2516 = vpack.c.b16 %v1804, %v1796
    %v2517 = vpack.c.b16 %v1805, %v1797
    %v2518 = vpack.c.b16 %v1806, %v1798
    %v2519 = vpack.c.b16 %v1807, %v1799
    %v2520 = vpack.c.b16 %v1808, %v1800
    %v2521 = vpack.c.b16 %v1809, %v1801
    %v2522 = vpack.c.b16 %v1818, %v1810
    %v2523 = vpack.c.b16 %v1819, %v1811
    %v2524 = vpack.c.b16 %v1820, %v1812
    %v2525 = vpack.c.b16 %v1821, %v1813
    %v2526 = vpack.c.b16 %v1822, %v1814
    %v2527 = vpack.c.b16 %v1823, %v1815
    %v2528 = vpack.c.b16 %v1824, %v1816
    %v2529 = vpack.c.b16 %v1825, %v1817
    %v2530 = vpack.c.b16 %v1834, %v1826
    %v2531 = vpack.c.b16 %v1835, %v1827
    %v2532 = vpack.c.b16 %v1836, %v1828
    %v2533 = vpack.c.b16 %v1837, %v1829
    %v2534 = vpack.c.b16 %v1838, %v1830
    %v2535 = vpack.c.b16 %v1839, %v1831
    %v2536 = vpack.c.b16 %v1840, %v1832
    %v2537 = vpack.c.b16 %v1841, %v1833
    %v2538 = vpack.c.b16 %v1850, %v1842
    %v2539 = vpack.c.b16 %v1851, %v1843
    %v2540 = vpack.c.b16 %v1852, %v1844
    %v2541 = vpack.c.b16 %v1853, %v1845
    %v2542 = vpack.c.b16 %v1854, %v1846
    %v2543 = vpack.c.b16 %v1855, %v1847
    %v2544 = vpack.c.b16 %v1856, %v1848
    %v2545 = vpack.c.b16 %v1857, %v1849
    %v2546 = vpack.c.b16 %v1866, %v1858
    %v2547 = vpack.c.b16 %v1867, %v1859
    %v2548 = vpack.c.b16 %v1868, %v1860
    %v2549 = vpack.c.b16 %v1869, %v1861
    %v2550 = vpack.c.b16 %v1870, %v1862
    %v2551 = vpack.c.b16 %v1871, %v1863
    %v2552 = vpack.c.b16 %v1872, %v1864
    %v2553 = vpack.c.b16 %v1873, %v1865
    %v2554 = vpack.c.b16 %v1882, %v1874
    %v2555 = vpack.c.b16 %v1883, %v1875
    %v2556 = vpack.c.b16 %v1884, %v1876
    %v2557 = vpack.c.b16 %v1885, %v1877
    %v2558 = vpack.c.b16 %v1886, %v1878
    %v2559 = vpack.c.b16 %v1887, %v1879
    %v2560 = vpack.c.b16 %v1888, %v1880
    %v2561 = vpack.c.b16 %v1889, %v1881
    %v2562 = vpack.c.b16 %v1898, %v1890
    %v2563 = vpack.c.b16 %v1899, %v1891
    %v2564 = vpack.c.b16 %v1900, %v1892
    %v2565 = vpack.c.b16 %v1901, %v1893
    %v2566 = vpack.c.b16 %v1902, %v1894
    %v2567 = vpack.c.b16 %v1903, %v1895
    %v2568 = vpack.c.b16 %v1904, %v1896
    %v2569 = vpack.c.b16 %v1905, %v1897
    %v2570 = vpack.c.b16 %v1914, %v1906
    %v2571 = vpack.c.b16 %v1915, %v1907
    %v2572 = vpack.c.b16 %v1916, %v1908
    %v2573 = vpack.c.b16 %v1917, %v1909
    %v2574 = vpack.c.b16 %v1918, %v1910
    %v2575 = vpack.c.b16 %v1919, %v1911
    %v2576 = vpack.c.b16 %v1920, %v1912
    %v2577 = vpack.c.b16 %v1921, %v1913
    %v2578 = vpack.c.b16 %v1930, %v1922
    %v2579 = vpack.c.b16 %v1931, %v1923
    %v2580 = vpack.c.b16 %v1932, %v1924
    %v2581 = vpack.c.b16 %v1933, %v1925
    %v2582 = vpack.c.b16 %v1934, %v1926
    %v2583 = vpack.c.b16 %v1935, %v1927
    %v2584 = vpack.c.b16 %v1936, %v1928
    %v2585 = vpack.c.b16 %v1937, %v1929
    %v2586 = vpack.c.b16 %v1946, %v1938
    %v2587 = vpack.c.b16 %v1947, %v1939
    %v2588 = vpack.c.b16 %v1948, %v1940
    %v2589 = vpack.c.b16 %v1949, %v1941
    %v2590 = vpack.c.b16 %v1950, %v1942
    %v2591 = vpack.c.b16 %v1951, %v1943
    %v2592 = vpack.c.b16 %v1952, %v1944
    %v2593 = vpack.c.b16 %v1953, %v1945
    %v2594 = vpack.c.b16 %v1962, %v1954
    %v2595 = vpack.c.b16 %v1963, %v1955
    %v2596 = vpack.c.b16 %v1964, %v1956
    %v2597 = vpack.c.b16 %v1965, %v1957
    %v2598 = vpack.c.b16 %v1966, %v1958
    %v2599 = vpack.c.b16 %v1967, %v1959
    %v2600 = vpack.c.b16 %v1968, %v1960
    %v2601 = vpack.c.b16 %v1969, %v1961
    %v2602 = vpack.c.b16 %v1978, %v1970
    %v2603 = vpack.c.b16 %v1979, %v1971
    %v2604 = vpack.c.b16 %v1980, %v1972
    %v2605 = vpack.c.b16 %v1981, %v1973
    %v2606 = vpack.c.b16 %v1982, %v1974
    %v2607 = vpack.c.b16 %v1983, %v1975
    %v2608 = vpack.c.b16 %v1984, %v1976
    %v2609 = vpack.c.b16 %v1985, %v1977
    %v2610 = vpack.c.b16 %v1994, %v1986
    %v2611 = vpack.c.b16 %v1995, %v1987
    %v2612 = vpack.c.b16 %v1996, %v1988
    %v2613 = vpack.c.b16 %v1997, %v1989
    %v2614 = vpack.c.b16 %v1998, %v1990
    %v2615 = vpack.c.b16 %v1999, %v1991
    %v2616 = vpack.c.b16 %v2000, %v1992
    %v2617 = vpack.c.b16 %v2001, %v1993
    %v2618 = vpack.c.b16 %v2010, %v2002
    %v2619 = vpack.c.b16 %v2011, %v2003
    %v2620 = vpack.c.b16 %v2012, %v2004
    %v2621 = vpack.c.b16 %v2013, %v2005
    %v2622 = vpack.c.b16 %v2014, %v2006
    %v2623 = vpack.c.b16 %v2015, %v2007
    %v2624 = vpack.c.b16 %v2016, %v2008
    %v2625 = vpack.c.b16 %v2017, %v2009
    %v2626 = vpack.c.b16 %v2026, %v2018
    %v2627 = vpack.c.b16 %v2027, %v2019
    %v2628 = vpack.c.b16 %v2028, %v2020
    %v2629 = vpack.c.b16 %v2029, %v2021
    %v2630 = vpack.c.b16 %v2030, %v2022
    %v2631 = vpack.c.b16 %v2031, %v2023
    %v2632 = vpack.c.b16 %v2032, %v2024
    %v2633 = vpack.c.b16 %v2033, %v2025
    %v2634 = vpack.c.b16 %v2042, %v2034
    %v2635 = vpack.c.b16 %v2043, %v2035
    %v2636 = vpack.c.b16 %v2044, %v2036
    %v2637 = vpack.c.b16 %v2045, %v2037
    %v2638 = vpack.c.b16 %v2046, %v2038
    %v2639 = vpack.c.b16 %v2047, %v2039
    %v2640 = vpack.c.b16 %v2048, %v2040
    %v2641 = vpack.c.b16 %v2049, %v2041
    %v2642 = vpack.c.b16 %v2058, %v2050
    %v2643 = vpack.c.b16 %v2059, %v2051
    %v2644 = vpack.c.b16 %v2060, %v2052
    %v2645 = vpack.c.b16 %v2061, %v2053
    %v2646 = vpack.c.b16 %v2062, %v2054
    %v2647 = vpack.c.b16 %v2063, %v2055
    %v2648 = vpack.c.b16 %v2064, %v2056
    %v2649 = vpack.c.b16 %v2065, %v2057
    %v2650 = vpack.c.b16 %v2074, %v2066
    %v2651 = vpack.c.b16 %v2075, %v2067
    %v2652 = vpack.c.b16 %v2076, %v2068
    %v2653 = vpack.c.b16 %v2077, %v2069
    %v2654 = vpack.c.b16 %v2078, %v2070
    %v2655 = vpack.c.b16 %v2079, %v2071
    %v2656 = vpack.c.b16 %v2080, %v2072
    %v2657 = vpack.c.b16 %v2081, %v2073
    %v2658 = vpack.c.b16 %v2090, %v2082
    %v2659 = vpack.c.b16 %v2091, %v2083
    %v2660 = vpack.c.b16 %v2092, %v2084
    %v2661 = vpack.c.b16 %v2093, %v2085
    %v2662 = vpack.c.b16 %v2094, %v2086
    %v2663 = vpack.c.b16 %v2095, %v2087
    %v2664 = vpack.c.b16 %v2096, %v2088
    %v2665 = vpack.c.b16 %v2097, %v2089
    %v2666 = vpack.c.b16 %v2106, %v2098
    %v2667 = vpack.c.b16 %v2107, %v2099
    %v2668 = vpack.c.b16 %v2108, %v2100
    %v2669 = vpack.c.b16 %v2109, %v2101
    %v2670 = vpack.c.b16 %v2110, %v2102
    %v2671 = vpack.c.b16 %v2111, %v2103
    %v2672 = vpack.c.b16 %v2112, %v2104
    %v2673 = vpack.c.b16 %v2113, %v2105
    %v2674 = vpack.c.b16 %v2122, %v2114
    %v2675 = vpack.c.b16 %v2123, %v2115
    %v2676 = vpack.c.b16 %v2124, %v2116
    %v2677 = vpack.c.b16 %v2125, %v2117
    %v2678 = vpack.c.b16 %v2126, %v2118
    %v2679 = vpack.c.b16 %v2127, %v2119
    %v2680 = vpack.c.b16 %v2128, %v2120
    %v2681 = vpack.c.b16 %v2129, %v2121
    %v2682 = vpack.c.b16 %v2138, %v2130
    %v2683 = vpack.c.b16 %v2139, %v2131
    %v2684 = vpack.c.b16 %v2140, %v2132
    %v2685 = vpack.c.b16 %v2141, %v2133
    %v2686 = vpack.c.b16 %v2142, %v2134
    %v2687 = vpack.c.b16 %v2143, %v2135
    %v2688 = vpack.c.b16 %v2144, %v2136
    %v2689 = vpack.c.b16 %v2145, %v2137
    %v2690 = vpack.c.b16 %v2154, %v2146
    %v2691 = vpack.c.b16 %v2155, %v2147
    %v2692 = vpack.c.b16 %v2156, %v2148
    %v2693 = vpack.c.b16 %v2157, %v2149
    %v2694 = vpack.c.b16 %v2158, %v2150
    %v2695 = vpack.c.b16 %v2159, %v2151
    %v2696 = vpack.c.b16 %v2160, %v2152
    %v2697 = vpack.c.b16 %v2161, %v2153
    %v2698 = vpack.c.b16 %v2170, %v2162
    %v2699 = vpack.c.b16 %v2171, %v2163
    %v2700 = vpack.c.b16 %v2172, %v2164
    %v2701 = vpack.c.b16 %v2173, %v2165
    %v2702 = vpack.c.b16 %v2174, %v2166
    %v2703 = vpack.c.b16 %v2175, %v2167
    %v2704 = vpack.c.b16 %v2176, %v2168
    %v2705 = vpack.c.b16 %v2177, %v2169
    %v2706 = vpack.c.b16 %v2186, %v2178
    %v2707 = vpack.c.b16 %v2187, %v2179
    %v2708 = vpack.c.b16 %v2188, %v2180
    %v2709 = vpack.c.b16 %v2189, %v2181
    %v2710 = vpack.c.b16 %v2190, %v2182
    %v2711 = vpack.c.b16 %v2191, %v2183
    %v2712 = vpack.c.b16 %v2192, %v2184
    %v2713 = vpack.c.b16 %v2193, %v2185
    %v2714 = vpack.c.b16 %v2202, %v2194
    %v2715 = vpack.c.b16 %v2203, %v2195
    %v2716 = vpack.c.b16 %v2204, %v2196
    %v2717 = vpack.c.b16 %v2205, %v2197
    %v2718 = vpack.c.b16 %v2206, %v2198
    %v2719 = vpack.c.b16 %v2207, %v2199
    %v2720 = vpack.c.b16 %v2208, %v2200
    %v2721 = vpack.c.b16 %v2209, %v2201
    %3234 = vmatprep.subr.bf16.mxu0 %v2267
    %3235 = vmatpush1.bf16.msra.mxu0 %v2266
    %3236 = vmatprep.subr.bf16.mxu0 %v2259
    %3237 = vmatpush1.bf16.msra.mxu0 %v2258
    %3238 = vmatprep.subr.bf16.mxu0 %v2251
    %3239 = vmatpush1.bf16.msra.mxu0 %v2250
    %3240 = vmatprep.subr.bf16.mxu0 %v2243
    %3241 = vmatpush1.bf16.msra.mxu0 %v2242
    %3242 = vmatprep.subr.bf16.mxu0 %v2235
    %3243 = vmatpush1.bf16.msra.mxu0 %v2234
    %3244 = vmatprep.subr.bf16.mxu0 %v2227
    %3245 = vmatpush1.bf16.msra.mxu0 %v2226
    %3246 = vmatprep.subr.bf16.mxu0 %v2219
    %3247 = vmatpush1.bf16.msra.mxu0 %v2218
    %3248 = vmatprep.subr.bf16.mxu0 %v2211
    %3249 = vmatpush1.bf16.msra.mxu0 %v2210
    %3250 = vmatprep.subr.bf16.mxu0 %v2331
    %3251 = vmatpush2.bf16.msra.mxu0 %v2330
    %3252 = vmatprep.subr.bf16.mxu0 %v2323
    %3253 = vmatpush2.bf16.msra.mxu0 %v2322
    %3254 = vmatprep.subr.bf16.mxu0 %v2315
    %3255 = vmatpush2.bf16.msra.mxu0 %v2314
    %3256 = vmatprep.subr.bf16.mxu0 %v2307
    %3257 = vmatpush2.bf16.msra.mxu0 %v2306
    %3258 = vmatprep.subr.bf16.mxu0 %v2299
    %3259 = vmatpush2.bf16.msra.mxu0 %v2298
    %3260 = vmatprep.subr.bf16.mxu0 %v2291
    %3261 = vmatpush2.bf16.msra.mxu0 %v2290
    %3262 = vmatprep.subr.bf16.mxu0 %v2283
    %3263 = vmatpush2.bf16.msra.mxu0 %v2282
    %3264 = vmatprep.subr.bf16.mxu0 %v2275
    %3265 = vmatpush2.bf16.msra.mxu0 %v2274
    %3266 = vmatprep.mubr.bf16.mxu0 %v659
    %3267 = vmatmul.mubr.bf16.gmra.mxu0 %v658
    %v3268 = vpop.f32.mrf.mxu0
    %v3269 = vadd.f32 %v617, %v3268
    %v3270 = vpop.f32.mrf.mxu0
    %v3271 = vadd.f32 %v621, %v3270
    %v3272 = vpop.f32.mrf.mxu0
    %v3273 = vpop.f32.mrf.mxu0
    %3274 = vdwg.mxu0
    %3275 = vmatprep.subr.bf16.mxu0 %v2395
    %3276 = vmatpush1.bf16.msra.mxu0 %v2394
    %3277 = vmatprep.subr.bf16.mxu0 %v2387
    %3278 = vmatpush1.bf16.msra.mxu0 %v2386
    %3279 = vmatprep.subr.bf16.mxu0 %v2379
    %3280 = vmatpush1.bf16.msra.mxu0 %v2378
    %3281 = vmatprep.subr.bf16.mxu0 %v2371
    %3282 = vmatpush1.bf16.msra.mxu0 %v2370
    %3283 = vmatprep.subr.bf16.mxu0 %v2363
    %3284 = vmatpush1.bf16.msra.mxu0 %v2362
    %3285 = vmatprep.subr.bf16.mxu0 %v2355
    %3286 = vmatpush1.bf16.msra.mxu0 %v2354
    %3287 = vmatprep.subr.bf16.mxu0 %v2347
    %3288 = vmatpush1.bf16.msra.mxu0 %v2346
    %3289 = vmatprep.subr.bf16.mxu0 %v2339
    %3290 = vmatpush1.bf16.msra.mxu0 %v2338
    %3291 = vmatprep.subr.bf16.mxu0 %v2459
    %3292 = vmatpush2.bf16.msra.mxu0 %v2458
    %3293 = vmatprep.subr.bf16.mxu0 %v2451
    %3294 = vmatpush2.bf16.msra.mxu0 %v2450
    %3295 = vmatprep.subr.bf16.mxu0 %v2443
    %3296 = vmatpush2.bf16.msra.mxu0 %v2442
    %3297 = vmatprep.subr.bf16.mxu0 %v2435
    %3298 = vmatpush2.bf16.msra.mxu0 %v2434
    %3299 = vmatprep.subr.bf16.mxu0 %v2427
    %3300 = vmatpush2.bf16.msra.mxu0 %v2426
    %3301 = vmatprep.subr.bf16.mxu0 %v2419
    %3302 = vmatpush2.bf16.msra.mxu0 %v2418
    %3303 = vmatprep.subr.bf16.mxu0 %v2411
    %3304 = vmatpush2.bf16.msra.mxu0 %v2410
    %3305 = vmatprep.subr.bf16.mxu0 %v2403
    %3306 = vmatpush2.bf16.msra.mxu0 %v2402
    %3307 = vmatprep.mubr.bf16.mxu0 %v661
    %3308 = vmatmul.mubr.bf16.gmra.mxu0 %v660
    %v3309 = vpop.f32.mrf.mxu0
    %v3310 = vadd.f32 %v3269, %v3309
    %v3311 = vpop.f32.mrf.mxu0
    %v3312 = vadd.f32 %v3271, %v3311
    %v3313 = vpop.f32.mrf.mxu0
    %v3314 = vpop.f32.mrf.mxu0
    %3315 = vdwg.mxu0
    %3316 = vmatprep.subr.bf16.mxu0 %v2523
    %3317 = vmatpush1.bf16.msra.mxu0 %v2522
    %3318 = vmatprep.subr.bf16.mxu0 %v2515
    %3319 = vmatpush1.bf16.msra.mxu0 %v2514
    %3320 = vmatprep.subr.bf16.mxu0 %v2507
    %3321 = vmatpush1.bf16.msra.mxu0 %v2506
    %3322 = vmatprep.subr.bf16.mxu0 %v2499
    %3323 = vmatpush1.bf16.msra.mxu0 %v2498
    %3324 = vmatprep.subr.bf16.mxu0 %v2491
    %3325 = vmatpush1.bf16.msra.mxu0 %v2490
    %3326 = vmatprep.subr.bf16.mxu0 %v2483
    %3327 = vmatpush1.bf16.msra.mxu0 %v2482
    %3328 = vmatprep.subr.bf16.mxu0 %v2475
    %3329 = vmatpush1.bf16.msra.mxu0 %v2474
    %3330 = vmatprep.subr.bf16.mxu0 %v2467
    %3331 = vmatpush1.bf16.msra.mxu0 %v2466
    %3332 = vmatprep.subr.bf16.mxu0 %v2587
    %3333 = vmatpush2.bf16.msra.mxu0 %v2586
    %3334 = vmatprep.subr.bf16.mxu0 %v2579
    %3335 = vmatpush2.bf16.msra.mxu0 %v2578
    %3336 = vmatprep.subr.bf16.mxu0 %v2571
    %3337 = vmatpush2.bf16.msra.mxu0 %v2570
    %3338 = vmatprep.subr.bf16.mxu0 %v2563
    %3339 = vmatpush2.bf16.msra.mxu0 %v2562
    %3340 = vmatprep.subr.bf16.mxu0 %v2555
    %3341 = vmatpush2.bf16.msra.mxu0 %v2554
    %3342 = vmatprep.subr.bf16.mxu0 %v2547
    %3343 = vmatpush2.bf16.msra.mxu0 %v2546
    %3344 = vmatprep.subr.bf16.mxu0 %v2539
    %3345 = vmatpush2.bf16.msra.mxu0 %v2538
    %3346 = vmatprep.subr.bf16.mxu0 %v2531
    %3347 = vmatpush2.bf16.msra.mxu0 %v2530
    %3348 = vmatprep.mubr.bf16.mxu0 %v663
    %3349 = vmatmul.mubr.bf16.gmra.mxu0 %v662
    %v3350 = vpop.f32.mrf.mxu0
    %v3351 = vadd.f32 %v3310, %v3350
    %v3352 = vpop.f32.mrf.mxu0
    %v3353 = vadd.f32 %v3312, %v3352
    %v3354 = vpop.f32.mrf.mxu0
    %v3355 = vpop.f32.mrf.mxu0
    %3356 = vdwg.mxu0
    %3357 = vmatprep.subr.bf16.mxu0 %v2651
    %3358 = vmatpush1.bf16.msra.mxu0 %v2650
    %3359 = vmatprep.subr.bf16.mxu0 %v2643
    %3360 = vmatpush1.bf16.msra.mxu0 %v2642
    %3361 = vmatprep.subr.bf16.mxu0 %v2635
    %3362 = vmatpush1.bf16.msra.mxu0 %v2634
    %3363 = vmatprep.subr.bf16.mxu0 %v2627
    %3364 = vmatpush1.bf16.msra.mxu0 %v2626
    %3365 = vmatprep.subr.bf16.mxu0 %v2619
    %3366 = vmatpush1.bf16.msra.mxu0 %v2618
    %3367 = vmatprep.subr.bf16.mxu0 %v2611
    %3368 = vmatpush1.bf16.msra.mxu0 %v2610
    %3369 = vmatprep.subr.bf16.mxu0 %v2603
    %3370 = vmatpush1.bf16.msra.mxu0 %v2602
    %3371 = vmatprep.subr.bf16.mxu0 %v2595
    %3372 = vmatpush1.bf16.msra.mxu0 %v2594
    %3373 = vmatprep.subr.bf16.mxu0 %v2715
    %3374 = vmatpush2.bf16.msra.mxu0 %v2714
    %3375 = vmatprep.subr.bf16.mxu0 %v2707
    %3376 = vmatpush2.bf16.msra.mxu0 %v2706
    %3377 = vmatprep.subr.bf16.mxu0 %v2699
    %3378 = vmatpush2.bf16.msra.mxu0 %v2698
    %3379 = vmatprep.subr.bf16.mxu0 %v2691
    %3380 = vmatpush2.bf16.msra.mxu0 %v2690
    %3381 = vmatprep.subr.bf16.mxu0 %v2683
    %3382 = vmatpush2.bf16.msra.mxu0 %v2682
    %3383 = vmatprep.subr.bf16.mxu0 %v2675
    %3384 = vmatpush2.bf16.msra.mxu0 %v2674
    %3385 = vmatprep.subr.bf16.mxu0 %v2667
    %3386 = vmatpush2.bf16.msra.mxu0 %v2666
    %3387 = vmatprep.subr.bf16.mxu0 %v2659
    %3388 = vmatpush2.bf16.msra.mxu0 %v2658
    %3389 = vmatprep.mubr.bf16.mxu0 %v665
    %3390 = vmatmul.mubr.bf16.gmra.mxu0 %v664
    %v3391 = vpop.f32.mrf.mxu0
    %v3392 = vadd.f32 %v3351, %v3391
    %v3393 = vpop.f32.mrf.mxu0
    %v3394 = vadd.f32 %v3353, %v3393
    %v3395 = vpop.f32.mrf.mxu0
    %v3396 = vpop.f32.mrf.mxu0
    %3397 = vdwg.mxu0
    %3398 = vmatprep.subr.bf16.mxu0 %v2269
    %3399 = vmatpush1.bf16.msra.mxu0 %v2268
    %3400 = vmatprep.subr.bf16.mxu0 %v2261
    %3401 = vmatpush1.bf16.msra.mxu0 %v2260
    %3402 = vmatprep.subr.bf16.mxu0 %v2253
    %3403 = vmatpush1.bf16.msra.mxu0 %v2252
    %3404 = vmatprep.subr.bf16.mxu0 %v2245
    %3405 = vmatpush1.bf16.msra.mxu0 %v2244
    %3406 = vmatprep.subr.bf16.mxu0 %v2237
    %3407 = vmatpush1.bf16.msra.mxu0 %v2236
    %3408 = vmatprep.subr.bf16.mxu0 %v2229
    %3409 = vmatpush1.bf16.msra.mxu0 %v2228
    %3410 = vmatprep.subr.bf16.mxu0 %v2221
    %3411 = vmatpush1.bf16.msra.mxu0 %v2220
    %3412 = vmatprep.subr.bf16.mxu0 %v2213
    %3413 = vmatpush1.bf16.msra.mxu0 %v2212
    %3414 = vmatprep.subr.bf16.mxu0 %v2333
    %3415 = vmatpush2.bf16.msra.mxu0 %v2332
    %3416 = vmatprep.subr.bf16.mxu0 %v2325
    %3417 = vmatpush2.bf16.msra.mxu0 %v2324
    %3418 = vmatprep.subr.bf16.mxu0 %v2317
    %3419 = vmatpush2.bf16.msra.mxu0 %v2316
    %3420 = vmatprep.subr.bf16.mxu0 %v2309
    %3421 = vmatpush2.bf16.msra.mxu0 %v2308
    %3422 = vmatprep.subr.bf16.mxu0 %v2301
    %3423 = vmatpush2.bf16.msra.mxu0 %v2300
    %3424 = vmatprep.subr.bf16.mxu0 %v2293
    %3425 = vmatpush2.bf16.msra.mxu0 %v2292
    %3426 = vmatprep.subr.bf16.mxu0 %v2285
    %3427 = vmatpush2.bf16.msra.mxu0 %v2284
    %3428 = vmatprep.subr.bf16.mxu0 %v2277
    %3429 = vmatpush2.bf16.msra.mxu0 %v2276
    %3430 = vmatprep.mubr.bf16.mxu0 %v659
    %3431 = vmatmul.mubr.bf16.gmra.mxu0 %v658
    %v3432 = vpop.f32.mrf.mxu0
    %v3433 = vadd.f32 %v625, %v3432
    %v3434 = vpop.f32.mrf.mxu0
    %v3435 = vadd.f32 %v629, %v3434
    %v3436 = vpop.f32.mrf.mxu0
    %v3437 = vpop.f32.mrf.mxu0
    %3438 = vdwg.mxu0
    %3439 = vmatprep.subr.bf16.mxu0 %v2397
    %3440 = vmatpush1.bf16.msra.mxu0 %v2396
    %3441 = vmatprep.subr.bf16.mxu0 %v2389
    %3442 = vmatpush1.bf16.msra.mxu0 %v2388
    %3443 = vmatprep.subr.bf16.mxu0 %v2381
    %3444 = vmatpush1.bf16.msra.mxu0 %v2380
    %3445 = vmatprep.subr.bf16.mxu0 %v2373
    %3446 = vmatpush1.bf16.msra.mxu0 %v2372
    %3447 = vmatprep.subr.bf16.mxu0 %v2365
    %3448 = vmatpush1.bf16.msra.mxu0 %v2364
    %3449 = vmatprep.subr.bf16.mxu0 %v2357
    %3450 = vmatpush1.bf16.msra.mxu0 %v2356
    %3451 = vmatprep.subr.bf16.mxu0 %v2349
    %3452 = vmatpush1.bf16.msra.mxu0 %v2348
    %3453 = vmatprep.subr.bf16.mxu0 %v2341
    %3454 = vmatpush1.bf16.msra.mxu0 %v2340
    %3455 = vmatprep.subr.bf16.mxu0 %v2461
    %3456 = vmatpush2.bf16.msra.mxu0 %v2460
    %3457 = vmatprep.subr.bf16.mxu0 %v2453
    %3458 = vmatpush2.bf16.msra.mxu0 %v2452
    %3459 = vmatprep.subr.bf16.mxu0 %v2445
    %3460 = vmatpush2.bf16.msra.mxu0 %v2444
    %3461 = vmatprep.subr.bf16.mxu0 %v2437
    %3462 = vmatpush2.bf16.msra.mxu0 %v2436
    %3463 = vmatprep.subr.bf16.mxu0 %v2429
    %3464 = vmatpush2.bf16.msra.mxu0 %v2428
    %3465 = vmatprep.subr.bf16.mxu0 %v2421
    %3466 = vmatpush2.bf16.msra.mxu0 %v2420
    %3467 = vmatprep.subr.bf16.mxu0 %v2413
    %3468 = vmatpush2.bf16.msra.mxu0 %v2412
    %3469 = vmatprep.subr.bf16.mxu0 %v2405
    %3470 = vmatpush2.bf16.msra.mxu0 %v2404
    %3471 = vmatprep.mubr.bf16.mxu0 %v661
    %3472 = vmatmul.mubr.bf16.gmra.mxu0 %v660
    %v3473 = vpop.f32.mrf.mxu0
    %v3474 = vadd.f32 %v3433, %v3473
    %v3475 = vpop.f32.mrf.mxu0
    %v3476 = vadd.f32 %v3435, %v3475
    %v3477 = vpop.f32.mrf.mxu0
    %v3478 = vpop.f32.mrf.mxu0
    %3479 = vdwg.mxu0
    %3480 = vmatprep.subr.bf16.mxu0 %v2525
    %3481 = vmatpush1.bf16.msra.mxu0 %v2524
    %3482 = vmatprep.subr.bf16.mxu0 %v2517
    %3483 = vmatpush1.bf16.msra.mxu0 %v2516
    %3484 = vmatprep.subr.bf16.mxu0 %v2509
    %3485 = vmatpush1.bf16.msra.mxu0 %v2508
    %3486 = vmatprep.subr.bf16.mxu0 %v2501
    %3487 = vmatpush1.bf16.msra.mxu0 %v2500
    %3488 = vmatprep.subr.bf16.mxu0 %v2493
    %3489 = vmatpush1.bf16.msra.mxu0 %v2492
    %3490 = vmatprep.subr.bf16.mxu0 %v2485
    %3491 = vmatpush1.bf16.msra.mxu0 %v2484
    %3492 = vmatprep.subr.bf16.mxu0 %v2477
    %3493 = vmatpush1.bf16.msra.mxu0 %v2476
    %3494 = vmatprep.subr.bf16.mxu0 %v2469
    %3495 = vmatpush1.bf16.msra.mxu0 %v2468
    %3496 = vmatprep.subr.bf16.mxu0 %v2589
    %3497 = vmatpush2.bf16.msra.mxu0 %v2588
    %3498 = vmatprep.subr.bf16.mxu0 %v2581
    %3499 = vmatpush2.bf16.msra.mxu0 %v2580
    %3500 = vmatprep.subr.bf16.mxu0 %v2573
    %3501 = vmatpush2.bf16.msra.mxu0 %v2572
    %3502 = vmatprep.subr.bf16.mxu0 %v2565
    %3503 = vmatpush2.bf16.msra.mxu0 %v2564
    %3504 = vmatprep.subr.bf16.mxu0 %v2557
    %3505 = vmatpush2.bf16.msra.mxu0 %v2556
    %3506 = vmatprep.subr.bf16.mxu0 %v2549
    %3507 = vmatpush2.bf16.msra.mxu0 %v2548
    %3508 = vmatprep.subr.bf16.mxu0 %v2541
    %3509 = vmatpush2.bf16.msra.mxu0 %v2540
    %3510 = vmatprep.subr.bf16.mxu0 %v2533
    %3511 = vmatpush2.bf16.msra.mxu0 %v2532
    %3512 = vmatprep.mubr.bf16.mxu0 %v663
    %3513 = vmatmul.mubr.bf16.gmra.mxu0 %v662
    %v3514 = vpop.f32.mrf.mxu0
    %v3515 = vadd.f32 %v3474, %v3514
    %v3516 = vpop.f32.mrf.mxu0
    %v3517 = vadd.f32 %v3476, %v3516
    %v3518 = vpop.f32.mrf.mxu0
    %v3519 = vpop.f32.mrf.mxu0
    %3520 = vdwg.mxu0
    %3521 = vmatprep.subr.bf16.mxu0 %v2653
    %3522 = vmatpush1.bf16.msra.mxu0 %v2652
    %3523 = vmatprep.subr.bf16.mxu0 %v2645
    %3524 = vmatpush1.bf16.msra.mxu0 %v2644
    %3525 = vmatprep.subr.bf16.mxu0 %v2637
    %3526 = vmatpush1.bf16.msra.mxu0 %v2636
    %3527 = vmatprep.subr.bf16.mxu0 %v2629
    %3528 = vmatpush1.bf16.msra.mxu0 %v2628
    %3529 = vmatprep.subr.bf16.mxu0 %v2621
    %3530 = vmatpush1.bf16.msra.mxu0 %v2620
    %3531 = vmatprep.subr.bf16.mxu0 %v2613
    %3532 = vmatpush1.bf16.msra.mxu0 %v2612
    %3533 = vmatprep.subr.bf16.mxu0 %v2605
    %3534 = vmatpush1.bf16.msra.mxu0 %v2604
    %3535 = vmatprep.subr.bf16.mxu0 %v2597
    %3536 = vmatpush1.bf16.msra.mxu0 %v2596
    %3537 = vmatprep.subr.bf16.mxu0 %v2717
    %3538 = vmatpush2.bf16.msra.mxu0 %v2716
    %3539 = vmatprep.subr.bf16.mxu0 %v2709
    %3540 = vmatpush2.bf16.msra.mxu0 %v2708
    %3541 = vmatprep.subr.bf16.mxu0 %v2701
    %3542 = vmatpush2.bf16.msra.mxu0 %v2700
    %3543 = vmatprep.subr.bf16.mxu0 %v2693
    %3544 = vmatpush2.bf16.msra.mxu0 %v2692
    %3545 = vmatprep.subr.bf16.mxu0 %v2685
    %3546 = vmatpush2.bf16.msra.mxu0 %v2684
    %3547 = vmatprep.subr.bf16.mxu0 %v2677
    %3548 = vmatpush2.bf16.msra.mxu0 %v2676
    %3549 = vmatprep.subr.bf16.mxu0 %v2669
    %3550 = vmatpush2.bf16.msra.mxu0 %v2668
    %3551 = vmatprep.subr.bf16.mxu0 %v2661
    %3552 = vmatpush2.bf16.msra.mxu0 %v2660
    %3553 = vmatprep.mubr.bf16.mxu0 %v665
    %3554 = vmatmul.mubr.bf16.gmra.mxu0 %v664
    %v3555 = vpop.f32.mrf.mxu0
    %v3556 = vadd.f32 %v3515, %v3555
    %v3557 = vpop.f32.mrf.mxu0
    %v3558 = vadd.f32 %v3517, %v3557
    %v3559 = vpop.f32.mrf.mxu0
    %v3560 = vpop.f32.mrf.mxu0
    %3561 = vdwg.mxu0
    %3562 = vmatprep.subr.bf16.mxu0 %v2271
    %3563 = vmatpush1.bf16.msra.mxu0 %v2270
    %3564 = vmatprep.subr.bf16.mxu0 %v2263
    %3565 = vmatpush1.bf16.msra.mxu0 %v2262
    %3566 = vmatprep.subr.bf16.mxu0 %v2255
    %3567 = vmatpush1.bf16.msra.mxu0 %v2254
    %3568 = vmatprep.subr.bf16.mxu0 %v2247
    %3569 = vmatpush1.bf16.msra.mxu0 %v2246
    %3570 = vmatprep.subr.bf16.mxu0 %v2239
    %3571 = vmatpush1.bf16.msra.mxu0 %v2238
    %3572 = vmatprep.subr.bf16.mxu0 %v2231
    %3573 = vmatpush1.bf16.msra.mxu0 %v2230
    %3574 = vmatprep.subr.bf16.mxu0 %v2223
    %3575 = vmatpush1.bf16.msra.mxu0 %v2222
    %3576 = vmatprep.subr.bf16.mxu0 %v2215
    %3577 = vmatpush1.bf16.msra.mxu0 %v2214
    %3578 = vmatprep.subr.bf16.mxu0 %v2335
    %3579 = vmatpush2.bf16.msra.mxu0 %v2334
    %3580 = vmatprep.subr.bf16.mxu0 %v2327
    %3581 = vmatpush2.bf16.msra.mxu0 %v2326
    %3582 = vmatprep.subr.bf16.mxu0 %v2319
    %3583 = vmatpush2.bf16.msra.mxu0 %v2318
    %3584 = vmatprep.subr.bf16.mxu0 %v2311
    %3585 = vmatpush2.bf16.msra.mxu0 %v2310
    %3586 = vmatprep.subr.bf16.mxu0 %v2303
    %3587 = vmatpush2.bf16.msra.mxu0 %v2302
    %3588 = vmatprep.subr.bf16.mxu0 %v2295
    %3589 = vmatpush2.bf16.msra.mxu0 %v2294
    %3590 = vmatprep.subr.bf16.mxu0 %v2287
    %3591 = vmatpush2.bf16.msra.mxu0 %v2286
    %3592 = vmatprep.subr.bf16.mxu0 %v2279
    %3593 = vmatpush2.bf16.msra.mxu0 %v2278
    %3594 = vmatprep.mubr.bf16.mxu0 %v659
    %3595 = vmatmul.mubr.bf16.gmra.mxu0 %v658
    %v3596 = vpop.f32.mrf.mxu0
    %v3597 = vadd.f32 %v633, %v3596
    %v3598 = vpop.f32.mrf.mxu0
    %v3599 = vadd.f32 %v637, %v3598
    %v3600 = vpop.f32.mrf.mxu0
    %v3601 = vpop.f32.mrf.mxu0
    %3602 = vdwg.mxu0
    %3603 = vmatprep.subr.bf16.mxu0 %v2399
    %3604 = vmatpush1.bf16.msra.mxu0 %v2398
    %3605 = vmatprep.subr.bf16.mxu0 %v2391
    %3606 = vmatpush1.bf16.msra.mxu0 %v2390
    %3607 = vmatprep.subr.bf16.mxu0 %v2383
    %3608 = vmatpush1.bf16.msra.mxu0 %v2382
    %3609 = vmatprep.subr.bf16.mxu0 %v2375
    %3610 = vmatpush1.bf16.msra.mxu0 %v2374
    %3611 = vmatprep.subr.bf16.mxu0 %v2367
    %3612 = vmatpush1.bf16.msra.mxu0 %v2366
    %3613 = vmatprep.subr.bf16.mxu0 %v2359
    %3614 = vmatpush1.bf16.msra.mxu0 %v2358
    %3615 = vmatprep.subr.bf16.mxu0 %v2351
    %3616 = vmatpush1.bf16.msra.mxu0 %v2350
    %3617 = vmatprep.subr.bf16.mxu0 %v2343
    %3618 = vmatpush1.bf16.msra.mxu0 %v2342
    %3619 = vmatprep.subr.bf16.mxu0 %v2463
    %3620 = vmatpush2.bf16.msra.mxu0 %v2462
    %3621 = vmatprep.subr.bf16.mxu0 %v2455
    %3622 = vmatpush2.bf16.msra.mxu0 %v2454
    %3623 = vmatprep.subr.bf16.mxu0 %v2447
    %3624 = vmatpush2.bf16.msra.mxu0 %v2446
    %3625 = vmatprep.subr.bf16.mxu0 %v2439
    %3626 = vmatpush2.bf16.msra.mxu0 %v2438
    %3627 = vmatprep.subr.bf16.mxu0 %v2431
    %3628 = vmatpush2.bf16.msra.mxu0 %v2430
    %3629 = vmatprep.subr.bf16.mxu0 %v2423
    %3630 = vmatpush2.bf16.msra.mxu0 %v2422
    %3631 = vmatprep.subr.bf16.mxu0 %v2415
    %3632 = vmatpush2.bf16.msra.mxu0 %v2414
    %3633 = vmatprep.subr.bf16.mxu0 %v2407
    %3634 = vmatpush2.bf16.msra.mxu0 %v2406
    %3635 = vmatprep.mubr.bf16.mxu0 %v661
    %3636 = vmatmul.mubr.bf16.gmra.mxu0 %v660
    %v3637 = vpop.f32.mrf.mxu0
    %v3638 = vadd.f32 %v3597, %v3637
    %v3639 = vpop.f32.mrf.mxu0
    %v3640 = vadd.f32 %v3599, %v3639
    %v3641 = vpop.f32.mrf.mxu0
    %v3642 = vpop.f32.mrf.mxu0
    %3643 = vdwg.mxu0
    %3644 = vmatprep.subr.bf16.mxu0 %v2527
    %3645 = vmatpush1.bf16.msra.mxu0 %v2526
    %3646 = vmatprep.subr.bf16.mxu0 %v2519
    %3647 = vmatpush1.bf16.msra.mxu0 %v2518
    %3648 = vmatprep.subr.bf16.mxu0 %v2511
    %3649 = vmatpush1.bf16.msra.mxu0 %v2510
    %3650 = vmatprep.subr.bf16.mxu0 %v2503
    %3651 = vmatpush1.bf16.msra.mxu0 %v2502
    %3652 = vmatprep.subr.bf16.mxu0 %v2495
    %3653 = vmatpush1.bf16.msra.mxu0 %v2494
    %3654 = vmatprep.subr.bf16.mxu0 %v2487
    %3655 = vmatpush1.bf16.msra.mxu0 %v2486
    %3656 = vmatprep.subr.bf16.mxu0 %v2479
    %3657 = vmatpush1.bf16.msra.mxu0 %v2478
    %3658 = vmatprep.subr.bf16.mxu0 %v2471
    %3659 = vmatpush1.bf16.msra.mxu0 %v2470
    %3660 = vmatprep.subr.bf16.mxu0 %v2591
    %3661 = vmatpush2.bf16.msra.mxu0 %v2590
    %3662 = vmatprep.subr.bf16.mxu0 %v2583
    %3663 = vmatpush2.bf16.msra.mxu0 %v2582
    %3664 = vmatprep.subr.bf16.mxu0 %v2575
    %3665 = vmatpush2.bf16.msra.mxu0 %v2574
    %3666 = vmatprep.subr.bf16.mxu0 %v2567
    %3667 = vmatpush2.bf16.msra.mxu0 %v2566
    %3668 = vmatprep.subr.bf16.mxu0 %v2559
    %3669 = vmatpush2.bf16.msra.mxu0 %v2558
    %3670 = vmatprep.subr.bf16.mxu0 %v2551
    %3671 = vmatpush2.bf16.msra.mxu0 %v2550
    %3672 = vmatprep.subr.bf16.mxu0 %v2543
    %3673 = vmatpush2.bf16.msra.mxu0 %v2542
    %3674 = vmatprep.subr.bf16.mxu0 %v2535
    %3675 = vmatpush2.bf16.msra.mxu0 %v2534
    %3676 = vmatprep.mubr.bf16.mxu0 %v663
    %3677 = vmatmul.mubr.bf16.gmra.mxu0 %v662
    %v3678 = vpop.f32.mrf.mxu0
    %v3679 = vadd.f32 %v3638, %v3678
    %v3680 = vpop.f32.mrf.mxu0
    %v3681 = vadd.f32 %v3640, %v3680
    %v3682 = vpop.f32.mrf.mxu0
    %v3683 = vpop.f32.mrf.mxu0
    %3684 = vdwg.mxu0
    %3685 = vmatprep.subr.bf16.mxu0 %v2655
    %3686 = vmatpush1.bf16.msra.mxu0 %v2654
    %3687 = vmatprep.subr.bf16.mxu0 %v2647
    %3688 = vmatpush1.bf16.msra.mxu0 %v2646
    %3689 = vmatprep.subr.bf16.mxu0 %v2639
    %3690 = vmatpush1.bf16.msra.mxu0 %v2638
    %3691 = vmatprep.subr.bf16.mxu0 %v2631
    %3692 = vmatpush1.bf16.msra.mxu0 %v2630
    %3693 = vmatprep.subr.bf16.mxu0 %v2623
    %3694 = vmatpush1.bf16.msra.mxu0 %v2622
    %3695 = vmatprep.subr.bf16.mxu0 %v2615
    %3696 = vmatpush1.bf16.msra.mxu0 %v2614
    %3697 = vmatprep.subr.bf16.mxu0 %v2607
    %3698 = vmatpush1.bf16.msra.mxu0 %v2606
    %3699 = vmatprep.subr.bf16.mxu0 %v2599
    %3700 = vmatpush1.bf16.msra.mxu0 %v2598
    %3701 = vmatprep.subr.bf16.mxu0 %v2719
    %3702 = vmatpush2.bf16.msra.mxu0 %v2718
    %3703 = vmatprep.subr.bf16.mxu0 %v2711
    %3704 = vmatpush2.bf16.msra.mxu0 %v2710
    %3705 = vmatprep.subr.bf16.mxu0 %v2703
    %3706 = vmatpush2.bf16.msra.mxu0 %v2702
    %3707 = vmatprep.subr.bf16.mxu0 %v2695
    %3708 = vmatpush2.bf16.msra.mxu0 %v2694
    %3709 = vmatprep.subr.bf16.mxu0 %v2687
    %3710 = vmatpush2.bf16.msra.mxu0 %v2686
    %3711 = vmatprep.subr.bf16.mxu0 %v2679
    %3712 = vmatpush2.bf16.msra.mxu0 %v2678
    %3713 = vmatprep.subr.bf16.mxu0 %v2671
    %3714 = vmatpush2.bf16.msra.mxu0 %v2670
    %3715 = vmatprep.subr.bf16.mxu0 %v2663
    %3716 = vmatpush2.bf16.msra.mxu0 %v2662
    %3717 = vmatprep.mubr.bf16.mxu0 %v665
    %3718 = vmatmul.mubr.bf16.gmra.mxu0 %v664
    %v3719 = vpop.f32.mrf.mxu0
    %v3720 = vadd.f32 %v3679, %v3719
    %v3721 = vpop.f32.mrf.mxu0
    %v3722 = vadd.f32 %v3681, %v3721
    %v3723 = vpop.f32.mrf.mxu0
    %v3724 = vpop.f32.mrf.mxu0
    %3725 = vdwg.mxu0
    %3726 = vmatprep.subr.bf16.mxu0 %v2273
    %3727 = vmatpush1.bf16.msra.mxu0 %v2272
    %3728 = vmatprep.subr.bf16.mxu0 %v2265
    %3729 = vmatpush1.bf16.msra.mxu0 %v2264
    %3730 = vmatprep.subr.bf16.mxu0 %v2257
    %3731 = vmatpush1.bf16.msra.mxu0 %v2256
    %3732 = vmatprep.subr.bf16.mxu0 %v2249
    %3733 = vmatpush1.bf16.msra.mxu0 %v2248
    %3734 = vmatprep.subr.bf16.mxu0 %v2241
    %3735 = vmatpush1.bf16.msra.mxu0 %v2240
    %3736 = vmatprep.subr.bf16.mxu0 %v2233
    %3737 = vmatpush1.bf16.msra.mxu0 %v2232
    %3738 = vmatprep.subr.bf16.mxu0 %v2225
    %3739 = vmatpush1.bf16.msra.mxu0 %v2224
    %3740 = vmatprep.subr.bf16.mxu0 %v2217
    %3741 = vmatpush1.bf16.msra.mxu0 %v2216
    %3742 = vmatprep.subr.bf16.mxu0 %v2337
    %3743 = vmatpush2.bf16.msra.mxu0 %v2336
    %3744 = vmatprep.subr.bf16.mxu0 %v2329
    %3745 = vmatpush2.bf16.msra.mxu0 %v2328
    %3746 = vmatprep.subr.bf16.mxu0 %v2321
    %3747 = vmatpush2.bf16.msra.mxu0 %v2320
    %3748 = vmatprep.subr.bf16.mxu0 %v2313
    %3749 = vmatpush2.bf16.msra.mxu0 %v2312
    %3750 = vmatprep.subr.bf16.mxu0 %v2305
    %3751 = vmatpush2.bf16.msra.mxu0 %v2304
    %3752 = vmatprep.subr.bf16.mxu0 %v2297
    %3753 = vmatpush2.bf16.msra.mxu0 %v2296
    %3754 = vmatprep.subr.bf16.mxu0 %v2289
    %3755 = vmatpush2.bf16.msra.mxu0 %v2288
    %3756 = vmatprep.subr.bf16.mxu0 %v2281
    %3757 = vmatpush2.bf16.msra.mxu0 %v2280
    %3758 = vmatprep.mubr.bf16.mxu0 %v659
    %3759 = vmatmul.mubr.bf16.gmra.mxu0 %v658
    %v3760 = vpop.f32.mrf.mxu0
    %v3761 = vadd.f32 %v641, %v3760
    %v3762 = vpop.f32.mrf.mxu0
    %v3763 = vadd.f32 %v645, %v3762
    %v3764 = vpop.f32.mrf.mxu0
    %v3765 = vpop.f32.mrf.mxu0
    %3766 = vdwg.mxu0
    %3767 = vmatprep.subr.bf16.mxu0 %v2401
    %3768 = vmatpush1.bf16.msra.mxu0 %v2400
    %3769 = vmatprep.subr.bf16.mxu0 %v2393
    %3770 = vmatpush1.bf16.msra.mxu0 %v2392
    %3771 = vmatprep.subr.bf16.mxu0 %v2385
    %3772 = vmatpush1.bf16.msra.mxu0 %v2384
    %3773 = vmatprep.subr.bf16.mxu0 %v2377
    %3774 = vmatpush1.bf16.msra.mxu0 %v2376
    %3775 = vmatprep.subr.bf16.mxu0 %v2369
    %3776 = vmatpush1.bf16.msra.mxu0 %v2368
    %3777 = vmatprep.subr.bf16.mxu0 %v2361
    %3778 = vmatpush1.bf16.msra.mxu0 %v2360
    %3779 = vmatprep.subr.bf16.mxu0 %v2353
    %3780 = vmatpush1.bf16.msra.mxu0 %v2352
    %3781 = vmatprep.subr.bf16.mxu0 %v2345
    %3782 = vmatpush1.bf16.msra.mxu0 %v2344
    %3783 = vmatprep.subr.bf16.mxu0 %v2465
    %3784 = vmatpush2.bf16.msra.mxu0 %v2464
    %3785 = vmatprep.subr.bf16.mxu0 %v2457
    %3786 = vmatpush2.bf16.msra.mxu0 %v2456
    %3787 = vmatprep.subr.bf16.mxu0 %v2449
    %3788 = vmatpush2.bf16.msra.mxu0 %v2448
    %3789 = vmatprep.subr.bf16.mxu0 %v2441
    %3790 = vmatpush2.bf16.msra.mxu0 %v2440
    %3791 = vmatprep.subr.bf16.mxu0 %v2433
    %3792 = vmatpush2.bf16.msra.mxu0 %v2432
    %3793 = vmatprep.subr.bf16.mxu0 %v2425
    %3794 = vmatpush2.bf16.msra.mxu0 %v2424
    %3795 = vmatprep.subr.bf16.mxu0 %v2417
    %3796 = vmatpush2.bf16.msra.mxu0 %v2416
    %3797 = vmatprep.subr.bf16.mxu0 %v2409
    %3798 = vmatpush2.bf16.msra.mxu0 %v2408
    %3799 = vmatprep.mubr.bf16.mxu0 %v661
    %3800 = vmatmul.mubr.bf16.gmra.mxu0 %v660
    %v3801 = vpop.f32.mrf.mxu0
    %v3802 = vadd.f32 %v3761, %v3801
    %v3803 = vpop.f32.mrf.mxu0
    %v3804 = vadd.f32 %v3763, %v3803
    %v3805 = vpop.f32.mrf.mxu0
    %v3806 = vpop.f32.mrf.mxu0
    %3807 = vdwg.mxu0
    %3808 = vmatprep.subr.bf16.mxu0 %v2529
    %3809 = vmatpush1.bf16.msra.mxu0 %v2528
    %3810 = vmatprep.subr.bf16.mxu0 %v2521
    %3811 = vmatpush1.bf16.msra.mxu0 %v2520
    %3812 = vmatprep.subr.bf16.mxu0 %v2513
    %3813 = vmatpush1.bf16.msra.mxu0 %v2512
    %3814 = vmatprep.subr.bf16.mxu0 %v2505
    %3815 = vmatpush1.bf16.msra.mxu0 %v2504
    %3816 = vmatprep.subr.bf16.mxu0 %v2497
    %3817 = vmatpush1.bf16.msra.mxu0 %v2496
    %3818 = vmatprep.subr.bf16.mxu0 %v2489
    %3819 = vmatpush1.bf16.msra.mxu0 %v2488
    %3820 = vmatprep.subr.bf16.mxu0 %v2481
    %3821 = vmatpush1.bf16.msra.mxu0 %v2480
    %3822 = vmatprep.subr.bf16.mxu0 %v2473
    %3823 = vmatpush1.bf16.msra.mxu0 %v2472
    %3824 = vmatprep.subr.bf16.mxu0 %v2593
    %3825 = vmatpush2.bf16.msra.mxu0 %v2592
    %3826 = vmatprep.subr.bf16.mxu0 %v2585
    %3827 = vmatpush2.bf16.msra.mxu0 %v2584
    %3828 = vmatprep.subr.bf16.mxu0 %v2577
    %3829 = vmatpush2.bf16.msra.mxu0 %v2576
    %3830 = vmatprep.subr.bf16.mxu0 %v2569
    %3831 = vmatpush2.bf16.msra.mxu0 %v2568
    %3832 = vmatprep.subr.bf16.mxu0 %v2561
    %3833 = vmatpush2.bf16.msra.mxu0 %v2560
    %3834 = vmatprep.subr.bf16.mxu0 %v2553
    %3835 = vmatpush2.bf16.msra.mxu0 %v2552
    %3836 = vmatprep.subr.bf16.mxu0 %v2545
    %3837 = vmatpush2.bf16.msra.mxu0 %v2544
    %3838 = vmatprep.subr.bf16.mxu0 %v2537
    %3839 = vmatpush2.bf16.msra.mxu0 %v2536
    %3840 = vmatprep.mubr.bf16.mxu0 %v663
    %3841 = vmatmul.mubr.bf16.gmra.mxu0 %v662
    %v3842 = vpop.f32.mrf.mxu0
    %v3843 = vadd.f32 %v3802, %v3842
    %v3844 = vpop.f32.mrf.mxu0
    %v3845 = vadd.f32 %v3804, %v3844
    %v3846 = vpop.f32.mrf.mxu0
    %v3847 = vpop.f32.mrf.mxu0
    %3848 = vdwg.mxu0
    %3849 = vmatprep.subr.bf16.mxu0 %v2657
    %3850 = vmatpush1.bf16.msra.mxu0 %v2656
    %3851 = vmatprep.subr.bf16.mxu0 %v2649
    %3852 = vmatpush1.bf16.msra.mxu0 %v2648
    %3853 = vmatprep.subr.bf16.mxu0 %v2641
    %3854 = vmatpush1.bf16.msra.mxu0 %v2640
    %3855 = vmatprep.subr.bf16.mxu0 %v2633
    %3856 = vmatpush1.bf16.msra.mxu0 %v2632
    %3857 = vmatprep.subr.bf16.mxu0 %v2625
    %3858 = vmatpush1.bf16.msra.mxu0 %v2624
    %3859 = vmatprep.subr.bf16.mxu0 %v2617
    %3860 = vmatpush1.bf16.msra.mxu0 %v2616
    %3861 = vmatprep.subr.bf16.mxu0 %v2609
    %3862 = vmatpush1.bf16.msra.mxu0 %v2608
    %3863 = vmatprep.subr.bf16.mxu0 %v2601
    %3864 = vmatpush1.bf16.msra.mxu0 %v2600
    %3865 = vmatprep.subr.bf16.mxu0 %v2721
    %3866 = vmatpush2.bf16.msra.mxu0 %v2720
    %3867 = vmatprep.subr.bf16.mxu0 %v2713
    %3868 = vmatpush2.bf16.msra.mxu0 %v2712
    %3869 = vmatprep.subr.bf16.mxu0 %v2705
    %3870 = vmatpush2.bf16.msra.mxu0 %v2704
    %3871 = vmatprep.subr.bf16.mxu0 %v2697
    %3872 = vmatpush2.bf16.msra.mxu0 %v2696
    %3873 = vmatprep.subr.bf16.mxu0 %v2689
    %3874 = vmatpush2.bf16.msra.mxu0 %v2688
    %3875 = vmatprep.subr.bf16.mxu0 %v2681
    %3876 = vmatpush2.bf16.msra.mxu0 %v2680
    %3877 = vmatprep.subr.bf16.mxu0 %v2673
    %3878 = vmatpush2.bf16.msra.mxu0 %v2672
    %3879 = vmatprep.subr.bf16.mxu0 %v2665
    %3880 = vmatpush2.bf16.msra.mxu0 %v2664
    %3881 = vmatprep.mubr.bf16.mxu0 %v665
    %3882 = vmatmul.mubr.bf16.gmra.mxu0 %v664
    %v3883 = vpop.f32.mrf.mxu0
    %v3884 = vadd.f32 %v3843, %v3883
    %v3885 = vpop.f32.mrf.mxu0
    %v3886 = vadd.f32 %v3845, %v3885
    %v3887 = vpop.f32.mrf.mxu0
    %v3888 = vpop.f32.mrf.mxu0
    %3889 = vdwg.mxu0
    %v3890 = vmax.f32 %v3392, 0.0
    %v3891 = vmax.f32 %v3394, 0.0
    %v3892 = vmax.f32 %v3556, 0.0
    %v3893 = vmax.f32 %v3558, 0.0
    %v3894 = vmax.f32 %v3720, 0.0
    %v3895 = vmax.f32 %v3722, 0.0
    %v3896 = vmax.f32 %v3884, 0.0
    %v3897 = vmax.f32 %v3886, 0.0
    %v3898 = vpack.c.bf16 %v3890, %v3890
    %v3899 = vpack.c.bf16 %v3891, %v3891
    %v3900 = vpack.c.bf16 %v3892, %v3892
    %v3901 = vpack.c.bf16 %v3893, %v3893
    %v3902 = vpack.c.bf16 %v3894, %v3894
    %v3903 = vpack.c.bf16 %v3895, %v3895
    %v3904 = vpack.c.bf16 %v3896, %v3896
    %v3905 = vpack.c.bf16 %v3897, %v3897
    %v3906 = vld [vmem:[#allocation4] sm:$0xff]
    %v3907 = vld [vmem:[#allocation4 + $0x8] sm:$0xff]
    %v3908 = vld [vmem:[#allocation4 + $0x10] sm:$0xf]
    %v3909 = vld [vmem:[#allocation4 + $0x14] sm:$0xff]
    %v3910 = vld [vmem:[#allocation4 + $0x1c] sm:$0xff]
    %v3911 = vld [vmem:[#allocation4 + $0x24] sm:$0xf]
    %v3912 = vld [vmem:[#allocation4 + $0x28] sm:$0xff]
    %v3913 = vld [vmem:[#allocation4 + $0x30] sm:$0xff]
    %v3914 = vld [vmem:[#allocation4 + $0x38] sm:$0xf]
    %v3915 = vld [vmem:[#allocation4 + $0x3c] sm:$0xff]
    %v3916 = vld [vmem:[#allocation4 + $0x44] sm:$0xff]
    %v3917 = vld [vmem:[#allocation4 + $0x4c] sm:$0xf]
    %v3918 = vld [vmem:[#allocation4 + $0x50] sm:$0xff]
    %v3919 = vld [vmem:[#allocation4 + $0x58] sm:$0xff]
    %v3920 = vld [vmem:[#allocation4 + $0x60] sm:$0xf]
    %v3921 = vld [vmem:[#allocation4 + $0x64] sm:$0xff]
    %v3922 = vld [vmem:[#allocation4 + $0x6c] sm:$0xff]
    %v3923 = vld [vmem:[#allocation4 + $0x74] sm:$0xf]
    %v3924 = vld [vmem:[#allocation4 + $0x78] sm:$0xff]
    %v3925 = vld [vmem:[#allocation4 + $0x80] sm:$0xff]
    %v3926 = vld [vmem:[#allocation4 + $0x88] sm:$0xf]
    %v3927 = vld [vmem:[#allocation4 + $0x8c] sm:$0xff]
    %v3928 = vld [vmem:[#allocation4 + $0x94] sm:$0xff]
    %v3929 = vld [vmem:[#allocation4 + $0x9c] sm:$0xf]
    %v3930 = vld [vmem:[#allocation4 + $0xa0] sm:$0xff]
    %v3931 = vld [vmem:[#allocation4 + $0xa8] sm:$0xff]
    %v3932 = vld [vmem:[#allocation4 + $0xb0] sm:$0xf]
    %v3933 = vld [vmem:[#allocation4 + $0xb4] sm:$0xff]
    %v3934 = vld [vmem:[#allocation4 + $0xbc] sm:$0xff]
    %v3935 = vld [vmem:[#allocation4 + $0xc4] sm:$0xf]
    %v3936 = vld [vmem:[#allocation4 + $0xc8] sm:$0xff]
    %v3937 = vld [vmem:[#allocation4 + $0xd0] sm:$0xff]
    %v3938 = vld [vmem:[#allocation4 + $0xd8] sm:$0xf]
    %v3939 = vld [vmem:[#allocation4 + $0xdc] sm:$0xff]
    %v3940 = vld [vmem:[#allocation4 + $0xe4] sm:$0xff]
    %v3941 = vld [vmem:[#allocation4 + $0xec] sm:$0xf]
    %v3942 = vld [vmem:[#allocation4 + $0xf0] sm:$0xff]
    %v3943 = vld [vmem:[#allocation4 + $0xf8] sm:$0xff]
    %v3944 = vld [vmem:[#allocation4 + $0x100] sm:$0xf]
    %v3945 = vld [vmem:[#allocation4 + $0x104] sm:$0xff]
    %v3946 = vld [vmem:[#allocation4 + $0x10c] sm:$0xff]
    %v3947 = vld [vmem:[#allocation4 + $0x114] sm:$0xf]
    %v3948 = vld [vmem:[#allocation4 + $0x118] sm:$0xff]
    %v3949 = vld [vmem:[#allocation4 + $0x120] sm:$0xff]
    %v3950 = vld [vmem:[#allocation4 + $0x128] sm:$0xf]
    %v3951 = vld [vmem:[#allocation4 + $0x12c] sm:$0xff]
    %v3952 = vld [vmem:[#allocation4 + $0x134] sm:$0xff]
    %v3953 = vld [vmem:[#allocation4 + $0x13c] sm:$0xf]
    %v3954 = vld [vmem:[#allocation4 + $0x140] sm:$0xff]
    %v3955 = vld [vmem:[#allocation4 + $0x148] sm:$0xff]
    %v3956 = vld [vmem:[#allocation4 + $0x150] sm:$0xf]
    %v3957 = vld [vmem:[#allocation4 + $0x154] sm:$0xff]
    %v3958 = vld [vmem:[#allocation4 + $0x15c] sm:$0xff]
    %v3959 = vld [vmem:[#allocation4 + $0x164] sm:$0xf]
    %v3960 = vld [vmem:[#allocation4 + $0x168] sm:$0xff]
    %v3961 = vld [vmem:[#allocation4 + $0x170] sm:$0xff]
    %v3962 = vld [vmem:[#allocation4 + $0x178] sm:$0xf]
    %v3963 = vld [vmem:[#allocation4 + $0x17c] sm:$0xff]
    %v3964 = vld [vmem:[#allocation4 + $0x184] sm:$0xff]
    %v3965 = vld [vmem:[#allocation4 + $0x18c] sm:$0xf]
    %v3966 = vld [vmem:[#allocation4 + $0x190] sm:$0xff]
    %v3967 = vld [vmem:[#allocation4 + $0x198] sm:$0xff]
    %v3968 = vld [vmem:[#allocation4 + $0x1a0] sm:$0xf]
    %v3969 = vld [vmem:[#allocation4 + $0x1a4] sm:$0xff]
    %v3970 = vld [vmem:[#allocation4 + $0x1ac] sm:$0xff]
    %v3971 = vld [vmem:[#allocation4 + $0x1b4] sm:$0xf]
    %v3972 = vld [vmem:[#allocation4 + $0x1b8] sm:$0xff]
    %v3973 = vld [vmem:[#allocation4 + $0x1c0] sm:$0xff]
    %v3974 = vld [vmem:[#allocation4 + $0x1c8] sm:$0xf]
    %v3975 = vld [vmem:[#allocation4 + $0x1cc] sm:$0xff]
    %v3976 = vld [vmem:[#allocation4 + $0x1d4] sm:$0xff]
    %v3977 = vld [vmem:[#allocation4 + $0x1dc] sm:$0xf]
    %v3978 = vld [vmem:[#allocation4 + $0x1e0] sm:$0xff]
    %v3979 = vld [vmem:[#allocation4 + $0x1e8] sm:$0xff]
    %v3980 = vld [vmem:[#allocation4 + $0x1f0] sm:$0xf]
    %v3981 = vld [vmem:[#allocation4 + $0x1f4] sm:$0xff]
    %v3982 = vld [vmem:[#allocation4 + $0x1fc] sm:$0xff]
    %v3983 = vld [vmem:[#allocation4 + $0x204] sm:$0xf]
    %v3984 = vld [vmem:[#allocation4 + $0x208] sm:$0xff]
    %v3985 = vld [vmem:[#allocation4 + $0x210] sm:$0xff]
    %v3986 = vld [vmem:[#allocation4 + $0x218] sm:$0xf]
    %v3987 = vld [vmem:[#allocation4 + $0x21c] sm:$0xff]
    %v3988 = vld [vmem:[#allocation4 + $0x224] sm:$0xff]
    %v3989 = vld [vmem:[#allocation4 + $0x22c] sm:$0xf]
    %v3990 = vld [vmem:[#allocation4 + $0x230] sm:$0xff]
    %v3991 = vld [vmem:[#allocation4 + $0x238] sm:$0xff]
    %v3992 = vld [vmem:[#allocation4 + $0x240] sm:$0xf]
    %v3993 = vld [vmem:[#allocation4 + $0x244] sm:$0xff]
    %v3994 = vld [vmem:[#allocation4 + $0x24c] sm:$0xff]
    %v3995 = vld [vmem:[#allocation4 + $0x254] sm:$0xf]
    %v3996 = vld [vmem:[#allocation4 + $0x258] sm:$0xff]
    %v3997 = vld [vmem:[#allocation4 + $0x260] sm:$0xff]
    %v3998 = vld [vmem:[#allocation4 + $0x268] sm:$0xf]
    %v3999 = vld [vmem:[#allocation4 + $0x26c] sm:$0xff]
    %v4000 = vld [vmem:[#allocation4 + $0x274] sm:$0xff]
    %v4001 = vld [vmem:[#allocation4 + $0x27c] sm:$0xf]
    %v4002 = vld [vmem:[#allocation4 + $0x280] sm:$0xff]
    %v4003 = vld [vmem:[#allocation4 + $0x288] sm:$0xff]
    %v4004 = vld [vmem:[#allocation4 + $0x290] sm:$0xf]
    %v4005 = vld [vmem:[#allocation4 + $0x294] sm:$0xff]
    %v4006 = vld [vmem:[#allocation4 + $0x29c] sm:$0xff]
    %v4007 = vld [vmem:[#allocation4 + $0x2a4] sm:$0xf]
    %v4008 = vld [vmem:[#allocation4 + $0x2a8] sm:$0xff]
    %v4009 = vld [vmem:[#allocation4 + $0x2b0] sm:$0xff]
    %v4010 = vld [vmem:[#allocation4 + $0x2b8] sm:$0xf]
    %v4011 = vld [vmem:[#allocation4 + $0x2bc] sm:$0xff]
    %v4012 = vld [vmem:[#allocation4 + $0x2c4] sm:$0xff]
    %v4013 = vld [vmem:[#allocation4 + $0x2cc] sm:$0xf]
    %v4014 = vld [vmem:[#allocation4 + $0x2d0] sm:$0xff]
    %v4015 = vld [vmem:[#allocation4 + $0x2d8] sm:$0xff]
    %v4016 = vld [vmem:[#allocation4 + $0x2e0] sm:$0xf]
    %v4017 = vld [vmem:[#allocation4 + $0x2e4] sm:$0xff]
    %v4018 = vld [vmem:[#allocation4 + $0x2ec] sm:$0xff]
    %v4019 = vld [vmem:[#allocation4 + $0x2f4] sm:$0xf]
    %v4020 = vld [vmem:[#allocation4 + $0x2f8] sm:$0xff]
    %v4021 = vld [vmem:[#allocation4 + $0x300] sm:$0xff]
    %v4022 = vld [vmem:[#allocation4 + $0x308] sm:$0xf]
    %v4023 = vld [vmem:[#allocation4 + $0x30c] sm:$0xff]
    %v4024 = vld [vmem:[#allocation4 + $0x314] sm:$0xff]
    %v4025 = vld [vmem:[#allocation4 + $0x31c] sm:$0xf]
    %v4026 = vld [vmem:[#allocation4 + $0x320] sm:$0xff]
    %v4027 = vld [vmem:[#allocation4 + $0x328] sm:$0xff]
    %v4028 = vld [vmem:[#allocation4 + $0x330] sm:$0xf]
    %v4029 = vld [vmem:[#allocation4 + $0x334] sm:$0xff]
    %v4030 = vld [vmem:[#allocation4 + $0x33c] sm:$0xff]
    %v4031 = vld [vmem:[#allocation4 + $0x344] sm:$0xf]
    %v4032 = vld [vmem:[#allocation4 + $0x348] sm:$0xff]
    %v4033 = vld [vmem:[#allocation4 + $0x350] sm:$0xff]
    %v4034 = vld [vmem:[#allocation4 + $0x358] sm:$0xf]
    %v4035 = vld [vmem:[#allocation4 + $0x35c] sm:$0xff]
    %v4036 = vld [vmem:[#allocation4 + $0x364] sm:$0xff]
    %v4037 = vld [vmem:[#allocation4 + $0x36c] sm:$0xf]
    %v4038 = vld [vmem:[#allocation4 + $0x370] sm:$0xff]
    %v4039 = vld [vmem:[#allocation4 + $0x378] sm:$0xff]
    %v4040 = vld [vmem:[#allocation4 + $0x380] sm:$0xf]
    %v4041 = vld [vmem:[#allocation4 + $0x384] sm:$0xff]
    %v4042 = vld [vmem:[#allocation4 + $0x38c] sm:$0xff]
    %v4043 = vld [vmem:[#allocation4 + $0x394] sm:$0xf]
    %v4044 = vld [vmem:[#allocation4 + $0x398] sm:$0xff]
    %v4045 = vld [vmem:[#allocation4 + $0x3a0] sm:$0xff]
    %v4046 = vld [vmem:[#allocation4 + $0x3a8] sm:$0xf]
    %v4047 = vld [vmem:[#allocation4 + $0x3ac] sm:$0xff]
    %v4048 = vld [vmem:[#allocation4 + $0x3b4] sm:$0xff]
    %v4049 = vld [vmem:[#allocation4 + $0x3bc] sm:$0xf]
    %v4050 = vld [vmem:[#allocation4 + $0x3c0] sm:$0xff]
    %v4051 = vld [vmem:[#allocation4 + $0x3c8] sm:$0xff]
    %v4052 = vld [vmem:[#allocation4 + $0x3d0] sm:$0xf]
    %v4053 = vld [vmem:[#allocation4 + $0x3d4] sm:$0xff]
    %v4054 = vld [vmem:[#allocation4 + $0x3dc] sm:$0xff]
    %v4055 = vld [vmem:[#allocation4 + $0x3e4] sm:$0xf]
    %v4056 = vld [vmem:[#allocation4 + $0x3e8] sm:$0xff]
    %v4057 = vld [vmem:[#allocation4 + $0x3f0] sm:$0xff]
    %v4058 = vld [vmem:[#allocation4 + $0x3f8] sm:$0xf]
    %v4059 = vld [vmem:[#allocation4 + $0x3fc] sm:$0xff]
    %v4060 = vld [vmem:[#allocation4 + $0x404] sm:$0xff]
    %v4061 = vld [vmem:[#allocation4 + $0x40c] sm:$0xf]
    %v4062 = vld [vmem:[#allocation4 + $0x410] sm:$0xff]
    %v4063 = vld [vmem:[#allocation4 + $0x418] sm:$0xff]
    %v4064 = vld [vmem:[#allocation4 + $0x420] sm:$0xf]
    %v4065 = vld [vmem:[#allocation4 + $0x424] sm:$0xff]
    %v4066 = vld [vmem:[#allocation4 + $0x42c] sm:$0xff]
    %v4067 = vld [vmem:[#allocation4 + $0x434] sm:$0xf]
    %v4068 = vld [vmem:[#allocation4 + $0x438] sm:$0xff]
    %v4069 = vld [vmem:[#allocation4 + $0x440] sm:$0xff]
    %v4070 = vld [vmem:[#allocation4 + $0x448] sm:$0xf]
    %v4071 = vld [vmem:[#allocation4 + $0x44c] sm:$0xff]
    %v4072 = vld [vmem:[#allocation4 + $0x454] sm:$0xff]
    %v4073 = vld [vmem:[#allocation4 + $0x45c] sm:$0xf]
    %v4074 = vld [vmem:[#allocation4 + $0x460] sm:$0xff]
    %v4075 = vld [vmem:[#allocation4 + $0x468] sm:$0xff]
    %v4076 = vld [vmem:[#allocation4 + $0x470] sm:$0xf]
    %v4077 = vld [vmem:[#allocation4 + $0x474] sm:$0xff]
    %v4078 = vld [vmem:[#allocation4 + $0x47c] sm:$0xff]
    %v4079 = vld [vmem:[#allocation4 + $0x484] sm:$0xf]
    %v4080 = vld [vmem:[#allocation4 + $0x488] sm:$0xff]
    %v4081 = vld [vmem:[#allocation4 + $0x490] sm:$0xff]
    %v4082 = vld [vmem:[#allocation4 + $0x498] sm:$0xf]
    %v4083 = vld [vmem:[#allocation4 + $0x49c] sm:$0xff]
    %v4084 = vld [vmem:[#allocation4 + $0x4a4] sm:$0xff]
    %v4085 = vld [vmem:[#allocation4 + $0x4ac] sm:$0xf]
    %v4086 = vld [vmem:[#allocation4 + $0x4b0] sm:$0xff]
    %v4087 = vld [vmem:[#allocation4 + $0x4b8] sm:$0xff]
    %v4088 = vld [vmem:[#allocation4 + $0x4c0] sm:$0xf]
    %v4089 = vld [vmem:[#allocation4 + $0x4c4] sm:$0xff]
    %v4090 = vld [vmem:[#allocation4 + $0x4cc] sm:$0xff]
    %v4091 = vld [vmem:[#allocation4 + $0x4d4] sm:$0xf]
    %v4092 = vld [vmem:[#allocation4 + $0x4d8] sm:$0xff]
    %v4093 = vld [vmem:[#allocation4 + $0x4e0] sm:$0xff]
    %v4094 = vld [vmem:[#allocation4 + $0x4e8] sm:$0xf]
    %v4095 = vld [vmem:[#allocation4 + $0x4ec] sm:$0xff]
    %v4096 = vld [vmem:[#allocation4 + $0x4f4] sm:$0xff]
    %v4097 = vld [vmem:[#allocation4 + $0x4fc] sm:$0xf]
    %v4098 = vld [vmem:[#allocation4 + $0x500] sm:$0xff]
    %v4099 = vld [vmem:[#allocation4 + $0x508] sm:$0xff]
    %v4100 = vld [vmem:[#allocation4 + $0x510] sm:$0xf]
    %v4101 = vld [vmem:[#allocation4 + $0x514] sm:$0xff]
    %v4102 = vld [vmem:[#allocation4 + $0x51c] sm:$0xff]
    %v4103 = vld [vmem:[#allocation4 + $0x524] sm:$0xf]
    %v4104 = vld [vmem:[#allocation4 + $0x528] sm:$0xff]
    %v4105 = vld [vmem:[#allocation4 + $0x530] sm:$0xff]
    %v4106 = vld [vmem:[#allocation4 + $0x538] sm:$0xf]
    %v4107 = vld [vmem:[#allocation4 + $0x53c] sm:$0xff]
    %v4108 = vld [vmem:[#allocation4 + $0x544] sm:$0xff]
    %v4109 = vld [vmem:[#allocation4 + $0x54c] sm:$0xf]
    %v4110 = vld [vmem:[#allocation4 + $0x550] sm:$0xff]
    %v4111 = vld [vmem:[#allocation4 + $0x558] sm:$0xff]
    %v4112 = vld [vmem:[#allocation4 + $0x560] sm:$0xf]
    %v4113 = vld [vmem:[#allocation4 + $0x564] sm:$0xff]
    %v4114 = vld [vmem:[#allocation4 + $0x56c] sm:$0xff]
    %v4115 = vld [vmem:[#allocation4 + $0x574] sm:$0xf]
    %v4116 = vld [vmem:[#allocation4 + $0x578] sm:$0xff]
    %v4117 = vld [vmem:[#allocation4 + $0x580] sm:$0xff]
    %v4118 = vld [vmem:[#allocation4 + $0x588] sm:$0xf]
    %v4119 = vld [vmem:[#allocation4 + $0x58c] sm:$0xff]
    %v4120 = vld [vmem:[#allocation4 + $0x594] sm:$0xff]
    %v4121 = vld [vmem:[#allocation4 + $0x59c] sm:$0xf]
    %v4122 = vld [vmem:[#allocation4 + $0x5a0] sm:$0xff]
    %v4123 = vld [vmem:[#allocation4 + $0x5a8] sm:$0xff]
    %v4124 = vld [vmem:[#allocation4 + $0x5b0] sm:$0xf]
    %v4125 = vld [vmem:[#allocation4 + $0x5b4] sm:$0xff]
    %v4126 = vld [vmem:[#allocation4 + $0x5bc] sm:$0xff]
    %v4127 = vld [vmem:[#allocation4 + $0x5c4] sm:$0xf]
    %v4128 = vld [vmem:[#allocation4 + $0x5c8] sm:$0xff]
    %v4129 = vld [vmem:[#allocation4 + $0x5d0] sm:$0xff]
    %v4130 = vld [vmem:[#allocation4 + $0x5d8] sm:$0xf]
    %v4131 = vld [vmem:[#allocation4 + $0x5dc] sm:$0xff]
    %v4132 = vld [vmem:[#allocation4 + $0x5e4] sm:$0xff]
    %v4133 = vld [vmem:[#allocation4 + $0x5ec] sm:$0xf]
    %v4134 = vld [vmem:[#allocation4 + $0x5f0] sm:$0xff]
    %v4135 = vld [vmem:[#allocation4 + $0x5f8] sm:$0xff]
    %v4136 = vld [vmem:[#allocation4 + $0x600] sm:$0xf]
    %v4137 = vld [vmem:[#allocation4 + $0x604] sm:$0xff]
    %v4138 = vld [vmem:[#allocation4 + $0x60c] sm:$0xff]
    %v4139 = vld [vmem:[#allocation4 + $0x614] sm:$0xf]
    %v4140 = vld [vmem:[#allocation4 + $0x618] sm:$0xff]
    %v4141 = vld [vmem:[#allocation4 + $0x620] sm:$0xff]
    %v4142 = vld [vmem:[#allocation4 + $0x628] sm:$0xf]
    %v4143 = vld [vmem:[#allocation4 + $0x62c] sm:$0xff]
    %v4144 = vld [vmem:[#allocation4 + $0x634] sm:$0xff]
    %v4145 = vld [vmem:[#allocation4 + $0x63c] sm:$0xf]
    %v4146 = vld [vmem:[#allocation4 + $0x640] sm:$0xff]
    %v4147 = vld [vmem:[#allocation4 + $0x648] sm:$0xff]
    %v4148 = vld [vmem:[#allocation4 + $0x650] sm:$0xf]
    %v4149 = vld [vmem:[#allocation4 + $0x654] sm:$0xff]
    %v4150 = vld [vmem:[#allocation4 + $0x65c] sm:$0xff]
    %v4151 = vld [vmem:[#allocation4 + $0x664] sm:$0xf]
    %v4152 = vld [vmem:[#allocation4 + $0x668] sm:$0xff]
    %v4153 = vld [vmem:[#allocation4 + $0x670] sm:$0xff]
    %v4154 = vld [vmem:[#allocation4 + $0x678] sm:$0xf]
    %v4155 = vld [vmem:[#allocation4 + $0x67c] sm:$0xff]
    %v4156 = vld [vmem:[#allocation4 + $0x684] sm:$0xff]
    %v4157 = vld [vmem:[#allocation4 + $0x68c] sm:$0xf]
    %v4158 = vld [vmem:[#allocation4 + $0x690] sm:$0xff]
    %v4159 = vld [vmem:[#allocation4 + $0x698] sm:$0xff]
    %v4160 = vld [vmem:[#allocation4 + $0x6a0] sm:$0xf]
    %v4161 = vld [vmem:[#allocation4 + $0x6a4] sm:$0xff]
    %v4162 = vld [vmem:[#allocation4 + $0x6ac] sm:$0xff]
    %v4163 = vld [vmem:[#allocation4 + $0x6b4] sm:$0xf]
    %v4164 = vld [vmem:[#allocation4 + $0x6b8] sm:$0xff]
    %v4165 = vld [vmem:[#allocation4 + $0x6c0] sm:$0xff]
    %v4166 = vld [vmem:[#allocation4 + $0x6c8] sm:$0xf]
    %v4167 = vld [vmem:[#allocation4 + $0x6cc] sm:$0xff]
    %v4168 = vld [vmem:[#allocation4 + $0x6d4] sm:$0xff]
    %v4169 = vld [vmem:[#allocation4 + $0x6dc] sm:$0xf]
    %v4170 = vld [vmem:[#allocation4 + $0x6e0] sm:$0xff]
    %v4171 = vld [vmem:[#allocation4 + $0x6e8] sm:$0xff]
    %v4172 = vld [vmem:[#allocation4 + $0x6f0] sm:$0xf]
    %v4173 = vld [vmem:[#allocation4 + $0x6f4] sm:$0xff]
    %v4174 = vld [vmem:[#allocation4 + $0x6fc] sm:$0xff]
    %v4175 = vld [vmem:[#allocation4 + $0x704] sm:$0xf]
    %v4176 = vld [vmem:[#allocation4 + $0x708] sm:$0xff]
    %v4177 = vld [vmem:[#allocation4 + $0x710] sm:$0xff]
    %v4178 = vld [vmem:[#allocation4 + $0x718] sm:$0xf]
    %v4179 = vld [vmem:[#allocation4 + $0x71c] sm:$0xff]
    %v4180 = vld [vmem:[#allocation4 + $0x724] sm:$0xff]
    %v4181 = vld [vmem:[#allocation4 + $0x72c] sm:$0xf]
    %v4182 = vld [vmem:[#allocation4 + $0x730] sm:$0xff]
    %v4183 = vld [vmem:[#allocation4 + $0x738] sm:$0xff]
    %v4184 = vld [vmem:[#allocation4 + $0x740] sm:$0xf]
    %v4185 = vld [vmem:[#allocation4 + $0x744] sm:$0xff]
    %v4186 = vld [vmem:[#allocation4 + $0x74c] sm:$0xff]
    %v4187 = vld [vmem:[#allocation4 + $0x754] sm:$0xf]
    %v4188 = vld [vmem:[#allocation4 + $0x758] sm:$0xff]
    %v4189 = vld [vmem:[#allocation4 + $0x760] sm:$0xff]
    %v4190 = vld [vmem:[#allocation4 + $0x768] sm:$0xf]
    %v4191 = vld [vmem:[#allocation4 + $0x76c] sm:$0xff]
    %v4192 = vld [vmem:[#allocation4 + $0x774] sm:$0xff]
    %v4193 = vld [vmem:[#allocation4 + $0x77c] sm:$0xf]
    %v4194 = vld [vmem:[#allocation4 + $0x780] sm:$0xff]
    %v4195 = vld [vmem:[#allocation4 + $0x788] sm:$0xff]
    %v4196 = vld [vmem:[#allocation4 + $0x790] sm:$0xf]
    %v4197 = vld [vmem:[#allocation4 + $0x794] sm:$0xff]
    %v4198 = vld [vmem:[#allocation4 + $0x79c] sm:$0xff]
    %v4199 = vld [vmem:[#allocation4 + $0x7a4] sm:$0xf]
    %v4200 = vld [vmem:[#allocation4 + $0x7a8] sm:$0xff]
    %v4201 = vld [vmem:[#allocation4 + $0x7b0] sm:$0xff]
    %v4202 = vld [vmem:[#allocation4 + $0x7b8] sm:$0xf]
    %v4203 = vld [vmem:[#allocation4 + $0x7bc] sm:$0xff]
    %v4204 = vld [vmem:[#allocation4 + $0x7c4] sm:$0xff]
    %v4205 = vld [vmem:[#allocation4 + $0x7cc] sm:$0xf]
    %v4206 = vld [vmem:[#allocation4 + $0x7d0] sm:$0xff]
    %v4207 = vld [vmem:[#allocation4 + $0x7d8] sm:$0xff]
    %v4208 = vld [vmem:[#allocation4 + $0x7e0] sm:$0xf]
    %v4209 = vld [vmem:[#allocation4 + $0x7e4] sm:$0xff]
    %v4210 = vld [vmem:[#allocation4 + $0x7ec] sm:$0xff]
    %v4211 = vld [vmem:[#allocation4 + $0x7f4] sm:$0xf]
    %v4212 = vld [vmem:[#allocation4 + $0x7f8] sm:$0xff]
    %v4213 = vld [vmem:[#allocation4 + $0x800] sm:$0xff]
    %v4214 = vld [vmem:[#allocation4 + $0x808] sm:$0xf]
    %v4215 = vld [vmem:[#allocation4 + $0x80c] sm:$0xff]
    %v4216 = vld [vmem:[#allocation4 + $0x814] sm:$0xff]
    %v4217 = vld [vmem:[#allocation4 + $0x81c] sm:$0xf]
    %v4218 = vld [vmem:[#allocation4 + $0x820] sm:$0xff]
    %v4219 = vld [vmem:[#allocation4 + $0x828] sm:$0xff]
    %v4220 = vld [vmem:[#allocation4 + $0x830] sm:$0xf]
    %v4221 = vld [vmem:[#allocation4 + $0x834] sm:$0xff]
    %v4222 = vld [vmem:[#allocation4 + $0x83c] sm:$0xff]
    %v4223 = vld [vmem:[#allocation4 + $0x844] sm:$0xf]
    %v4224 = vld [vmem:[#allocation4 + $0x848] sm:$0xff]
    %v4225 = vld [vmem:[#allocation4 + $0x850] sm:$0xff]
    %v4226 = vld [vmem:[#allocation4 + $0x858] sm:$0xf]
    %v4227 = vld [vmem:[#allocation4 + $0x85c] sm:$0xff]
    %v4228 = vld [vmem:[#allocation4 + $0x864] sm:$0xff]
    %v4229 = vld [vmem:[#allocation4 + $0x86c] sm:$0xf]
    %v4230 = vld [vmem:[#allocation4 + $0x870] sm:$0xff]
    %v4231 = vld [vmem:[#allocation4 + $0x878] sm:$0xff]
    %v4232 = vld [vmem:[#allocation4 + $0x880] sm:$0xf]
    %v4233 = vld [vmem:[#allocation4 + $0x884] sm:$0xff]
    %v4234 = vld [vmem:[#allocation4 + $0x88c] sm:$0xff]
    %v4235 = vld [vmem:[#allocation4 + $0x894] sm:$0xf]
    %v4236 = vld [vmem:[#allocation4 + $0x898] sm:$0xff]
    %v4237 = vld [vmem:[#allocation4 + $0x8a0] sm:$0xff]
    %v4238 = vld [vmem:[#allocation4 + $0x8a8] sm:$0xf]
    %v4239 = vld [vmem:[#allocation4 + $0x8ac] sm:$0xff]
    %v4240 = vld [vmem:[#allocation4 + $0x8b4] sm:$0xff]
    %v4241 = vld [vmem:[#allocation4 + $0x8bc] sm:$0xf]
    %v4242 = vld [vmem:[#allocation4 + $0x8c0] sm:$0xff]
    %v4243 = vld [vmem:[#allocation4 + $0x8c8] sm:$0xff]
    %v4244 = vld [vmem:[#allocation4 + $0x8d0] sm:$0xf]
    %v4245 = vld [vmem:[#allocation4 + $0x8d4] sm:$0xff]
    %v4246 = vld [vmem:[#allocation4 + $0x8dc] sm:$0xff]
    %v4247 = vld [vmem:[#allocation4 + $0x8e4] sm:$0xf]
    %v4248 = vld [vmem:[#allocation4 + $0x8e8] sm:$0xff]
    %v4249 = vld [vmem:[#allocation4 + $0x8f0] sm:$0xff]
    %v4250 = vld [vmem:[#allocation4 + $0x8f8] sm:$0xf]
    %v4251 = vld [vmem:[#allocation4 + $0x8fc] sm:$0xff]
    %v4252 = vld [vmem:[#allocation4 + $0x904] sm:$0xff]
    %v4253 = vld [vmem:[#allocation4 + $0x90c] sm:$0xf]
    %v4254 = vld [vmem:[#allocation4 + $0x910] sm:$0xff]
    %v4255 = vld [vmem:[#allocation4 + $0x918] sm:$0xff]
    %v4256 = vld [vmem:[#allocation4 + $0x920] sm:$0xf]
    %v4257 = vld [vmem:[#allocation4 + $0x924] sm:$0xff]
    %v4258 = vld [vmem:[#allocation4 + $0x92c] sm:$0xff]
    %v4259 = vld [vmem:[#allocation4 + $0x934] sm:$0xf]
    %v4260 = vld [vmem:[#allocation4 + $0x938] sm:$0xff]
    %v4261 = vld [vmem:[#allocation4 + $0x940] sm:$0xff]
    %v4262 = vld [vmem:[#allocation4 + $0x948] sm:$0xf]
    %v4263 = vld [vmem:[#allocation4 + $0x94c] sm:$0xff]
    %v4264 = vld [vmem:[#allocation4 + $0x954] sm:$0xff]
    %v4265 = vld [vmem:[#allocation4 + $0x95c] sm:$0xf]
    %v4266 = vld [vmem:[#allocation4 + $0x960] sm:$0xff]
    %v4267 = vld [vmem:[#allocation4 + $0x968] sm:$0xff]
    %v4268 = vld [vmem:[#allocation4 + $0x970] sm:$0xf]
    %v4269 = vld [vmem:[#allocation4 + $0x974] sm:$0xff]
    %v4270 = vld [vmem:[#allocation4 + $0x97c] sm:$0xff]
    %v4271 = vld [vmem:[#allocation4 + $0x984] sm:$0xf]
    %v4272 = vld [vmem:[#allocation4 + $0x988] sm:$0xff]
    %v4273 = vld [vmem:[#allocation4 + $0x990] sm:$0xff]
    %v4274 = vld [vmem:[#allocation4 + $0x998] sm:$0xf]
    %v4275 = vld [vmem:[#allocation4 + $0x99c] sm:$0xff]
    %v4276 = vld [vmem:[#allocation4 + $0x9a4] sm:$0xff]
    %v4277 = vld [vmem:[#allocation4 + $0x9ac] sm:$0xf]
    %v4278 = vld [vmem:[#allocation4 + $0x9b0] sm:$0xff]
    %v4279 = vld [vmem:[#allocation4 + $0x9b8] sm:$0xff]
    %v4280 = vld [vmem:[#allocation4 + $0x9c0] sm:$0xf]
    %v4281 = vld [vmem:[#allocation4 + $0x9c4] sm:$0xff]
    %v4282 = vld [vmem:[#allocation4 + $0x9cc] sm:$0xff]
    %v4283 = vld [vmem:[#allocation4 + $0x9d4] sm:$0xf]
    %v4284 = vld [vmem:[#allocation4 + $0x9d8] sm:$0xff]
    %v4285 = vld [vmem:[#allocation4 + $0x9e0] sm:$0xff]
    %v4286 = vld [vmem:[#allocation4 + $0x9e8] sm:$0xf]
    %v4287 = vld [vmem:[#allocation4 + $0x9ec] sm:$0xff]
    %v4288 = vld [vmem:[#allocation4 + $0x9f4] sm:$0xff]
    %v4289 = vld [vmem:[#allocation4 + $0x9fc] sm:$0xf]
    %v4290 = vlaneseq
    %v4291 = vshrl.u32 %v4290, 7
    %v4292 = vsub.s32 1, %v4291
    %v4293 = vrot.slane %v94, %v4292
    %v4294 = vlaneseq
    %v4295 = vshrl.u32 %v4294, 7
    %v4296 = vsub.s32 1, %v4295
    %v4297 = vrot.slane %v95, %v4296
    %v4298 = vlaneseq
    %v4299 = vshrl.u32 %v4298, 7
    %v4300 = vsub.s32 1, %v4299
    %v4301 = vrot.slane %v96, %v4300
    %v4302 = vlaneseq
    %v4303 = vshrl.u32 %v4302, 7
    %v4304 = vsub.s32 1, %v4303
    %v4305 = vrot.slane %v97, %v4304
    %v4306 = vlaneseq
    %v4307 = vshrl.u32 %v4306, 7
    %v4308 = vsub.s32 1, %v4307
    %v4309 = vrot.slane %v98, %v4308
    %v4694 = vunpack.c.l.b16 %v3906
    %v4695 = vunpack.c.h.b16 %v3906
    %v4696 = vunpack.c.l.b16 %v3907
    %v4697 = vunpack.c.h.b16 %v3907
    %v4698 = vunpack.c.l.b16 %v3908
    %v4699 = vunpack.c.l.b16 %v3909
    %v4700 = vunpack.c.h.b16 %v3909
    %v4701 = vunpack.c.l.b16 %v3910
    %v4702 = vunpack.c.h.b16 %v3910
    %v4703 = vunpack.c.l.b16 %v3911
    %v4704 = vunpack.c.l.b16 %v3912
    %v4705 = vunpack.c.h.b16 %v3912
    %v4706 = vunpack.c.l.b16 %v3913
    %v4707 = vunpack.c.h.b16 %v3913
    %v4708 = vunpack.c.l.b16 %v3914
    %v4709 = vunpack.c.l.b16 %v3915
    %v4710 = vunpack.c.h.b16 %v3915
    %v4711 = vunpack.c.l.b16 %v3916
    %v4712 = vunpack.c.h.b16 %v3916
    %v4713 = vunpack.c.l.b16 %v3917
    %v4714 = vunpack.c.l.b16 %v3918
    %v4715 = vunpack.c.h.b16 %v3918
    %v4716 = vunpack.c.l.b16 %v3919
    %v4717 = vunpack.c.h.b16 %v3919
    %v4718 = vunpack.c.l.b16 %v3920
    %v4719 = vunpack.c.l.b16 %v3921
    %v4720 = vunpack.c.h.b16 %v3921
    %v4721 = vunpack.c.l.b16 %v3922
    %v4722 = vunpack.c.h.b16 %v3922
    %v4723 = vunpack.c.l.b16 %v3923
    %v4724 = vunpack.c.l.b16 %v3924
    %v4725 = vunpack.c.h.b16 %v3924
    %v4726 = vunpack.c.l.b16 %v3925
    %v4727 = vunpack.c.h.b16 %v3925
    %v4728 = vunpack.c.l.b16 %v3926
    %v4729 = vunpack.c.l.b16 %v3927
    %v4730 = vunpack.c.h.b16 %v3927
    %v4731 = vunpack.c.l.b16 %v3928
    %v4732 = vunpack.c.h.b16 %v3928
    %v4733 = vunpack.c.l.b16 %v3929
    %v4734 = vunpack.c.l.b16 %v3930
    %v4735 = vunpack.c.h.b16 %v3930
    %v4736 = vunpack.c.l.b16 %v3931
    %v4737 = vunpack.c.h.b16 %v3931
    %v4738 = vunpack.c.l.b16 %v3932
    %v4739 = vunpack.c.l.b16 %v3933
    %v4740 = vunpack.c.h.b16 %v3933
    %v4741 = vunpack.c.l.b16 %v3934
    %v4742 = vunpack.c.h.b16 %v3934
    %v4743 = vunpack.c.l.b16 %v3935
    %v4744 = vunpack.c.l.b16 %v3936
    %v4745 = vunpack.c.h.b16 %v3936
    %v4746 = vunpack.c.l.b16 %v3937
    %v4747 = vunpack.c.h.b16 %v3937
    %v4748 = vunpack.c.l.b16 %v3938
    %v4749 = vunpack.c.l.b16 %v3939
    %v4750 = vunpack.c.h.b16 %v3939
    %v4751 = vunpack.c.l.b16 %v3940
    %v4752 = vunpack.c.h.b16 %v3940
    %v4753 = vunpack.c.l.b16 %v3941
    %v4754 = vunpack.c.l.b16 %v3942
    %v4755 = vunpack.c.h.b16 %v3942
    %v4756 = vunpack.c.l.b16 %v3943
    %v4757 = vunpack.c.h.b16 %v3943
    %v4758 = vunpack.c.l.b16 %v3944
    %v4759 = vunpack.c.l.b16 %v3945
    %v4760 = vunpack.c.h.b16 %v3945
    %v4761 = vunpack.c.l.b16 %v3946
    %v4762 = vunpack.c.h.b16 %v3946
    %v4763 = vunpack.c.l.b16 %v3947
    %v4764 = vunpack.c.l.b16 %v3948
    %v4765 = vunpack.c.h.b16 %v3948
    %v4766 = vunpack.c.l.b16 %v3949
    %v4767 = vunpack.c.h.b16 %v3949
    %v4768 = vunpack.c.l.b16 %v3950
    %v4769 = vunpack.c.l.b16 %v3951
    %v4770 = vunpack.c.h.b16 %v3951
    %v4771 = vunpack.c.l.b16 %v3952
    %v4772 = vunpack.c.h.b16 %v3952
    %v4773 = vunpack.c.l.b16 %v3953
    %v4774 = vunpack.c.l.b16 %v3954
    %v4775 = vunpack.c.h.b16 %v3954
    %v4776 = vunpack.c.l.b16 %v3955
    %v4777 = vunpack.c.h.b16 %v3955
    %v4778 = vunpack.c.l.b16 %v3956
    %v4779 = vunpack.c.l.b16 %v3957
    %v4780 = vunpack.c.h.b16 %v3957
    %v4781 = vunpack.c.l.b16 %v3958
    %v4782 = vunpack.c.h.b16 %v3958
    %v4783 = vunpack.c.l.b16 %v3959
    %v4784 = vunpack.c.l.b16 %v3960
    %v4785 = vunpack.c.h.b16 %v3960
    %v4786 = vunpack.c.l.b16 %v3961
    %v4787 = vunpack.c.h.b16 %v3961
    %v4788 = vunpack.c.l.b16 %v3962
    %v4789 = vunpack.c.l.b16 %v3963
    %v4790 = vunpack.c.h.b16 %v3963
    %v4791 = vunpack.c.l.b16 %v3964
    %v4792 = vunpack.c.h.b16 %v3964
    %v4793 = vunpack.c.l.b16 %v3965
    %v4794 = vunpack.c.l.b16 %v3966
    %v4795 = vunpack.c.h.b16 %v3966
    %v4796 = vunpack.c.l.b16 %v3967
    %v4797 = vunpack.c.h.b16 %v3967
    %v4798 = vunpack.c.l.b16 %v3968
    %v4799 = vunpack.c.l.b16 %v3969
    %v4800 = vunpack.c.h.b16 %v3969
    %v4801 = vunpack.c.l.b16 %v3970
    %v4802 = vunpack.c.h.b16 %v3970
    %v4803 = vunpack.c.l.b16 %v3971
    %v4804 = vunpack.c.l.b16 %v3972
    %v4805 = vunpack.c.h.b16 %v3972
    %v4806 = vunpack.c.l.b16 %v3973
    %v4807 = vunpack.c.h.b16 %v3973
    %v4808 = vunpack.c.l.b16 %v3974
    %v4809 = vunpack.c.l.b16 %v3975
    %v4810 = vunpack.c.h.b16 %v3975
    %v4811 = vunpack.c.l.b16 %v3976
    %v4812 = vunpack.c.h.b16 %v3976
    %v4813 = vunpack.c.l.b16 %v3977
    %v4814 = vunpack.c.l.b16 %v3978
    %v4815 = vunpack.c.h.b16 %v3978
    %v4816 = vunpack.c.l.b16 %v3979
    %v4817 = vunpack.c.h.b16 %v3979
    %v4818 = vunpack.c.l.b16 %v3980
    %v4819 = vunpack.c.l.b16 %v3981
    %v4820 = vunpack.c.h.b16 %v3981
    %v4821 = vunpack.c.l.b16 %v3982
    %v4822 = vunpack.c.h.b16 %v3982
    %v4823 = vunpack.c.l.b16 %v3983
    %v4824 = vunpack.c.l.b16 %v3984
    %v4825 = vunpack.c.h.b16 %v3984
    %v4826 = vunpack.c.l.b16 %v3985
    %v4827 = vunpack.c.h.b16 %v3985
    %v4828 = vunpack.c.l.b16 %v3986
    %v4829 = vunpack.c.l.b16 %v3987
    %v4830 = vunpack.c.h.b16 %v3987
    %v4831 = vunpack.c.l.b16 %v3988
    %v4832 = vunpack.c.h.b16 %v3988
    %v4833 = vunpack.c.l.b16 %v3989
    %v4834 = vunpack.c.l.b16 %v3990
    %v4835 = vunpack.c.h.b16 %v3990
    %v4836 = vunpack.c.l.b16 %v3991
    %v4837 = vunpack.c.h.b16 %v3991
    %v4838 = vunpack.c.l.b16 %v3992
    %v4839 = vunpack.c.l.b16 %v3993
    %v4840 = vunpack.c.h.b16 %v3993
    %v4841 = vunpack.c.l.b16 %v3994
    %v4842 = vunpack.c.h.b16 %v3994
    %v4843 = vunpack.c.l.b16 %v3995
    %v4844 = vunpack.c.l.b16 %v3996
    %v4845 = vunpack.c.h.b16 %v3996
    %v4846 = vunpack.c.l.b16 %v3997
    %v4847 = vunpack.c.h.b16 %v3997
    %v4848 = vunpack.c.l.b16 %v3998
    %v4849 = vunpack.c.l.b16 %v3999
    %v4850 = vunpack.c.h.b16 %v3999
    %v4851 = vunpack.c.l.b16 %v4000
    %v4852 = vunpack.c.h.b16 %v4000
    %v4853 = vunpack.c.l.b16 %v4001
    %v4854 = vunpack.c.l.b16 %v4002
    %v4855 = vunpack.c.h.b16 %v4002
    %v4856 = vunpack.c.l.b16 %v4003
    %v4857 = vunpack.c.h.b16 %v4003
    %v4858 = vunpack.c.l.b16 %v4004
    %v4859 = vunpack.c.l.b16 %v4005
    %v4860 = vunpack.c.h.b16 %v4005
    %v4861 = vunpack.c.l.b16 %v4006
    %v4862 = vunpack.c.h.b16 %v4006
    %v4863 = vunpack.c.l.b16 %v4007
    %v4864 = vunpack.c.l.b16 %v4008
    %v4865 = vunpack.c.h.b16 %v4008
    %v4866 = vunpack.c.l.b16 %v4009
    %v4867 = vunpack.c.h.b16 %v4009
    %v4868 = vunpack.c.l.b16 %v4010
    %v4869 = vunpack.c.l.b16 %v4011
    %v4870 = vunpack.c.h.b16 %v4011
    %v4871 = vunpack.c.l.b16 %v4012
    %v4872 = vunpack.c.h.b16 %v4012
    %v4873 = vunpack.c.l.b16 %v4013
    %v4874 = vunpack.c.l.b16 %v4014
    %v4875 = vunpack.c.h.b16 %v4014
    %v4876 = vunpack.c.l.b16 %v4015
    %v4877 = vunpack.c.h.b16 %v4015
    %v4878 = vunpack.c.l.b16 %v4016
    %v4879 = vunpack.c.l.b16 %v4017
    %v4880 = vunpack.c.h.b16 %v4017
    %v4881 = vunpack.c.l.b16 %v4018
    %v4882 = vunpack.c.h.b16 %v4018
    %v4883 = vunpack.c.l.b16 %v4019
    %v4884 = vunpack.c.l.b16 %v4020
    %v4885 = vunpack.c.h.b16 %v4020
    %v4886 = vunpack.c.l.b16 %v4021
    %v4887 = vunpack.c.h.b16 %v4021
    %v4888 = vunpack.c.l.b16 %v4022
    %v4889 = vunpack.c.l.b16 %v4023
    %v4890 = vunpack.c.h.b16 %v4023
    %v4891 = vunpack.c.l.b16 %v4024
    %v4892 = vunpack.c.h.b16 %v4024
    %v4893 = vunpack.c.l.b16 %v4025
    %v4894 = vunpack.c.l.b16 %v4026
    %v4895 = vunpack.c.h.b16 %v4026
    %v4896 = vunpack.c.l.b16 %v4027
    %v4897 = vunpack.c.h.b16 %v4027
    %v4898 = vunpack.c.l.b16 %v4028
    %v4899 = vunpack.c.l.b16 %v4029
    %v4900 = vunpack.c.h.b16 %v4029
    %v4901 = vunpack.c.l.b16 %v4030
    %v4902 = vunpack.c.h.b16 %v4030
    %v4903 = vunpack.c.l.b16 %v4031
    %v4904 = vunpack.c.l.b16 %v4032
    %v4905 = vunpack.c.h.b16 %v4032
    %v4906 = vunpack.c.l.b16 %v4033
    %v4907 = vunpack.c.h.b16 %v4033
    %v4908 = vunpack.c.l.b16 %v4034
    %v4909 = vunpack.c.l.b16 %v4035
    %v4910 = vunpack.c.h.b16 %v4035
    %v4911 = vunpack.c.l.b16 %v4036
    %v4912 = vunpack.c.h.b16 %v4036
    %v4913 = vunpack.c.l.b16 %v4037
    %v4914 = vunpack.c.l.b16 %v4038
    %v4915 = vunpack.c.h.b16 %v4038
    %v4916 = vunpack.c.l.b16 %v4039
    %v4917 = vunpack.c.h.b16 %v4039
    %v4918 = vunpack.c.l.b16 %v4040
    %v4919 = vunpack.c.l.b16 %v4041
    %v4920 = vunpack.c.h.b16 %v4041
    %v4921 = vunpack.c.l.b16 %v4042
    %v4922 = vunpack.c.h.b16 %v4042
    %v4923 = vunpack.c.l.b16 %v4043
    %v4924 = vunpack.c.l.b16 %v4044
    %v4925 = vunpack.c.h.b16 %v4044
    %v4926 = vunpack.c.l.b16 %v4045
    %v4927 = vunpack.c.h.b16 %v4045
    %v4928 = vunpack.c.l.b16 %v4046
    %v4929 = vunpack.c.l.b16 %v4047
    %v4930 = vunpack.c.h.b16 %v4047
    %v4931 = vunpack.c.l.b16 %v4048
    %v4932 = vunpack.c.h.b16 %v4048
    %v4933 = vunpack.c.l.b16 %v4049
    %v4934 = vunpack.c.l.b16 %v4050
    %v4935 = vunpack.c.h.b16 %v4050
    %v4936 = vunpack.c.l.b16 %v4051
    %v4937 = vunpack.c.h.b16 %v4051
    %v4938 = vunpack.c.l.b16 %v4052
    %v4939 = vunpack.c.l.b16 %v4053
    %v4940 = vunpack.c.h.b16 %v4053
    %v4941 = vunpack.c.l.b16 %v4054
    %v4942 = vunpack.c.h.b16 %v4054
    %v4943 = vunpack.c.l.b16 %v4055
    %v4944 = vunpack.c.l.b16 %v4056
    %v4945 = vunpack.c.h.b16 %v4056
    %v4946 = vunpack.c.l.b16 %v4057
    %v4947 = vunpack.c.h.b16 %v4057
    %v4948 = vunpack.c.l.b16 %v4058
    %v4949 = vunpack.c.l.b16 %v4059
    %v4950 = vunpack.c.h.b16 %v4059
    %v4951 = vunpack.c.l.b16 %v4060
    %v4952 = vunpack.c.h.b16 %v4060
    %v4953 = vunpack.c.l.b16 %v4061
    %v4954 = vunpack.c.l.b16 %v4062
    %v4955 = vunpack.c.h.b16 %v4062
    %v4956 = vunpack.c.l.b16 %v4063
    %v4957 = vunpack.c.h.b16 %v4063
    %v4958 = vunpack.c.l.b16 %v4064
    %v4959 = vunpack.c.l.b16 %v4065
    %v4960 = vunpack.c.h.b16 %v4065
    %v4961 = vunpack.c.l.b16 %v4066
    %v4962 = vunpack.c.h.b16 %v4066
    %v4963 = vunpack.c.l.b16 %v4067
    %v4964 = vunpack.c.l.b16 %v4068
    %v4965 = vunpack.c.h.b16 %v4068
    %v4966 = vunpack.c.l.b16 %v4069
    %v4967 = vunpack.c.h.b16 %v4069
    %v4968 = vunpack.c.l.b16 %v4070
    %v4969 = vunpack.c.l.b16 %v4071
    %v4970 = vunpack.c.h.b16 %v4071
    %v4971 = vunpack.c.l.b16 %v4072
    %v4972 = vunpack.c.h.b16 %v4072
    %v4973 = vunpack.c.l.b16 %v4073
    %v4974 = vunpack.c.l.b16 %v4074
    %v4975 = vunpack.c.h.b16 %v4074
    %v4976 = vunpack.c.l.b16 %v4075
    %v4977 = vunpack.c.h.b16 %v4075
    %v4978 = vunpack.c.l.b16 %v4076
    %v4979 = vunpack.c.l.b16 %v4077
    %v4980 = vunpack.c.h.b16 %v4077
    %v4981 = vunpack.c.l.b16 %v4078
    %v4982 = vunpack.c.h.b16 %v4078
    %v4983 = vunpack.c.l.b16 %v4079
    %v4984 = vunpack.c.l.b16 %v4080
    %v4985 = vunpack.c.h.b16 %v4080
    %v4986 = vunpack.c.l.b16 %v4081
    %v4987 = vunpack.c.h.b16 %v4081
    %v4988 = vunpack.c.l.b16 %v4082
    %v4989 = vunpack.c.l.b16 %v4083
    %v4990 = vunpack.c.h.b16 %v4083
    %v4991 = vunpack.c.l.b16 %v4084
    %v4992 = vunpack.c.h.b16 %v4084
    %v4993 = vunpack.c.l.b16 %v4085
    %v4994 = vunpack.c.l.b16 %v4086
    %v4995 = vunpack.c.h.b16 %v4086
    %v4996 = vunpack.c.l.b16 %v4087
    %v4997 = vunpack.c.h.b16 %v4087
    %v4998 = vunpack.c.l.b16 %v4088
    %v4999 = vunpack.c.l.b16 %v4089
    %v5000 = vunpack.c.h.b16 %v4089
    %v5001 = vunpack.c.l.b16 %v4090
    %v5002 = vunpack.c.h.b16 %v4090
    %v5003 = vunpack.c.l.b16 %v4091
    %v5004 = vunpack.c.l.b16 %v4092
    %v5005 = vunpack.c.h.b16 %v4092
    %v5006 = vunpack.c.l.b16 %v4093
    %v5007 = vunpack.c.h.b16 %v4093
    %v5008 = vunpack.c.l.b16 %v4094
    %v5009 = vunpack.c.l.b16 %v4095
    %v5010 = vunpack.c.h.b16 %v4095
    %v5011 = vunpack.c.l.b16 %v4096
    %v5012 = vunpack.c.h.b16 %v4096
    %v5013 = vunpack.c.l.b16 %v4097
    %v5014 = vunpack.c.l.b16 %v4098
    %v5015 = vunpack.c.h.b16 %v4098
    %v5016 = vunpack.c.l.b16 %v4099
    %v5017 = vunpack.c.h.b16 %v4099
    %v5018 = vunpack.c.l.b16 %v4100
    %v5019 = vunpack.c.l.b16 %v4101
    %v5020 = vunpack.c.h.b16 %v4101
    %v5021 = vunpack.c.l.b16 %v4102
    %v5022 = vunpack.c.h.b16 %v4102
    %v5023 = vunpack.c.l.b16 %v4103
    %v5024 = vunpack.c.l.b16 %v4104
    %v5025 = vunpack.c.h.b16 %v4104
    %v5026 = vunpack.c.l.b16 %v4105
    %v5027 = vunpack.c.h.b16 %v4105
    %v5028 = vunpack.c.l.b16 %v4106
    %v5029 = vunpack.c.l.b16 %v4107
    %v5030 = vunpack.c.h.b16 %v4107
    %v5031 = vunpack.c.l.b16 %v4108
    %v5032 = vunpack.c.h.b16 %v4108
    %v5033 = vunpack.c.l.b16 %v4109
    %v5034 = vunpack.c.l.b16 %v4110
    %v5035 = vunpack.c.h.b16 %v4110
    %v5036 = vunpack.c.l.b16 %v4111
    %v5037 = vunpack.c.h.b16 %v4111
    %v5038 = vunpack.c.l.b16 %v4112
    %v5039 = vunpack.c.l.b16 %v4113
    %v5040 = vunpack.c.h.b16 %v4113
    %v5041 = vunpack.c.l.b16 %v4114
    %v5042 = vunpack.c.h.b16 %v4114
    %v5043 = vunpack.c.l.b16 %v4115
    %v5044 = vunpack.c.l.b16 %v4116
    %v5045 = vunpack.c.h.b16 %v4116
    %v5046 = vunpack.c.l.b16 %v4117
    %v5047 = vunpack.c.h.b16 %v4117
    %v5048 = vunpack.c.l.b16 %v4118
    %v5049 = vunpack.c.l.b16 %v4119
    %v5050 = vunpack.c.h.b16 %v4119
    %v5051 = vunpack.c.l.b16 %v4120
    %v5052 = vunpack.c.h.b16 %v4120
    %v5053 = vunpack.c.l.b16 %v4121
    %v5054 = vunpack.c.l.b16 %v4122
    %v5055 = vunpack.c.h.b16 %v4122
    %v5056 = vunpack.c.l.b16 %v4123
    %v5057 = vunpack.c.h.b16 %v4123
    %v5058 = vunpack.c.l.b16 %v4124
    %v5059 = vunpack.c.l.b16 %v4125
    %v5060 = vunpack.c.h.b16 %v4125
    %v5061 = vunpack.c.l.b16 %v4126
    %v5062 = vunpack.c.h.b16 %v4126
    %v5063 = vunpack.c.l.b16 %v4127
    %v5064 = vunpack.c.l.b16 %v4128
    %v5065 = vunpack.c.h.b16 %v4128
    %v5066 = vunpack.c.l.b16 %v4129
    %v5067 = vunpack.c.h.b16 %v4129
    %v5068 = vunpack.c.l.b16 %v4130
    %v5069 = vunpack.c.l.b16 %v4131
    %v5070 = vunpack.c.h.b16 %v4131
    %v5071 = vunpack.c.l.b16 %v4132
    %v5072 = vunpack.c.h.b16 %v4132
    %v5073 = vunpack.c.l.b16 %v4133
    %v5074 = vunpack.c.l.b16 %v4134
    %v5075 = vunpack.c.h.b16 %v4134
    %v5076 = vunpack.c.l.b16 %v4135
    %v5077 = vunpack.c.h.b16 %v4135
    %v5078 = vunpack.c.l.b16 %v4136
    %v5079 = vunpack.c.l.b16 %v4137
    %v5080 = vunpack.c.h.b16 %v4137
    %v5081 = vunpack.c.l.b16 %v4138
    %v5082 = vunpack.c.h.b16 %v4138
    %v5083 = vunpack.c.l.b16 %v4139
    %v5084 = vunpack.c.l.b16 %v4140
    %v5085 = vunpack.c.h.b16 %v4140
    %v5086 = vunpack.c.l.b16 %v4141
    %v5087 = vunpack.c.h.b16 %v4141
    %v5088 = vunpack.c.l.b16 %v4142
    %v5089 = vunpack.c.l.b16 %v4143
    %v5090 = vunpack.c.h.b16 %v4143
    %v5091 = vunpack.c.l.b16 %v4144
    %v5092 = vunpack.c.h.b16 %v4144
    %v5093 = vunpack.c.l.b16 %v4145
    %v5094 = vunpack.c.l.b16 %v4146
    %v5095 = vunpack.c.h.b16 %v4146
    %v5096 = vunpack.c.l.b16 %v4147
    %v5097 = vunpack.c.h.b16 %v4147
    %v5098 = vunpack.c.l.b16 %v4148
    %v5099 = vunpack.c.l.b16 %v4149
    %v5100 = vunpack.c.h.b16 %v4149
    %v5101 = vunpack.c.l.b16 %v4150
    %v5102 = vunpack.c.h.b16 %v4150
    %v5103 = vunpack.c.l.b16 %v4151
    %v5104 = vunpack.c.l.b16 %v4152
    %v5105 = vunpack.c.h.b16 %v4152
    %v5106 = vunpack.c.l.b16 %v4153
    %v5107 = vunpack.c.h.b16 %v4153
    %v5108 = vunpack.c.l.b16 %v4154
    %v5109 = vunpack.c.l.b16 %v4155
    %v5110 = vunpack.c.h.b16 %v4155
    %v5111 = vunpack.c.l.b16 %v4156
    %v5112 = vunpack.c.h.b16 %v4156
    %v5113 = vunpack.c.l.b16 %v4157
    %v5114 = vunpack.c.l.b16 %v4158
    %v5115 = vunpack.c.h.b16 %v4158
    %v5116 = vunpack.c.l.b16 %v4159
    %v5117 = vunpack.c.h.b16 %v4159
    %v5118 = vunpack.c.l.b16 %v4160
    %v5119 = vunpack.c.l.b16 %v4161
    %v5120 = vunpack.c.h.b16 %v4161
    %v5121 = vunpack.c.l.b16 %v4162
    %v5122 = vunpack.c.h.b16 %v4162
    %v5123 = vunpack.c.l.b16 %v4163
    %v5124 = vunpack.c.l.b16 %v4164
    %v5125 = vunpack.c.h.b16 %v4164
    %v5126 = vunpack.c.l.b16 %v4165
    %v5127 = vunpack.c.h.b16 %v4165
    %v5128 = vunpack.c.l.b16 %v4166
    %v5129 = vunpack.c.l.b16 %v4167
    %v5130 = vunpack.c.h.b16 %v4167
    %v5131 = vunpack.c.l.b16 %v4168
    %v5132 = vunpack.c.h.b16 %v4168
    %v5133 = vunpack.c.l.b16 %v4169
    %v5134 = vunpack.c.l.b16 %v4170
    %v5135 = vunpack.c.h.b16 %v4170
    %v5136 = vunpack.c.l.b16 %v4171
    %v5137 = vunpack.c.h.b16 %v4171
    %v5138 = vunpack.c.l.b16 %v4172
    %v5139 = vunpack.c.l.b16 %v4173
    %v5140 = vunpack.c.h.b16 %v4173
    %v5141 = vunpack.c.l.b16 %v4174
    %v5142 = vunpack.c.h.b16 %v4174
    %v5143 = vunpack.c.l.b16 %v4175
    %v5144 = vunpack.c.l.b16 %v4176
    %v5145 = vunpack.c.h.b16 %v4176
    %v5146 = vunpack.c.l.b16 %v4177
    %v5147 = vunpack.c.h.b16 %v4177
    %v5148 = vunpack.c.l.b16 %v4178
    %v5149 = vunpack.c.l.b16 %v4179
    %v5150 = vunpack.c.h.b16 %v4179
    %v5151 = vunpack.c.l.b16 %v4180
    %v5152 = vunpack.c.h.b16 %v4180
    %v5153 = vunpack.c.l.b16 %v4181
    %v5154 = vunpack.c.l.b16 %v4182
    %v5155 = vunpack.c.h.b16 %v4182
    %v5156 = vunpack.c.l.b16 %v4183
    %v5157 = vunpack.c.h.b16 %v4183
    %v5158 = vunpack.c.l.b16 %v4184
    %v5159 = vunpack.c.l.b16 %v4185
    %v5160 = vunpack.c.h.b16 %v4185
    %v5161 = vunpack.c.l.b16 %v4186
    %v5162 = vunpack.c.h.b16 %v4186
    %v5163 = vunpack.c.l.b16 %v4187
    %v5164 = vunpack.c.l.b16 %v4188
    %v5165 = vunpack.c.h.b16 %v4188
    %v5166 = vunpack.c.l.b16 %v4189
    %v5167 = vunpack.c.h.b16 %v4189
    %v5168 = vunpack.c.l.b16 %v4190
    %v5169 = vunpack.c.l.b16 %v4191
    %v5170 = vunpack.c.h.b16 %v4191
    %v5171 = vunpack.c.l.b16 %v4192
    %v5172 = vunpack.c.h.b16 %v4192
    %v5173 = vunpack.c.l.b16 %v4193
    %v5174 = vunpack.c.l.b16 %v4194
    %v5175 = vunpack.c.h.b16 %v4194
    %v5176 = vunpack.c.l.b16 %v4195
    %v5177 = vunpack.c.h.b16 %v4195
    %v5178 = vunpack.c.l.b16 %v4196
    %v5179 = vunpack.c.l.b16 %v4197
    %v5180 = vunpack.c.h.b16 %v4197
    %v5181 = vunpack.c.l.b16 %v4198
    %v5182 = vunpack.c.h.b16 %v4198
    %v5183 = vunpack.c.l.b16 %v4199
    %v5184 = vunpack.c.l.b16 %v4200
    %v5185 = vunpack.c.h.b16 %v4200
    %v5186 = vunpack.c.l.b16 %v4201
    %v5187 = vunpack.c.h.b16 %v4201
    %v5188 = vunpack.c.l.b16 %v4202
    %v5189 = vunpack.c.l.b16 %v4203
    %v5190 = vunpack.c.h.b16 %v4203
    %v5191 = vunpack.c.l.b16 %v4204
    %v5192 = vunpack.c.h.b16 %v4204
    %v5193 = vunpack.c.l.b16 %v4205
    %v5194 = vunpack.c.l.b16 %v4206
    %v5195 = vunpack.c.h.b16 %v4206
    %v5196 = vunpack.c.l.b16 %v4207
    %v5197 = vunpack.c.h.b16 %v4207
    %v5198 = vunpack.c.l.b16 %v4208
    %v5199 = vunpack.c.l.b16 %v4209
    %v5200 = vunpack.c.h.b16 %v4209
    %v5201 = vunpack.c.l.b16 %v4210
    %v5202 = vunpack.c.h.b16 %v4210
    %v5203 = vunpack.c.l.b16 %v4211
    %v5204 = vunpack.c.l.b16 %v4212
    %v5205 = vunpack.c.h.b16 %v4212
    %v5206 = vunpack.c.l.b16 %v4213
    %v5207 = vunpack.c.h.b16 %v4213
    %v5208 = vunpack.c.l.b16 %v4214
    %v5209 = vunpack.c.l.b16 %v4215
    %v5210 = vunpack.c.h.b16 %v4215
    %v5211 = vunpack.c.l.b16 %v4216
    %v5212 = vunpack.c.h.b16 %v4216
    %v5213 = vunpack.c.l.b16 %v4217
    %v5214 = vunpack.c.l.b16 %v4218
    %v5215 = vunpack.c.h.b16 %v4218
    %v5216 = vunpack.c.l.b16 %v4219
    %v5217 = vunpack.c.h.b16 %v4219
    %v5218 = vunpack.c.l.b16 %v4220
    %v5219 = vunpack.c.l.b16 %v4221
    %v5220 = vunpack.c.h.b16 %v4221
    %v5221 = vunpack.c.l.b16 %v4222
    %v5222 = vunpack.c.h.b16 %v4222
    %v5223 = vunpack.c.l.b16 %v4223
    %v5224 = vunpack.c.l.b16 %v4224
    %v5225 = vunpack.c.h.b16 %v4224
    %v5226 = vunpack.c.l.b16 %v4225
    %v5227 = vunpack.c.h.b16 %v4225
    %v5228 = vunpack.c.l.b16 %v4226
    %v5229 = vunpack.c.l.b16 %v4227
    %v5230 = vunpack.c.h.b16 %v4227
    %v5231 = vunpack.c.l.b16 %v4228
    %v5232 = vunpack.c.h.b16 %v4228
    %v5233 = vunpack.c.l.b16 %v4229
    %v5234 = vunpack.c.l.b16 %v4230
    %v5235 = vunpack.c.h.b16 %v4230
    %v5236 = vunpack.c.l.b16 %v4231
    %v5237 = vunpack.c.h.b16 %v4231
    %v5238 = vunpack.c.l.b16 %v4232
    %v5239 = vunpack.c.l.b16 %v4233
    %v5240 = vunpack.c.h.b16 %v4233
    %v5241 = vunpack.c.l.b16 %v4234
    %v5242 = vunpack.c.h.b16 %v4234
    %v5243 = vunpack.c.l.b16 %v4235
    %v5244 = vunpack.c.l.b16 %v4236
    %v5245 = vunpack.c.h.b16 %v4236
    %v5246 = vunpack.c.l.b16 %v4237
    %v5247 = vunpack.c.h.b16 %v4237
    %v5248 = vunpack.c.l.b16 %v4238
    %v5249 = vunpack.c.l.b16 %v4239
    %v5250 = vunpack.c.h.b16 %v4239
    %v5251 = vunpack.c.l.b16 %v4240
    %v5252 = vunpack.c.h.b16 %v4240
    %v5253 = vunpack.c.l.b16 %v4241
    %v5254 = vunpack.c.l.b16 %v4242
    %v5255 = vunpack.c.h.b16 %v4242
    %v5256 = vunpack.c.l.b16 %v4243
    %v5257 = vunpack.c.h.b16 %v4243
    %v5258 = vunpack.c.l.b16 %v4244
    %v5259 = vunpack.c.l.b16 %v4245
    %v5260 = vunpack.c.h.b16 %v4245
    %v5261 = vunpack.c.l.b16 %v4246
    %v5262 = vunpack.c.h.b16 %v4246
    %v5263 = vunpack.c.l.b16 %v4247
    %v5264 = vunpack.c.l.b16 %v4248
    %v5265 = vunpack.c.h.b16 %v4248
    %v5266 = vunpack.c.l.b16 %v4249
    %v5267 = vunpack.c.h.b16 %v4249
    %v5268 = vunpack.c.l.b16 %v4250
    %v5269 = vunpack.c.l.b16 %v4251
    %v5270 = vunpack.c.h.b16 %v4251
    %v5271 = vunpack.c.l.b16 %v4252
    %v5272 = vunpack.c.h.b16 %v4252
    %v5273 = vunpack.c.l.b16 %v4253
    %v5274 = vunpack.c.l.b16 %v4254
    %v5275 = vunpack.c.h.b16 %v4254
    %v5276 = vunpack.c.l.b16 %v4255
    %v5277 = vunpack.c.h.b16 %v4255
    %v5278 = vunpack.c.l.b16 %v4256
    %v5279 = vunpack.c.l.b16 %v4257
    %v5280 = vunpack.c.h.b16 %v4257
    %v5281 = vunpack.c.l.b16 %v4258
    %v5282 = vunpack.c.h.b16 %v4258
    %v5283 = vunpack.c.l.b16 %v4259
    %v5284 = vunpack.c.l.b16 %v4260
    %v5285 = vunpack.c.h.b16 %v4260
    %v5286 = vunpack.c.l.b16 %v4261
    %v5287 = vunpack.c.h.b16 %v4261
    %v5288 = vunpack.c.l.b16 %v4262
    %v5289 = vunpack.c.l.b16 %v4263
    %v5290 = vunpack.c.h.b16 %v4263
    %v5291 = vunpack.c.l.b16 %v4264
    %v5292 = vunpack.c.h.b16 %v4264
    %v5293 = vunpack.c.l.b16 %v4265
    %v5294 = vunpack.c.l.b16 %v4266
    %v5295 = vunpack.c.h.b16 %v4266
    %v5296 = vunpack.c.l.b16 %v4267
    %v5297 = vunpack.c.h.b16 %v4267
    %v5298 = vunpack.c.l.b16 %v4268
    %v5299 = vunpack.c.l.b16 %v4269
    %v5300 = vunpack.c.h.b16 %v4269
    %v5301 = vunpack.c.l.b16 %v4270
    %v5302 = vunpack.c.h.b16 %v4270
    %v5303 = vunpack.c.l.b16 %v4271
    %v5304 = vunpack.c.l.b16 %v4272
    %v5305 = vunpack.c.h.b16 %v4272
    %v5306 = vunpack.c.l.b16 %v4273
    %v5307 = vunpack.c.h.b16 %v4273
    %v5308 = vunpack.c.l.b16 %v4274
    %v5309 = vunpack.c.l.b16 %v4275
    %v5310 = vunpack.c.h.b16 %v4275
    %v5311 = vunpack.c.l.b16 %v4276
    %v5312 = vunpack.c.h.b16 %v4276
    %v5313 = vunpack.c.l.b16 %v4277
    %v5314 = vunpack.c.l.b16 %v4278
    %v5315 = vunpack.c.h.b16 %v4278
    %v5316 = vunpack.c.l.b16 %v4279
    %v5317 = vunpack.c.h.b16 %v4279
    %v5318 = vunpack.c.l.b16 %v4280
    %v5319 = vunpack.c.l.b16 %v4281
    %v5320 = vunpack.c.h.b16 %v4281
    %v5321 = vunpack.c.l.b16 %v4282
    %v5322 = vunpack.c.h.b16 %v4282
    %v5323 = vunpack.c.l.b16 %v4283
    %v5324 = vunpack.c.l.b16 %v4284
    %v5325 = vunpack.c.h.b16 %v4284
    %v5326 = vunpack.c.l.b16 %v4285
    %v5327 = vunpack.c.h.b16 %v4285
    %v5328 = vunpack.c.l.b16 %v4286
    %v5329 = vunpack.c.l.b16 %v4287
    %v5330 = vunpack.c.h.b16 %v4287
    %v5331 = vunpack.c.l.b16 %v4288
    %v5332 = vunpack.c.h.b16 %v4288
    %v5333 = vunpack.c.l.b16 %v4289
    %v5334 = vpack.c.b16 %v4699, %v4694
    %v5335 = vpack.c.b16 %v4700, %v4695
    %v5336 = vpack.c.b16 %v4701, %v4696
    %v5337 = vpack.c.b16 %v4702, %v4697
    %v5338 = vpack.c.b16 %v4703, %v4698
    %v5339 = vpack.c.b16 %v4709, %v4704
    %v5340 = vpack.c.b16 %v4710, %v4705
    %v5341 = vpack.c.b16 %v4711, %v4706
    %v5342 = vpack.c.b16 %v4712, %v4707
    %v5343 = vpack.c.b16 %v4713, %v4708
    %v5344 = vpack.c.b16 %v4719, %v4714
    %v5345 = vpack.c.b16 %v4720, %v4715
    %v5346 = vpack.c.b16 %v4721, %v4716
    %v5347 = vpack.c.b16 %v4722, %v4717
    %v5348 = vpack.c.b16 %v4723, %v4718
    %v5349 = vpack.c.b16 %v4729, %v4724
    %v5350 = vpack.c.b16 %v4730, %v4725
    %v5351 = vpack.c.b16 %v4731, %v4726
    %v5352 = vpack.c.b16 %v4732, %v4727
    %v5353 = vpack.c.b16 %v4733, %v4728
    %v5354 = vpack.c.b16 %v4739, %v4734
    %v5355 = vpack.c.b16 %v4740, %v4735
    %v5356 = vpack.c.b16 %v4741, %v4736
    %v5357 = vpack.c.b16 %v4742, %v4737
    %v5358 = vpack.c.b16 %v4743, %v4738
    %v5359 = vpack.c.b16 %v4749, %v4744
    %v5360 = vpack.c.b16 %v4750, %v4745
    %v5361 = vpack.c.b16 %v4751, %v4746
    %v5362 = vpack.c.b16 %v4752, %v4747
    %v5363 = vpack.c.b16 %v4753, %v4748
    %v5364 = vpack.c.b16 %v4759, %v4754
    %v5365 = vpack.c.b16 %v4760, %v4755
    %v5366 = vpack.c.b16 %v4761, %v4756
    %v5367 = vpack.c.b16 %v4762, %v4757
    %v5368 = vpack.c.b16 %v4763, %v4758
    %v5369 = vpack.c.b16 %v4769, %v4764
    %v5370 = vpack.c.b16 %v4770, %v4765
    %v5371 = vpack.c.b16 %v4771, %v4766
    %v5372 = vpack.c.b16 %v4772, %v4767
    %v5373 = vpack.c.b16 %v4773, %v4768
    %v5374 = vpack.c.b16 %v4779, %v4774
    %v5375 = vpack.c.b16 %v4780, %v4775
    %v5376 = vpack.c.b16 %v4781, %v4776
    %v5377 = vpack.c.b16 %v4782, %v4777
    %v5378 = vpack.c.b16 %v4783, %v4778
    %v5379 = vpack.c.b16 %v4789, %v4784
    %v5380 = vpack.c.b16 %v4790, %v4785
    %v5381 = vpack.c.b16 %v4791, %v4786
    %v5382 = vpack.c.b16 %v4792, %v4787
    %v5383 = vpack.c.b16 %v4793, %v4788
    %v5384 = vpack.c.b16 %v4799, %v4794
    %v5385 = vpack.c.b16 %v4800, %v4795
    %v5386 = vpack.c.b16 %v4801, %v4796
    %v5387 = vpack.c.b16 %v4802, %v4797
    %v5388 = vpack.c.b16 %v4803, %v4798
    %v5389 = vpack.c.b16 %v4809, %v4804
    %v5390 = vpack.c.b16 %v4810, %v4805
    %v5391 = vpack.c.b16 %v4811, %v4806
    %v5392 = vpack.c.b16 %v4812, %v4807
    %v5393 = vpack.c.b16 %v4813, %v4808
    %v5394 = vpack.c.b16 %v4819, %v4814
    %v5395 = vpack.c.b16 %v4820, %v4815
    %v5396 = vpack.c.b16 %v4821, %v4816
    %v5397 = vpack.c.b16 %v4822, %v4817
    %v5398 = vpack.c.b16 %v4823, %v4818
    %v5399 = vpack.c.b16 %v4829, %v4824
    %v5400 = vpack.c.b16 %v4830, %v4825
    %v5401 = vpack.c.b16 %v4831, %v4826
    %v5402 = vpack.c.b16 %v4832, %v4827
    %v5403 = vpack.c.b16 %v4833, %v4828
    %v5404 = vpack.c.b16 %v4839, %v4834
    %v5405 = vpack.c.b16 %v4840, %v4835
    %v5406 = vpack.c.b16 %v4841, %v4836
    %v5407 = vpack.c.b16 %v4842, %v4837
    %v5408 = vpack.c.b16 %v4843, %v4838
    %v5409 = vpack.c.b16 %v4849, %v4844
    %v5410 = vpack.c.b16 %v4850, %v4845
    %v5411 = vpack.c.b16 %v4851, %v4846
    %v5412 = vpack.c.b16 %v4852, %v4847
    %v5413 = vpack.c.b16 %v4853, %v4848
    %v5414 = vpack.c.b16 %v4859, %v4854
    %v5415 = vpack.c.b16 %v4860, %v4855
    %v5416 = vpack.c.b16 %v4861, %v4856
    %v5417 = vpack.c.b16 %v4862, %v4857
    %v5418 = vpack.c.b16 %v4863, %v4858
    %v5419 = vpack.c.b16 %v4869, %v4864
    %v5420 = vpack.c.b16 %v4870, %v4865
    %v5421 = vpack.c.b16 %v4871, %v4866
    %v5422 = vpack.c.b16 %v4872, %v4867
    %v5423 = vpack.c.b16 %v4873, %v4868
    %v5424 = vpack.c.b16 %v4879, %v4874
    %v5425 = vpack.c.b16 %v4880, %v4875
    %v5426 = vpack.c.b16 %v4881, %v4876
    %v5427 = vpack.c.b16 %v4882, %v4877
    %v5428 = vpack.c.b16 %v4883, %v4878
    %v5429 = vpack.c.b16 %v4889, %v4884
    %v5430 = vpack.c.b16 %v4890, %v4885
    %v5431 = vpack.c.b16 %v4891, %v4886
    %v5432 = vpack.c.b16 %v4892, %v4887
    %v5433 = vpack.c.b16 %v4893, %v4888
    %v5434 = vpack.c.b16 %v4899, %v4894
    %v5435 = vpack.c.b16 %v4900, %v4895
    %v5436 = vpack.c.b16 %v4901, %v4896
    %v5437 = vpack.c.b16 %v4902, %v4897
    %v5438 = vpack.c.b16 %v4903, %v4898
    %v5439 = vpack.c.b16 %v4909, %v4904
    %v5440 = vpack.c.b16 %v4910, %v4905
    %v5441 = vpack.c.b16 %v4911, %v4906
    %v5442 = vpack.c.b16 %v4912, %v4907
    %v5443 = vpack.c.b16 %v4913, %v4908
    %v5444 = vpack.c.b16 %v4919, %v4914
    %v5445 = vpack.c.b16 %v4920, %v4915
    %v5446 = vpack.c.b16 %v4921, %v4916
    %v5447 = vpack.c.b16 %v4922, %v4917
    %v5448 = vpack.c.b16 %v4923, %v4918
    %v5449 = vpack.c.b16 %v4929, %v4924
    %v5450 = vpack.c.b16 %v4930, %v4925
    %v5451 = vpack.c.b16 %v4931, %v4926
    %v5452 = vpack.c.b16 %v4932, %v4927
    %v5453 = vpack.c.b16 %v4933, %v4928
    %v5454 = vpack.c.b16 %v4939, %v4934
    %v5455 = vpack.c.b16 %v4940, %v4935
    %v5456 = vpack.c.b16 %v4941, %v4936
    %v5457 = vpack.c.b16 %v4942, %v4937
    %v5458 = vpack.c.b16 %v4943, %v4938
    %v5459 = vpack.c.b16 %v4949, %v4944
    %v5460 = vpack.c.b16 %v4950, %v4945
    %v5461 = vpack.c.b16 %v4951, %v4946
    %v5462 = vpack.c.b16 %v4952, %v4947
    %v5463 = vpack.c.b16 %v4953, %v4948
    %v5464 = vpack.c.b16 %v4959, %v4954
    %v5465 = vpack.c.b16 %v4960, %v4955
    %v5466 = vpack.c.b16 %v4961, %v4956
    %v5467 = vpack.c.b16 %v4962, %v4957
    %v5468 = vpack.c.b16 %v4963, %v4958
    %v5469 = vpack.c.b16 %v4969, %v4964
    %v5470 = vpack.c.b16 %v4970, %v4965
    %v5471 = vpack.c.b16 %v4971, %v4966
    %v5472 = vpack.c.b16 %v4972, %v4967
    %v5473 = vpack.c.b16 %v4973, %v4968
    %v5474 = vpack.c.b16 %v4979, %v4974
    %v5475 = vpack.c.b16 %v4980, %v4975
    %v5476 = vpack.c.b16 %v4981, %v4976
    %v5477 = vpack.c.b16 %v4982, %v4977
    %v5478 = vpack.c.b16 %v4983, %v4978
    %v5479 = vpack.c.b16 %v4989, %v4984
    %v5480 = vpack.c.b16 %v4990, %v4985
    %v5481 = vpack.c.b16 %v4991, %v4986
    %v5482 = vpack.c.b16 %v4992, %v4987
    %v5483 = vpack.c.b16 %v4993, %v4988
    %v5484 = vpack.c.b16 %v4999, %v4994
    %v5485 = vpack.c.b16 %v5000, %v4995
    %v5486 = vpack.c.b16 %v5001, %v4996
    %v5487 = vpack.c.b16 %v5002, %v4997
    %v5488 = vpack.c.b16 %v5003, %v4998
    %v5489 = vpack.c.b16 %v5009, %v5004
    %v5490 = vpack.c.b16 %v5010, %v5005
    %v5491 = vpack.c.b16 %v5011, %v5006
    %v5492 = vpack.c.b16 %v5012, %v5007
    %v5493 = vpack.c.b16 %v5013, %v5008
    %v5494 = vpack.c.b16 %v5019, %v5014
    %v5495 = vpack.c.b16 %v5020, %v5015
    %v5496 = vpack.c.b16 %v5021, %v5016
    %v5497 = vpack.c.b16 %v5022, %v5017
    %v5498 = vpack.c.b16 %v5023, %v5018
    %v5499 = vpack.c.b16 %v5029, %v5024
    %v5500 = vpack.c.b16 %v5030, %v5025
    %v5501 = vpack.c.b16 %v5031, %v5026
    %v5502 = vpack.c.b16 %v5032, %v5027
    %v5503 = vpack.c.b16 %v5033, %v5028
    %v5504 = vpack.c.b16 %v5039, %v5034
    %v5505 = vpack.c.b16 %v5040, %v5035
    %v5506 = vpack.c.b16 %v5041, %v5036
    %v5507 = vpack.c.b16 %v5042, %v5037
    %v5508 = vpack.c.b16 %v5043, %v5038
    %v5509 = vpack.c.b16 %v5049, %v5044
    %v5510 = vpack.c.b16 %v5050, %v5045
    %v5511 = vpack.c.b16 %v5051, %v5046
    %v5512 = vpack.c.b16 %v5052, %v5047
    %v5513 = vpack.c.b16 %v5053, %v5048
    %v5514 = vpack.c.b16 %v5059, %v5054
    %v5515 = vpack.c.b16 %v5060, %v5055
    %v5516 = vpack.c.b16 %v5061, %v5056
    %v5517 = vpack.c.b16 %v5062, %v5057
    %v5518 = vpack.c.b16 %v5063, %v5058
    %v5519 = vpack.c.b16 %v5069, %v5064
    %v5520 = vpack.c.b16 %v5070, %v5065
    %v5521 = vpack.c.b16 %v5071, %v5066
    %v5522 = vpack.c.b16 %v5072, %v5067
    %v5523 = vpack.c.b16 %v5073, %v5068
    %v5524 = vpack.c.b16 %v5079, %v5074
    %v5525 = vpack.c.b16 %v5080, %v5075
    %v5526 = vpack.c.b16 %v5081, %v5076
    %v5527 = vpack.c.b16 %v5082, %v5077
    %v5528 = vpack.c.b16 %v5083, %v5078
    %v5529 = vpack.c.b16 %v5089, %v5084
    %v5530 = vpack.c.b16 %v5090, %v5085
    %v5531 = vpack.c.b16 %v5091, %v5086
    %v5532 = vpack.c.b16 %v5092, %v5087
    %v5533 = vpack.c.b16 %v5093, %v5088
    %v5534 = vpack.c.b16 %v5099, %v5094
    %v5535 = vpack.c.b16 %v5100, %v5095
    %v5536 = vpack.c.b16 %v5101, %v5096
    %v5537 = vpack.c.b16 %v5102, %v5097
    %v5538 = vpack.c.b16 %v5103, %v5098
    %v5539 = vpack.c.b16 %v5109, %v5104
    %v5540 = vpack.c.b16 %v5110, %v5105
    %v5541 = vpack.c.b16 %v5111, %v5106
    %v5542 = vpack.c.b16 %v5112, %v5107
    %v5543 = vpack.c.b16 %v5113, %v5108
    %v5544 = vpack.c.b16 %v5119, %v5114
    %v5545 = vpack.c.b16 %v5120, %v5115
    %v5546 = vpack.c.b16 %v5121, %v5116
    %v5547 = vpack.c.b16 %v5122, %v5117
    %v5548 = vpack.c.b16 %v5123, %v5118
    %v5549 = vpack.c.b16 %v5129, %v5124
    %v5550 = vpack.c.b16 %v5130, %v5125
    %v5551 = vpack.c.b16 %v5131, %v5126
    %v5552 = vpack.c.b16 %v5132, %v5127
    %v5553 = vpack.c.b16 %v5133, %v5128
    %v5554 = vpack.c.b16 %v5139, %v5134
    %v5555 = vpack.c.b16 %v5140, %v5135
    %v5556 = vpack.c.b16 %v5141, %v5136
    %v5557 = vpack.c.b16 %v5142, %v5137
    %v5558 = vpack.c.b16 %v5143, %v5138
    %v5559 = vpack.c.b16 %v5149, %v5144
    %v5560 = vpack.c.b16 %v5150, %v5145
    %v5561 = vpack.c.b16 %v5151, %v5146
    %v5562 = vpack.c.b16 %v5152, %v5147
    %v5563 = vpack.c.b16 %v5153, %v5148
    %v5564 = vpack.c.b16 %v5159, %v5154
    %v5565 = vpack.c.b16 %v5160, %v5155
    %v5566 = vpack.c.b16 %v5161, %v5156
    %v5567 = vpack.c.b16 %v5162, %v5157
    %v5568 = vpack.c.b16 %v5163, %v5158
    %v5569 = vpack.c.b16 %v5169, %v5164
    %v5570 = vpack.c.b16 %v5170, %v5165
    %v5571 = vpack.c.b16 %v5171, %v5166
    %v5572 = vpack.c.b16 %v5172, %v5167
    %v5573 = vpack.c.b16 %v5173, %v5168
    %v5574 = vpack.c.b16 %v5179, %v5174
    %v5575 = vpack.c.b16 %v5180, %v5175
    %v5576 = vpack.c.b16 %v5181, %v5176
    %v5577 = vpack.c.b16 %v5182, %v5177
    %v5578 = vpack.c.b16 %v5183, %v5178
    %v5579 = vpack.c.b16 %v5189, %v5184
    %v5580 = vpack.c.b16 %v5190, %v5185
    %v5581 = vpack.c.b16 %v5191, %v5186
    %v5582 = vpack.c.b16 %v5192, %v5187
    %v5583 = vpack.c.b16 %v5193, %v5188
    %v5584 = vpack.c.b16 %v5199, %v5194
    %v5585 = vpack.c.b16 %v5200, %v5195
    %v5586 = vpack.c.b16 %v5201, %v5196
    %v5587 = vpack.c.b16 %v5202, %v5197
    %v5588 = vpack.c.b16 %v5203, %v5198
    %v5589 = vpack.c.b16 %v5209, %v5204
    %v5590 = vpack.c.b16 %v5210, %v5205
    %v5591 = vpack.c.b16 %v5211, %v5206
    %v5592 = vpack.c.b16 %v5212, %v5207
    %v5593 = vpack.c.b16 %v5213, %v5208
    %v5594 = vpack.c.b16 %v5219, %v5214
    %v5595 = vpack.c.b16 %v5220, %v5215
    %v5596 = vpack.c.b16 %v5221, %v5216
    %v5597 = vpack.c.b16 %v5222, %v5217
    %v5598 = vpack.c.b16 %v5223, %v5218
    %v5599 = vpack.c.b16 %v5229, %v5224
    %v5600 = vpack.c.b16 %v5230, %v5225
    %v5601 = vpack.c.b16 %v5231, %v5226
    %v5602 = vpack.c.b16 %v5232, %v5227
    %v5603 = vpack.c.b16 %v5233, %v5228
    %v5604 = vpack.c.b16 %v5239, %v5234
    %v5605 = vpack.c.b16 %v5240, %v5235
    %v5606 = vpack.c.b16 %v5241, %v5236
    %v5607 = vpack.c.b16 %v5242, %v5237
    %v5608 = vpack.c.b16 %v5243, %v5238
    %v5609 = vpack.c.b16 %v5249, %v5244
    %v5610 = vpack.c.b16 %v5250, %v5245
    %v5611 = vpack.c.b16 %v5251, %v5246
    %v5612 = vpack.c.b16 %v5252, %v5247
    %v5613 = vpack.c.b16 %v5253, %v5248
    %v5614 = vpack.c.b16 %v5259, %v5254
    %v5615 = vpack.c.b16 %v5260, %v5255
    %v5616 = vpack.c.b16 %v5261, %v5256
    %v5617 = vpack.c.b16 %v5262, %v5257
    %v5618 = vpack.c.b16 %v5263, %v5258
    %v5619 = vpack.c.b16 %v5269, %v5264
    %v5620 = vpack.c.b16 %v5270, %v5265
    %v5621 = vpack.c.b16 %v5271, %v5266
    %v5622 = vpack.c.b16 %v5272, %v5267
    %v5623 = vpack.c.b16 %v5273, %v5268
    %v5624 = vpack.c.b16 %v5279, %v5274
    %v5625 = vpack.c.b16 %v5280, %v5275
    %v5626 = vpack.c.b16 %v5281, %v5276
    %v5627 = vpack.c.b16 %v5282, %v5277
    %v5628 = vpack.c.b16 %v5283, %v5278
    %v5629 = vpack.c.b16 %v5289, %v5284
    %v5630 = vpack.c.b16 %v5290, %v5285
    %v5631 = vpack.c.b16 %v5291, %v5286
    %v5632 = vpack.c.b16 %v5292, %v5287
    %v5633 = vpack.c.b16 %v5293, %v5288
    %v5634 = vpack.c.b16 %v5299, %v5294
    %v5635 = vpack.c.b16 %v5300, %v5295
    %v5636 = vpack.c.b16 %v5301, %v5296
    %v5637 = vpack.c.b16 %v5302, %v5297
    %v5638 = vpack.c.b16 %v5303, %v5298
    %v5639 = vpack.c.b16 %v5309, %v5304
    %v5640 = vpack.c.b16 %v5310, %v5305
    %v5641 = vpack.c.b16 %v5311, %v5306
    %v5642 = vpack.c.b16 %v5312, %v5307
    %v5643 = vpack.c.b16 %v5313, %v5308
    %v5644 = vpack.c.b16 %v5319, %v5314
    %v5645 = vpack.c.b16 %v5320, %v5315
    %v5646 = vpack.c.b16 %v5321, %v5316
    %v5647 = vpack.c.b16 %v5322, %v5317
    %v5648 = vpack.c.b16 %v5323, %v5318
    %v5649 = vpack.c.b16 %v5329, %v5324
    %v5650 = vpack.c.b16 %v5330, %v5325
    %v5651 = vpack.c.b16 %v5331, %v5326
    %v5652 = vpack.c.b16 %v5332, %v5327
    %v5653 = vpack.c.b16 %v5333, %v5328
    %5974 = vmatprep.subr.bf16.mxu0 %v5370
    %5975 = vmatpush1.bf16.msra.mxu0 %v5369
    %5976 = vmatprep.subr.bf16.mxu0 %v5365
    %5977 = vmatpush1.bf16.msra.mxu0 %v5364
    %5978 = vmatprep.subr.bf16.mxu0 %v5360
    %5979 = vmatpush1.bf16.msra.mxu0 %v5359
    %5980 = vmatprep.subr.bf16.mxu0 %v5355
    %5981 = vmatpush1.bf16.msra.mxu0 %v5354
    %5982 = vmatprep.subr.bf16.mxu0 %v5350
    %5983 = vmatpush1.bf16.msra.mxu0 %v5349
    %5984 = vmatprep.subr.bf16.mxu0 %v5345
    %5985 = vmatpush1.bf16.msra.mxu0 %v5344
    %5986 = vmatprep.subr.bf16.mxu0 %v5340
    %5987 = vmatpush1.bf16.msra.mxu0 %v5339
    %5988 = vmatprep.subr.bf16.mxu0 %v5335
    %5989 = vmatpush1.bf16.msra.mxu0 %v5334
    %5990 = vmatprep.subr.bf16.mxu0 %v5410
    %5991 = vmatpush2.bf16.msra.mxu0 %v5409
    %5992 = vmatprep.subr.bf16.mxu0 %v5405
    %5993 = vmatpush2.bf16.msra.mxu0 %v5404
    %5994 = vmatprep.subr.bf16.mxu0 %v5400
    %5995 = vmatpush2.bf16.msra.mxu0 %v5399
    %5996 = vmatprep.subr.bf16.mxu0 %v5395
    %5997 = vmatpush2.bf16.msra.mxu0 %v5394
    %5998 = vmatprep.subr.bf16.mxu0 %v5390
    %5999 = vmatpush2.bf16.msra.mxu0 %v5389
    %6000 = vmatprep.subr.bf16.mxu0 %v5385
    %6001 = vmatpush2.bf16.msra.mxu0 %v5384
    %6002 = vmatprep.subr.bf16.mxu0 %v5380
    %6003 = vmatpush2.bf16.msra.mxu0 %v5379
    %6004 = vmatprep.subr.bf16.mxu0 %v5375
    %6005 = vmatpush2.bf16.msra.mxu0 %v5374
    %6006 = vmatprep.mubr.bf16.mxu0 %v3899
    %6007 = vmatmul.mubr.bf16.gmra.mxu0 %v3898
    %v6008 = vpop.f32.mrf.mxu0
    %v6009 = vadd.f32 %v4293, %v6008
    %v6010 = vpop.f32.mrf.mxu0
    %v6011 = vadd.f32 %v4297, %v6010
    %v6012 = vpop.f32.mrf.mxu0
    %v6013 = vpop.f32.mrf.mxu0
    %6014 = vdwg.mxu0
    %6015 = vmatprep.subr.bf16.mxu0 %v5450
    %6016 = vmatpush1.bf16.msra.mxu0 %v5449
    %6017 = vmatprep.subr.bf16.mxu0 %v5445
    %6018 = vmatpush1.bf16.msra.mxu0 %v5444
    %6019 = vmatprep.subr.bf16.mxu0 %v5440
    %6020 = vmatpush1.bf16.msra.mxu0 %v5439
    %6021 = vmatprep.subr.bf16.mxu0 %v5435
    %6022 = vmatpush1.bf16.msra.mxu0 %v5434
    %6023 = vmatprep.subr.bf16.mxu0 %v5430
    %6024 = vmatpush1.bf16.msra.mxu0 %v5429
    %6025 = vmatprep.subr.bf16.mxu0 %v5425
    %6026 = vmatpush1.bf16.msra.mxu0 %v5424
    %6027 = vmatprep.subr.bf16.mxu0 %v5420
    %6028 = vmatpush1.bf16.msra.mxu0 %v5419
    %6029 = vmatprep.subr.bf16.mxu0 %v5415
    %6030 = vmatpush1.bf16.msra.mxu0 %v5414
    %6031 = vmatprep.subr.bf16.mxu0 %v5490
    %6032 = vmatpush2.bf16.msra.mxu0 %v5489
    %6033 = vmatprep.subr.bf16.mxu0 %v5485
    %6034 = vmatpush2.bf16.msra.mxu0 %v5484
    %6035 = vmatprep.subr.bf16.mxu0 %v5480
    %6036 = vmatpush2.bf16.msra.mxu0 %v5479
    %6037 = vmatprep.subr.bf16.mxu0 %v5475
    %6038 = vmatpush2.bf16.msra.mxu0 %v5474
    %6039 = vmatprep.subr.bf16.mxu0 %v5470
    %6040 = vmatpush2.bf16.msra.mxu0 %v5469
    %6041 = vmatprep.subr.bf16.mxu0 %v5465
    %6042 = vmatpush2.bf16.msra.mxu0 %v5464
    %6043 = vmatprep.subr.bf16.mxu0 %v5460
    %6044 = vmatpush2.bf16.msra.mxu0 %v5459
    %6045 = vmatprep.subr.bf16.mxu0 %v5455
    %6046 = vmatpush2.bf16.msra.mxu0 %v5454
    %6047 = vmatprep.mubr.bf16.mxu0 %v3901
    %6048 = vmatmul.mubr.bf16.gmra.mxu0 %v3900
    %v6049 = vpop.f32.mrf.mxu0
    %v6050 = vadd.f32 %v6009, %v6049
    %v6051 = vpop.f32.mrf.mxu0
    %v6052 = vadd.f32 %v6011, %v6051
    %v6053 = vpop.f32.mrf.mxu0
    %v6054 = vpop.f32.mrf.mxu0
    %6055 = vdwg.mxu0
    %6056 = vmatprep.subr.bf16.mxu0 %v5530
    %6057 = vmatpush1.bf16.msra.mxu0 %v5529
    %6058 = vmatprep.subr.bf16.mxu0 %v5525
    %6059 = vmatpush1.bf16.msra.mxu0 %v5524
    %6060 = vmatprep.subr.bf16.mxu0 %v5520
    %6061 = vmatpush1.bf16.msra.mxu0 %v5519
    %6062 = vmatprep.subr.bf16.mxu0 %v5515
    %6063 = vmatpush1.bf16.msra.mxu0 %v5514
    %6064 = vmatprep.subr.bf16.mxu0 %v5510
    %6065 = vmatpush1.bf16.msra.mxu0 %v5509
    %6066 = vmatprep.subr.bf16.mxu0 %v5505
    %6067 = vmatpush1.bf16.msra.mxu0 %v5504
    %6068 = vmatprep.subr.bf16.mxu0 %v5500
    %6069 = vmatpush1.bf16.msra.mxu0 %v5499
    %6070 = vmatprep.subr.bf16.mxu0 %v5495
    %6071 = vmatpush1.bf16.msra.mxu0 %v5494
    %6072 = vmatprep.subr.bf16.mxu0 %v5570
    %6073 = vmatpush2.bf16.msra.mxu0 %v5569
    %6074 = vmatprep.subr.bf16.mxu0 %v5565
    %6075 = vmatpush2.bf16.msra.mxu0 %v5564
    %6076 = vmatprep.subr.bf16.mxu0 %v5560
    %6077 = vmatpush2.bf16.msra.mxu0 %v5559
    %6078 = vmatprep.subr.bf16.mxu0 %v5555
    %6079 = vmatpush2.bf16.msra.mxu0 %v5554
    %6080 = vmatprep.subr.bf16.mxu0 %v5550
    %6081 = vmatpush2.bf16.msra.mxu0 %v5549
    %6082 = vmatprep.subr.bf16.mxu0 %v5545
    %6083 = vmatpush2.bf16.msra.mxu0 %v5544
    %6084 = vmatprep.subr.bf16.mxu0 %v5540
    %6085 = vmatpush2.bf16.msra.mxu0 %v5539
    %6086 = vmatprep.subr.bf16.mxu0 %v5535
    %6087 = vmatpush2.bf16.msra.mxu0 %v5534
    %6088 = vmatprep.mubr.bf16.mxu0 %v3903
    %6089 = vmatmul.mubr.bf16.gmra.mxu0 %v3902
    %v6090 = vpop.f32.mrf.mxu0
    %v6091 = vadd.f32 %v6050, %v6090
    %v6092 = vpop.f32.mrf.mxu0
    %v6093 = vadd.f32 %v6052, %v6092
    %v6094 = vpop.f32.mrf.mxu0
    %v6095 = vpop.f32.mrf.mxu0
    %6096 = vdwg.mxu0
    %6097 = vmatprep.subr.bf16.mxu0 %v5610
    %6098 = vmatpush1.bf16.msra.mxu0 %v5609
    %6099 = vmatprep.subr.bf16.mxu0 %v5605
    %6100 = vmatpush1.bf16.msra.mxu0 %v5604
    %6101 = vmatprep.subr.bf16.mxu0 %v5600
    %6102 = vmatpush1.bf16.msra.mxu0 %v5599
    %6103 = vmatprep.subr.bf16.mxu0 %v5595
    %6104 = vmatpush1.bf16.msra.mxu0 %v5594
    %6105 = vmatprep.subr.bf16.mxu0 %v5590
    %6106 = vmatpush1.bf16.msra.mxu0 %v5589
    %6107 = vmatprep.subr.bf16.mxu0 %v5585
    %6108 = vmatpush1.bf16.msra.mxu0 %v5584
    %6109 = vmatprep.subr.bf16.mxu0 %v5580
    %6110 = vmatpush1.bf16.msra.mxu0 %v5579
    %6111 = vmatprep.subr.bf16.mxu0 %v5575
    %6112 = vmatpush1.bf16.msra.mxu0 %v5574
    %6113 = vmatprep.subr.bf16.mxu0 %v5650
    %6114 = vmatpush2.bf16.msra.mxu0 %v5649
    %6115 = vmatprep.subr.bf16.mxu0 %v5645
    %6116 = vmatpush2.bf16.msra.mxu0 %v5644
    %6117 = vmatprep.subr.bf16.mxu0 %v5640
    %6118 = vmatpush2.bf16.msra.mxu0 %v5639
    %6119 = vmatprep.subr.bf16.mxu0 %v5635
    %6120 = vmatpush2.bf16.msra.mxu0 %v5634
    %6121 = vmatprep.subr.bf16.mxu0 %v5630
    %6122 = vmatpush2.bf16.msra.mxu0 %v5629
    %6123 = vmatprep.subr.bf16.mxu0 %v5625
    %6124 = vmatpush2.bf16.msra.mxu0 %v5624
    %6125 = vmatprep.subr.bf16.mxu0 %v5620
    %6126 = vmatpush2.bf16.msra.mxu0 %v5619
    %6127 = vmatprep.subr.bf16.mxu0 %v5615
    %6128 = vmatpush2.bf16.msra.mxu0 %v5614
    %6129 = vmatprep.mubr.bf16.mxu0 %v3905
    %6130 = vmatmul.mubr.bf16.gmra.mxu0 %v3904
    %v6131 = vpop.f32.mrf.mxu0
    %v6132 = vadd.f32 %v6091, %v6131
    %v6133 = vpop.f32.mrf.mxu0
    %v6134 = vadd.f32 %v6093, %v6133
    %v6135 = vpop.f32.mrf.mxu0
    %v6136 = vpop.f32.mrf.mxu0
    %6137 = vdwg.mxu0
    %6138 = vmatprep.subr.bf16.mxu0 %v5372
    %6139 = vmatpush1.bf16.msra.mxu0 %v5371
    %6140 = vmatprep.subr.bf16.mxu0 %v5367
    %6141 = vmatpush1.bf16.msra.mxu0 %v5366
    %6142 = vmatprep.subr.bf16.mxu0 %v5362
    %6143 = vmatpush1.bf16.msra.mxu0 %v5361
    %6144 = vmatprep.subr.bf16.mxu0 %v5357
    %6145 = vmatpush1.bf16.msra.mxu0 %v5356
    %6146 = vmatprep.subr.bf16.mxu0 %v5352
    %6147 = vmatpush1.bf16.msra.mxu0 %v5351
    %6148 = vmatprep.subr.bf16.mxu0 %v5347
    %6149 = vmatpush1.bf16.msra.mxu0 %v5346
    %6150 = vmatprep.subr.bf16.mxu0 %v5342
    %6151 = vmatpush1.bf16.msra.mxu0 %v5341
    %6152 = vmatprep.subr.bf16.mxu0 %v5337
    %6153 = vmatpush1.bf16.msra.mxu0 %v5336
    %6154 = vmatprep.subr.bf16.mxu0 %v5412
    %6155 = vmatpush2.bf16.msra.mxu0 %v5411
    %6156 = vmatprep.subr.bf16.mxu0 %v5407
    %6157 = vmatpush2.bf16.msra.mxu0 %v5406
    %6158 = vmatprep.subr.bf16.mxu0 %v5402
    %6159 = vmatpush2.bf16.msra.mxu0 %v5401
    %6160 = vmatprep.subr.bf16.mxu0 %v5397
    %6161 = vmatpush2.bf16.msra.mxu0 %v5396
    %6162 = vmatprep.subr.bf16.mxu0 %v5392
    %6163 = vmatpush2.bf16.msra.mxu0 %v5391
    %6164 = vmatprep.subr.bf16.mxu0 %v5387
    %6165 = vmatpush2.bf16.msra.mxu0 %v5386
    %6166 = vmatprep.subr.bf16.mxu0 %v5382
    %6167 = vmatpush2.bf16.msra.mxu0 %v5381
    %6168 = vmatprep.subr.bf16.mxu0 %v5377
    %6169 = vmatpush2.bf16.msra.mxu0 %v5376
    %6170 = vmatprep.mubr.bf16.mxu0 %v3899
    %6171 = vmatmul.mubr.bf16.gmra.mxu0 %v3898
    %v6172 = vpop.f32.mrf.mxu0
    %v6173 = vadd.f32 %v4301, %v6172
    %v6174 = vpop.f32.mrf.mxu0
    %v6175 = vadd.f32 %v4305, %v6174
    %v6176 = vpop.f32.mrf.mxu0
    %v6177 = vpop.f32.mrf.mxu0
    %6178 = vdwg.mxu0
    %6179 = vmatprep.subr.bf16.mxu0 %v5452
    %6180 = vmatpush1.bf16.msra.mxu0 %v5451
    %6181 = vmatprep.subr.bf16.mxu0 %v5447
    %6182 = vmatpush1.bf16.msra.mxu0 %v5446
    %6183 = vmatprep.subr.bf16.mxu0 %v5442
    %6184 = vmatpush1.bf16.msra.mxu0 %v5441
    %6185 = vmatprep.subr.bf16.mxu0 %v5437
    %6186 = vmatpush1.bf16.msra.mxu0 %v5436
    %6187 = vmatprep.subr.bf16.mxu0 %v5432
    %6188 = vmatpush1.bf16.msra.mxu0 %v5431
    %6189 = vmatprep.subr.bf16.mxu0 %v5427
    %6190 = vmatpush1.bf16.msra.mxu0 %v5426
    %6191 = vmatprep.subr.bf16.mxu0 %v5422
    %6192 = vmatpush1.bf16.msra.mxu0 %v5421
    %6193 = vmatprep.subr.bf16.mxu0 %v5417
    %6194 = vmatpush1.bf16.msra.mxu0 %v5416
    %6195 = vmatprep.subr.bf16.mxu0 %v5492
    %6196 = vmatpush2.bf16.msra.mxu0 %v5491
    %6197 = vmatprep.subr.bf16.mxu0 %v5487
    %6198 = vmatpush2.bf16.msra.mxu0 %v5486
    %6199 = vmatprep.subr.bf16.mxu0 %v5482
    %6200 = vmatpush2.bf16.msra.mxu0 %v5481
    %6201 = vmatprep.subr.bf16.mxu0 %v5477
    %6202 = vmatpush2.bf16.msra.mxu0 %v5476
    %6203 = vmatprep.subr.bf16.mxu0 %v5472
    %6204 = vmatpush2.bf16.msra.mxu0 %v5471
    %6205 = vmatprep.subr.bf16.mxu0 %v5467
    %6206 = vmatpush2.bf16.msra.mxu0 %v5466
    %6207 = vmatprep.subr.bf16.mxu0 %v5462
    %6208 = vmatpush2.bf16.msra.mxu0 %v5461
    %6209 = vmatprep.subr.bf16.mxu0 %v5457
    %6210 = vmatpush2.bf16.msra.mxu0 %v5456
    %6211 = vmatprep.mubr.bf16.mxu0 %v3901
    %6212 = vmatmul.mubr.bf16.gmra.mxu0 %v3900
    %v6213 = vpop.f32.mrf.mxu0
    %v6214 = vadd.f32 %v6173, %v6213
    %v6215 = vpop.f32.mrf.mxu0
    %v6216 = vadd.f32 %v6175, %v6215
    %v6217 = vpop.f32.mrf.mxu0
    %v6218 = vpop.f32.mrf.mxu0
    %6219 = vdwg.mxu0
    %6220 = vmatprep.subr.bf16.mxu0 %v5532
    %6221 = vmatpush1.bf16.msra.mxu0 %v5531
    %6222 = vmatprep.subr.bf16.mxu0 %v5527
    %6223 = vmatpush1.bf16.msra.mxu0 %v5526
    %6224 = vmatprep.subr.bf16.mxu0 %v5522
    %6225 = vmatpush1.bf16.msra.mxu0 %v5521
    %6226 = vmatprep.subr.bf16.mxu0 %v5517
    %6227 = vmatpush1.bf16.msra.mxu0 %v5516
    %6228 = vmatprep.subr.bf16.mxu0 %v5512
    %6229 = vmatpush1.bf16.msra.mxu0 %v5511
    %6230 = vmatprep.subr.bf16.mxu0 %v5507
    %6231 = vmatpush1.bf16.msra.mxu0 %v5506
    %6232 = vmatprep.subr.bf16.mxu0 %v5502
    %6233 = vmatpush1.bf16.msra.mxu0 %v5501
    %6234 = vmatprep.subr.bf16.mxu0 %v5497
    %6235 = vmatpush1.bf16.msra.mxu0 %v5496
    %6236 = vmatprep.subr.bf16.mxu0 %v5572
    %6237 = vmatpush2.bf16.msra.mxu0 %v5571
    %6238 = vmatprep.subr.bf16.mxu0 %v5567
    %6239 = vmatpush2.bf16.msra.mxu0 %v5566
    %6240 = vmatprep.subr.bf16.mxu0 %v5562
    %6241 = vmatpush2.bf16.msra.mxu0 %v5561
    %6242 = vmatprep.subr.bf16.mxu0 %v5557
    %6243 = vmatpush2.bf16.msra.mxu0 %v5556
    %6244 = vmatprep.subr.bf16.mxu0 %v5552
    %6245 = vmatpush2.bf16.msra.mxu0 %v5551
    %6246 = vmatprep.subr.bf16.mxu0 %v5547
    %6247 = vmatpush2.bf16.msra.mxu0 %v5546
    %6248 = vmatprep.subr.bf16.mxu0 %v5542
    %6249 = vmatpush2.bf16.msra.mxu0 %v5541
    %6250 = vmatprep.subr.bf16.mxu0 %v5537
    %6251 = vmatpush2.bf16.msra.mxu0 %v5536
    %6252 = vmatprep.mubr.bf16.mxu0 %v3903
    %6253 = vmatmul.mubr.bf16.gmra.mxu0 %v3902
    %v6254 = vpop.f32.mrf.mxu0
    %v6255 = vadd.f32 %v6214, %v6254
    %v6256 = vpop.f32.mrf.mxu0
    %v6257 = vadd.f32 %v6216, %v6256
    %v6258 = vpop.f32.mrf.mxu0
    %v6259 = vpop.f32.mrf.mxu0
    %6260 = vdwg.mxu0
    %6261 = vmatprep.subr.bf16.mxu0 %v5612
    %6262 = vmatpush1.bf16.msra.mxu0 %v5611
    %6263 = vmatprep.subr.bf16.mxu0 %v5607
    %6264 = vmatpush1.bf16.msra.mxu0 %v5606
    %6265 = vmatprep.subr.bf16.mxu0 %v5602
    %6266 = vmatpush1.bf16.msra.mxu0 %v5601
    %6267 = vmatprep.subr.bf16.mxu0 %v5597
    %6268 = vmatpush1.bf16.msra.mxu0 %v5596
    %6269 = vmatprep.subr.bf16.mxu0 %v5592
    %6270 = vmatpush1.bf16.msra.mxu0 %v5591
    %6271 = vmatprep.subr.bf16.mxu0 %v5587
    %6272 = vmatpush1.bf16.msra.mxu0 %v5586
    %6273 = vmatprep.subr.bf16.mxu0 %v5582
    %6274 = vmatpush1.bf16.msra.mxu0 %v5581
    %6275 = vmatprep.subr.bf16.mxu0 %v5577
    %6276 = vmatpush1.bf16.msra.mxu0 %v5576
    %6277 = vmatprep.subr.bf16.mxu0 %v5652
    %6278 = vmatpush2.bf16.msra.mxu0 %v5651
    %6279 = vmatprep.subr.bf16.mxu0 %v5647
    %6280 = vmatpush2.bf16.msra.mxu0 %v5646
    %6281 = vmatprep.subr.bf16.mxu0 %v5642
    %6282 = vmatpush2.bf16.msra.mxu0 %v5641
    %6283 = vmatprep.subr.bf16.mxu0 %v5637
    %6284 = vmatpush2.bf16.msra.mxu0 %v5636
    %6285 = vmatprep.subr.bf16.mxu0 %v5632
    %6286 = vmatpush2.bf16.msra.mxu0 %v5631
    %6287 = vmatprep.subr.bf16.mxu0 %v5627
    %6288 = vmatpush2.bf16.msra.mxu0 %v5626
    %6289 = vmatprep.subr.bf16.mxu0 %v5622
    %6290 = vmatpush2.bf16.msra.mxu0 %v5621
    %6291 = vmatprep.subr.bf16.mxu0 %v5617
    %6292 = vmatpush2.bf16.msra.mxu0 %v5616
    %6293 = vmatprep.mubr.bf16.mxu0 %v3905
    %6294 = vmatmul.mubr.bf16.gmra.mxu0 %v3904
    %v6295 = vpop.f32.mrf.mxu0
    %v6296 = vadd.f32 %v6255, %v6295
    %v6297 = vpop.f32.mrf.mxu0
    %v6298 = vadd.f32 %v6257, %v6297
    %v6299 = vpop.f32.mrf.mxu0
    %v6300 = vpop.f32.mrf.mxu0
    %6301 = vdwg.mxu0
    %6302 = vmatprep.subr.bf16.mxu0 0
    %6303 = vmatpush1.bf16.msra.mxu0 %v5373
    %6304 = vmatprep.subr.bf16.mxu0 0
    %6305 = vmatpush1.bf16.msra.mxu0 %v5368
    %6306 = vmatprep.subr.bf16.mxu0 0
    %6307 = vmatpush1.bf16.msra.mxu0 %v5363
    %6308 = vmatprep.subr.bf16.mxu0 0
    %6309 = vmatpush1.bf16.msra.mxu0 %v5358
    %6310 = vmatprep.subr.bf16.mxu0 0
    %6311 = vmatpush1.bf16.msra.mxu0 %v5353
    %6312 = vmatprep.subr.bf16.mxu0 0
    %6313 = vmatpush1.bf16.msra.mxu0 %v5348
    %6314 = vmatprep.subr.bf16.mxu0 0
    %6315 = vmatpush1.bf16.msra.mxu0 %v5343
    %6316 = vmatprep.subr.bf16.mxu0 0
    %6317 = vmatpush1.bf16.msra.mxu0 %v5338
    %6318 = vmatprep.subr.bf16.mxu0 0
    %6319 = vmatpush2.bf16.msra.mxu0 %v5413
    %6320 = vmatprep.subr.bf16.mxu0 0
    %6321 = vmatpush2.bf16.msra.mxu0 %v5408
    %6322 = vmatprep.subr.bf16.mxu0 0
    %6323 = vmatpush2.bf16.msra.mxu0 %v5403
    %6324 = vmatprep.subr.bf16.mxu0 0
    %6325 = vmatpush2.bf16.msra.mxu0 %v5398
    %6326 = vmatprep.subr.bf16.mxu0 0
    %6327 = vmatpush2.bf16.msra.mxu0 %v5393
    %6328 = vmatprep.subr.bf16.mxu0 0
    %6329 = vmatpush2.bf16.msra.mxu0 %v5388
    %6330 = vmatprep.subr.bf16.mxu0 0
    %6331 = vmatpush2.bf16.msra.mxu0 %v5383
    %6332 = vmatprep.subr.bf16.mxu0 0
    %6333 = vmatpush2.bf16.msra.mxu0 %v5378
    %6334 = vmatprep.mubr.bf16.mxu0 %v3899
    %6335 = vmatmul.mubr.bf16.gmra.mxu0 %v3898
    %v6336 = vpop.f32.mrf.mxu0
    %v6337 = vadd.f32 %v4309, %v6336
    %v6338 = vpop.f32.mrf.mxu0
    %v6339 = vpop.f32.mrf.mxu0
    %v6340 = vpop.f32.mrf.mxu0
    %6341 = vdwg.mxu0
    %6342 = vmatprep.subr.bf16.mxu0 0
    %6343 = vmatpush1.bf16.msra.mxu0 %v5453
    %6344 = vmatprep.subr.bf16.mxu0 0
    %6345 = vmatpush1.bf16.msra.mxu0 %v5448
    %6346 = vmatprep.subr.bf16.mxu0 0
    %6347 = vmatpush1.bf16.msra.mxu0 %v5443
    %6348 = vmatprep.subr.bf16.mxu0 0
    %6349 = vmatpush1.bf16.msra.mxu0 %v5438
    %6350 = vmatprep.subr.bf16.mxu0 0
    %6351 = vmatpush1.bf16.msra.mxu0 %v5433
    %6352 = vmatprep.subr.bf16.mxu0 0
    %6353 = vmatpush1.bf16.msra.mxu0 %v5428
    %6354 = vmatprep.subr.bf16.mxu0 0
    %6355 = vmatpush1.bf16.msra.mxu0 %v5423
    %6356 = vmatprep.subr.bf16.mxu0 0
    %6357 = vmatpush1.bf16.msra.mxu0 %v5418
    %6358 = vmatprep.subr.bf16.mxu0 0
    %6359 = vmatpush2.bf16.msra.mxu0 %v5493
    %6360 = vmatprep.subr.bf16.mxu0 0
    %6361 = vmatpush2.bf16.msra.mxu0 %v5488
    %6362 = vmatprep.subr.bf16.mxu0 0
    %6363 = vmatpush2.bf16.msra.mxu0 %v5483
    %6364 = vmatprep.subr.bf16.mxu0 0
    %6365 = vmatpush2.bf16.msra.mxu0 %v5478
    %6366 = vmatprep.subr.bf16.mxu0 0
    %6367 = vmatpush2.bf16.msra.mxu0 %v5473
    %6368 = vmatprep.subr.bf16.mxu0 0
    %6369 = vmatpush2.bf16.msra.mxu0 %v5468
    %6370 = vmatprep.subr.bf16.mxu0 0
    %6371 = vmatpush2.bf16.msra.mxu0 %v5463
    %6372 = vmatprep.subr.bf16.mxu0 0
    %6373 = vmatpush2.bf16.msra.mxu0 %v5458
    %6374 = vmatprep.mubr.bf16.mxu0 %v3901
    %6375 = vmatmul.mubr.bf16.gmra.mxu0 %v3900
    %v6376 = vpop.f32.mrf.mxu0
    %v6377 = vadd.f32 %v6337, %v6376
    %v6378 = vpop.f32.mrf.mxu0
    %v6379 = vpop.f32.mrf.mxu0
    %v6380 = vpop.f32.mrf.mxu0
    %6381 = vdwg.mxu0
    %6382 = vmatprep.subr.bf16.mxu0 0
    %6383 = vmatpush1.bf16.msra.mxu0 %v5533
    %6384 = vmatprep.subr.bf16.mxu0 0
    %6385 = vmatpush1.bf16.msra.mxu0 %v5528
    %6386 = vmatprep.subr.bf16.mxu0 0
    %6387 = vmatpush1.bf16.msra.mxu0 %v5523
    %6388 = vmatprep.subr.bf16.mxu0 0
    %6389 = vmatpush1.bf16.msra.mxu0 %v5518
    %6390 = vmatprep.subr.bf16.mxu0 0
    %6391 = vmatpush1.bf16.msra.mxu0 %v5513
    %6392 = vmatprep.subr.bf16.mxu0 0
    %6393 = vmatpush1.bf16.msra.mxu0 %v5508
    %6394 = vmatprep.subr.bf16.mxu0 0
    %6395 = vmatpush1.bf16.msra.mxu0 %v5503
    %6396 = vmatprep.subr.bf16.mxu0 0
    %6397 = vmatpush1.bf16.msra.mxu0 %v5498
    %6398 = vmatprep.subr.bf16.mxu0 0
    %6399 = vmatpush2.bf16.msra.mxu0 %v5573
    %6400 = vmatprep.subr.bf16.mxu0 0
    %6401 = vmatpush2.bf16.msra.mxu0 %v5568
    %6402 = vmatprep.subr.bf16.mxu0 0
    %6403 = vmatpush2.bf16.msra.mxu0 %v5563
    %6404 = vmatprep.subr.bf16.mxu0 0
    %6405 = vmatpush2.bf16.msra.mxu0 %v5558
    %6406 = vmatprep.subr.bf16.mxu0 0
    %6407 = vmatpush2.bf16.msra.mxu0 %v5553
    %6408 = vmatprep.subr.bf16.mxu0 0
    %6409 = vmatpush2.bf16.msra.mxu0 %v5548
    %6410 = vmatprep.subr.bf16.mxu0 0
    %6411 = vmatpush2.bf16.msra.mxu0 %v5543
    %6412 = vmatprep.subr.bf16.mxu0 0
    %6413 = vmatpush2.bf16.msra.mxu0 %v5538
    %6414 = vmatprep.mubr.bf16.mxu0 %v3903
    %6415 = vmatmul.mubr.bf16.gmra.mxu0 %v3902
    %v6416 = vpop.f32.mrf.mxu0
    %v6417 = vadd.f32 %v6377, %v6416
    %v6418 = vpop.f32.mrf.mxu0
    %v6419 = vpop.f32.mrf.mxu0
    %v6420 = vpop.f32.mrf.mxu0
    %6421 = vdwg.mxu0
    %6422 = vmatprep.subr.bf16.mxu0 0
    %6423 = vmatpush1.bf16.msra.mxu0 %v5613
    %6424 = vmatprep.subr.bf16.mxu0 0
    %6425 = vmatpush1.bf16.msra.mxu0 %v5608
    %6426 = vmatprep.subr.bf16.mxu0 0
    %6427 = vmatpush1.bf16.msra.mxu0 %v5603
    %6428 = vmatprep.subr.bf16.mxu0 0
    %6429 = vmatpush1.bf16.msra.mxu0 %v5598
    %6430 = vmatprep.subr.bf16.mxu0 0
    %6431 = vmatpush1.bf16.msra.mxu0 %v5593
    %6432 = vmatprep.subr.bf16.mxu0 0
    %6433 = vmatpush1.bf16.msra.mxu0 %v5588
    %6434 = vmatprep.subr.bf16.mxu0 0
    %6435 = vmatpush1.bf16.msra.mxu0 %v5583
    %6436 = vmatprep.subr.bf16.mxu0 0
    %6437 = vmatpush1.bf16.msra.mxu0 %v5578
    %6438 = vmatprep.subr.bf16.mxu0 0
    %6439 = vmatpush2.bf16.msra.mxu0 %v5653
    %6440 = vmatprep.subr.bf16.mxu0 0
    %6441 = vmatpush2.bf16.msra.mxu0 %v5648
    %6442 = vmatprep.subr.bf16.mxu0 0
    %6443 = vmatpush2.bf16.msra.mxu0 %v5643
    %6444 = vmatprep.subr.bf16.mxu0 0
    %6445 = vmatpush2.bf16.msra.mxu0 %v5638
    %6446 = vmatprep.subr.bf16.mxu0 0
    %6447 = vmatpush2.bf16.msra.mxu0 %v5633
    %6448 = vmatprep.subr.bf16.mxu0 0
    %6449 = vmatpush2.bf16.msra.mxu0 %v5628
    %6450 = vmatprep.subr.bf16.mxu0 0
    %6451 = vmatpush2.bf16.msra.mxu0 %v5623
    %6452 = vmatprep.subr.bf16.mxu0 0
    %6453 = vmatpush2.bf16.msra.mxu0 %v5618
    %6454 = vmatprep.mubr.bf16.mxu0 %v3905
    %6455 = vmatmul.mubr.bf16.gmra.mxu0 %v3904
    %v6456 = vpop.f32.mrf.mxu0
    %v6457 = vadd.f32 %v6417, %v6456
    %v6458 = vpop.f32.mrf.mxu0
    %v6459 = vpop.f32.mrf.mxu0
    %v6460 = vpop.f32.mrf.mxu0
    %6461 = vdwg.mxu0
    %v6462 = vmax.f32 %v6132, 0.0
    %v6463 = vmax.f32 %v6134, 0.0
    %v6464 = vmax.f32 %v6296, 0.0
    %v6465 = vmax.f32 %v6298, 0.0
    %v6466 = vmax.f32 %v6457, 0.0
    %v6467 = vpack.c.bf16 %v6463, %v6463
    %v6468 = vpack.c.bf16 %v6464, %v6464
    %v6469 = vpack.c.bf16 %v6465, %v6465
    %v6470 = vpack.c.bf16 %v6466, %v6466
    %v6471 = vld [vmem:[#allocation7] sm:$0xff]
    %v6472 = vld [vmem:[#allocation7 + $0x8] sm:$0xff]
    %v6473 = vld [vmem:[#allocation7 + $0x10] sm:$0xff]
    %v6474 = vld [vmem:[#allocation7 + $0x18] sm:$0xff]
    %v6475 = vld [vmem:[#allocation7 + $0x20] sm:$0xff]
    %v6476 = vld [vmem:[#allocation7 + $0x28] sm:$0xff]
    %v6477 = vld [vmem:[#allocation7 + $0x30] sm:$0xff]
    %v6478 = vld [vmem:[#allocation7 + $0x38] sm:$0xff]
    %v6479 = vld [vmem:[#allocation7 + $0x40] sm:$0xff]
    %v6480 = vld [vmem:[#allocation7 + $0x48] sm:$0xff]
    %v6481 = vld [vmem:[#allocation7 + $0x50] sm:$0xff]
    %v6482 = vld [vmem:[#allocation7 + $0x58] sm:$0xff]
    %v6483 = vld [vmem:[#allocation7 + $0x60] sm:$0xff]
    %v6484 = vld [vmem:[#allocation7 + $0x68] sm:$0xff]
    %v6485 = vld [vmem:[#allocation7 + $0x70] sm:$0xff]
    %v6486 = vld [vmem:[#allocation7 + $0x78] sm:$0xff]
    %v6487 = vlaneseq
    %v6488 = vshrl.u32 %v6487, 7
    %v6489 = vsub.s32 3, %v6488
    %v6490 = vrot.slane %v94, %v6489
    %6491 = vmatprep.subr.mxu0 0.0
    %6492 = vmatpush1.msra.mxu0 %v6486
    %6493 = vmatprep.subr.mxu0 0.0
    %6494 = vmatpush1.msra.mxu0 %v6485
    %6495 = vmatprep.subr.mxu0 0.0
    %6496 = vmatpush1.msra.mxu0 %v6484
    %6497 = vmatprep.subr.mxu0 0.0
    %6498 = vmatpush1.msra.mxu0 %v6483
    %6499 = vmatprep.subr.mxu0 0.0
    %6500 = vmatpush1.msra.mxu0 %v6482
    %6501 = vmatprep.subr.mxu0 0.0
    %6502 = vmatpush1.msra.mxu0 %v6481
    %6503 = vmatprep.subr.mxu0 0.0
    %6504 = vmatpush1.msra.mxu0 %v6480
    %6505 = vmatprep.subr.mxu0 0.0
    %6506 = vmatpush1.msra.mxu0 %v6479
    %6507 = vmatprep.subr.mxu0 0.0
    %6508 = vmatpush1.msra.mxu0 %v6478
    %6509 = vmatprep.subr.mxu0 0.0
    %6510 = vmatpush1.msra.mxu0 %v6477
    %6511 = vmatprep.subr.mxu0 0.0
    %6512 = vmatpush1.msra.mxu0 %v6476
    %6513 = vmatprep.subr.mxu0 0.0
    %6514 = vmatpush1.msra.mxu0 %v6475
    %6515 = vmatprep.subr.mxu0 0.0
    %6516 = vmatpush1.msra.mxu0 %v6474
    %6517 = vmatprep.subr.mxu0 0.0
    %6518 = vmatpush1.msra.mxu0 %v6473
    %6519 = vmatprep.subr.mxu0 0.0
    %6520 = vmatpush1.msra.mxu0 %v6472
    %6521 = vmatprep.subr.mxu0 0.0
    %6522 = vmatpush1.msra.mxu0 %v6471
    %6523 = vmatprep.subr.mxu0 0.0
    %6524 = vmatpush2.msra.mxu0 0.0
    %6525 = vmatprep.subr.mxu0 0.0
    %6526 = vmatpush2.msra.mxu0 0.0
    %6527 = vmatprep.subr.mxu0 0.0
    %6528 = vmatpush2.msra.mxu0 0.0
    %6529 = vmatprep.subr.mxu0 0.0
    %6530 = vmatpush2.msra.mxu0 0.0
    %6531 = vmatprep.subr.mxu0 0.0
    %6532 = vmatpush2.msra.mxu0 0.0
    %6533 = vmatprep.subr.mxu0 0.0
    %6534 = vmatpush2.msra.mxu0 0.0
    %6535 = vmatprep.subr.mxu0 0.0
    %6536 = vmatpush2.msra.mxu0 0.0
    %6537 = vmatprep.subr.mxu0 0.0
    %6538 = vmatpush2.msra.mxu0 0.0
    %6539 = vmatprep.subr.mxu0 0.0
    %6540 = vmatpush2.msra.mxu0 0.0
    %6541 = vmatprep.subr.mxu0 0.0
    %6542 = vmatpush2.msra.mxu0 0.0
    %6543 = vmatprep.subr.mxu0 0.0
    %6544 = vmatpush2.msra.mxu0 0.0
    %6545 = vmatprep.subr.mxu0 0.0
    %6546 = vmatpush2.msra.mxu0 0.0
    %6547 = vmatprep.subr.mxu0 0.0
    %6548 = vmatpush2.msra.mxu0 0.0
    %6549 = vmatprep.subr.mxu0 0.0
    %6550 = vmatpush2.msra.mxu0 0.0
    %6551 = vmatprep.subr.mxu0 0.0
    %6552 = vmatpush2.msra.mxu0 0.0
    %6553 = vmatprep.subr.mxu0 0.0
    %6554 = vmatpush2.msra.mxu0 0.0
    %6555 = vmatprep.mubr.f32.mxu0 0.0
    %6556 = vmatmul.mubr.f32.gmra.mxu0 %v6462
    %v6557 = vpop.f32.mrf.mxu0
    %v6558 = vadd.f32 %v6490, %v6557
    %v6559 = vpop.f32.mrf.mxu0
    %6560 = vdwg.mxu0
    %v6561 = vmax.f32 %v6558, 0.0
    %v6562 = vld [vmem:[#allocation7 + $0x80] sm:$0xff]
    %v6563 = vld [vmem:[#allocation7 + $0x88] sm:$0xff]
    %v6564 = vld [vmem:[#allocation7 + $0x90] sm:$0xff]
    %v6565 = vld [vmem:[#allocation7 + $0x98] sm:$0xff]
    %v6566 = vld [vmem:[#allocation7 + $0xa0] sm:$0xff]
    %v6567 = vld [vmem:[#allocation7 + $0xa8] sm:$0xff]
    %v6568 = vld [vmem:[#allocation7 + $0xb0] sm:$0xff]
    %v6569 = vld [vmem:[#allocation7 + $0xb8] sm:$0xff]
    %v6570 = vld [vmem:[#allocation7 + $0xc0] sm:$0xff]
    %v6571 = vld [vmem:[#allocation7 + $0xc8] sm:$0xff]
    %v6572 = vld [vmem:[#allocation7 + $0xd0] sm:$0xff]
    %v6573 = vld [vmem:[#allocation7 + $0xd8] sm:$0xff]
    %v6574 = vld [vmem:[#allocation7 + $0xe0] sm:$0xff]
    %v6575 = vld [vmem:[#allocation7 + $0xe8] sm:$0xff]
    %v6576 = vld [vmem:[#allocation7 + $0xf0] sm:$0xff]
    %v6577 = vld [vmem:[#allocation7 + $0xf8] sm:$0xff]
    %v6578 = vlaneseq
    %v6579 = vshrl.u32 %v6578, 7
    %v6580 = vsub.s32 4, %v6579
    %v6581 = vrot.slane %v94, %v6580
    %6582 = vmatprep.subr.mxu0 0.0
    %6583 = vmatpush1.msra.mxu0 %v6577
    %6584 = vmatprep.subr.mxu0 0.0
    %6585 = vmatpush1.msra.mxu0 %v6576
    %6586 = vmatprep.subr.mxu0 0.0
    %6587 = vmatpush1.msra.mxu0 %v6575
    %6588 = vmatprep.subr.mxu0 0.0
    %6589 = vmatpush1.msra.mxu0 %v6574
    %6590 = vmatprep.subr.mxu0 0.0
    %6591 = vmatpush1.msra.mxu0 %v6573
    %6592 = vmatprep.subr.mxu0 0.0
    %6593 = vmatpush1.msra.mxu0 %v6572
    %6594 = vmatprep.subr.mxu0 0.0
    %6595 = vmatpush1.msra.mxu0 %v6571
    %6596 = vmatprep.subr.mxu0 0.0
    %6597 = vmatpush1.msra.mxu0 %v6570
    %6598 = vmatprep.subr.mxu0 0.0
    %6599 = vmatpush1.msra.mxu0 %v6569
    %6600 = vmatprep.subr.mxu0 0.0
    %6601 = vmatpush1.msra.mxu0 %v6568
    %6602 = vmatprep.subr.mxu0 0.0
    %6603 = vmatpush1.msra.mxu0 %v6567
    %6604 = vmatprep.subr.mxu0 0.0
    %6605 = vmatpush1.msra.mxu0 %v6566
    %6606 = vmatprep.subr.mxu0 0.0
    %6607 = vmatpush1.msra.mxu0 %v6565
    %6608 = vmatprep.subr.mxu0 0.0
    %6609 = vmatpush1.msra.mxu0 %v6564
    %6610 = vmatprep.subr.mxu0 0.0
    %6611 = vmatpush1.msra.mxu0 %v6563
    %6612 = vmatprep.subr.mxu0 0.0
    %6613 = vmatpush1.msra.mxu0 %v6562
    %6614 = vmatprep.subr.mxu0 0.0
    %6615 = vmatpush2.msra.mxu0 0.0
    %6616 = vmatprep.subr.mxu0 0.0
    %6617 = vmatpush2.msra.mxu0 0.0
    %6618 = vmatprep.subr.mxu0 0.0
    %6619 = vmatpush2.msra.mxu0 0.0
    %6620 = vmatprep.subr.mxu0 0.0
    %6621 = vmatpush2.msra.mxu0 0.0
    %6622 = vmatprep.subr.mxu0 0.0
    %6623 = vmatpush2.msra.mxu0 0.0
    %6624 = vmatprep.subr.mxu0 0.0
    %6625 = vmatpush2.msra.mxu0 0.0
    %6626 = vmatprep.subr.mxu0 0.0
    %6627 = vmatpush2.msra.mxu0 0.0
    %6628 = vmatprep.subr.mxu0 0.0
    %6629 = vmatpush2.msra.mxu0 0.0
    %6630 = vmatprep.subr.mxu0 0.0
    %6631 = vmatpush2.msra.mxu0 0.0
    %6632 = vmatprep.subr.mxu0 0.0
    %6633 = vmatpush2.msra.mxu0 0.0
    %6634 = vmatprep.subr.mxu0 0.0
    %6635 = vmatpush2.msra.mxu0 0.0
    %6636 = vmatprep.subr.mxu0 0.0
    %6637 = vmatpush2.msra.mxu0 0.0
    %6638 = vmatprep.subr.mxu0 0.0
    %6639 = vmatpush2.msra.mxu0 0.0
    %6640 = vmatprep.subr.mxu0 0.0
    %6641 = vmatpush2.msra.mxu0 0.0
    %6642 = vmatprep.subr.mxu0 0.0
    %6643 = vmatpush2.msra.mxu0 0.0
    %6644 = vmatprep.subr.mxu0 0.0
    %6645 = vmatpush2.msra.mxu0 0.0
    %6646 = vmatprep.mubr.f32.mxu0 0.0
    %6647 = vmatmul.mubr.f32.gmra.mxu0 %v6561
    %v6648 = vpop.f32.mrf.mxu0
    %v6649 = vadd.f32 %v6581, %v6648
    %v6650 = vpop.f32.mrf.mxu0
    %6651 = vdwg.mxu0
    %v6652 = vmax.f32 %v6649, 0.0
    %v6653 = vld [vmem:[#allocation7 + $0x100] sm:$0xff]
    %v6654 = vld [vmem:[#allocation7 + $0x108] sm:$0xff]
    %v6655 = vld [vmem:[#allocation7 + $0x110] sm:$0xff]
    %v6656 = vld [vmem:[#allocation7 + $0x118] sm:$0xff]
    %v6657 = vld [vmem:[#allocation7 + $0x120] sm:$0xff]
    %v6658 = vld [vmem:[#allocation7 + $0x128] sm:$0xff]
    %v6659 = vld [vmem:[#allocation7 + $0x130] sm:$0xff]
    %v6660 = vld [vmem:[#allocation7 + $0x138] sm:$0xff]
    %v6661 = vld [vmem:[#allocation7 + $0x140] sm:$0xff]
    %v6662 = vld [vmem:[#allocation7 + $0x148] sm:$0xff]
    %v6663 = vld [vmem:[#allocation7 + $0x150] sm:$0xff]
    %v6664 = vld [vmem:[#allocation7 + $0x158] sm:$0xff]
    %v6665 = vld [vmem:[#allocation7 + $0x160] sm:$0xff]
    %v6666 = vld [vmem:[#allocation7 + $0x168] sm:$0xff]
    %v6667 = vld [vmem:[#allocation7 + $0x170] sm:$0xff]
    %v6668 = vld [vmem:[#allocation7 + $0x178] sm:$0xff]
    %v6669 = vlaneseq
    %v6670 = vshrl.u32 %v6669, 7
    %v6671 = vsub.s32 5, %v6670
    %v6672 = vrot.slane %v94, %v6671
    %6673 = vmatprep.subr.mxu0 0.0
    %6674 = vmatpush1.msra.mxu0 %v6668
    %6675 = vmatprep.subr.mxu0 0.0
    %6676 = vmatpush1.msra.mxu0 %v6667
    %6677 = vmatprep.subr.mxu0 0.0
    %6678 = vmatpush1.msra.mxu0 %v6666
    %6679 = vmatprep.subr.mxu0 0.0
    %6680 = vmatpush1.msra.mxu0 %v6665
    %6681 = vmatprep.subr.mxu0 0.0
    %6682 = vmatpush1.msra.mxu0 %v6664
    %6683 = vmatprep.subr.mxu0 0.0
    %6684 = vmatpush1.msra.mxu0 %v6663
    %6685 = vmatprep.subr.mxu0 0.0
    %6686 = vmatpush1.msra.mxu0 %v6662
    %6687 = vmatprep.subr.mxu0 0.0
    %6688 = vmatpush1.msra.mxu0 %v6661
    %6689 = vmatprep.subr.mxu0 0.0
    %6690 = vmatpush1.msra.mxu0 %v6660
    %6691 = vmatprep.subr.mxu0 0.0
    %6692 = vmatpush1.msra.mxu0 %v6659
    %6693 = vmatprep.subr.mxu0 0.0
    %6694 = vmatpush1.msra.mxu0 %v6658
    %6695 = vmatprep.subr.mxu0 0.0
    %6696 = vmatpush1.msra.mxu0 %v6657
    %6697 = vmatprep.subr.mxu0 0.0
    %6698 = vmatpush1.msra.mxu0 %v6656
    %6699 = vmatprep.subr.mxu0 0.0
    %6700 = vmatpush1.msra.mxu0 %v6655
    %6701 = vmatprep.subr.mxu0 0.0
    %6702 = vmatpush1.msra.mxu0 %v6654
    %6703 = vmatprep.subr.mxu0 0.0
    %6704 = vmatpush1.msra.mxu0 %v6653
    %6705 = vmatprep.subr.mxu0 0.0
    %6706 = vmatpush2.msra.mxu0 0.0
    %6707 = vmatprep.subr.mxu0 0.0
    %6708 = vmatpush2.msra.mxu0 0.0
    %6709 = vmatprep.subr.mxu0 0.0
    %6710 = vmatpush2.msra.mxu0 0.0
    %6711 = vmatprep.subr.mxu0 0.0
    %6712 = vmatpush2.msra.mxu0 0.0
    %6713 = vmatprep.subr.mxu0 0.0
    %6714 = vmatpush2.msra.mxu0 0.0
    %6715 = vmatprep.subr.mxu0 0.0
    %6716 = vmatpush2.msra.mxu0 0.0
    %6717 = vmatprep.subr.mxu0 0.0
    %6718 = vmatpush2.msra.mxu0 0.0
    %6719 = vmatprep.subr.mxu0 0.0
    %6720 = vmatpush2.msra.mxu0 0.0
    %6721 = vmatprep.subr.mxu0 0.0
    %6722 = vmatpush2.msra.mxu0 0.0
    %6723 = vmatprep.subr.mxu0 0.0
    %6724 = vmatpush2.msra.mxu0 0.0
    %6725 = vmatprep.subr.mxu0 0.0
    %6726 = vmatpush2.msra.mxu0 0.0
    %6727 = vmatprep.subr.mxu0 0.0
    %6728 = vmatpush2.msra.mxu0 0.0
    %6729 = vmatprep.subr.mxu0 0.0
    %6730 = vmatpush2.msra.mxu0 0.0
    %6731 = vmatprep.subr.mxu0 0.0
    %6732 = vmatpush2.msra.mxu0 0.0
    %6733 = vmatprep.subr.mxu0 0.0
    %6734 = vmatpush2.msra.mxu0 0.0
    %6735 = vmatprep.subr.mxu0 0.0
    %6736 = vmatpush2.msra.mxu0 0.0
    %6737 = vmatprep.mubr.f32.mxu0 0.0
    %6738 = vmatmul.mubr.f32.gmra.mxu0 %v6652
    %v6739 = vpop.f32.mrf.mxu0
    %v6740 = vadd.f32 %v6672, %v6739
    %v6741 = vpop.f32.mrf.mxu0
    %6742 = vdwg.mxu0
    %v6743 = vsub.f32 0.0, %v6740
    %v6744 = vmul.f32 %v6743, 1.442695
    %v6745 = vpow.pop %v6744
    %v6746 = vadd.f32 %v6745, 1.0
    %v6747 = vrcp.pop %v6746
    %6748 = vst [vmem:[%s6] sm:$0xff] %v6747
    %v6749 = vld [vmem:[#allocation6] sm:$0xff]
    %v6750 = vld [vmem:[#allocation6 + $0x8] sm:$0xff]
    %v6751 = vld [vmem:[#allocation6 + $0x10] sm:$0xff]
    %v6752 = vld [vmem:[#allocation6 + $0x18] sm:$0xff]
    %v6753 = vld [vmem:[#allocation6 + $0x20] sm:$0xff]
    %v6754 = vld [vmem:[#allocation6 + $0x28] sm:$0xff]
    %v6755 = vld [vmem:[#allocation6 + $0x30] sm:$0xff]
    %v6756 = vld [vmem:[#allocation6 + $0x38] sm:$0xff]
    %v6757 = vld [vmem:[#allocation6 + $0x40] sm:$0xff]
    %v6758 = vld [vmem:[#allocation6 + $0x48] sm:$0xff]
    %v6759 = vld [vmem:[#allocation6 + $0x50] sm:$0xff]
    %v6760 = vld [vmem:[#allocation6 + $0x58] sm:$0xff]
    %v6761 = vld [vmem:[#allocation6 + $0x60] sm:$0xff]
    %v6762 = vld [vmem:[#allocation6 + $0x68] sm:$0xff]
    %v6763 = vld [vmem:[#allocation6 + $0x70] sm:$0xff]
    %v6764 = vld [vmem:[#allocation6 + $0x78] sm:$0xff]
    %v6765 = vld [vmem:[#allocation6 + $0x80] sm:$0xff]
    %v6766 = vld [vmem:[#allocation6 + $0x88] sm:$0xff]
    %v6767 = vld [vmem:[#allocation6 + $0x90] sm:$0xff]
    %v6768 = vld [vmem:[#allocation6 + $0x98] sm:$0xff]
    %v6769 = vld [vmem:[#allocation6 + $0xa0] sm:$0xff]
    %v6770 = vld [vmem:[#allocation6 + $0xa8] sm:$0xff]
    %v6771 = vld [vmem:[#allocation6 + $0xb0] sm:$0xff]
    %v6772 = vld [vmem:[#allocation6 + $0xb8] sm:$0xff]
    %v6773 = vld [vmem:[#allocation6 + $0xc0] sm:$0xff]
    %v6774 = vld [vmem:[#allocation6 + $0xc8] sm:$0xff]
    %v6775 = vld [vmem:[#allocation6 + $0xd0] sm:$0xff]
    %v6776 = vld [vmem:[#allocation6 + $0xd8] sm:$0xff]
    %v6777 = vld [vmem:[#allocation6 + $0xe0] sm:$0xff]
    %v6778 = vld [vmem:[#allocation6 + $0xe8] sm:$0xff]
    %v6779 = vld [vmem:[#allocation6 + $0xf0] sm:$0xff]
    %v6780 = vld [vmem:[#allocation6 + $0xf8] sm:$0xff]
    %v6781 = vld [vmem:[#allocation6 + $0x100] sm:$0xff]
    %v6782 = vld [vmem:[#allocation6 + $0x108] sm:$0xff]
    %v6783 = vld [vmem:[#allocation6 + $0x110] sm:$0xff]
    %v6784 = vld [vmem:[#allocation6 + $0x118] sm:$0xff]
    %v6785 = vld [vmem:[#allocation6 + $0x120] sm:$0xff]
    %v6786 = vld [vmem:[#allocation6 + $0x128] sm:$0xff]
    %v6787 = vld [vmem:[#allocation6 + $0x130] sm:$0xff]
    %v6788 = vld [vmem:[#allocation6 + $0x138] sm:$0xff]
    %v6789 = vld [vmem:[#allocation6 + $0x140] sm:$0xff]
    %v6790 = vld [vmem:[#allocation6 + $0x148] sm:$0xff]
    %v6791 = vld [vmem:[#allocation6 + $0x150] sm:$0xff]
    %v6792 = vld [vmem:[#allocation6 + $0x158] sm:$0xff]
    %v6793 = vld [vmem:[#allocation6 + $0x160] sm:$0xff]
    %v6794 = vld [vmem:[#allocation6 + $0x168] sm:$0xff]
    %v6795 = vld [vmem:[#allocation6 + $0x170] sm:$0xff]
    %v6796 = vld [vmem:[#allocation6 + $0x178] sm:$0xff]
    %v6797 = vld [vmem:[#allocation6 + $0x180] sm:$0xff]
    %v6798 = vld [vmem:[#allocation6 + $0x188] sm:$0xff]
    %v6799 = vld [vmem:[#allocation6 + $0x190] sm:$0xff]
    %v6800 = vld [vmem:[#allocation6 + $0x198] sm:$0xff]
    %v6801 = vld [vmem:[#allocation6 + $0x1a0] sm:$0xff]
    %v6802 = vld [vmem:[#allocation6 + $0x1a8] sm:$0xff]
    %v6803 = vld [vmem:[#allocation6 + $0x1b0] sm:$0xff]
    %v6804 = vld [vmem:[#allocation6 + $0x1b8] sm:$0xff]
    %v6805 = vld [vmem:[#allocation6 + $0x1c0] sm:$0xff]
    %v6806 = vld [vmem:[#allocation6 + $0x1c8] sm:$0xff]
    %v6807 = vld [vmem:[#allocation6 + $0x1d0] sm:$0xff]
    %v6808 = vld [vmem:[#allocation6 + $0x1d8] sm:$0xff]
    %v6809 = vld [vmem:[#allocation6 + $0x1e0] sm:$0xff]
    %v6810 = vld [vmem:[#allocation6 + $0x1e8] sm:$0xff]
    %v6811 = vld [vmem:[#allocation6 + $0x1f0] sm:$0xff]
    %v6812 = vld [vmem:[#allocation6 + $0x1f8] sm:$0xff]
    %v6813 = vld [vmem:[#allocation6 + $0x200] sm:$0xff]
    %v6814 = vld [vmem:[#allocation6 + $0x208] sm:$0xff]
    %v6815 = vld [vmem:[#allocation6 + $0x210] sm:$0xff]
    %v6816 = vld [vmem:[#allocation6 + $0x218] sm:$0xff]
    %v6817 = vld [vmem:[#allocation6 + $0x220] sm:$0xff]
    %v6818 = vld [vmem:[#allocation6 + $0x228] sm:$0xff]
    %v6819 = vld [vmem:[#allocation6 + $0x230] sm:$0xff]
    %v6820 = vld [vmem:[#allocation6 + $0x238] sm:$0xff]
    %v6821 = vld [vmem:[#allocation6 + $0x240] sm:$0xff]
    %v6822 = vld [vmem:[#allocation6 + $0x248] sm:$0xff]
    %v6823 = vld [vmem:[#allocation6 + $0x250] sm:$0xff]
    %v6824 = vld [vmem:[#allocation6 + $0x258] sm:$0xff]
    %v6825 = vld [vmem:[#allocation6 + $0x260] sm:$0xff]
    %v6826 = vld [vmem:[#allocation6 + $0x268] sm:$0xff]
    %v6827 = vld [vmem:[#allocation6 + $0x270] sm:$0xff]
    %v6828 = vld [vmem:[#allocation6 + $0x278] sm:$0xff]
    %v6829 = vld [vmem:[#allocation6 + $0x280] sm:$0xff]
    %v6830 = vld [vmem:[#allocation6 + $0x288] sm:$0xff]
    %v6831 = vld [vmem:[#allocation6 + $0x290] sm:$0xff]
    %v6832 = vld [vmem:[#allocation6 + $0x298] sm:$0xff]
    %v6833 = vld [vmem:[#allocation6 + $0x2a0] sm:$0xff]
    %v6834 = vld [vmem:[#allocation6 + $0x2a8] sm:$0xff]
    %v6835 = vld [vmem:[#allocation6 + $0x2b0] sm:$0xff]
    %v6836 = vld [vmem:[#allocation6 + $0x2b8] sm:$0xff]
    %v6837 = vld [vmem:[#allocation6 + $0x2c0] sm:$0xff]
    %v6838 = vld [vmem:[#allocation6 + $0x2c8] sm:$0xff]
    %v6839 = vld [vmem:[#allocation6 + $0x2d0] sm:$0xff]
    %v6840 = vld [vmem:[#allocation6 + $0x2d8] sm:$0xff]
    %v6841 = vld [vmem:[#allocation6 + $0x2e0] sm:$0xff]
    %v6842 = vld [vmem:[#allocation6 + $0x2e8] sm:$0xff]
    %v6843 = vld [vmem:[#allocation6 + $0x2f0] sm:$0xff]
    %v6844 = vld [vmem:[#allocation6 + $0x2f8] sm:$0xff]
    %v6845 = vld [vmem:[#allocation6 + $0x300] sm:$0xff]
    %v6846 = vld [vmem:[#allocation6 + $0x308] sm:$0xff]
    %v6847 = vld [vmem:[#allocation6 + $0x310] sm:$0xff]
    %v6848 = vld [vmem:[#allocation6 + $0x318] sm:$0xff]
    %v6849 = vld [vmem:[#allocation6 + $0x320] sm:$0xff]
    %v6850 = vld [vmem:[#allocation6 + $0x328] sm:$0xff]
    %v6851 = vld [vmem:[#allocation6 + $0x330] sm:$0xff]
    %v6852 = vld [vmem:[#allocation6 + $0x338] sm:$0xff]
    %v6853 = vld [vmem:[#allocation6 + $0x340] sm:$0xff]
    %v6854 = vld [vmem:[#allocation6 + $0x348] sm:$0xff]
    %v6855 = vld [vmem:[#allocation6 + $0x350] sm:$0xff]
    %v6856 = vld [vmem:[#allocation6 + $0x358] sm:$0xff]
    %v6857 = vld [vmem:[#allocation6 + $0x360] sm:$0xff]
    %v6858 = vld [vmem:[#allocation6 + $0x368] sm:$0xff]
    %v6859 = vld [vmem:[#allocation6 + $0x370] sm:$0xff]
    %v6860 = vld [vmem:[#allocation6 + $0x378] sm:$0xff]
    %v6861 = vld [vmem:[#allocation6 + $0x380] sm:$0xff]
    %v6862 = vld [vmem:[#allocation6 + $0x388] sm:$0xff]
    %v6863 = vld [vmem:[#allocation6 + $0x390] sm:$0xff]
    %v6864 = vld [vmem:[#allocation6 + $0x398] sm:$0xff]
    %v6865 = vld [vmem:[#allocation6 + $0x3a0] sm:$0xff]
    %v6866 = vld [vmem:[#allocation6 + $0x3a8] sm:$0xff]
    %v6867 = vld [vmem:[#allocation6 + $0x3b0] sm:$0xff]
    %v6868 = vld [vmem:[#allocation6 + $0x3b8] sm:$0xff]
    %v6869 = vld [vmem:[#allocation6 + $0x3c0] sm:$0xff]
    %v6870 = vld [vmem:[#allocation6 + $0x3c8] sm:$0xff]
    %v6871 = vld [vmem:[#allocation6 + $0x3d0] sm:$0xff]
    %v6872 = vld [vmem:[#allocation6 + $0x3d8] sm:$0xff]
    %v6873 = vld [vmem:[#allocation6 + $0x3e0] sm:$0xff]
    %v6874 = vld [vmem:[#allocation6 + $0x3e8] sm:$0xff]
    %v6875 = vld [vmem:[#allocation6 + $0x3f0] sm:$0xff]
    %v6876 = vld [vmem:[#allocation6 + $0x3f8] sm:$0xff]
    %v6877 = vlaneseq
    %v6878 = vshrl.u32 %v6877, 7
    %v6879 = vsub.s32 2, %v6878
    %v6880 = vrot.slane %v94, %v6879
    %v6881 = vlaneseq
    %v6882 = vshrl.u32 %v6881, 7
    %v6883 = vsub.s32 2, %v6882
    %v6884 = vrot.slane %v95, %v6883
    %v6885 = vlaneseq
    %v6886 = vshrl.u32 %v6885, 7
    %v6887 = vsub.s32 2, %v6886
    %v6888 = vrot.slane %v96, %v6887
    %v6889 = vlaneseq
    %v6890 = vshrl.u32 %v6889, 7
    %v6891 = vsub.s32 2, %v6890
    %v6892 = vrot.slane %v97, %v6891
    %v7021 = vunpack.c.l.b16 %v6749
    %v7022 = vunpack.c.h.b16 %v6749
    %v7023 = vunpack.c.l.b16 %v6750
    %v7024 = vunpack.c.h.b16 %v6750
    %v7025 = vunpack.c.l.b16 %v6751
    %v7026 = vunpack.c.h.b16 %v6751
    %v7027 = vunpack.c.l.b16 %v6752
    %v7028 = vunpack.c.h.b16 %v6752
    %v7029 = vunpack.c.l.b16 %v6753
    %v7030 = vunpack.c.h.b16 %v6753
    %v7031 = vunpack.c.l.b16 %v6754
    %v7032 = vunpack.c.h.b16 %v6754
    %v7033 = vunpack.c.l.b16 %v6755
    %v7034 = vunpack.c.h.b16 %v6755
    %v7035 = vunpack.c.l.b16 %v6756
    %v7036 = vunpack.c.h.b16 %v6756
    %v7037 = vunpack.c.l.b16 %v6757
    %v7038 = vunpack.c.h.b16 %v6757
    %v7039 = vunpack.c.l.b16 %v6758
    %v7040 = vunpack.c.h.b16 %v6758
    %v7041 = vunpack.c.l.b16 %v6759
    %v7042 = vunpack.c.h.b16 %v6759
    %v7043 = vunpack.c.l.b16 %v6760
    %v7044 = vunpack.c.h.b16 %v6760
    %v7045 = vunpack.c.l.b16 %v6761
    %v7046 = vunpack.c.h.b16 %v6761
    %v7047 = vunpack.c.l.b16 %v6762
    %v7048 = vunpack.c.h.b16 %v6762
    %v7049 = vunpack.c.l.b16 %v6763
    %v7050 = vunpack.c.h.b16 %v6763
    %v7051 = vunpack.c.l.b16 %v6764
    %v7052 = vunpack.c.h.b16 %v6764
    %v7053 = vunpack.c.l.b16 %v6765
    %v7054 = vunpack.c.h.b16 %v6765
    %v7055 = vunpack.c.l.b16 %v6766
    %v7056 = vunpack.c.h.b16 %v6766
    %v7057 = vunpack.c.l.b16 %v6767
    %v7058 = vunpack.c.h.b16 %v6767
    %v7059 = vunpack.c.l.b16 %v6768
    %v7060 = vunpack.c.h.b16 %v6768
    %v7061 = vunpack.c.l.b16 %v6769
    %v7062 = vunpack.c.h.b16 %v6769
    %v7063 = vunpack.c.l.b16 %v6770
    %v7064 = vunpack.c.h.b16 %v6770
    %v7065 = vunpack.c.l.b16 %v6771
    %v7066 = vunpack.c.h.b16 %v6771
    %v7067 = vunpack.c.l.b16 %v6772
    %v7068 = vunpack.c.h.b16 %v6772
    %v7069 = vunpack.c.l.b16 %v6773
    %v7070 = vunpack.c.h.b16 %v6773
    %v7071 = vunpack.c.l.b16 %v6774
    %v7072 = vunpack.c.h.b16 %v6774
    %v7073 = vunpack.c.l.b16 %v6775
    %v7074 = vunpack.c.h.b16 %v6775
    %v7075 = vunpack.c.l.b16 %v6776
    %v7076 = vunpack.c.h.b16 %v6776
    %v7077 = vunpack.c.l.b16 %v6777
    %v7078 = vunpack.c.h.b16 %v6777
    %v7079 = vunpack.c.l.b16 %v6778
    %v7080 = vunpack.c.h.b16 %v6778
    %v7081 = vunpack.c.l.b16 %v6779
    %v7082 = vunpack.c.h.b16 %v6779
    %v7083 = vunpack.c.l.b16 %v6780
    %v7084 = vunpack.c.h.b16 %v6780
    %v7085 = vunpack.c.l.b16 %v6781
    %v7086 = vunpack.c.h.b16 %v6781
    %v7087 = vunpack.c.l.b16 %v6782
    %v7088 = vunpack.c.h.b16 %v6782
    %v7089 = vunpack.c.l.b16 %v6783
    %v7090 = vunpack.c.h.b16 %v6783
    %v7091 = vunpack.c.l.b16 %v6784
    %v7092 = vunpack.c.h.b16 %v6784
    %v7093 = vunpack.c.l.b16 %v6785
    %v7094 = vunpack.c.h.b16 %v6785
    %v7095 = vunpack.c.l.b16 %v6786
    %v7096 = vunpack.c.h.b16 %v6786
    %v7097 = vunpack.c.l.b16 %v6787
    %v7098 = vunpack.c.h.b16 %v6787
    %v7099 = vunpack.c.l.b16 %v6788
    %v7100 = vunpack.c.h.b16 %v6788
    %v7101 = vunpack.c.l.b16 %v6789
    %v7102 = vunpack.c.h.b16 %v6789
    %v7103 = vunpack.c.l.b16 %v6790
    %v7104 = vunpack.c.h.b16 %v6790
    %v7105 = vunpack.c.l.b16 %v6791
    %v7106 = vunpack.c.h.b16 %v6791
    %v7107 = vunpack.c.l.b16 %v6792
    %v7108 = vunpack.c.h.b16 %v6792
    %v7109 = vunpack.c.l.b16 %v6793
    %v7110 = vunpack.c.h.b16 %v6793
    %v7111 = vunpack.c.l.b16 %v6794
    %v7112 = vunpack.c.h.b16 %v6794
    %v7113 = vunpack.c.l.b16 %v6795
    %v7114 = vunpack.c.h.b16 %v6795
    %v7115 = vunpack.c.l.b16 %v6796
    %v7116 = vunpack.c.h.b16 %v6796
    %v7117 = vunpack.c.l.b16 %v6797
    %v7118 = vunpack.c.h.b16 %v6797
    %v7119 = vunpack.c.l.b16 %v6798
    %v7120 = vunpack.c.h.b16 %v6798
    %v7121 = vunpack.c.l.b16 %v6799
    %v7122 = vunpack.c.h.b16 %v6799
    %v7123 = vunpack.c.l.b16 %v6800
    %v7124 = vunpack.c.h.b16 %v6800
    %v7125 = vunpack.c.l.b16 %v6801
    %v7126 = vunpack.c.h.b16 %v6801
    %v7127 = vunpack.c.l.b16 %v6802
    %v7128 = vunpack.c.h.b16 %v6802
    %v7129 = vunpack.c.l.b16 %v6803
    %v7130 = vunpack.c.h.b16 %v6803
    %v7131 = vunpack.c.l.b16 %v6804
    %v7132 = vunpack.c.h.b16 %v6804
    %v7133 = vunpack.c.l.b16 %v6805
    %v7134 = vunpack.c.h.b16 %v6805
    %v7135 = vunpack.c.l.b16 %v6806
    %v7136 = vunpack.c.h.b16 %v6806
    %v7137 = vunpack.c.l.b16 %v6807
    %v7138 = vunpack.c.h.b16 %v6807
    %v7139 = vunpack.c.l.b16 %v6808
    %v7140 = vunpack.c.h.b16 %v6808
    %v7141 = vunpack.c.l.b16 %v6809
    %v7142 = vunpack.c.h.b16 %v6809
    %v7143 = vunpack.c.l.b16 %v6810
    %v7144 = vunpack.c.h.b16 %v6810
    %v7145 = vunpack.c.l.b16 %v6811
    %v7146 = vunpack.c.h.b16 %v6811
    %v7147 = vunpack.c.l.b16 %v6812
    %v7148 = vunpack.c.h.b16 %v6812
    %v7149 = vunpack.c.l.b16 %v6813
    %v7150 = vunpack.c.h.b16 %v6813
    %v7151 = vunpack.c.l.b16 %v6814
    %v7152 = vunpack.c.h.b16 %v6814
    %v7153 = vunpack.c.l.b16 %v6815
    %v7154 = vunpack.c.h.b16 %v6815
    %v7155 = vunpack.c.l.b16 %v6816
    %v7156 = vunpack.c.h.b16 %v6816
    %v7157 = vunpack.c.l.b16 %v6817
    %v7158 = vunpack.c.h.b16 %v6817
    %v7159 = vunpack.c.l.b16 %v6818
    %v7160 = vunpack.c.h.b16 %v6818
    %v7161 = vunpack.c.l.b16 %v6819
    %v7162 = vunpack.c.h.b16 %v6819
    %v7163 = vunpack.c.l.b16 %v6820
    %v7164 = vunpack.c.h.b16 %v6820
    %v7165 = vunpack.c.l.b16 %v6821
    %v7166 = vunpack.c.h.b16 %v6821
    %v7167 = vunpack.c.l.b16 %v6822
    %v7168 = vunpack.c.h.b16 %v6822
    %v7169 = vunpack.c.l.b16 %v6823
    %v7170 = vunpack.c.h.b16 %v6823
    %v7171 = vunpack.c.l.b16 %v6824
    %v7172 = vunpack.c.h.b16 %v6824
    %v7173 = vunpack.c.l.b16 %v6825
    %v7174 = vunpack.c.h.b16 %v6825
    %v7175 = vunpack.c.l.b16 %v6826
    %v7176 = vunpack.c.h.b16 %v6826
    %v7177 = vunpack.c.l.b16 %v6827
    %v7178 = vunpack.c.h.b16 %v6827
    %v7179 = vunpack.c.l.b16 %v6828
    %v7180 = vunpack.c.h.b16 %v6828
    %v7181 = vunpack.c.l.b16 %v6829
    %v7182 = vunpack.c.h.b16 %v6829
    %v7183 = vunpack.c.l.b16 %v6830
    %v7184 = vunpack.c.h.b16 %v6830
    %v7185 = vunpack.c.l.b16 %v6831
    %v7186 = vunpack.c.h.b16 %v6831
    %v7187 = vunpack.c.l.b16 %v6832
    %v7188 = vunpack.c.h.b16 %v6832
    %v7189 = vunpack.c.l.b16 %v6833
    %v7190 = vunpack.c.h.b16 %v6833
    %v7191 = vunpack.c.l.b16 %v6834
    %v7192 = vunpack.c.h.b16 %v6834
    %v7193 = vunpack.c.l.b16 %v6835
    %v7194 = vunpack.c.h.b16 %v6835
    %v7195 = vunpack.c.l.b16 %v6836
    %v7196 = vunpack.c.h.b16 %v6836
    %v7197 = vunpack.c.l.b16 %v6837
    %v7198 = vunpack.c.h.b16 %v6837
    %v7199 = vunpack.c.l.b16 %v6838
    %v7200 = vunpack.c.h.b16 %v6838
    %v7201 = vunpack.c.l.b16 %v6839
    %v7202 = vunpack.c.h.b16 %v6839
    %v7203 = vunpack.c.l.b16 %v6840
    %v7204 = vunpack.c.h.b16 %v6840
    %v7205 = vunpack.c.l.b16 %v6841
    %v7206 = vunpack.c.h.b16 %v6841
    %v7207 = vunpack.c.l.b16 %v6842
    %v7208 = vunpack.c.h.b16 %v6842
    %v7209 = vunpack.c.l.b16 %v6843
    %v7210 = vunpack.c.h.b16 %v6843
    %v7211 = vunpack.c.l.b16 %v6844
    %v7212 = vunpack.c.h.b16 %v6844
    %v7213 = vunpack.c.l.b16 %v6845
    %v7214 = vunpack.c.h.b16 %v6845
    %v7215 = vunpack.c.l.b16 %v6846
    %v7216 = vunpack.c.h.b16 %v6846
    %v7217 = vunpack.c.l.b16 %v6847
    %v7218 = vunpack.c.h.b16 %v6847
    %v7219 = vunpack.c.l.b16 %v6848
    %v7220 = vunpack.c.h.b16 %v6848
    %v7221 = vunpack.c.l.b16 %v6849
    %v7222 = vunpack.c.h.b16 %v6849
    %v7223 = vunpack.c.l.b16 %v6850
    %v7224 = vunpack.c.h.b16 %v6850
    %v7225 = vunpack.c.l.b16 %v6851
    %v7226 = vunpack.c.h.b16 %v6851
    %v7227 = vunpack.c.l.b16 %v6852
    %v7228 = vunpack.c.h.b16 %v6852
    %v7229 = vunpack.c.l.b16 %v6853
    %v7230 = vunpack.c.h.b16 %v6853
    %v7231 = vunpack.c.l.b16 %v6854
    %v7232 = vunpack.c.h.b16 %v6854
    %v7233 = vunpack.c.l.b16 %v6855
    %v7234 = vunpack.c.h.b16 %v6855
    %v7235 = vunpack.c.l.b16 %v6856
    %v7236 = vunpack.c.h.b16 %v6856
    %v7237 = vunpack.c.l.b16 %v6857
    %v7238 = vunpack.c.h.b16 %v6857
    %v7239 = vunpack.c.l.b16 %v6858
    %v7240 = vunpack.c.h.b16 %v6858
    %v7241 = vunpack.c.l.b16 %v6859
    %v7242 = vunpack.c.h.b16 %v6859
    %v7243 = vunpack.c.l.b16 %v6860
    %v7244 = vunpack.c.h.b16 %v6860
    %v7245 = vunpack.c.l.b16 %v6861
    %v7246 = vunpack.c.h.b16 %v6861
    %v7247 = vunpack.c.l.b16 %v6862
    %v7248 = vunpack.c.h.b16 %v6862
    %v7249 = vunpack.c.l.b16 %v6863
    %v7250 = vunpack.c.h.b16 %v6863
    %v7251 = vunpack.c.l.b16 %v6864
    %v7252 = vunpack.c.h.b16 %v6864
    %v7253 = vunpack.c.l.b16 %v6865
    %v7254 = vunpack.c.h.b16 %v6865
    %v7255 = vunpack.c.l.b16 %v6866
    %v7256 = vunpack.c.h.b16 %v6866
    %v7257 = vunpack.c.l.b16 %v6867
    %v7258 = vunpack.c.h.b16 %v6867
    %v7259 = vunpack.c.l.b16 %v6868
    %v7260 = vunpack.c.h.b16 %v6868
    %v7261 = vunpack.c.l.b16 %v6869
    %v7262 = vunpack.c.h.b16 %v6869
    %v7263 = vunpack.c.l.b16 %v6870
    %v7264 = vunpack.c.h.b16 %v6870
    %v7265 = vunpack.c.l.b16 %v6871
    %v7266 = vunpack.c.h.b16 %v6871
    %v7267 = vunpack.c.l.b16 %v6872
    %v7268 = vunpack.c.h.b16 %v6872
    %v7269 = vunpack.c.l.b16 %v6873
    %v7270 = vunpack.c.h.b16 %v6873
    %v7271 = vunpack.c.l.b16 %v6874
    %v7272 = vunpack.c.h.b16 %v6874
    %v7273 = vunpack.c.l.b16 %v6875
    %v7274 = vunpack.c.h.b16 %v6875
    %v7275 = vunpack.c.l.b16 %v6876
    %v7276 = vunpack.c.h.b16 %v6876
    %v7277 = vpack.c.b16 %v7025, %v7021
    %v7278 = vpack.c.b16 %v7026, %v7022
    %v7279 = vpack.c.b16 %v7027, %v7023
    %v7280 = vpack.c.b16 %v7028, %v7024
    %v7281 = vpack.c.b16 %v7033, %v7029
    %v7282 = vpack.c.b16 %v7034, %v7030
    %v7283 = vpack.c.b16 %v7035, %v7031
    %v7284 = vpack.c.b16 %v7036, %v7032
    %v7285 = vpack.c.b16 %v7041, %v7037
    %v7286 = vpack.c.b16 %v7042, %v7038
    %v7287 = vpack.c.b16 %v7043, %v7039
    %v7288 = vpack.c.b16 %v7044, %v7040
    %v7289 = vpack.c.b16 %v7049, %v7045
    %v7290 = vpack.c.b16 %v7050, %v7046
    %v7291 = vpack.c.b16 %v7051, %v7047
    %v7292 = vpack.c.b16 %v7052, %v7048
    %v7293 = vpack.c.b16 %v7057, %v7053
    %v7294 = vpack.c.b16 %v7058, %v7054
    %v7295 = vpack.c.b16 %v7059, %v7055
    %v7296 = vpack.c.b16 %v7060, %v7056
    %v7297 = vpack.c.b16 %v7065, %v7061
    %v7298 = vpack.c.b16 %v7066, %v7062
    %v7299 = vpack.c.b16 %v7067, %v7063
    %v7300 = vpack.c.b16 %v7068, %v7064
    %v7301 = vpack.c.b16 %v7073, %v7069
    %v7302 = vpack.c.b16 %v7074, %v7070
    %v7303 = vpack.c.b16 %v7075, %v7071
    %v7304 = vpack.c.b16 %v7076, %v7072
    %v7305 = vpack.c.b16 %v7081, %v7077
    %v7306 = vpack.c.b16 %v7082, %v7078
    %v7307 = vpack.c.b16 %v7083, %v7079
    %v7308 = vpack.c.b16 %v7084, %v7080
    %v7309 = vpack.c.b16 %v7089, %v7085
    %v7310 = vpack.c.b16 %v7090, %v7086
    %v7311 = vpack.c.b16 %v7091, %v7087
    %v7312 = vpack.c.b16 %v7092, %v7088
    %v7313 = vpack.c.b16 %v7097, %v7093
    %v7314 = vpack.c.b16 %v7098, %v7094
    %v7315 = vpack.c.b16 %v7099, %v7095
    %v7316 = vpack.c.b16 %v7100, %v7096
    %v7317 = vpack.c.b16 %v7105, %v7101
    %v7318 = vpack.c.b16 %v7106, %v7102
    %v7319 = vpack.c.b16 %v7107, %v7103
    %v7320 = vpack.c.b16 %v7108, %v7104
    %v7321 = vpack.c.b16 %v7113, %v7109
    %v7322 = vpack.c.b16 %v7114, %v7110
    %v7323 = vpack.c.b16 %v7115, %v7111
    %v7324 = vpack.c.b16 %v7116, %v7112
    %v7325 = vpack.c.b16 %v7121, %v7117
    %v7326 = vpack.c.b16 %v7122, %v7118
    %v7327 = vpack.c.b16 %v7123, %v7119
    %v7328 = vpack.c.b16 %v7124, %v7120
    %v7329 = vpack.c.b16 %v7129, %v7125
    %v7330 = vpack.c.b16 %v7130, %v7126
    %v7331 = vpack.c.b16 %v7131, %v7127
    %v7332 = vpack.c.b16 %v7132, %v7128
    %v7333 = vpack.c.b16 %v7137, %v7133
    %v7334 = vpack.c.b16 %v7138, %v7134
    %v7335 = vpack.c.b16 %v7139, %v7135
    %v7336 = vpack.c.b16 %v7140, %v7136
    %v7337 = vpack.c.b16 %v7145, %v7141
    %v7338 = vpack.c.b16 %v7146, %v7142
    %v7339 = vpack.c.b16 %v7147, %v7143
    %v7340 = vpack.c.b16 %v7148, %v7144
    %v7341 = vpack.c.b16 %v7153, %v7149
    %v7342 = vpack.c.b16 %v7154, %v7150
    %v7343 = vpack.c.b16 %v7155, %v7151
    %v7344 = vpack.c.b16 %v7156, %v7152
    %v7345 = vpack.c.b16 %v7161, %v7157
    %v7346 = vpack.c.b16 %v7162, %v7158
    %v7347 = vpack.c.b16 %v7163, %v7159
    %v7348 = vpack.c.b16 %v7164, %v7160
    %v7349 = vpack.c.b16 %v7169, %v7165
    %v7350 = vpack.c.b16 %v7170, %v7166
    %v7351 = vpack.c.b16 %v7171, %v7167
    %v7352 = vpack.c.b16 %v7172, %v7168
    %v7353 = vpack.c.b16 %v7177, %v7173
    %v7354 = vpack.c.b16 %v7178, %v7174
    %v7355 = vpack.c.b16 %v7179, %v7175
    %v7356 = vpack.c.b16 %v7180, %v7176
    %v7357 = vpack.c.b16 %v7185, %v7181
    %v7358 = vpack.c.b16 %v7186, %v7182
    %v7359 = vpack.c.b16 %v7187, %v7183
    %v7360 = vpack.c.b16 %v7188, %v7184
    %v7361 = vpack.c.b16 %v7193, %v7189
    %v7362 = vpack.c.b16 %v7194, %v7190
    %v7363 = vpack.c.b16 %v7195, %v7191
    %v7364 = vpack.c.b16 %v7196, %v7192
    %v7365 = vpack.c.b16 %v7201, %v7197
    %v7366 = vpack.c.b16 %v7202, %v7198
    %v7367 = vpack.c.b16 %v7203, %v7199
    %v7368 = vpack.c.b16 %v7204, %v7200
    %v7369 = vpack.c.b16 %v7209, %v7205
    %v7370 = vpack.c.b16 %v7210, %v7206
    %v7371 = vpack.c.b16 %v7211, %v7207
    %v7372 = vpack.c.b16 %v7212, %v7208
    %v7373 = vpack.c.b16 %v7217, %v7213
    %v7374 = vpack.c.b16 %v7218, %v7214
    %v7375 = vpack.c.b16 %v7219, %v7215
    %v7376 = vpack.c.b16 %v7220, %v7216
    %v7377 = vpack.c.b16 %v7225, %v7221
    %v7378 = vpack.c.b16 %v7226, %v7222
    %v7379 = vpack.c.b16 %v7227, %v7223
    %v7380 = vpack.c.b16 %v7228, %v7224
    %v7381 = vpack.c.b16 %v7233, %v7229
    %v7382 = vpack.c.b16 %v7234, %v7230
    %v7383 = vpack.c.b16 %v7235, %v7231
    %v7384 = vpack.c.b16 %v7236, %v7232
    %v7385 = vpack.c.b16 %v7241, %v7237
    %v7386 = vpack.c.b16 %v7242, %v7238
    %v7387 = vpack.c.b16 %v7243, %v7239
    %v7388 = vpack.c.b16 %v7244, %v7240
    %v7389 = vpack.c.b16 %v7249, %v7245
    %v7390 = vpack.c.b16 %v7250, %v7246
    %v7391 = vpack.c.b16 %v7251, %v7247
    %v7392 = vpack.c.b16 %v7252, %v7248
    %v7393 = vpack.c.b16 %v7257, %v7253
    %v7394 = vpack.c.b16 %v7258, %v7254
    %v7395 = vpack.c.b16 %v7259, %v7255
    %v7396 = vpack.c.b16 %v7260, %v7256
    %v7397 = vpack.c.b16 %v7265, %v7261
    %v7398 = vpack.c.b16 %v7266, %v7262
    %v7399 = vpack.c.b16 %v7267, %v7263
    %v7400 = vpack.c.b16 %v7268, %v7264
    %v7401 = vpack.c.b16 %v7273, %v7269
    %v7402 = vpack.c.b16 %v7274, %v7270
    %v7403 = vpack.c.b16 %v7275, %v7271
    %v7404 = vpack.c.b16 %v7276, %v7272
    %7533 = vmatprep.subr.bf16.mxu0 %v7306
    %7534 = vmatpush1.bf16.msra.mxu0 %v7305
    %7535 = vmatprep.subr.bf16.mxu0 %v7302
    %7536 = vmatpush1.bf16.msra.mxu0 %v7301
    %7537 = vmatprep.subr.bf16.mxu0 %v7298
    %7538 = vmatpush1.bf16.msra.mxu0 %v7297
    %7539 = vmatprep.subr.bf16.mxu0 %v7294
    %7540 = vmatpush1.bf16.msra.mxu0 %v7293
    %7541 = vmatprep.subr.bf16.mxu0 %v7290
    %7542 = vmatpush1.bf16.msra.mxu0 %v7289
    %7543 = vmatprep.subr.bf16.mxu0 %v7286
    %7544 = vmatpush1.bf16.msra.mxu0 %v7285
    %7545 = vmatprep.subr.bf16.mxu0 %v7282
    %7546 = vmatpush1.bf16.msra.mxu0 %v7281
    %7547 = vmatprep.subr.bf16.mxu0 %v7278
    %7548 = vmatpush1.bf16.msra.mxu0 %v7277
    %7549 = vmatprep.subr.bf16.mxu0 %v7338
    %7550 = vmatpush2.bf16.msra.mxu0 %v7337
    %7551 = vmatprep.subr.bf16.mxu0 %v7334
    %7552 = vmatpush2.bf16.msra.mxu0 %v7333
    %7553 = vmatprep.subr.bf16.mxu0 %v7330
    %7554 = vmatpush2.bf16.msra.mxu0 %v7329
    %7555 = vmatprep.subr.bf16.mxu0 %v7326
    %7556 = vmatpush2.bf16.msra.mxu0 %v7325
    %7557 = vmatprep.subr.bf16.mxu0 %v7322
    %7558 = vmatpush2.bf16.msra.mxu0 %v7321
    %7559 = vmatprep.subr.bf16.mxu0 %v7318
    %7560 = vmatpush2.bf16.msra.mxu0 %v7317
    %7561 = vmatprep.subr.bf16.mxu0 %v7314
    %7562 = vmatpush2.bf16.msra.mxu0 %v7313
    %7563 = vmatprep.subr.bf16.mxu0 %v7310
    %7564 = vmatpush2.bf16.msra.mxu0 %v7309
    %7565 = vmatprep.mubr.bf16.mxu0 %v6468
    %7566 = vmatmul.mubr.bf16.gmra.mxu0 %v6467
    %v7567 = vpop.f32.mrf.mxu0
    %v7568 = vadd.f32 %v6880, %v7567
    %v7569 = vpop.f32.mrf.mxu0
    %v7570 = vadd.f32 %v6884, %v7569
    %v7571 = vpop.f32.mrf.mxu0
    %v7572 = vpop.f32.mrf.mxu0
    %7573 = vdwg.mxu0
    %7574 = vmatprep.subr.bf16.mxu0 %v7370
    %7575 = vmatpush1.bf16.msra.mxu0 %v7369
    %7576 = vmatprep.subr.bf16.mxu0 %v7366
    %7577 = vmatpush1.bf16.msra.mxu0 %v7365
    %7578 = vmatprep.subr.bf16.mxu0 %v7362
    %7579 = vmatpush1.bf16.msra.mxu0 %v7361
    %7580 = vmatprep.subr.bf16.mxu0 %v7358
    %7581 = vmatpush1.bf16.msra.mxu0 %v7357
    %7582 = vmatprep.subr.bf16.mxu0 %v7354
    %7583 = vmatpush1.bf16.msra.mxu0 %v7353
    %7584 = vmatprep.subr.bf16.mxu0 %v7350
    %7585 = vmatpush1.bf16.msra.mxu0 %v7349
    %7586 = vmatprep.subr.bf16.mxu0 %v7346
    %7587 = vmatpush1.bf16.msra.mxu0 %v7345
    %7588 = vmatprep.subr.bf16.mxu0 %v7342
    %7589 = vmatpush1.bf16.msra.mxu0 %v7341
    %7590 = vmatprep.subr.bf16.mxu0 %v7402
    %7591 = vmatpush2.bf16.msra.mxu0 %v7401
    %7592 = vmatprep.subr.bf16.mxu0 %v7398
    %7593 = vmatpush2.bf16.msra.mxu0 %v7397
    %7594 = vmatprep.subr.bf16.mxu0 %v7394
    %7595 = vmatpush2.bf16.msra.mxu0 %v7393
    %7596 = vmatprep.subr.bf16.mxu0 %v7390
    %7597 = vmatpush2.bf16.msra.mxu0 %v7389
    %7598 = vmatprep.subr.bf16.mxu0 %v7386
    %7599 = vmatpush2.bf16.msra.mxu0 %v7385
    %7600 = vmatprep.subr.bf16.mxu0 %v7382
    %7601 = vmatpush2.bf16.msra.mxu0 %v7381
    %7602 = vmatprep.subr.bf16.mxu0 %v7378
    %7603 = vmatpush2.bf16.msra.mxu0 %v7377
    %7604 = vmatprep.subr.bf16.mxu0 %v7374
    %7605 = vmatpush2.bf16.msra.mxu0 %v7373
    %7606 = vmatprep.mubr.bf16.mxu0 %v6470
    %7607 = vmatmul.mubr.bf16.gmra.mxu0 %v6469
    %v7608 = vpop.f32.mrf.mxu0
    %v7609 = vadd.f32 %v7568, %v7608
    %v7610 = vpop.f32.mrf.mxu0
    %v7611 = vadd.f32 %v7570, %v7610
    %v7612 = vpop.f32.mrf.mxu0
    %v7613 = vpop.f32.mrf.mxu0
    %7614 = vdwg.mxu0
    %7615 = vmatprep.subr.bf16.mxu0 %v7308
    %7616 = vmatpush1.bf16.msra.mxu0 %v7307
    %7617 = vmatprep.subr.bf16.mxu0 %v7304
    %7618 = vmatpush1.bf16.msra.mxu0 %v7303
    %7619 = vmatprep.subr.bf16.mxu0 %v7300
    %7620 = vmatpush1.bf16.msra.mxu0 %v7299
    %7621 = vmatprep.subr.bf16.mxu0 %v7296
    %7622 = vmatpush1.bf16.msra.mxu0 %v7295
    %7623 = vmatprep.subr.bf16.mxu0 %v7292
    %7624 = vmatpush1.bf16.msra.mxu0 %v7291
    %7625 = vmatprep.subr.bf16.mxu0 %v7288
    %7626 = vmatpush1.bf16.msra.mxu0 %v7287
    %7627 = vmatprep.subr.bf16.mxu0 %v7284
    %7628 = vmatpush1.bf16.msra.mxu0 %v7283
    %7629 = vmatprep.subr.bf16.mxu0 %v7280
    %7630 = vmatpush1.bf16.msra.mxu0 %v7279
    %7631 = vmatprep.subr.bf16.mxu0 %v7340
    %7632 = vmatpush2.bf16.msra.mxu0 %v7339
    %7633 = vmatprep.subr.bf16.mxu0 %v7336
    %7634 = vmatpush2.bf16.msra.mxu0 %v7335
    %7635 = vmatprep.subr.bf16.mxu0 %v7332
    %7636 = vmatpush2.bf16.msra.mxu0 %v7331
    %7637 = vmatprep.subr.bf16.mxu0 %v7328
    %7638 = vmatpush2.bf16.msra.mxu0 %v7327
    %7639 = vmatprep.subr.bf16.mxu0 %v7324
    %7640 = vmatpush2.bf16.msra.mxu0 %v7323
    %7641 = vmatprep.subr.bf16.mxu0 %v7320
    %7642 = vmatpush2.bf16.msra.mxu0 %v7319
    %7643 = vmatprep.subr.bf16.mxu0 %v7316
    %7644 = vmatpush2.bf16.msra.mxu0 %v7315
    %7645 = vmatprep.subr.bf16.mxu0 %v7312
    %7646 = vmatpush2.bf16.msra.mxu0 %v7311
    %7647 = vmatprep.mubr.bf16.mxu0 %v6468
    %7648 = vmatmul.mubr.bf16.gmra.mxu0 %v6467
    %v7649 = vpop.f32.mrf.mxu0
    %v7650 = vadd.f32 %v6888, %v7649
    %v7651 = vpop.f32.mrf.mxu0
    %v7652 = vadd.f32 %v6892, %v7651
    %v7653 = vpop.f32.mrf.mxu0
    %v7654 = vpop.f32.mrf.mxu0
    %7655 = vdwg.mxu0
    %7656 = vmatprep.subr.bf16.mxu0 %v7372
    %7657 = vmatpush1.bf16.msra.mxu0 %v7371
    %7658 = vmatprep.subr.bf16.mxu0 %v7368
    %7659 = vmatpush1.bf16.msra.mxu0 %v7367
    %7660 = vmatprep.subr.bf16.mxu0 %v7364
    %7661 = vmatpush1.bf16.msra.mxu0 %v7363
    %7662 = vmatprep.subr.bf16.mxu0 %v7360
    %7663 = vmatpush1.bf16.msra.mxu0 %v7359
    %7664 = vmatprep.subr.bf16.mxu0 %v7356
    %7665 = vmatpush1.bf16.msra.mxu0 %v7355
    %7666 = vmatprep.subr.bf16.mxu0 %v7352
    %7667 = vmatpush1.bf16.msra.mxu0 %v7351
    %7668 = vmatprep.subr.bf16.mxu0 %v7348
    %7669 = vmatpush1.bf16.msra.mxu0 %v7347
    %7670 = vmatprep.subr.bf16.mxu0 %v7344
    %7671 = vmatpush1.bf16.msra.mxu0 %v7343
    %7672 = vmatprep.subr.bf16.mxu0 %v7404
    %7673 = vmatpush2.bf16.msra.mxu0 %v7403
    %7674 = vmatprep.subr.bf16.mxu0 %v7400
    %7675 = vmatpush2.bf16.msra.mxu0 %v7399
    %7676 = vmatprep.subr.bf16.mxu0 %v7396
    %7677 = vmatpush2.bf16.msra.mxu0 %v7395
    %7678 = vmatprep.subr.bf16.mxu0 %v7392
    %7679 = vmatpush2.bf16.msra.mxu0 %v7391
    %7680 = vmatprep.subr.bf16.mxu0 %v7388
    %7681 = vmatpush2.bf16.msra.mxu0 %v7387
    %7682 = vmatprep.subr.bf16.mxu0 %v7384
    %7683 = vmatpush2.bf16.msra.mxu0 %v7383
    %7684 = vmatprep.subr.bf16.mxu0 %v7380
    %7685 = vmatpush2.bf16.msra.mxu0 %v7379
    %7686 = vmatprep.subr.bf16.mxu0 %v7376
    %7687 = vmatpush2.bf16.msra.mxu0 %v7375
    %7688 = vmatprep.mubr.bf16.mxu0 %v6470
    %7689 = vmatmul.mubr.bf16.gmra.mxu0 %v6469
    %v7690 = vpop.f32.mrf.mxu0
    %v7691 = vadd.f32 %v7650, %v7690
    %v7692 = vpop.f32.mrf.mxu0
    %v7693 = vadd.f32 %v7652, %v7692
    %v7694 = vpop.f32.mrf.mxu0
    %v7695 = vpop.f32.mrf.mxu0
    %7696 = vdwg.mxu0
    %v7697 = vmax.f32 %v7609, 0.0
    %v7698 = vmax.f32 %v7611, 0.0
    %v7699 = vmax.f32 %v7691, 0.0
    %v7700 = vmax.f32 %v7693, 0.0
    %v7701 = vld [vmem:[#allocation7 + $0x180] sm:$0xff]
    %v7702 = vld [vmem:[#allocation7 + $0x188] sm:$0xff]
    %v7703 = vld [vmem:[#allocation7 + $0x190] sm:$0xff]
    %v7704 = vld [vmem:[#allocation7 + $0x198] sm:$0xff]
    %v7705 = vld [vmem:[#allocation7 + $0x1a0] sm:$0xff]
    %v7706 = vld [vmem:[#allocation7 + $0x1a8] sm:$0xff]
    %v7707 = vld [vmem:[#allocation7 + $0x1b0] sm:$0xff]
    %v7708 = vld [vmem:[#allocation7 + $0x1b8] sm:$0xff]
    %v7709 = vld [vmem:[#allocation7 + $0x1c0] sm:$0xff]
    %v7710 = vld [vmem:[#allocation7 + $0x1c8] sm:$0xff]
    %v7711 = vld [vmem:[#allocation7 + $0x1d0] sm:$0xff]
    %v7712 = vld [vmem:[#allocation7 + $0x1d8] sm:$0xff]
    %v7713 = vld [vmem:[#allocation7 + $0x1e0] sm:$0xff]
    %v7714 = vld [vmem:[#allocation7 + $0x1e8] sm:$0xff]
    %v7715 = vld [vmem:[#allocation7 + $0x1f0] sm:$0xff]
    %v7716 = vld [vmem:[#allocation7 + $0x1f8] sm:$0xff]
    %v7717 = vld [vmem:[#allocation7 + $0x200] sm:$0xff]
    %v7718 = vld [vmem:[#allocation7 + $0x208] sm:$0xff]
    %v7719 = vld [vmem:[#allocation7 + $0x210] sm:$0xff]
    %v7720 = vld [vmem:[#allocation7 + $0x218] sm:$0xff]
    %v7721 = vld [vmem:[#allocation7 + $0x220] sm:$0xff]
    %v7722 = vld [vmem:[#allocation7 + $0x228] sm:$0xff]
    %v7723 = vld [vmem:[#allocation7 + $0x230] sm:$0xff]
    %v7724 = vld [vmem:[#allocation7 + $0x238] sm:$0xff]
    %v7725 = vld [vmem:[#allocation7 + $0x240] sm:$0xff]
    %v7726 = vld [vmem:[#allocation7 + $0x248] sm:$0xff]
    %v7727 = vld [vmem:[#allocation7 + $0x250] sm:$0xff]
    %v7728 = vld [vmem:[#allocation7 + $0x258] sm:$0xff]
    %v7729 = vld [vmem:[#allocation7 + $0x260] sm:$0xff]
    %v7730 = vld [vmem:[#allocation7 + $0x268] sm:$0xff]
    %v7731 = vld [vmem:[#allocation7 + $0x270] sm:$0xff]
    %v7732 = vld [vmem:[#allocation7 + $0x278] sm:$0xff]
    %v7733 = vld [vmem:[#allocation7 + $0x280] sm:$0xff]
    %v7734 = vld [vmem:[#allocation7 + $0x288] sm:$0xff]
    %v7735 = vld [vmem:[#allocation7 + $0x290] sm:$0xff]
    %v7736 = vld [vmem:[#allocation7 + $0x298] sm:$0xff]
    %v7737 = vld [vmem:[#allocation7 + $0x2a0] sm:$0xff]
    %v7738 = vld [vmem:[#allocation7 + $0x2a8] sm:$0xff]
    %v7739 = vld [vmem:[#allocation7 + $0x2b0] sm:$0xff]
    %v7740 = vld [vmem:[#allocation7 + $0x2b8] sm:$0xff]
    %v7741 = vld [vmem:[#allocation7 + $0x2c0] sm:$0xff]
    %v7742 = vld [vmem:[#allocation7 + $0x2c8] sm:$0xff]
    %v7743 = vld [vmem:[#allocation7 + $0x2d0] sm:$0xff]
    %v7744 = vld [vmem:[#allocation7 + $0x2d8] sm:$0xff]
    %v7745 = vld [vmem:[#allocation7 + $0x2e0] sm:$0xff]
    %v7746 = vld [vmem:[#allocation7 + $0x2e8] sm:$0xff]
    %v7747 = vld [vmem:[#allocation7 + $0x2f0] sm:$0xff]
    %v7748 = vld [vmem:[#allocation7 + $0x2f8] sm:$0xff]
    %v7749 = vld [vmem:[#allocation7 + $0x300] sm:$0xff]
    %v7750 = vld [vmem:[#allocation7 + $0x308] sm:$0xff]
    %v7751 = vld [vmem:[#allocation7 + $0x310] sm:$0xff]
    %v7752 = vld [vmem:[#allocation7 + $0x318] sm:$0xff]
    %v7753 = vld [vmem:[#allocation7 + $0x320] sm:$0xff]
    %v7754 = vld [vmem:[#allocation7 + $0x328] sm:$0xff]
    %v7755 = vld [vmem:[#allocation7 + $0x330] sm:$0xff]
    %v7756 = vld [vmem:[#allocation7 + $0x338] sm:$0xff]
    %v7757 = vld [vmem:[#allocation7 + $0x340] sm:$0xff]
    %v7758 = vld [vmem:[#allocation7 + $0x348] sm:$0xff]
    %v7759 = vld [vmem:[#allocation7 + $0x350] sm:$0xff]
    %v7760 = vld [vmem:[#allocation7 + $0x358] sm:$0xff]
    %v7761 = vld [vmem:[#allocation7 + $0x360] sm:$0xff]
    %v7762 = vld [vmem:[#allocation7 + $0x368] sm:$0xff]
    %v7763 = vld [vmem:[#allocation7 + $0x370] sm:$0xff]
    %v7764 = vld [vmem:[#allocation7 + $0x378] sm:$0xff]
    %v7765 = vlaneseq
    %v7766 = vshrl.u32 %v7765, 7
    %v7767 = vsub.s32 6, %v7766
    %v7768 = vrot.slane %v94, %v7767
    %7769 = vmatprep.subr.mxu0 0.0
    %7770 = vmatpush1.msra.mxu0 %v7716
    %7771 = vmatprep.subr.mxu0 0.0
    %7772 = vmatpush1.msra.mxu0 %v7715
    %7773 = vmatprep.subr.mxu0 0.0
    %7774 = vmatpush1.msra.mxu0 %v7714
    %7775 = vmatprep.subr.mxu0 0.0
    %7776 = vmatpush1.msra.mxu0 %v7713
    %7777 = vmatprep.subr.mxu0 0.0
    %7778 = vmatpush1.msra.mxu0 %v7712
    %7779 = vmatprep.subr.mxu0 0.0
    %7780 = vmatpush1.msra.mxu0 %v7711
    %7781 = vmatprep.subr.mxu0 0.0
    %7782 = vmatpush1.msra.mxu0 %v7710
    %7783 = vmatprep.subr.mxu0 0.0
    %7784 = vmatpush1.msra.mxu0 %v7709
    %7785 = vmatprep.subr.mxu0 0.0
    %7786 = vmatpush1.msra.mxu0 %v7708
    %7787 = vmatprep.subr.mxu0 0.0
    %7788 = vmatpush1.msra.mxu0 %v7707
    %7789 = vmatprep.subr.mxu0 0.0
    %7790 = vmatpush1.msra.mxu0 %v7706
    %7791 = vmatprep.subr.mxu0 0.0
    %7792 = vmatpush1.msra.mxu0 %v7705
    %7793 = vmatprep.subr.mxu0 0.0
    %7794 = vmatpush1.msra.mxu0 %v7704
    %7795 = vmatprep.subr.mxu0 0.0
    %7796 = vmatpush1.msra.mxu0 %v7703
    %7797 = vmatprep.subr.mxu0 0.0
    %7798 = vmatpush1.msra.mxu0 %v7702
    %7799 = vmatprep.subr.mxu0 0.0
    %7800 = vmatpush1.msra.mxu0 %v7701
    %7801 = vmatprep.subr.mxu0 0.0
    %7802 = vmatpush2.msra.mxu0 %v7732
    %7803 = vmatprep.subr.mxu0 0.0
    %7804 = vmatpush2.msra.mxu0 %v7731
    %7805 = vmatprep.subr.mxu0 0.0
    %7806 = vmatpush2.msra.mxu0 %v7730
    %7807 = vmatprep.subr.mxu0 0.0
    %7808 = vmatpush2.msra.mxu0 %v7729
    %7809 = vmatprep.subr.mxu0 0.0
    %7810 = vmatpush2.msra.mxu0 %v7728
    %7811 = vmatprep.subr.mxu0 0.0
    %7812 = vmatpush2.msra.mxu0 %v7727
    %7813 = vmatprep.subr.mxu0 0.0
    %7814 = vmatpush2.msra.mxu0 %v7726
    %7815 = vmatprep.subr.mxu0 0.0
    %7816 = vmatpush2.msra.mxu0 %v7725
    %7817 = vmatprep.subr.mxu0 0.0
    %7818 = vmatpush2.msra.mxu0 %v7724
    %7819 = vmatprep.subr.mxu0 0.0
    %7820 = vmatpush2.msra.mxu0 %v7723
    %7821 = vmatprep.subr.mxu0 0.0
    %7822 = vmatpush2.msra.mxu0 %v7722
    %7823 = vmatprep.subr.mxu0 0.0
    %7824 = vmatpush2.msra.mxu0 %v7721
    %7825 = vmatprep.subr.mxu0 0.0
    %7826 = vmatpush2.msra.mxu0 %v7720
    %7827 = vmatprep.subr.mxu0 0.0
    %7828 = vmatpush2.msra.mxu0 %v7719
    %7829 = vmatprep.subr.mxu0 0.0
    %7830 = vmatpush2.msra.mxu0 %v7718
    %7831 = vmatprep.subr.mxu0 0.0
    %7832 = vmatpush2.msra.mxu0 %v7717
    %7833 = vmatprep.mubr.f32.mxu0 %v7698
    %7834 = vmatmul.mubr.f32.gmra.mxu0 %v7697
    %v7835 = vpop.f32.mrf.mxu0
    %v7836 = vadd.f32 %v7768, %v7835
    %v7837 = vpop.f32.mrf.mxu0
    %7838 = vdwg.mxu0
    %7839 = vmatprep.subr.mxu0 0.0
    %7840 = vmatpush1.msra.mxu0 %v7748
    %7841 = vmatprep.subr.mxu0 0.0
    %7842 = vmatpush1.msra.mxu0 %v7747
    %7843 = vmatprep.subr.mxu0 0.0
    %7844 = vmatpush1.msra.mxu0 %v7746
    %7845 = vmatprep.subr.mxu0 0.0
    %7846 = vmatpush1.msra.mxu0 %v7745
    %7847 = vmatprep.subr.mxu0 0.0
    %7848 = vmatpush1.msra.mxu0 %v7744
    %7849 = vmatprep.subr.mxu0 0.0
    %7850 = vmatpush1.msra.mxu0 %v7743
    %7851 = vmatprep.subr.mxu0 0.0
    %7852 = vmatpush1.msra.mxu0 %v7742
    %7853 = vmatprep.subr.mxu0 0.0
    %7854 = vmatpush1.msra.mxu0 %v7741
    %7855 = vmatprep.subr.mxu0 0.0
    %7856 = vmatpush1.msra.mxu0 %v7740
    %7857 = vmatprep.subr.mxu0 0.0
    %7858 = vmatpush1.msra.mxu0 %v7739
    %7859 = vmatprep.subr.mxu0 0.0
    %7860 = vmatpush1.msra.mxu0 %v7738
    %7861 = vmatprep.subr.mxu0 0.0
    %7862 = vmatpush1.msra.mxu0 %v7737
    %7863 = vmatprep.subr.mxu0 0.0
    %7864 = vmatpush1.msra.mxu0 %v7736
    %7865 = vmatprep.subr.mxu0 0.0
    %7866 = vmatpush1.msra.mxu0 %v7735
    %7867 = vmatprep.subr.mxu0 0.0
    %7868 = vmatpush1.msra.mxu0 %v7734
    %7869 = vmatprep.subr.mxu0 0.0
    %7870 = vmatpush1.msra.mxu0 %v7733
    %7871 = vmatprep.subr.mxu0 0.0
    %7872 = vmatpush2.msra.mxu0 %v7764
    %7873 = vmatprep.subr.mxu0 0.0
    %7874 = vmatpush2.msra.mxu0 %v7763
    %7875 = vmatprep.subr.mxu0 0.0
    %7876 = vmatpush2.msra.mxu0 %v7762
    %7877 = vmatprep.subr.mxu0 0.0
    %7878 = vmatpush2.msra.mxu0 %v7761
    %7879 = vmatprep.subr.mxu0 0.0
    %7880 = vmatpush2.msra.mxu0 %v7760
    %7881 = vmatprep.subr.mxu0 0.0
    %7882 = vmatpush2.msra.mxu0 %v7759
    %7883 = vmatprep.subr.mxu0 0.0
    %7884 = vmatpush2.msra.mxu0 %v7758
    %7885 = vmatprep.subr.mxu0 0.0
    %7886 = vmatpush2.msra.mxu0 %v7757
    %7887 = vmatprep.subr.mxu0 0.0
    %7888 = vmatpush2.msra.mxu0 %v7756
    %7889 = vmatprep.subr.mxu0 0.0
    %7890 = vmatpush2.msra.mxu0 %v7755
    %7891 = vmatprep.subr.mxu0 0.0
    %7892 = vmatpush2.msra.mxu0 %v7754
    %7893 = vmatprep.subr.mxu0 0.0
    %7894 = vmatpush2.msra.mxu0 %v7753
    %7895 = vmatprep.subr.mxu0 0.0
    %7896 = vmatpush2.msra.mxu0 %v7752
    %7897 = vmatprep.subr.mxu0 0.0
    %7898 = vmatpush2.msra.mxu0 %v7751
    %7899 = vmatprep.subr.mxu0 0.0
    %7900 = vmatpush2.msra.mxu0 %v7750
    %7901 = vmatprep.subr.mxu0 0.0
    %7902 = vmatpush2.msra.mxu0 %v7749
    %7903 = vmatprep.mubr.f32.mxu0 %v7700
    %7904 = vmatmul.mubr.f32.gmra.mxu0 %v7699
    %v7905 = vpop.f32.mrf.mxu0
    %v7906 = vadd.f32 %v7836, %v7905
    %v7907 = vpop.f32.mrf.mxu0
    %7908 = vdwg.mxu0
    %v7909 = vlaneseq
    %v7910 = vand.u32 %v7909, 127
    %vm7911 = vcmp.lt.s32.totalorder %v7910, 8
    %v7912 = vsel %vm7911, %v7906, -inf
    %7913 = vmax.xlane.f32.xlu0 %v7912
    %v7914 = vpop.xlane.xlu0 %7913
    %v7915 = vsub.f32 %v7912, %v7914
    %v7916 = vmul.f32 %v7915, 1.442695
    %v7917 = vpow.pop %v7916
    %7918 = vadd.xlane.f32.xlu0 %v7917
    %v7919 = vpop.xlane.xlu0 %7918
    %v7920 = vrcp.pop %v7919
    %v7921 = vmul.f32 %v7917, %v7920
    %s7922 = scalar_lea.vmem %s6, 8
    %7923 = vst [vmem:[%s7922] sm:$0xff] %v7921
    // Predicated region
    $region46: #{object_detector_forward.1} parent=1 // pred_check
      _
    $region47: #{object_detector_forward.1} parent=1 // pred_check_branch
      %7925 = sbr.rel (0) target = $region49
    $region48: #{object_detector_forward.1} parent=1 // pred_region
      _
    $region49: #{object_detector_forward.1} parent=1 // pred_fallthru
      _
    // Predicated region
    $region50: #{object_detector_forward.1} parent=1 // pred_check
      _
    $region51: #{object_detector_forward.1} parent=1 // pred_check_branch
      %7927 = sbr.rel (0) target = $region53
    $region52: #{object_detector_forward.1} parent=1 // pred_region
      _
    $region53: #{object_detector_forward.1} parent=1 // pred_fallthru
      _
    %7928 = vsyncpa [#allocation3], 1
    %7929 = vsyncpa [#allocation5], 1
    %7930 = vsyncpa [#allocation8], 1

</llo_original>
